<compile_context>
chip_gen: v5e
topology: v5e:2x2
jax: 0.10.0
libtpu: 0.0.40
codegen_flags: <defaults>
</compile_context>

<pallas_src>
import functools

import numpy as np
import jax
import jax.numpy as jnp
from jax import lax
from jax.experimental import pallas as pl
from jax.experimental.pallas import tpu as pltpu


def _silu(x):
    return x * jax.nn.sigmoid(x)


# --------------------------------------------------------------- helpers ----
def _build_masks(H, W):
    """Rows 0..8: validity of each 3x3 tap under 'SAME' zero padding (tap order
    dy in (-1,0,1) outer, dx inner).  Row 9: even-pixel mask used to read the
    stride-2 conv2 output out of the stride-1 result."""
    pos = np.arange(H * W)
    row, col = pos // W, pos % W
    rows = []
    for dy in (-1, 0, 1):
        for dx in (-1, 0, 1):
            rows.append(((row + dy >= 0) & (row + dy < H) &
                         (col + dx >= 0) & (col + dx < W)).astype(np.float32))
    rows.append(((row % 2 == 0) & (col % 2 == 0)).astype(np.float32))
    return jnp.asarray(np.stack(rows, axis=0))                  # (10, H*W) f32


def _pick_cin_tile(cin, hw):
    # Prefer big tiles (few grid steps: ~0.35us/step overhead dominates the
    # sub-microsecond MXU work) while keeping the triple-buffered f32 x tile
    # comfortably inside VMEM on every generation (including v7x's 64 MiB).
    budget = 24 << 20
    for t in (2048, 1536, 1024, 768, 512, 384, 256, 192, 128, 64, 32, 16, 8):
        if cin % t == 0 and 3 * t * hw * 4 <= budget:
            return t
    return cin


def _accumulate_taps(y_all, masks, cout, H, W):
    """y_all: (9*cout, H*W) per-tap matmul results evaluated at the *input*
    pixel positions.  Rolls every tap onto the output pixel it contributes to,
    zeroes contributions that fall in the zero-padded border (masks rows 0..8)
    and sums, giving the 3x3 'SAME' conv output (cout, H*W) in f32."""
    HW = H * W
    out = None
    t = 0
    for dy in (-1, 0, 1):
        for dx in (-1, 0, 1):
            tap = y_all[t * cout:(t + 1) * cout, :]
            off = dy * W + dx
            if off != 0:                         # center tap: no roll, no mask
                tap = pltpu.roll(tap, (-off) % HW, axis=1)
                tap = tap * masks[t:t + 1, :]
            out = tap if out is None else out + tap
            t += 1
    return out


# ------------------------------------------------------------ fused kernel --
def _fused_kernel(x_ref, w1_ref, b1_ref, mul0_ref, add0_ref, w2_ref, b2_ref,
                  wfc1_ref, bfc1_ref, wfc2_ref, bfc2_ref, masks_ref,
                  o_ref, acc_ref, *, H, W, eps):
    """Whole TimePredictor forward for one batch element.

    grid = (B, n_k): B is 'parallel'; the Cin axis (k) is the innermost
    'arbitrary' reduction.  INVARIANT: acc_ref accumulates over k and is
    (re)initialized at k == 0 / consumed at k == n_k - 1, so the k axis must
    stay innermost per batch element -- do not reorder the grid."""
    k = pl.program_id(1)
    cout = b1_ref.shape[0]
    masks = masks_ref[...]                                      # (10, HW) f32

    @pl.when(k == 0)
    def _init():
        acc_ref[...] = jnp.zeros_like(acc_ref)

    # conv1 partial sum for this Cin tile: one stacked (9*Cout, tc)@(tc, HW)
    # MXU matmul (bf16 in / f32 acc); x is cast to bf16 in-kernel (no separate
    # HBM cast pass).  Roll/mask the 9 taps here so acc stays (Cout, HW).
    xb = x_ref[0].astype(jnp.bfloat16)                          # (tc, HW)
    wk = w1_ref[k]                                              # (9*Cout, tc) bf16
    y = jnp.dot(wk, xb, preferred_element_type=jnp.float32)     # (9*Cout, HW)
    acc_ref[...] += _accumulate_taps(y, masks, cout, H, W)

    @pl.when(k == pl.num_programs(1) - 1)
    def _epilogue():
        conv = acc_ref[...] + b1_ref[...]                       # (Cout, HW) f32

        # GroupNorm(num_groups=1): two-pass stats for precision; the GN affine
        # and the adaLN-zero modulation are pre-folded (in XLA) into mul0/add0.
        mean = jnp.mean(conv)
        cen = conv - mean
        var = jnp.mean(cen * cen)
        rstd = lax.rsqrt(var + eps)
        mul = mul0_ref[0] * rstd                                # (Cout, 1)
        add = add0_ref[0] - mean * mul
        h1 = _silu(conv * mul + add)                            # (Cout, HW) f32

        # conv2 (3x3, stride 2, pad 1) == stride-1 conv sub-sampled at even
        # pixels; adaptive_avg_pool2d((16,16)) is the identity here, so the
        # even-masked row max below is exactly adaptive_max_pool2d((1,1)).
        y2 = jnp.dot(w2_ref[...], h1.astype(jnp.bfloat16),
                     preferred_element_type=jnp.float32)        # (9*Cout, HW)
        conv2 = _accumulate_taps(y2, masks, cout, H, W) + b2_ref[...]
        even = masks[9:10, :] > 0.0
        pooled = jnp.max(jnp.where(even, conv2, -jnp.inf),
                         axis=1, keepdims=True)                 # (Cout, 1)

        # fc1 + SiLU + fc2 + exp(x) + 1
        f = jnp.dot(wfc1_ref[...], pooled,
                    preferred_element_type=jnp.float32) + bfc1_ref[...]
        f = _silu(f)
        yy = jnp.dot(wfc2_ref[...], f,
                     preferred_element_type=jnp.float32) + bfc2_ref[...]
        o_ref[0] = jnp.exp(yy) + 1.0


# ----------------------------------------------------------------- wrapper ---
def time_predictor_forward(params, x_nchw, temb, cin_tile=None):
    B, Cin, H, W = x_nchw.shape
    cout = params['w_conv1'].shape[-1]
    HW = H * W
    if ((H - 1) // 2 + 1, (W - 1) // 2 + 1) != (16, 16):
        # TODO(synk): general adaptive_avg_pool2d((16,16)) resampling (conv2
        # output != 16x16) is not fused; only the identity case is supported.
        raise NotImplementedError("expected conv2 output spatial of 16x16")

    tc = cin_tile if cin_tile is not None else _pick_cin_tile(Cin, HW)
    assert Cin % tc == 0, (Cin, tc)
    n_k = Cin // tc
    f32 = jnp.float32

    # Tiny XLA-side layout glue (weights/scalars only).  The big activation x
    # is only reshaped -- no transpose and no cast pass through HBM.
    x_flat = x_nchw.reshape(B, Cin, HW)                                  # f32
    w1s = jnp.transpose(params['w_conv1'], (0, 1, 3, 2)).reshape(9 * cout, Cin)
    w1t = jnp.transpose(w1s.reshape(9 * cout, n_k, tc), (1, 0, 2))       # slabs
    w1t = w1t.astype(jnp.bfloat16)                                       # (n_k, 9C, tc)
    w2s = jnp.transpose(params['w_conv2'], (0, 1, 3, 2)).reshape(9 * cout, cout)
    w2s = w2s.astype(jnp.bfloat16)
    b1 = params['b_conv1'].astype(f32).reshape(cout, 1)
    b2 = params['b_conv2'].astype(f32).reshape(cout, 1)

    # adaLN-zero hoisted to XLA over the full batch (in-kernel it was an N=1
    # matmul per element); fold the GN affine + modulation into mul0/add0.
    emb = (_silu(temb.astype(f32)) @ params['w_lin'].astype(f32)
           + params['b_lin'].astype(f32))                                # (B, 2C)
    shift, scale = emb[:, :cout], emb[:, cout:]
    gamma = params['gn_gamma'].astype(f32)[None, :]
    beta = params['gn_beta'].astype(f32)[None, :]
    mul0 = (gamma * (1.0 + scale)).reshape(B, cout, 1)
    add0 = (beta * (1.0 + scale) + shift).reshape(B, cout, 1)

    wfc1_t = jnp.transpose(params['w_fc1']).astype(f32)                  # (128, C)
    bfc1 = params['b_fc1'].astype(f32).reshape(-1, 1)
    wfc2_t = jnp.transpose(params['w_fc2']).astype(f32)                  # (proj, 128)
    bfc2 = params['b_fc2'].astype(f32).reshape(-1, 1)
    d1 = wfc1_t.shape[0]
    proj = wfc2_t.shape[0]
    masks = _build_masks(H, W)                                           # (10, HW)

    kernel = functools.partial(_fused_kernel, H=H, W=W, eps=1e-6)

    # Deeper pipelining on the dominant (HBM-bound) x stream when the Cin
    # reduction has enough steps to benefit.
    x_idx = lambda b, k: (b, k, 0)
    if n_k >= 3:
        try:
            x_spec = pl.BlockSpec((1, tc, HW), x_idx, pipeline_mode=pl.Buffered(3))
        except TypeError:
            x_spec = pl.BlockSpec((1, tc, HW), x_idx)
    else:
        x_spec = pl.BlockSpec((1, tc, HW), x_idx)

    out = pl.pallas_call(
        kernel,
        out_shape=jax.ShapeDtypeStruct((B, proj, 1), f32),
        grid=(B, n_k),
        in_specs=[
            x_spec,                                                       # x (f32)
            pl.BlockSpec((n_k, 9 * cout, tc), lambda b, k: (0, 0, 0)),    # w1 resident
            pl.BlockSpec((cout, 1), lambda b, k: (0, 0)),                 # b1
            pl.BlockSpec((1, cout, 1), lambda b, k: (b, 0, 0)),           # mul0
            pl.BlockSpec((1, cout, 1), lambda b, k: (b, 0, 0)),           # add0
            pl.BlockSpec((9 * cout, cout), lambda b, k: (0, 0)),          # w2 stack
            pl.BlockSpec((cout, 1), lambda b, k: (0, 0)),                 # b2
            pl.BlockSpec((d1, cout), lambda b, k: (0, 0)),                # w_fc1^T
            pl.BlockSpec((d1, 1), lambda b, k: (0, 0)),                   # b_fc1
            pl.BlockSpec((proj, d1), lambda b, k: (0, 0)),                # w_fc2^T
            pl.BlockSpec((proj, 1), lambda b, k: (0, 0)),                 # b_fc2
            pl.BlockSpec((10, HW), lambda b, k: (0, 0)),                  # masks
        ],
        out_specs=pl.BlockSpec((1, proj, 1), lambda b, k: (b, 0, 0)),
        scratch_shapes=[pltpu.VMEM((cout, HW), jnp.float32)],             # conv1 acc
        compiler_params=pltpu.CompilerParams(
            dimension_semantics=("parallel", "arbitrary"),
            # VMEM budget at production scale (Cin=3072, Cout=32, tc=1536):
            #   3*tc*HW*4 (~19MiB x, f32, triple-buffered) + 9*Cout*Cin*2
            #   (~1.7MiB resident w1) + stacked-tap temporaries (~4MiB) +
            #   acc/masks/misc (<0.5MiB) ~= 25MiB -- well under this 48MiB cap
            #   and under v7x's 64MiB physical VMEM.
            vmem_limit_bytes=48 * 1024 * 1024),
        # TODO(synk): v7x megacore only engages through the 'parallel' B axis;
        # for B == 1 inference, split the Cin reduction across the two cores.
    )(x_flat, w1t, b1, mul0, add0, w2s, b2, wfc1_t, bfc1, wfc2_t, bfc2, masks)
    return out[:, :, 0]


# ------------------------------------------------------------- reference -----
def reference_forward(params, x_nchw, temb):
    # Mirrors the kernel's precision policy: conv operands rounded to bf16,
    # all accumulation / normalization in f32.
    f32 = jnp.float32
    dn = ('NHWC', 'HWIO', 'NHWC')
    x = jnp.transpose(x_nchw, (0, 2, 3, 1)).astype(jnp.bfloat16).astype(f32)
    w1 = params['w_conv1'].astype(jnp.bfloat16).astype(f32)
    h = lax.conv_general_dilated(x, w1, (1, 1), 'SAME', dimension_numbers=dn,
                                 precision=lax.Precision.HIGHEST)
    h = h + params['b_conv1']
    cout = w1.shape[-1]
    emb = _silu(temb.astype(f32)) @ params['w_lin'] + params['b_lin']
    shift, scale = emb[:, :cout], emb[:, cout:]
    mean = jnp.mean(h, axis=(1, 2, 3), keepdims=True)
    var = jnp.mean((h - mean) ** 2, axis=(1, 2, 3), keepdims=True)
    hn = (h - mean) / jnp.sqrt(var + 1e-6)
    hn = hn * params['gn_gamma'] + params['gn_beta']
    h = _silu(hn * (1.0 + scale[:, None, None, :]) + shift[:, None, None, :])
    h = h.astype(jnp.bfloat16).astype(f32)
    w2 = params['w_conv2'].astype(jnp.bfloat16).astype(f32)
    h = lax.conv_general_dilated(h, w2, (2, 2), [(1, 1), (1, 1)],
                                 dimension_numbers=dn,
                                 precision=lax.Precision.HIGHEST)
    h = h + params['b_conv2']
    # adaptive_avg_pool2d((16,16)) is the identity here (conv2 output is 16x16)
    pooled = jnp.max(h, axis=(1, 2))
    h = _silu(pooled @ params['w_fc1'] + params['b_fc1'])
    h = h @ params['w_fc2'] + params['b_fc2']
    return jnp.exp(h) + 1.0


# ------------------------------------------------------------------- main ----
if __name__ == "__main__":
    # Small synthetic config (module defaults use in_channels=3072; scaled
    # down, same structure: temb dim = in_channels // 2, conv2 output 16x16).
    B, Cin, H, W = 2, 64, 32, 32
    Cout = 32                 # conv_out_channels
    Tin = Cin // 2            # adaLN linear input dim
    proj = 2

    key = jax.random.PRNGKey(0)
    ks = jax.random.split(key, 8)
    params = {
        'w_conv1': 0.02 * jax.random.normal(ks[0], (3, 3, Cin, Cout), jnp.float32),
        'b_conv1': jnp.zeros((Cout,), jnp.float32),
        'w_conv2': 0.02 * jax.random.normal(ks[1], (3, 3, Cout, Cout), jnp.float32),
        'b_conv2': jnp.zeros((Cout,), jnp.float32),
        'w_lin': 0.02 * jax.random.normal(ks[2], (Tin, 2 * Cout), jnp.float32),
        'b_lin': (float(Tin) ** -0.5) * jax.random.uniform(
            ks[3], (2 * Cout,), jnp.float32, -1.0, 1.0),
        'gn_gamma': jnp.ones((Cout,), jnp.float32),
        'gn_beta': jnp.zeros((Cout,), jnp.float32),
        'w_fc1': 0.02 * jax.random.normal(ks[4], (Cout, 128), jnp.float32),
        'b_fc1': jnp.zeros((128,), jnp.float32),
        'w_fc2': 0.02 * jax.random.normal(ks[5], (128, proj), jnp.float32),
        'b_fc2': jnp.array([1.5, -0.7], jnp.float32),   # init_alpha, init_beta
    }

    x = jax.random.normal(ks[6], (B, Cin, H, W), jnp.float32)   # NCHW like torch
    temb = jax.random.normal(ks[7], (B, Tin), jnp.float32)

    ref = reference_forward(params, x, temb)

    # Default path (auto tile -> single-step Cin reduction at this small Cin).
    fwd = jax.jit(lambda p, xx, tt: time_predictor_forward(p, xx, tt))
    out = jax.block_until_ready(fwd(params, x, temb))
    assert out.shape == (B, proj)
    assert jnp.allclose(out, ref, rtol=1e-2, atol=1e-2), (out, ref)

    # Also exercise the multi-step Cin reduction / accumulator path (n_k > 1).
    fwd_tiled = jax.jit(
        lambda p, xx, tt: time_predictor_forward(p, xx, tt, cin_tile=16))
    out2 = jax.block_until_ready(fwd_tiled(params, x, temb))
    assert jnp.allclose(out2, ref, rtol=1e-2, atol=1e-2), (out2, ref)

    print("KERNEL_OK")
</pallas_src>

<mosaic_0001>
module attributes {stable_mosaic.version = 11 : i64} {
  func.func @_fused_kernel(%arg0: i32, %arg1: i32, %arg2: memref<1x64x1024xf32, #tpu.memory_space<vmem>>, %arg3: memref<1x288x64xbf16, #tpu.memory_space<vmem>>, %arg4: memref<32x1xf32, #tpu.memory_space<vmem>>, %arg5: memref<1x32x1xf32, #tpu.memory_space<vmem>>, %arg6: memref<1x32x1xf32, #tpu.memory_space<vmem>>, %arg7: memref<288x32xbf16, #tpu.memory_space<vmem>>, %arg8: memref<32x1xf32, #tpu.memory_space<vmem>>, %arg9: memref<128x32xf32, #tpu.memory_space<vmem>>, %arg10: memref<128x1xf32, #tpu.memory_space<vmem>>, %arg11: memref<2x128xf32, #tpu.memory_space<vmem>>, %arg12: memref<2x1xf32, #tpu.memory_space<vmem>>, %arg13: memref<10x1024xf32, #tpu.memory_space<vmem>>, %arg14: memref<1x2x1xf32, #tpu.memory_space<vmem>>, %arg15: memref<32x1024xf32, #tpu.memory_space<vmem>>) attributes {dimension_semantics = [#tpu.dimension_semantics<parallel>, #tpu.dimension_semantics<arbitrary>], iteration_bounds = array<i64: 2, 1>, scalar_prefetch = 0 : i64, scratch_operands = 1 : i64, tpu.core_type = #tpu.core_type<tc>, window_params = [{transform_indices = @transform_0, window_bounds = array<i64: 1, 64, 1024>}, {pipeline_mode = #tpu.pipeline_mode<synchronous>, transform_indices = @transform_1, window_bounds = array<i64: 1, 288, 64>}, {pipeline_mode = #tpu.pipeline_mode<synchronous>, transform_indices = @transform_2, window_bounds = array<i64: 32, 1>}, {transform_indices = @transform_3, window_bounds = array<i64: 1, 32, 1>}, {transform_indices = @transform_4, window_bounds = array<i64: 1, 32, 1>}, {pipeline_mode = #tpu.pipeline_mode<synchronous>, transform_indices = @transform_5, window_bounds = array<i64: 288, 32>}, {pipeline_mode = #tpu.pipeline_mode<synchronous>, transform_indices = @transform_6, window_bounds = array<i64: 32, 1>}, {pipeline_mode = #tpu.pipeline_mode<synchronous>, transform_indices = @transform_7, window_bounds = array<i64: 128, 32>}, {pipeline_mode = #tpu.pipeline_mode<synchronous>, transform_indices = @transform_8, window_bounds = array<i64: 128, 1>}, {pipeline_mode = #tpu.pipeline_mode<synchronous>, transform_indices = @transform_9, window_bounds = array<i64: 2, 128>}, {pipeline_mode = #tpu.pipeline_mode<synchronous>, transform_indices = @transform_10, window_bounds = array<i64: 2, 1>}, {pipeline_mode = #tpu.pipeline_mode<synchronous>, transform_indices = @transform_11, window_bounds = array<i64: 10, 1024>}, {transform_indices = @transform_12, window_bounds = array<i64: 1, 2, 1>}]} {
    %c0 = arith.constant 0 : index
    %c0_0 = arith.constant 0 : index
    %0 = vector.load %arg13[%c0, %c0_0] : memref<10x1024xf32, #tpu.memory_space<vmem>>, vector<10x1024xf32>
    %c0_i32 = arith.constant 0 : i32
    %1 = arith.cmpi eq, %arg1, %c0_i32 : i32
    %2 = arith.extui %1 : i1 to i32
    %c0_i32_1 = arith.constant 0 : i32
    %3 = arith.cmpi ne, %2, %c0_i32_1 : i32
    scf.if %3 {
      %cst_13 = arith.constant 0.000000e+00 : f32
      %66 = vector.broadcast %cst_13 : f32 to vector<32x1024xf32>
      %c0_14 = arith.constant 0 : index
      %c0_15 = arith.constant 0 : index
      %67 = vector.load %arg15[%c0_14, %c0_15] : memref<32x1024xf32, #tpu.memory_space<vmem>>, vector<32x1024xf32>
      tpu.vector_store %arg15[%c0_14, %c0_15], %66 {strides = array<i32>} : memref<32x1024xf32, #tpu.memory_space<vmem>>, vector<32x1024xf32>,
    } else {
    }
    %c0_2 = arith.constant 0 : index
    %c0_3 = arith.constant 0 : index
    %c0_4 = arith.constant 0 : index
    %4 = vector.load %arg2[%c0_2, %c0_3, %c0_4] : memref<1x64x1024xf32, #tpu.memory_space<vmem>>, vector<1x64x1024xf32>
    %5 = vector.shape_cast %4 : vector<1x64x1024xf32> to vector<64x1024xf32>
    %6 = arith.truncf %5 : vector<64x1024xf32> to vector<64x1024xbf16>
    %7 = arith.index_cast %arg1 : i32 to index
    %c0_5 = arith.constant 0 : index
    %c0_6 = arith.constant 0 : index
    %8 = vector.load %arg3[%7, %c0_5, %c0_6] : memref<1x288x64xbf16, #tpu.memory_space<vmem>>, vector<1x288x64xbf16>
    %9 = vector.shape_cast %8 : vector<1x288x64xbf16> to vector<288x64xbf16>
    %cst = arith.constant dense<0.000000e+00> : vector<288x1024xf32>
    %10 = tpu.matmul %9, %6, %cst {dimension_numbers = #tpu.dot_dimension_numbers<[1], [0], [0], [1], [0, 0, 1, 1], [], []>} : vector<288x64xbf16>, vector<64x1024xbf16>, vector<288x1024xf32> -> vector<288x1024xf32>
    %c0_7 = arith.constant 0 : index
    %c0_8 = arith.constant 0 : index
    %11 = vector.load %arg15[%c0_7, %c0_8] : memref<32x1024xf32, #tpu.memory_space<vmem>>, vector<32x1024xf32>
    %12 = vector.extract_strided_slice %10 {offsets = [0, 0], sizes = [32, 1024], strides = [1, 1]} : vector<288x1024xf32> to vector<32x1024xf32>
    %c33_i32 = arith.constant 33 : i32
    %13 = tpu.dynamic_rotate %12 by %c33_i32 dim 1 : vector<32x1024xf32>, i32 -> vector<32x1024xf32>
    %14 = vector.extract_strided_slice %0 {offsets = [0, 0], sizes = [1, 1024], strides = [1, 1]} : vector<10x1024xf32> to vector<1x1024xf32>
    %15 = vector.broadcast %14 : vector<1x1024xf32> to vector<32x1024xf32>
    %16 = arith.mulf %13, %15 : vector<32x1024xf32>
    %17 = vector.extract_strided_slice %10 {offsets = [32, 0], sizes = [32, 1024], strides = [1, 1]} : vector<288x1024xf32> to vector<32x1024xf32>
    %c32_i32 = arith.constant 32 : i32
    %18 = tpu.dynamic_rotate %17 by %c32_i32 dim 1 : vector<32x1024xf32>, i32 -> vector<32x1024xf32>
    %19 = vector.extract_strided_slice %0 {offsets = [1, 0], sizes = [1, 1024], strides = [1, 1]} : vector<10x1024xf32> to vector<1x1024xf32>
    %20 = vector.broadcast %19 : vector<1x1024xf32> to vector<32x1024xf32>
    %21 = arith.mulf %18, %20 : vector<32x1024xf32>
    %22 = arith.addf %16, %21 : vector<32x1024xf32>
    %23 = vector.extract_strided_slice %10 {offsets = [64, 0], sizes = [32, 1024], strides = [1, 1]} : vector<288x1024xf32> to vector<32x1024xf32>
    %c31_i32 = arith.constant 31 : i32
    %24 = tpu.dynamic_rotate %23 by %c31_i32 dim 1 : vector<32x1024xf32>, i32 -> vector<32x1024xf32>
    %25 = vector.extract_strided_slice %0 {offsets = [2, 0], sizes = [1, 1024], strides = [1, 1]} : vector<10x1024xf32> to vector<1x1024xf32>
    %26 = vector.broadcast %25 : vector<1x1024xf32> to vector<32x1024xf32>
    %27 = arith.mulf %24, %26 : vector<32x1024xf32>
    %28 = arith.addf %22, %27 : vector<32x1024xf32>
    %29 = vector.extract_strided_slice %10 {offsets = [96, 0], sizes = [32, 1024], strides = [1, 1]} : vector<288x1024xf32> to vector<32x1024xf32>
    %c1_i32 = arith.constant 1 : i32
    %30 = tpu.dynamic_rotate %29 by %c1_i32 dim 1 : vector<32x1024xf32>, i32 -> vector<32x1024xf32>
    %31 = vector.extract_strided_slice %0 {offsets = [3, 0], sizes = [1, 1024], strides = [1, 1]} : vector<10x1024xf32> to vector<1x1024xf32>
    %32 = vector.broadcast %31 : vector<1x1024xf32> to vector<32x1024xf32>
    %33 = arith.mulf %30, %32 : vector<32x1024xf32>
    %34 = arith.addf %28, %33 : vector<32x1024xf32>
    %35 = vector.extract_strided_slice %10 {offsets = [128, 0], sizes = [32, 1024], strides = [1, 1]} : vector<288x1024xf32> to vector<32x1024xf32>
    %36 = arith.addf %34, %35 : vector<32x1024xf32>
    %37 = vector.extract_strided_slice %10 {offsets = [160, 0], sizes = [32, 1024], strides = [1, 1]} : vector<288x1024xf32> to vector<32x1024xf32>
    %c1023_i32 = arith.constant 1023 : i32
    %38 = tpu.dynamic_rotate %37 by %c1023_i32 dim 1 : vector<32x1024xf32>, i32 -> vector<32x1024xf32>
    %39 = vector.extract_strided_slice %0 {offsets = [5, 0], sizes = [1, 1024], strides = [1, 1]} : vector<10x1024xf32> to vector<1x1024xf32>
    %40 = vector.broadcast %39 : vector<1x1024xf32> to vector<32x1024xf32>
    %41 = arith.mulf %38, %40 : vector<32x1024xf32>
    %42 = arith.addf %36, %41 : vector<32x1024xf32>
    %43 = vector.extract_strided_slice %10 {offsets = [192, 0], sizes = [32, 1024], strides = [1, 1]} : vector<288x1024xf32> to vector<32x1024xf32>
    %c993_i32 = arith.constant 993 : i32
    %44 = tpu.dynamic_rotate %43 by %c993_i32 dim 1 : vector<32x1024xf32>, i32 -> vector<32x1024xf32>
    %45 = vector.extract_strided_slice %0 {offsets = [6, 0], sizes = [1, 1024], strides = [1, 1]} : vector<10x1024xf32> to vector<1x1024xf32>
    %46 = vector.broadcast %45 : vector<1x1024xf32> to vector<32x1024xf32>
    %47 = arith.mulf %44, %46 : vector<32x1024xf32>
    %48 = arith.addf %42, %47 : vector<32x1024xf32>
    %49 = vector.extract_strided_slice %10 {offsets = [224, 0], sizes = [32, 1024], strides = [1, 1]} : vector<288x1024xf32> to vector<32x1024xf32>
    %c992_i32 = arith.constant 992 : i32
    %50 = tpu.dynamic_rotate %49 by %c992_i32 dim 1 : vector<32x1024xf32>, i32 -> vector<32x1024xf32>
    %51 = vector.extract_strided_slice %0 {offsets = [7, 0], sizes = [1, 1024], strides = [1, 1]} : vector<10x1024xf32> to vector<1x1024xf32>
    %52 = vector.broadcast %51 : vector<1x1024xf32> to vector<32x1024xf32>
    %53 = arith.mulf %50, %52 : vector<32x1024xf32>
    %54 = arith.addf %48, %53 : vector<32x1024xf32>
    %55 = vector.extract_strided_slice %10 {offsets = [256, 0], sizes = [32, 1024], strides = [1, 1]} : vector<288x1024xf32> to vector<32x1024xf32>
    %c991_i32 = arith.constant 991 : i32
    %56 = tpu.dynamic_rotate %55 by %c991_i32 dim 1 : vector<32x1024xf32>, i32 -> vector<32x1024xf32>
    %57 = vector.extract_strided_slice %0 {offsets = [8, 0], sizes = [1, 1024], strides = [1, 1]} : vector<10x1024xf32> to vector<1x1024xf32>
    %58 = vector.broadcast %57 : vector<1x1024xf32> to vector<32x1024xf32>
    %59 = arith.mulf %56, %58 : vector<32x1024xf32>
    %60 = arith.addf %54, %59 : vector<32x1024xf32>
    %61 = arith.addf %11, %60 : vector<32x1024xf32>
    %c0_9 = arith.constant 0 : index
    %c0_10 = arith.constant 0 : index
    %62 = vector.load %arg15[%c0_9, %c0_10] : memref<32x1024xf32, #tpu.memory_space<vmem>>, vector<32x1024xf32>
    tpu.vector_store %arg15[%c0_9, %c0_10], %61 {strides = array<i32>} : memref<32x1024xf32, #tpu.memory_space<vmem>>, vector<32x1024xf32>,
    %c0_i32_11 = arith.constant 0 : i32
    %63 = arith.cmpi eq, %arg1, %c0_i32_11 : i32
    %64 = arith.extui %63 : i1 to i32
    %c0_i32_12 = arith.constant 0 : i32
    %65 = arith.cmpi ne, %64, %c0_i32_12 : i32
    scf.if %65 {
      %c0_13 = arith.constant 0 : index
      %c0_14 = arith.constant 0 : index
      %66 = vector.load %arg15[%c0_13, %c0_14] : memref<32x1024xf32, #tpu.memory_space<vmem>>, vector<32x1024xf32>
      %c0_15 = arith.constant 0 : index
      %c0_16 = arith.constant 0 : index
      %67 = vector.load %arg4[%c0_15, %c0_16] : memref<32x1xf32, #tpu.memory_space<vmem>>, vector<32x1xf32>
      %68 = vector.broadcast %67 : vector<32x1xf32> to vector<32x1024xf32>
      %69 = arith.addf %66, %68 : vector<32x1024xf32>
      %70 = vector.shape_cast %69 : vector<32x1024xf32> to vector<1x32x1024xf32>
      %cst_17 = arith.constant dense<0.000000e+00> : vector<1xf32>
      %71 = vector.multi_reduction <add>, %70, %cst_17 [1, 2] : vector<1x32x1024xf32> to vector<1xf32>
      %72 = vector.shape_cast %71 : vector<1xf32> to vector<1x1x1xf32>
      %73 = vector.extract %72[0, 0, 0] : f32 from vector<1x1x1xf32>
      %cst_18 = arith.constant 3.276800e+04 : f32
      %74 = arith.divf %73, %cst_18 : f32
      %75 = vector.broadcast %74 : f32 to vector<32x1024xf32>
      %76 = arith.subf %69, %75 : vector<32x1024xf32>
      %77 = arith.mulf %76, %76 : vector<32x1024xf32>
      %78 = vector.shape_cast %77 : vector<32x1024xf32> to vector<1x32x1024xf32>
      %cst_19 = arith.constant dense<0.000000e+00> : vector<1xf32>
      %79 = vector.multi_reduction <add>, %78, %cst_19 [1, 2] : vector<1x32x1024xf32> to vector<1xf32>
      %80 = vector.shape_cast %79 : vector<1xf32> to vector<1x1x1xf32>
      %81 = vector.extract %80[0, 0, 0] : f32 from vector<1x1x1xf32>
      %cst_20 = arith.constant 3.276800e+04 : f32
      %82 = arith.divf %81, %cst_20 : f32
      %cst_21 = arith.constant 9.99999997E-7 : f32
      %83 = arith.addf %82, %cst_21 : f32
      %84 = math.rsqrt %83 : f32
      %c0_22 = arith.constant 0 : index
      %c0_23 = arith.constant 0 : index
      %c0_24 = arith.constant 0 : index
      %85 = vector.load %arg5[%c0_22, %c0_23, %c0_24] : memref<1x32x1xf32, #tpu.memory_space<vmem>>, vector<1x32x1xf32>
      %86 = vector.shape_cast %85 : vector<1x32x1xf32> to vector<32x1xf32>
      %87 = vector.broadcast %84 : f32 to vector<32x1xf32>
      %88 = arith.mulf %86, %87 : vector<32x1xf32>
      %c0_25 = arith.constant 0 : index
      %c0_26 = arith.constant 0 : index
      %c0_27 = arith.constant 0 : index
      %89 = vector.load %arg6[%c0_25, %c0_26, %c0_27] : memref<1x32x1xf32, #tpu.memory_space<vmem>>, vector<1x32x1xf32>
      %90 = vector.shape_cast %89 : vector<1x32x1xf32> to vector<32x1xf32>
      %91 = vector.broadcast %74 : f32 to vector<32x1xf32>
      %92 = arith.mulf %91, %88 : vector<32x1xf32>
      %93 = arith.subf %90, %92 : vector<32x1xf32>
      %94 = vector.broadcast %88 : vector<32x1xf32> to vector<32x1024xf32>
      %95 = arith.mulf %69, %94 : vector<32x1024xf32>
      %96 = vector.broadcast %93 : vector<32x1xf32> to vector<32x1024xf32>
      %97 = arith.addf %95, %96 : vector<32x1024xf32>
      %98 = arith.negf %97 : vector<32x1024xf32>
      %99 = math.exp %98 : vector<32x1024xf32>
      %cst_28 = arith.constant 1.000000e+00 : f32
      %100 = vector.broadcast %cst_28 : f32 to vector<32x1024xf32>
      %101 = arith.addf %100, %99 : vector<32x1024xf32>
      %102 = arith.divf %100, %101 : vector<32x1024xf32>
      %103 = arith.mulf %97, %102 : vector<32x1024xf32>
      %c0_29 = arith.constant 0 : index
      %c0_30 = arith.constant 0 : index
      %104 = vector.load %arg7[%c0_29, %c0_30] : memref<288x32xbf16, #tpu.memory_space<vmem>>, vector<288x32xbf16>
      %105 = arith.truncf %103 : vector<32x1024xf32> to vector<32x1024xbf16>
      %cst_31 = arith.constant dense<0.000000e+00> : vector<288x1024xf32>
      %106 = tpu.matmul %104, %105, %cst_31 {dimension_numbers = #tpu.dot_dimension_numbers<[1], [0], [0], [1], [0, 0, 1, 1], [], []>} : vector<288x32xbf16>, vector<32x1024xbf16>, vector<288x1024xf32> -> vector<288x1024xf32>
      %107 = vector.extract_strided_slice %106 {offsets = [0, 0], sizes = [32, 1024], strides = [1, 1]} : vector<288x1024xf32> to vector<32x1024xf32>
      %c33_i32_32 = arith.constant 33 : i32
      %108 = tpu.dynamic_rotate %107 by %c33_i32_32 dim 1 : vector<32x1024xf32>, i32 -> vector<32x1024xf32>
      %109 = vector.extract_strided_slice %0 {offsets = [0, 0], sizes = [1, 1024], strides = [1, 1]} : vector<10x1024xf32> to vector<1x1024xf32>
      %110 = vector.broadcast %109 : vector<1x1024xf32> to vector<32x1024xf32>
      %111 = arith.mulf %108, %110 : vector<32x1024xf32>
      %112 = vector.extract_strided_slice %106 {offsets = [32, 0], sizes = [32, 1024], strides = [1, 1]} : vector<288x1024xf32> to vector<32x1024xf32>
      %c32_i32_33 = arith.constant 32 : i32
      %113 = tpu.dynamic_rotate %112 by %c32_i32_33 dim 1 : vector<32x1024xf32>, i32 -> vector<32x1024xf32>
      %114 = vector.extract_strided_slice %0 {offsets = [1, 0], sizes = [1, 1024], strides = [1, 1]} : vector<10x1024xf32> to vector<1x1024xf32>
      %115 = vector.broadcast %114 : vector<1x1024xf32> to vector<32x1024xf32>
      %116 = arith.mulf %113, %115 : vector<32x1024xf32>
      %117 = arith.addf %111, %116 : vector<32x1024xf32>
      %118 = vector.extract_strided_slice %106 {offsets = [64, 0], sizes = [32, 1024], strides = [1, 1]} : vector<288x1024xf32> to vector<32x1024xf32>
      %c31_i32_34 = arith.constant 31 : i32
      %119 = tpu.dynamic_rotate %118 by %c31_i32_34 dim 1 : vector<32x1024xf32>, i32 -> vector<32x1024xf32>
      %120 = vector.extract_strided_slice %0 {offsets = [2, 0], sizes = [1, 1024], strides = [1, 1]} : vector<10x1024xf32> to vector<1x1024xf32>
      %121 = vector.broadcast %120 : vector<1x1024xf32> to vector<32x1024xf32>
      %122 = arith.mulf %119, %121 : vector<32x1024xf32>
      %123 = arith.addf %117, %122 : vector<32x1024xf32>
      %124 = vector.extract_strided_slice %106 {offsets = [96, 0], sizes = [32, 1024], strides = [1, 1]} : vector<288x1024xf32> to vector<32x1024xf32>
      %c1_i32_35 = arith.constant 1 : i32
      %125 = tpu.dynamic_rotate %124 by %c1_i32_35 dim 1 : vector<32x1024xf32>, i32 -> vector<32x1024xf32>
      %126 = vector.extract_strided_slice %0 {offsets = [3, 0], sizes = [1, 1024], strides = [1, 1]} : vector<10x1024xf32> to vector<1x1024xf32>
      %127 = vector.broadcast %126 : vector<1x1024xf32> to vector<32x1024xf32>
      %128 = arith.mulf %125, %127 : vector<32x1024xf32>
      %129 = arith.addf %123, %128 : vector<32x1024xf32>
      %130 = vector.extract_strided_slice %106 {offsets = [128, 0], sizes = [32, 1024], strides = [1, 1]} : vector<288x1024xf32> to vector<32x1024xf32>
      %131 = arith.addf %129, %130 : vector<32x1024xf32>
      %132 = vector.extract_strided_slice %106 {offsets = [160, 0], sizes = [32, 1024], strides = [1, 1]} : vector<288x1024xf32> to vector<32x1024xf32>
      %c1023_i32_36 = arith.constant 1023 : i32
      %133 = tpu.dynamic_rotate %132 by %c1023_i32_36 dim 1 : vector<32x1024xf32>, i32 -> vector<32x1024xf32>
      %134 = vector.extract_strided_slice %0 {offsets = [5, 0], sizes = [1, 1024], strides = [1, 1]} : vector<10x1024xf32> to vector<1x1024xf32>
      %135 = vector.broadcast %134 : vector<1x1024xf32> to vector<32x1024xf32>
      %136 = arith.mulf %133, %135 : vector<32x1024xf32>
      %137 = arith.addf %131, %136 : vector<32x1024xf32>
      %138 = vector.extract_strided_slice %106 {offsets = [192, 0], sizes = [32, 1024], strides = [1, 1]} : vector<288x1024xf32> to vector<32x1024xf32>
      %c993_i32_37 = arith.constant 993 : i32
      %139 = tpu.dynamic_rotate %138 by %c993_i32_37 dim 1 : vector<32x1024xf32>, i32 -> vector<32x1024xf32>
      %140 = vector.extract_strided_slice %0 {offsets = [6, 0], sizes = [1, 1024], strides = [1, 1]} : vector<10x1024xf32> to vector<1x1024xf32>
      %141 = vector.broadcast %140 : vector<1x1024xf32> to vector<32x1024xf32>
      %142 = arith.mulf %139, %141 : vector<32x1024xf32>
      %143 = arith.addf %137, %142 : vector<32x1024xf32>
      %144 = vector.extract_strided_slice %106 {offsets = [224, 0], sizes = [32, 1024], strides = [1, 1]} : vector<288x1024xf32> to vector<32x1024xf32>
      %c992_i32_38 = arith.constant 992 : i32
      %145 = tpu.dynamic_rotate %144 by %c992_i32_38 dim 1 : vector<32x1024xf32>, i32 -> vector<32x1024xf32>
      %146 = vector.extract_strided_slice %0 {offsets = [7, 0], sizes = [1, 1024], strides = [1, 1]} : vector<10x1024xf32> to vector<1x1024xf32>
      %147 = vector.broadcast %146 : vector<1x1024xf32> to vector<32x1024xf32>
      %148 = arith.mulf %145, %147 : vector<32x1024xf32>
      %149 = arith.addf %143, %148 : vector<32x1024xf32>
      %150 = vector.extract_strided_slice %106 {offsets = [256, 0], sizes = [32, 1024], strides = [1, 1]} : vector<288x1024xf32> to vector<32x1024xf32>
      %c991_i32_39 = arith.constant 991 : i32
      %151 = tpu.dynamic_rotate %150 by %c991_i32_39 dim 1 : vector<32x1024xf32>, i32 -> vector<32x1024xf32>
      %152 = vector.extract_strided_slice %0 {offsets = [8, 0], sizes = [1, 1024], strides = [1, 1]} : vector<10x1024xf32> to vector<1x1024xf32>
      %153 = vector.broadcast %152 : vector<1x1024xf32> to vector<32x1024xf32>
      %154 = arith.mulf %151, %153 : vector<32x1024xf32>
      %155 = arith.addf %149, %154 : vector<32x1024xf32>
      %c0_40 = arith.constant 0 : index
      %c0_41 = arith.constant 0 : index
      %156 = vector.load %arg8[%c0_40, %c0_41] : memref<32x1xf32, #tpu.memory_space<vmem>>, vector<32x1xf32>
      %157 = vector.broadcast %156 : vector<32x1xf32> to vector<32x1024xf32>
      %158 = arith.addf %155, %157 : vector<32x1024xf32>
      %159 = vector.extract_strided_slice %0 {offsets = [9, 0], sizes = [1, 1024], strides = [1, 1]} : vector<10x1024xf32> to vector<1x1024xf32>
      %cst_42 = arith.constant 0.000000e+00 : f32
      %160 = vector.broadcast %cst_42 : f32 to vector<1x1024xf32>
      %161 = arith.cmpf ogt, %159, %160 : vector<1x1024xf32>
      %cst_43 = arith.constant 0xFF800000 : f32
      %162 = vector.shape_cast %161 : vector<1x1024xi1> to vector<1x1024xi1>
      %163 = vector.broadcast %162 : vector<1x1024xi1> to vector<32x1024xi1>
      %164 = vector.broadcast %cst_43 : f32 to vector<32x1024xf32>
      %165 = arith.select %163, %158, %164 : vector<32x1024xi1>, vector<32x1024xf32>
      %cst_44 = arith.constant dense<0xFF800000> : vector<32xf32>
      %166 = vector.multi_reduction <maximumf>, %165, %cst_44 [1] : vector<32x1024xf32> to vector<32xf32>
      %167 = vector.shape_cast %166 : vector<32xf32> to vector<32x1xf32>
      %c0_45 = arith.constant 0 : index
      %c0_46 = arith.constant 0 : index
      %168 = vector.load %arg9[%c0_45, %c0_46] : memref<128x32xf32, #tpu.memory_space<vmem>>, vector<128x32xf32>
      %cst_47 = arith.constant dense<0.000000e+00> : vector<128x1xf32>
      %169 = tpu.matmul %168, %167, %cst_47 {dimension_numbers = #tpu.dot_dimension_numbers<[1], [0], [0], [1], [0, 0, 1, 1], [], []>} : vector<128x32xf32>, vector<32x1xf32>, vector<128x1xf32> -> vector<128x1xf32>
      %c0_48 = arith.constant 0 : index
      %c0_49 = arith.constant 0 : index
      %170 = vector.load %arg10[%c0_48, %c0_49] : memref<128x1xf32, #tpu.memory_space<vmem>>, vector<128x1xf32>
      %171 = arith.addf %169, %170 : vector<128x1xf32>
      %172 = arith.negf %171 : vector<128x1xf32>
      %173 = math.exp %172 : vector<128x1xf32>
      %cst_50 = arith.constant 1.000000e+00 : f32
      %174 = vector.broadcast %cst_50 : f32 to vector<128x1xf32>
      %175 = arith.addf %174, %173 : vector<128x1xf32>
      %176 = arith.divf %174, %175 : vector<128x1xf32>
      %177 = arith.mulf %171, %176 : vector<128x1xf32>
      %c0_51 = arith.constant 0 : index
      %c0_52 = arith.constant 0 : index
      %178 = vector.load %arg11[%c0_51, %c0_52] : memref<2x128xf32, #tpu.memory_space<vmem>>, vector<2x128xf32>
      %cst_53 = arith.constant dense<0.000000e+00> : vector<2x1xf32>
      %179 = tpu.matmul %178, %177, %cst_53 {dimension_numbers = #tpu.dot_dimension_numbers<[1], [0], [0], [1], [0, 0, 1, 1], [], []>} : vector<2x128xf32>, vector<128x1xf32>, vector<2x1xf32> -> vector<2x1xf32>
      %c0_54 = arith.constant 0 : index
      %c0_55 = arith.constant 0 : index
      %180 = vector.load %arg12[%c0_54, %c0_55] : memref<2x1xf32, #tpu.memory_space<vmem>>, vector<2x1xf32>
      %181 = arith.addf %179, %180 : vector<2x1xf32>
      %182 = math.exp %181 : vector<2x1xf32>
      %cst_56 = arith.constant 1.000000e+00 : f32
      %183 = vector.broadcast %cst_56 : f32 to vector<2x1xf32>
      %184 = arith.addf %182, %183 : vector<2x1xf32>
      %c0_57 = arith.constant 0 : index
      %c0_58 = arith.constant 0 : index
      %c0_59 = arith.constant 0 : index
      %185 = vector.load %arg14[%c0_57, %c0_58, %c0_59] : memref<1x2x1xf32, #tpu.memory_space<vmem>>, vector<1x2x1xf32>
      %186 = vector.shape_cast %185 : vector<1x2x1xf32> to vector<2x1xf32>
      %187 = vector.shape_cast %184 : vector<2x1xf32> to vector<1x2x1xf32>
      tpu.vector_store %arg14[%c0_57, %c0_58, %c0_59], %187 {strides = array<i32>} : memref<1x2x1xf32, #tpu.memory_space<vmem>>, vector<1x2x1xf32>,
    } else {
    }
    return
  }
  func.func @transform_0(%arg0: i32, %arg1: i32) -> (i32, i32, i32) {
    %c0_i32 = arith.constant 0 : i32
    %c0_i32_0 = arith.constant 0 : i32
    return %arg0, %arg1, %c0_i32 : i32, i32, i32
  }
  func.func @transform_1(%arg0: i32, %arg1: i32) -> (i32, i32, i32) {
    %c0_i32 = arith.constant 0 : i32
    %c0_i32_0 = arith.constant 0 : i32
    %c0_i32_1 = arith.constant 0 : i32
    %c0_i32_2 = arith.constant 0 : i32
    return %c0_i32, %c0_i32_0, %c0_i32_1 : i32, i32, i32
  }
  func.func @transform_2(%arg0: i32, %arg1: i32) -> (i32, i32) {
    %c0_i32 = arith.constant 0 : i32
    %c0_i32_0 = arith.constant 0 : i32
    %c0_i32_1 = arith.constant 0 : i32
    return %c0_i32, %c0_i32_0 : i32, i32
  }
  func.func @transform_3(%arg0: i32, %arg1: i32) -> (i32, i32, i32) {
    %c0_i32 = arith.constant 0 : i32
    %c0_i32_0 = arith.constant 0 : i32
    %c0_i32_1 = arith.constant 0 : i32
    return %arg0, %c0_i32, %c0_i32_0 : i32, i32, i32
  }
  func.func @transform_4(%arg0: i32, %arg1: i32) -> (i32, i32, i32) {
    %c0_i32 = arith.constant 0 : i32
    %c0_i32_0 = arith.constant 0 : i32
    %c0_i32_1 = arith.constant 0 : i32
    return %arg0, %c0_i32, %c0_i32_0 : i32, i32, i32
  }
  func.func @transform_5(%arg0: i32, %arg1: i32) -> (i32, i32) {
    %c0_i32 = arith.constant 0 : i32
    %c0_i32_0 = arith.constant 0 : i32
    %c0_i32_1 = arith.constant 0 : i32
    return %c0_i32, %c0_i32_0 : i32, i32
  }
  func.func @transform_6(%arg0: i32, %arg1: i32) -> (i32, i32) {
    %c0_i32 = arith.constant 0 : i32
    %c0_i32_0 = arith.constant 0 : i32
    %c0_i32_1 = arith.constant 0 : i32
    return %c0_i32, %c0_i32_0 : i32, i32
  }
  func.func @transform_7(%arg0: i32, %arg1: i32) -> (i32, i32) {
    %c0_i32 = arith.constant 0 : i32
    %c0_i32_0 = arith.constant 0 : i32
    %c0_i32_1 = arith.constant 0 : i32
    return %c0_i32, %c0_i32_0 : i32, i32
  }
  func.func @transform_8(%arg0: i32, %arg1: i32) -> (i32, i32) {
    %c0_i32 = arith.constant 0 : i32
    %c0_i32_0 = arith.constant 0 : i32
    %c0_i32_1 = arith.constant 0 : i32
    return %c0_i32, %c0_i32_0 : i32, i32
  }
  func.func @transform_9(%arg0: i32, %arg1: i32) -> (i32, i32) {
    %c0_i32 = arith.constant 0 : i32
    %c0_i32_0 = arith.constant 0 : i32
    %c0_i32_1 = arith.constant 0 : i32
    return %c0_i32, %c0_i32_0 : i32, i32
  }
  func.func @transform_10(%arg0: i32, %arg1: i32) -> (i32, i32) {
    %c0_i32 = arith.constant 0 : i32
    %c0_i32_0 = arith.constant 0 : i32
    %c0_i32_1 = arith.constant 0 : i32
    return %c0_i32, %c0_i32_0 : i32, i32
  }
  func.func @transform_11(%arg0: i32, %arg1: i32) -> (i32, i32) {
    %c0_i32 = arith.constant 0 : i32
    %c0_i32_0 = arith.constant 0 : i32
    %c0_i32_1 = arith.constant 0 : i32
    return %c0_i32, %c0_i32_0 : i32, i32
  }
  func.func @transform_12(%arg0: i32, %arg1: i32) -> (i32, i32, i32) {
    %c0_i32 = arith.constant 0 : i32
    %c0_i32_0 = arith.constant 0 : i32
    %c0_i32_1 = arith.constant 0 : i32
    return %arg0, %c0_i32, %c0_i32_0 : i32, i32, i32
  }
}

</mosaic_0001>

<llo_original>
// kernel: _lambda_.1
$region0: #{_lambda_.1}
  #allocation0 [shape = 'u32[]', space=smem, size = 0x4, offset = 0x4, fixed_abs, tag = 'smem constant byte address 0x4 - core index']
  #allocation1 [shape = 'u32[72,128]{1,0:T(1,128)}', space=vmem, size = 0x9000, scoped, tag = 'internal scratch']
  #allocation2 [shape = 'f32[32,1024]{1,0:T(8,128)}', space=vmem, size = 0x20000, scoped, tag = 'scratch operand']
  %s0 = inlined_call_operand.vmem [shape: f32[2,64,1024], index: 0, kind: input, shape index: {}]
  %s1 = inlined_call_operand.vmem [shape: bf16[1,288,64], index: 1, kind: input, shape index: {}]
  %s2 = inlined_call_operand.vmem [shape: f32[32,1], index: 2, kind: input, shape index: {}]
  %s3 = inlined_call_operand.vmem [shape: f32[2,32,1], index: 3, kind: input, shape index: {}]
  %s4 = inlined_call_operand.vmem [shape: f32[2,32,1], index: 4, kind: input, shape index: {}]
  %s5 = inlined_call_operand.vmem [shape: bf16[288,32], index: 5, kind: input, shape index: {}]
  %s6 = inlined_call_operand.vmem [shape: f32[32,1], index: 6, kind: input, shape index: {}]
  %s7 = inlined_call_operand.vmem [shape: f32[128,32], index: 7, kind: input, shape index: {}]
  %s8 = inlined_call_operand.vmem [shape: f32[128,1], index: 8, kind: input, shape index: {}]
  %s9 = inlined_call_operand.vmem [shape: f32[2,128], index: 9, kind: input, shape index: {}]
  %s10 = inlined_call_operand.vmem [shape: f32[2,1], index: 10, kind: input, shape index: {}]
  %s11 = inlined_call_operand.vmem [shape: f32[10,1024], index: 11, kind: input, shape index: {}]
  %s12 = inlined_call_operand.vmem [shape: f32[2,2,1], index: 12, kind: output, shape index: {}]
  %s13 = sld [smem:[#allocation0]]
  $region89: #{_lambda_.1} parent=0
    _
  %s15 = ssub.s32 1, %s13
  %s16 = scalar_select 0, %s15, %s13
  loop: start=0, step=1, limit=4
  $region2: #{_lambda_.1} parent=0 // loop_pre_header
    _
  $region3: #{_lambda_.1} parent=0 // loop_header
    %s18 = sphi 0, %s22
    %p19 = scmp.ge.s32.totalorder %s18, 4
    %s25 = sphi 0, %s37
    %s26 = sphi 0, %s33
    %s27 = sphi 0, %s25
    %s28 = sphi 0, %s26
    %s29 = sphi 0, %s27
    %s30 = sphi 0, %s28
    %s42 = sphi 0, %s44
    %s45 = sphi 0, %s42
    %s46 = sphi 0, %s45
    %s62 = sphi 0, %s46
    %s66 = sphi 0, %s66
    %s68 = sphi 0, %s66
    %s69 = sphi 0, %s68
    %s83 = sphi 0, %s69
    %s87 = sphi 0, %s87
    %s89 = sphi 0, %s87
    %s90 = sphi 0, %s89
    %s104 = sphi 0, %s90
    %s110 = sphi 0, %s112
    %s113 = sphi 0, %s110
    %s114 = sphi 0, %s113
    %s130 = sphi 0, %s114
    %s136 = sphi 0, %s138
    %s139 = sphi 0, %s136
    %s140 = sphi 0, %s139
    %s156 = sphi 0, %s140
    %s160 = sphi 0, %s160
    %s162 = sphi 0, %s160
    %s163 = sphi 0, %s162
    %s177 = sphi 0, %s163
    %s181 = sphi 0, %s181
    %s183 = sphi 0, %s181
    %s184 = sphi 0, %s183
    %s198 = sphi 0, %s184
    %s202 = sphi 0, %s202
    %s204 = sphi 0, %s202
    %s205 = sphi 0, %s204
    %s219 = sphi 0, %s205
    %s223 = sphi 0, %s223
    %s225 = sphi 0, %s223
    %s226 = sphi 0, %s225
    %s240 = sphi 0, %s226
    %s244 = sphi 0, %s244
    %s246 = sphi 0, %s244
    %s247 = sphi 0, %s246
    %s261 = sphi 0, %s247
    %s265 = sphi 0, %s265
    %s267 = sphi 0, %s265
    %s268 = sphi 0, %s267
    %s282 = sphi 0, %s268
    %s286 = sphi 0, %s286
    %s288 = sphi 0, %s286
    %s289 = sphi 0, %s288
    %s303 = sphi 0, %s289
    %s309 = sphi 0, %s311
    %s312 = sphi 0, %s309
    %s313 = sphi 0, %s312
    %s329 = sphi 0, %s313
  $region4: #{_lambda_.1} parent=0 // loop_header_branch
    %21 = sbr.rel (%p19) target = $region8
  $region5: #{_lambda_.1} parent=0 // loop_body
    %s23 = ssub.s32 %s18, 1
    %s24 = ssub.s32 %s18, 2
    %s31 = sadd.s32 1, %s26
    %p32 = scmp.ge.s32.totalorder %s31, 1
    %s33 = scalar_select %p32, 0, %s31
    %s34 = sadd.s32 1, %s25
    %s35 = scalar_select %p32, %s34, %s25
    %p36 = scmp.ge.s32.totalorder %s35, 2
    %s37 = scalar_select %p36, 0, %s35
    %s38 = ssub.s32 %s25, %s37
    %s39 = ssub.s32 %s26, %s33
    %s40 = sor.u32 %s38, %s39
    %p41 = scmp.eq.s32.totalorder %s40, 0
    %s43 = sadd.s32 %s42, 1
    %s44 = scalar_select %p41, %s42, %s43
    %p47 = pneg %p41
    %p48 = scmp.eq.s32.totalorder %s18, 1
    %p49 = por %p47, %p48
    %p50 = scmp.ne.s32.totalorder %s42, %s45
    %p51 = scmp.eq.s32.totalorder %s18, 0
    %p52 = por %p50, %p51
    %p53 = scmp.ne.s32.totalorder %s42, %s45
    %p54 = scmp.eq.s32.totalorder %s23, 1
    %p55 = por %p53, %p54
    %p56 = scmp.ne.s32.totalorder %s45, %s46
    %p57 = scmp.eq.s32.totalorder %s23, 0
    %p58 = por %p56, %p57
    %p59 = scmp.ne.s32.totalorder %s45, %s46
    %p60 = scmp.eq.s32.totalorder %s24, 1
    %p61 = por %p59, %p60
    %p63 = scmp.ne.s32.totalorder %s46, %s62
    %p64 = scmp.eq.s32.totalorder %s24, 0
    %p65 = por %p63, %p64
    %s67 = sadd.s32 %s66, 1
    %p70 = scmp.eq.s32.totalorder %s18, 1
    %p71 = scmp.ne.s32.totalorder %s66, %s68
    %p72 = scmp.eq.s32.totalorder %s18, 0
    %p73 = por %p71, %p72
    %p74 = scmp.ne.s32.totalorder %s66, %s68
    %p75 = scmp.eq.s32.totalorder %s23, 1
    %p76 = por %p74, %p75
    %p77 = scmp.ne.s32.totalorder %s68, %s69
    %p78 = scmp.eq.s32.totalorder %s23, 0
    %p79 = por %p77, %p78
    %p80 = scmp.ne.s32.totalorder %s68, %s69
    %p81 = scmp.eq.s32.totalorder %s24, 1
    %p82 = por %p80, %p81
    %p84 = scmp.ne.s32.totalorder %s69, %s83
    %p85 = scmp.eq.s32.totalorder %s24, 0
    %p86 = por %p84, %p85
    %s88 = sadd.s32 %s87, 1
    %p91 = scmp.eq.s32.totalorder %s18, 1
    %p92 = scmp.ne.s32.totalorder %s87, %s89
    %p93 = scmp.eq.s32.totalorder %s18, 0
    %p94 = por %p92, %p93
    %p95 = scmp.ne.s32.totalorder %s87, %s89
    %p96 = scmp.eq.s32.totalorder %s23, 1
    %p97 = por %p95, %p96
    %p98 = scmp.ne.s32.totalorder %s89, %s90
    %p99 = scmp.eq.s32.totalorder %s23, 0
    %p100 = por %p98, %p99
    %p101 = scmp.ne.s32.totalorder %s89, %s90
    %p102 = scmp.eq.s32.totalorder %s24, 1
    %p103 = por %p101, %p102
    %p105 = scmp.ne.s32.totalorder %s90, %s104
    %p106 = scmp.eq.s32.totalorder %s24, 0
    %p107 = por %p105, %p106
    %s108 = ssub.s32 %s25, %s37
    %p109 = scmp.eq.s32.totalorder %s108, 0
    %s111 = sadd.s32 %s110, 1
    %s112 = scalar_select %p109, %s110, %s111
    %p115 = pneg %p109
    %p116 = scmp.eq.s32.totalorder %s18, 1
    %p117 = por %p115, %p116
    %p118 = scmp.ne.s32.totalorder %s110, %s113
    %p119 = scmp.eq.s32.totalorder %s18, 0
    %p120 = por %p118, %p119
    %p121 = scmp.ne.s32.totalorder %s110, %s113
    %p122 = scmp.eq.s32.totalorder %s23, 1
    %p123 = por %p121, %p122
    %p124 = scmp.ne.s32.totalorder %s113, %s114
    %p125 = scmp.eq.s32.totalorder %s23, 0
    %p126 = por %p124, %p125
    %p127 = scmp.ne.s32.totalorder %s113, %s114
    %p128 = scmp.eq.s32.totalorder %s24, 1
    %p129 = por %p127, %p128
    %p131 = scmp.ne.s32.totalorder %s114, %s130
    %p132 = scmp.eq.s32.totalorder %s24, 0
    %p133 = por %p131, %p132
    %s134 = ssub.s32 %s25, %s37
    %p135 = scmp.eq.s32.totalorder %s134, 0
    %s137 = sadd.s32 %s136, 1
    %s138 = scalar_select %p135, %s136, %s137
    %p141 = pneg %p135
    %p142 = scmp.eq.s32.totalorder %s18, 1
    %p143 = por %p141, %p142
    %p144 = scmp.ne.s32.totalorder %s136, %s139
    %p145 = scmp.eq.s32.totalorder %s18, 0
    %p146 = por %p144, %p145
    %p147 = scmp.ne.s32.totalorder %s136, %s139
    %p148 = scmp.eq.s32.totalorder %s23, 1
    %p149 = por %p147, %p148
    %p150 = scmp.ne.s32.totalorder %s139, %s140
    %p151 = scmp.eq.s32.totalorder %s23, 0
    %p152 = por %p150, %p151
    %p153 = scmp.ne.s32.totalorder %s139, %s140
    %p154 = scmp.eq.s32.totalorder %s24, 1
    %p155 = por %p153, %p154
    %p157 = scmp.ne.s32.totalorder %s140, %s156
    %p158 = scmp.eq.s32.totalorder %s24, 0
    %p159 = por %p157, %p158
    %s161 = sadd.s32 %s160, 1
    %p164 = scmp.eq.s32.totalorder %s18, 1
    %p165 = scmp.ne.s32.totalorder %s160, %s162
    %p166 = scmp.eq.s32.totalorder %s18, 0
    %p167 = por %p165, %p166
    %p168 = scmp.ne.s32.totalorder %s160, %s162
    %p169 = scmp.eq.s32.totalorder %s23, 1
    %p170 = por %p168, %p169
    %p171 = scmp.ne.s32.totalorder %s162, %s163
    %p172 = scmp.eq.s32.totalorder %s23, 0
    %p173 = por %p171, %p172
    %p174 = scmp.ne.s32.totalorder %s162, %s163
    %p175 = scmp.eq.s32.totalorder %s24, 1
    %p176 = por %p174, %p175
    %p178 = scmp.ne.s32.totalorder %s163, %s177
    %p179 = scmp.eq.s32.totalorder %s24, 0
    %p180 = por %p178, %p179
    %s182 = sadd.s32 %s181, 1
    %p185 = scmp.eq.s32.totalorder %s18, 1
    %p186 = scmp.ne.s32.totalorder %s181, %s183
    %p187 = scmp.eq.s32.totalorder %s18, 0
    %p188 = por %p186, %p187
    %p189 = scmp.ne.s32.totalorder %s181, %s183
    %p190 = scmp.eq.s32.totalorder %s23, 1
    %p191 = por %p189, %p190
    %p192 = scmp.ne.s32.totalorder %s183, %s184
    %p193 = scmp.eq.s32.totalorder %s23, 0
    %p194 = por %p192, %p193
    %p195 = scmp.ne.s32.totalorder %s183, %s184
    %p196 = scmp.eq.s32.totalorder %s24, 1
    %p197 = por %p195, %p196
    %p199 = scmp.ne.s32.totalorder %s184, %s198
    %p200 = scmp.eq.s32.totalorder %s24, 0
    %p201 = por %p199, %p200
    %s203 = sadd.s32 %s202, 1
    %p206 = scmp.eq.s32.totalorder %s18, 1
    %p207 = scmp.ne.s32.totalorder %s202, %s204
    %p208 = scmp.eq.s32.totalorder %s18, 0
    %p209 = por %p207, %p208
    %p210 = scmp.ne.s32.totalorder %s202, %s204
    %p211 = scmp.eq.s32.totalorder %s23, 1
    %p212 = por %p210, %p211
    %p213 = scmp.ne.s32.totalorder %s204, %s205
    %p214 = scmp.eq.s32.totalorder %s23, 0
    %p215 = por %p213, %p214
    %p216 = scmp.ne.s32.totalorder %s204, %s205
    %p217 = scmp.eq.s32.totalorder %s24, 1
    %p218 = por %p216, %p217
    %p220 = scmp.ne.s32.totalorder %s205, %s219
    %p221 = scmp.eq.s32.totalorder %s24, 0
    %p222 = por %p220, %p221
    %s224 = sadd.s32 %s223, 1
    %p227 = scmp.eq.s32.totalorder %s18, 1
    %p228 = scmp.ne.s32.totalorder %s223, %s225
    %p229 = scmp.eq.s32.totalorder %s18, 0
    %p230 = por %p228, %p229
    %p231 = scmp.ne.s32.totalorder %s223, %s225
    %p232 = scmp.eq.s32.totalorder %s23, 1
    %p233 = por %p231, %p232
    %p234 = scmp.ne.s32.totalorder %s225, %s226
    %p235 = scmp.eq.s32.totalorder %s23, 0
    %p236 = por %p234, %p235
    %p237 = scmp.ne.s32.totalorder %s225, %s226
    %p238 = scmp.eq.s32.totalorder %s24, 1
    %p239 = por %p237, %p238
    %p241 = scmp.ne.s32.totalorder %s226, %s240
    %p242 = scmp.eq.s32.totalorder %s24, 0
    %p243 = por %p241, %p242
    %s245 = sadd.s32 %s244, 1
    %p248 = scmp.eq.s32.totalorder %s18, 1
    %p249 = scmp.ne.s32.totalorder %s244, %s246
    %p250 = scmp.eq.s32.totalorder %s18, 0
    %p251 = por %p249, %p250
    %p252 = scmp.ne.s32.totalorder %s244, %s246
    %p253 = scmp.eq.s32.totalorder %s23, 1
    %p254 = por %p252, %p253
    %p255 = scmp.ne.s32.totalorder %s246, %s247
    %p256 = scmp.eq.s32.totalorder %s23, 0
    %p257 = por %p255, %p256
    %p258 = scmp.ne.s32.totalorder %s246, %s247
    %p259 = scmp.eq.s32.totalorder %s24, 1
    %p260 = por %p258, %p259
    %p262 = scmp.ne.s32.totalorder %s247, %s261
    %p263 = scmp.eq.s32.totalorder %s24, 0
    %p264 = por %p262, %p263
    %s266 = sadd.s32 %s265, 1
    %p269 = scmp.eq.s32.totalorder %s18, 1
    %p270 = scmp.ne.s32.totalorder %s265, %s267
    %p271 = scmp.eq.s32.totalorder %s18, 0
    %p272 = por %p270, %p271
    %p273 = scmp.ne.s32.totalorder %s265, %s267
    %p274 = scmp.eq.s32.totalorder %s23, 1
    %p275 = por %p273, %p274
    %p276 = scmp.ne.s32.totalorder %s267, %s268
    %p277 = scmp.eq.s32.totalorder %s23, 0
    %p278 = por %p276, %p277
    %p279 = scmp.ne.s32.totalorder %s267, %s268
    %p280 = scmp.eq.s32.totalorder %s24, 1
    %p281 = por %p279, %p280
    %p283 = scmp.ne.s32.totalorder %s268, %s282
    %p284 = scmp.eq.s32.totalorder %s24, 0
    %p285 = por %p283, %p284
    %s287 = sadd.s32 %s286, 1
    %p290 = scmp.eq.s32.totalorder %s18, 1
    %p291 = scmp.ne.s32.totalorder %s286, %s288
    %p292 = scmp.eq.s32.totalorder %s18, 0
    %p293 = por %p291, %p292
    %p294 = scmp.ne.s32.totalorder %s286, %s288
    %p295 = scmp.eq.s32.totalorder %s23, 1
    %p296 = por %p294, %p295
    %p297 = scmp.ne.s32.totalorder %s288, %s289
    %p298 = scmp.eq.s32.totalorder %s23, 0
    %p299 = por %p297, %p298
    %p300 = scmp.ne.s32.totalorder %s288, %s289
    %p301 = scmp.eq.s32.totalorder %s24, 1
    %p302 = por %p300, %p301
    %p304 = scmp.ne.s32.totalorder %s289, %s303
    %p305 = scmp.eq.s32.totalorder %s24, 0
    %p306 = por %p304, %p305
    %s307 = ssub.s32 %s25, %s37
    %p308 = scmp.eq.s32.totalorder %s307, 0
    %s310 = sadd.s32 %s309, 1
    %s311 = scalar_select %p308, %s309, %s310
    %p314 = pneg %p308
    %p315 = scmp.eq.s32.totalorder %s18, 1
    %p316 = por %p314, %p315
    %p317 = scmp.ne.s32.totalorder %s309, %s312
    %p318 = scmp.eq.s32.totalorder %s18, 0
    %p319 = por %p317, %p318
    %p320 = scmp.ne.s32.totalorder %s309, %s312
    %p321 = scmp.eq.s32.totalorder %s23, 1
    %p322 = por %p320, %p321
    %p323 = scmp.ne.s32.totalorder %s312, %s313
    %p324 = scmp.eq.s32.totalorder %s23, 0
    %p325 = por %p323, %p324
    %p326 = scmp.ne.s32.totalorder %s312, %s313
    %p327 = scmp.eq.s32.totalorder %s24, 1
    %p328 = por %p326, %p327
    %p330 = scmp.ne.s32.totalorder %s313, %s329
    %p331 = scmp.eq.s32.totalorder %s24, 0
    %p332 = por %p330, %p331
    %p333 = scmp.le.s32.totalorder 1, %s18
    %p334 = scmp.lt.s32.totalorder %s18, 3
    %p335 = pnand %p333, %p334
    %p336 = pneg %p335
    // Predicated region
    $region9: #{_lambda_.1} parent=5 // pred_check
      _
    $region10: #{_lambda_.1} parent=5 // pred_check_branch
      %338 = sbr.rel (%p335) target = $region12
    $region11: #{_lambda_.1} parent=5 // pred_region
      %s339 = ssub.s32 %s18, 1
      // Predicated region
      $region13: #{_lambda_.1} parent=11 // pred_check
        %p340 = pneg %p79
      $region14: #{_lambda_.1} parent=11 // pred_check_branch
        %342 = sbr.rel (%p340) target = $region16
      $region15: #{_lambda_.1} parent=11 // pred_region
        _
      $region16: #{_lambda_.1} parent=11 // pred_fallthru
        _
      // Predicated region
      $region17: #{_lambda_.1} parent=11 // pred_check
        %p343 = pneg %p100
      $region18: #{_lambda_.1} parent=11 // pred_check_branch
        %345 = sbr.rel (%p343) target = $region20
      $region19: #{_lambda_.1} parent=11 // pred_region
        _
      $region20: #{_lambda_.1} parent=11 // pred_fallthru
        _
      // Predicated region
      $region21: #{_lambda_.1} parent=11 // pred_check
        %p346 = pneg %p173
      $region22: #{_lambda_.1} parent=11 // pred_check_branch
        %348 = sbr.rel (%p346) target = $region24
      $region23: #{_lambda_.1} parent=11 // pred_region
        _
      $region24: #{_lambda_.1} parent=11 // pred_fallthru
        _
      // Predicated region
      $region25: #{_lambda_.1} parent=11 // pred_check
        %p349 = pneg %p194
      $region26: #{_lambda_.1} parent=11 // pred_check_branch
        %351 = sbr.rel (%p349) target = $region28
      $region27: #{_lambda_.1} parent=11 // pred_region
        _
      $region28: #{_lambda_.1} parent=11 // pred_fallthru
        _
      // Predicated region
      $region29: #{_lambda_.1} parent=11 // pred_check
        %p352 = pneg %p215
      $region30: #{_lambda_.1} parent=11 // pred_check_branch
        %354 = sbr.rel (%p352) target = $region32
      $region31: #{_lambda_.1} parent=11 // pred_region
        _
      $region32: #{_lambda_.1} parent=11 // pred_fallthru
        _
      // Predicated region
      $region33: #{_lambda_.1} parent=11 // pred_check
        %p355 = pneg %p236
      $region34: #{_lambda_.1} parent=11 // pred_check_branch
        %357 = sbr.rel (%p355) target = $region36
      $region35: #{_lambda_.1} parent=11 // pred_region
        _
      $region36: #{_lambda_.1} parent=11 // pred_fallthru
        _
      // Predicated region
      $region37: #{_lambda_.1} parent=11 // pred_check
        %p358 = pneg %p257
      $region38: #{_lambda_.1} parent=11 // pred_check_branch
        %360 = sbr.rel (%p358) target = $region40
      $region39: #{_lambda_.1} parent=11 // pred_region
        _
      $region40: #{_lambda_.1} parent=11 // pred_fallthru
        _
      // Predicated region
      $region41: #{_lambda_.1} parent=11 // pred_check
        %p361 = pneg %p278
      $region42: #{_lambda_.1} parent=11 // pred_check_branch
        %363 = sbr.rel (%p361) target = $region44
      $region43: #{_lambda_.1} parent=11 // pred_region
        _
      $region44: #{_lambda_.1} parent=11 // pred_fallthru
        _
      // Predicated region
      $region45: #{_lambda_.1} parent=11 // pred_check
        %p364 = pneg %p299
      $region46: #{_lambda_.1} parent=11 // pred_check_branch
        %366 = sbr.rel (%p364) target = $region48
      $region47: #{_lambda_.1} parent=11 // pred_region
        _
      $region48: #{_lambda_.1} parent=11 // pred_fallthru
        _
    $region12: #{_lambda_.1} parent=5 // pred_fallthru
      _
    %p367 = scmp.lt.s32.totalorder %s18, 2
    // Predicated region
    $region49: #{_lambda_.1} parent=5 // pred_check
      %p368 = pneg %p367
    $region50: #{_lambda_.1} parent=5 // pred_check_branch
      %370 = sbr.rel (%p368) target = $region52
    $region51: #{_lambda_.1} parent=5 // pred_region
      // Predicated region
      $region53: #{_lambda_.1} parent=51 // pred_check
        %p371 = pneg %p52
      $region54: #{_lambda_.1} parent=51 // pred_check_branch
        %373 = sbr.rel (%p371) target = $region56
      $region55: #{_lambda_.1} parent=51 // pred_region
        %s374 = smul.u32 8, %s26
        %p375 = scmp.lt.s32.totalorder %s25, 1
        %s376 = scalar_select %p375, %s25, 1
        %p377 = scmp.lt.s32.totalorder %s374, 7
        %s378 = scalar_select %p377, %s374, 7
        %s379 = smul.addr %s378, 8
        %s380 = smul.addr %s376, 64
        %s381 = sadd.s32 %s379, %s380
        %s382 = smul.addr %s381, 8
        %s383 = scalar_lea.vmem %s0, %s382
        %s384 = smul.u32 8, %s26
      $region56: #{_lambda_.1} parent=51 // pred_fallthru
        _
      // Predicated region
      $region57: #{_lambda_.1} parent=51 // pred_check
        %p385 = pneg %p120
      $region58: #{_lambda_.1} parent=51 // pred_check_branch
        %387 = sbr.rel (%p385) target = $region60
      $region59: #{_lambda_.1} parent=51 // pred_region
        %p388 = scmp.lt.s32.totalorder %s25, 1
        %s389 = scalar_select %p388, %s25, 1
        %s390 = smul.addr %s389, 4
        %s391 = smul.addr %s390, 8
        %s392 = scalar_lea.vmem %s3, %s391
      $region60: #{_lambda_.1} parent=51 // pred_fallthru
        _
      // Predicated region
      $region61: #{_lambda_.1} parent=51 // pred_check
        %p393 = pneg %p146
      $region62: #{_lambda_.1} parent=51 // pred_check_branch
        %395 = sbr.rel (%p393) target = $region64
      $region63: #{_lambda_.1} parent=51 // pred_region
        %p396 = scmp.lt.s32.totalorder %s25, 1
        %s397 = scalar_select %p396, %s25, 1
        %s398 = smul.addr %s397, 4
        %s399 = smul.addr %s398, 8
        %s400 = scalar_lea.vmem %s4, %s399
      $region64: #{_lambda_.1} parent=51 // pred_fallthru
        _
    $region52: #{_lambda_.1} parent=5 // pred_fallthru
      _
    %p401 = scmp.le.s32.totalorder 1, %s18
    %p402 = scmp.lt.s32.totalorder %s18, 3
    %p403 = pnand %p401, %p402
    %p404 = pneg %p403
    // Predicated region
    $region65: #{_lambda_.1} parent=5 // pred_check
      _
    $region66: #{_lambda_.1} parent=5 // pred_check_branch
      %406 = sbr.rel (%p403) target = $region68
    $region67: #{_lambda_.1} parent=5 // pred_region
      %s407 = ssub.s32 %s18, 1
      %s408 = smul.u32 8, %s28
      %p409 = scmp.lt.s32.totalorder %s27, 1
      %s410 = scalar_select %p409, %s27, 1
      %p411 = scmp.lt.s32.totalorder %s408, 7
      %s412 = scalar_select %p411, %s408, 7
      %s413 = smul.addr %s412, 8
      %s414 = smul.addr %s410, 64
      %s415 = sadd.s32 %s413, %s414
      %s416 = smul.addr %s415, 8
      %s417 = scalar_lea.vmem %s0, %s416
      %p418 = pneg %p58
      %p419 = pneg %p55
      %p420 = pneg %p79
      %p421 = pneg %p76
      %p422 = pneg %p100
      %p423 = pneg %p97
      %p424 = scmp.lt.s32.totalorder %s27, 1
      %s425 = scalar_select %p424, %s27, 1
      %s426 = smul.addr %s425, 4
      %s427 = smul.addr %s426, 8
      %s428 = scalar_lea.vmem %s3, %s427
      %p429 = pneg %p126
      %p430 = pneg %p123
      %p431 = scmp.lt.s32.totalorder %s27, 1
      %s432 = scalar_select %p431, %s27, 1
      %s433 = smul.addr %s432, 4
      %s434 = smul.addr %s433, 8
      %s435 = scalar_lea.vmem %s4, %s434
      %p436 = pneg %p152
      %p437 = pneg %p149
      %p438 = pneg %p173
      %p439 = pneg %p170
      %p440 = pneg %p194
      %p441 = pneg %p191
      %p442 = pneg %p215
      %p443 = pneg %p212
      %p444 = pneg %p236
      %p445 = pneg %p233
      %p446 = pneg %p257
      %p447 = pneg %p254
      %p448 = pneg %p278
      %p449 = pneg %p275
      %p450 = pneg %p299
      %p451 = pneg %p296
      %p452 = pneg %p325
      %p453 = pneg %p322
      %p454 = scmp.lt.s32.totalorder %s27, 1
      %s455 = scalar_select %p454, %s27, 1
      %s456 = smul.addr %s455, 2
      %s457 = scalar_lea.vmem %s12, %s456
      %s458 = smul.u32 8, %s28
      %p459 = scmp.lt.s32.totalorder %s27, 1
      %s460 = scalar_select %p459, %s27, 1
      %p461 = scmp.lt.s32.totalorder %s458, 7
      %s462 = scalar_select %p461, %s458, 7
      %s463 = smul.addr %s462, 8
      %s464 = smul.addr %s460, 64
      %s465 = sadd.s32 %s463, %s464
      %s466 = smul.addr %s465, 8
      %s467 = scalar_lea.vmem %s0, %s466
      %s468 = smul.u32 8, %s28
      %p469 = scmp.lt.s32.totalorder %s27, 1
      %s470 = scalar_select %p469, %s27, 1
      %s471 = smul.addr %s470, 4
      %s472 = smul.addr %s471, 8
      %s473 = scalar_lea.vmem %s3, %s472
      %p474 = scmp.lt.s32.totalorder %s27, 1
      %s475 = scalar_select %p474, %s27, 1
      %s476 = smul.addr %s475, 4
      %s477 = smul.addr %s476, 8
      %s478 = scalar_lea.vmem %s4, %s477
      %p479 = scmp.lt.s32.totalorder %s27, 1
      %s480 = scalar_select %p479, %s27, 1
      %s481 = smul.addr %s480, 2
      %s482 = scalar_lea.vmem %s12, %s481
      %v484 = vld [vmem:[%s11] sm:$0xff]
      %v485 = vld [vmem:[%s11 + $0x8] sm:$0xff]
      %v486 = vld [vmem:[%s11 + $0x10] sm:$0xff]
      %v487 = vld [vmem:[%s11 + $0x18] sm:$0xff]
      %v488 = vld [vmem:[%s11 + $0x20] sm:$0xff]
      %v489 = vld [vmem:[%s11 + $0x28] sm:$0xff]
      %v490 = vld [vmem:[%s11 + $0x30] sm:$0xff]
      %v491 = vld [vmem:[%s11 + $0x38] sm:$0xff]
      %v492 = vld [vmem:[%s11 + $0x40] sm:$0x3]
      %v493 = vld [vmem:[%s11 + $0x48] sm:$0x3]
      %v494 = vld [vmem:[%s11 + $0x50] sm:$0x3]
      %v495 = vld [vmem:[%s11 + $0x58] sm:$0x3]
      %v496 = vld [vmem:[%s11 + $0x60] sm:$0x3]
      %v497 = vld [vmem:[%s11 + $0x68] sm:$0x3]
      %v498 = vld [vmem:[%s11 + $0x70] sm:$0x3]
      %v499 = vld [vmem:[%s11 + $0x78] sm:$0x3]
      %p500 = scmp.eq.s32.totalorder %s28, 0
      // Predicated region
      $region69: #{_lambda_.1} parent=67 // pred_check
        %p501 = pneg %p500
      $region70: #{_lambda_.1} parent=67 // pred_check_branch
        %503 = sbr.rel (%p501) target = $region72
      $region71: #{_lambda_.1} parent=67 // pred_region
        %504 = vst [vmem:[#allocation2] sm:$0xff] 0.0
        %505 = vst [vmem:[#allocation2 + $0x8] sm:$0xff] 0.0
        %506 = vst [vmem:[#allocation2 + $0x10] sm:$0xff] 0.0
        %507 = vst [vmem:[#allocation2 + $0x18] sm:$0xff] 0.0
        %508 = vst [vmem:[#allocation2 + $0x20] sm:$0xff] 0.0
        %509 = vst [vmem:[#allocation2 + $0x28] sm:$0xff] 0.0
        %510 = vst [vmem:[#allocation2 + $0x30] sm:$0xff] 0.0
        %511 = vst [vmem:[#allocation2 + $0x38] sm:$0xff] 0.0
        %512 = vst [vmem:[#allocation2 + $0x40] sm:$0xff] 0.0
        %513 = vst [vmem:[#allocation2 + $0x48] sm:$0xff] 0.0
        %514 = vst [vmem:[#allocation2 + $0x50] sm:$0xff] 0.0
        %515 = vst [vmem:[#allocation2 + $0x58] sm:$0xff] 0.0
        %516 = vst [vmem:[#allocation2 + $0x60] sm:$0xff] 0.0
        %517 = vst [vmem:[#allocation2 + $0x68] sm:$0xff] 0.0
        %518 = vst [vmem:[#allocation2 + $0x70] sm:$0xff] 0.0
        %519 = vst [vmem:[#allocation2 + $0x78] sm:$0xff] 0.0
        %520 = vst [vmem:[#allocation2 + $0x80] sm:$0xff] 0.0
        %521 = vst [vmem:[#allocation2 + $0x88] sm:$0xff] 0.0
        %522 = vst [vmem:[#allocation2 + $0x90] sm:$0xff] 0.0
        %523 = vst [vmem:[#allocation2 + $0x98] sm:$0xff] 0.0
        %524 = vst [vmem:[#allocation2 + $0xa0] sm:$0xff] 0.0
        %525 = vst [vmem:[#allocation2 + $0xa8] sm:$0xff] 0.0
        %526 = vst [vmem:[#allocation2 + $0xb0] sm:$0xff] 0.0
        %527 = vst [vmem:[#allocation2 + $0xb8] sm:$0xff] 0.0
        %528 = vst [vmem:[#allocation2 + $0xc0] sm:$0xff] 0.0
        %529 = vst [vmem:[#allocation2 + $0xc8] sm:$0xff] 0.0
        %530 = vst [vmem:[#allocation2 + $0xd0] sm:$0xff] 0.0
        %531 = vst [vmem:[#allocation2 + $0xd8] sm:$0xff] 0.0
        %532 = vst [vmem:[#allocation2 + $0xe0] sm:$0xff] 0.0
        %533 = vst [vmem:[#allocation2 + $0xe8] sm:$0xff] 0.0
        %534 = vst [vmem:[#allocation2 + $0xf0] sm:$0xff] 0.0
        %535 = vst [vmem:[#allocation2 + $0xf8] sm:$0xff] 0.0
      $region72: #{_lambda_.1} parent=67 // pred_fallthru
        _
      %v536 = vld [vmem:[%s467] sm:$0xff]
      %v537 = vld [vmem:[%s467 + $0x8] sm:$0xff]
      %v538 = vld [vmem:[%s467 + $0x10] sm:$0xff]
      %v539 = vld [vmem:[%s467 + $0x18] sm:$0xff]
      %v540 = vld [vmem:[%s467 + $0x20] sm:$0xff]
      %v541 = vld [vmem:[%s467 + $0x28] sm:$0xff]
      %v542 = vld [vmem:[%s467 + $0x30] sm:$0xff]
      %v543 = vld [vmem:[%s467 + $0x38] sm:$0xff]
      %v544 = vld [vmem:[%s467 + $0x40] sm:$0xff]
      %v545 = vld [vmem:[%s467 + $0x48] sm:$0xff]
      %v546 = vld [vmem:[%s467 + $0x50] sm:$0xff]
      %v547 = vld [vmem:[%s467 + $0x58] sm:$0xff]
      %v548 = vld [vmem:[%s467 + $0x60] sm:$0xff]
      %v549 = vld [vmem:[%s467 + $0x68] sm:$0xff]
      %v550 = vld [vmem:[%s467 + $0x70] sm:$0xff]
      %v551 = vld [vmem:[%s467 + $0x78] sm:$0xff]
      %v552 = vld [vmem:[%s467 + $0x80] sm:$0xff]
      %v553 = vld [vmem:[%s467 + $0x88] sm:$0xff]
      %v554 = vld [vmem:[%s467 + $0x90] sm:$0xff]
      %v555 = vld [vmem:[%s467 + $0x98] sm:$0xff]
      %v556 = vld [vmem:[%s467 + $0xa0] sm:$0xff]
      %v557 = vld [vmem:[%s467 + $0xa8] sm:$0xff]
      %v558 = vld [vmem:[%s467 + $0xb0] sm:$0xff]
      %v559 = vld [vmem:[%s467 + $0xb8] sm:$0xff]
      %v560 = vld [vmem:[%s467 + $0xc0] sm:$0xff]
      %v561 = vld [vmem:[%s467 + $0xc8] sm:$0xff]
      %v562 = vld [vmem:[%s467 + $0xd0] sm:$0xff]
      %v563 = vld [vmem:[%s467 + $0xd8] sm:$0xff]
      %v564 = vld [vmem:[%s467 + $0xe0] sm:$0xff]
      %v565 = vld [vmem:[%s467 + $0xe8] sm:$0xff]
      %v566 = vld [vmem:[%s467 + $0xf0] sm:$0xff]
      %v567 = vld [vmem:[%s467 + $0xf8] sm:$0xff]
      %v568 = vld [vmem:[%s467 + $0x100] sm:$0xff]
      %v569 = vld [vmem:[%s467 + $0x108] sm:$0xff]
      %v570 = vld [vmem:[%s467 + $0x110] sm:$0xff]
      %v571 = vld [vmem:[%s467 + $0x118] sm:$0xff]
      %v572 = vld [vmem:[%s467 + $0x120] sm:$0xff]
      %v573 = vld [vmem:[%s467 + $0x128] sm:$0xff]
      %v574 = vld [vmem:[%s467 + $0x130] sm:$0xff]
      %v575 = vld [vmem:[%s467 + $0x138] sm:$0xff]
      %v576 = vld [vmem:[%s467 + $0x140] sm:$0xff]
      %v577 = vld [vmem:[%s467 + $0x148] sm:$0xff]
      %v578 = vld [vmem:[%s467 + $0x150] sm:$0xff]
      %v579 = vld [vmem:[%s467 + $0x158] sm:$0xff]
      %v580 = vld [vmem:[%s467 + $0x160] sm:$0xff]
      %v581 = vld [vmem:[%s467 + $0x168] sm:$0xff]
      %v582 = vld [vmem:[%s467 + $0x170] sm:$0xff]
      %v583 = vld [vmem:[%s467 + $0x178] sm:$0xff]
      %v584 = vld [vmem:[%s467 + $0x180] sm:$0xff]
      %v585 = vld [vmem:[%s467 + $0x188] sm:$0xff]
      %v586 = vld [vmem:[%s467 + $0x190] sm:$0xff]
      %v587 = vld [vmem:[%s467 + $0x198] sm:$0xff]
      %v588 = vld [vmem:[%s467 + $0x1a0] sm:$0xff]
      %v589 = vld [vmem:[%s467 + $0x1a8] sm:$0xff]
      %v590 = vld [vmem:[%s467 + $0x1b0] sm:$0xff]
      %v591 = vld [vmem:[%s467 + $0x1b8] sm:$0xff]
      %v592 = vld [vmem:[%s467 + $0x1c0] sm:$0xff]
      %v593 = vld [vmem:[%s467 + $0x1c8] sm:$0xff]
      %v594 = vld [vmem:[%s467 + $0x1d0] sm:$0xff]
      %v595 = vld [vmem:[%s467 + $0x1d8] sm:$0xff]
      %v596 = vld [vmem:[%s467 + $0x1e0] sm:$0xff]
      %v597 = vld [vmem:[%s467 + $0x1e8] sm:$0xff]
      %v598 = vld [vmem:[%s467 + $0x1f0] sm:$0xff]
      %v599 = vld [vmem:[%s467 + $0x1f8] sm:$0xff]
      %v600 = vpack.c.bf16 %v544, %v536
      %v601 = vpack.c.bf16 %v545, %v537
      %v602 = vpack.c.bf16 %v546, %v538
      %v603 = vpack.c.bf16 %v547, %v539
      %v604 = vpack.c.bf16 %v548, %v540
      %v605 = vpack.c.bf16 %v549, %v541
      %v606 = vpack.c.bf16 %v550, %v542
      %v607 = vpack.c.bf16 %v551, %v543
      %v608 = vpack.c.bf16 %v560, %v552
      %v609 = vpack.c.bf16 %v561, %v553
      %v610 = vpack.c.bf16 %v562, %v554
      %v611 = vpack.c.bf16 %v563, %v555
      %v612 = vpack.c.bf16 %v564, %v556
      %v613 = vpack.c.bf16 %v565, %v557
      %v614 = vpack.c.bf16 %v566, %v558
      %v615 = vpack.c.bf16 %v567, %v559
      %v616 = vpack.c.bf16 %v576, %v568
      %v617 = vpack.c.bf16 %v577, %v569
      %v618 = vpack.c.bf16 %v578, %v570
      %v619 = vpack.c.bf16 %v579, %v571
      %v620 = vpack.c.bf16 %v580, %v572
      %v621 = vpack.c.bf16 %v581, %v573
      %v622 = vpack.c.bf16 %v582, %v574
      %v623 = vpack.c.bf16 %v583, %v575
      %v624 = vpack.c.bf16 %v592, %v584
      %v625 = vpack.c.bf16 %v593, %v585
      %v626 = vpack.c.bf16 %v594, %v586
      %v627 = vpack.c.bf16 %v595, %v587
      %v628 = vpack.c.bf16 %v596, %v588
      %v629 = vpack.c.bf16 %v597, %v589
      %v630 = vpack.c.bf16 %v598, %v590
      %v631 = vpack.c.bf16 %v599, %v591
      %s632 = smul.u32 %s28, 36
      %s633 = smul.addr %s632, 4
      %s634 = scalar_lea.vmem %s1, %s633
      %v635 = vld [vmem:[%s634] sm:$0xf]
      %v636 = vld [vmem:[%s634 + $0x4] sm:$0xf]
      %v637 = vld [vmem:[%s634 + $0x8] sm:$0xf]
      %v638 = vld [vmem:[%s634 + $0xc] sm:$0xf]
      %v639 = vld [vmem:[%s634 + $0x10] sm:$0xf]
      %v640 = vld [vmem:[%s634 + $0x14] sm:$0xf]
      %v641 = vld [vmem:[%s634 + $0x18] sm:$0xf]
      %v642 = vld [vmem:[%s634 + $0x1c] sm:$0xf]
      %v643 = vld [vmem:[%s634 + $0x20] sm:$0xf]
      %v644 = vld [vmem:[%s634 + $0x24] sm:$0xf]
      %v645 = vld [vmem:[%s634 + $0x28] sm:$0xf]
      %v646 = vld [vmem:[%s634 + $0x2c] sm:$0xf]
      %v647 = vld [vmem:[%s634 + $0x30] sm:$0xf]
      %v648 = vld [vmem:[%s634 + $0x34] sm:$0xf]
      %v649 = vld [vmem:[%s634 + $0x38] sm:$0xf]
      %v650 = vld [vmem:[%s634 + $0x3c] sm:$0xf]
      %v651 = vld [vmem:[%s634 + $0x40] sm:$0xf]
      %v652 = vld [vmem:[%s634 + $0x44] sm:$0xf]
      %v653 = vld [vmem:[%s634 + $0x48] sm:$0xf]
      %v654 = vld [vmem:[%s634 + $0x4c] sm:$0xf]
      %v655 = vld [vmem:[%s634 + $0x50] sm:$0xf]
      %v656 = vld [vmem:[%s634 + $0x54] sm:$0xf]
      %v657 = vld [vmem:[%s634 + $0x58] sm:$0xf]
      %v658 = vld [vmem:[%s634 + $0x5c] sm:$0xf]
      %v659 = vld [vmem:[%s634 + $0x60] sm:$0xf]
      %v660 = vld [vmem:[%s634 + $0x64] sm:$0xf]
      %v661 = vld [vmem:[%s634 + $0x68] sm:$0xf]
      %v662 = vld [vmem:[%s634 + $0x6c] sm:$0xf]
      %v663 = vld [vmem:[%s634 + $0x70] sm:$0xf]
      %v664 = vld [vmem:[%s634 + $0x74] sm:$0xf]
      %v665 = vld [vmem:[%s634 + $0x78] sm:$0xf]
      %v666 = vld [vmem:[%s634 + $0x7c] sm:$0xf]
      %v667 = vld [vmem:[%s634 + $0x80] sm:$0xf]
      %v668 = vld [vmem:[%s634 + $0x84] sm:$0xf]
      %v669 = vld [vmem:[%s634 + $0x88] sm:$0xf]
      %v670 = vld [vmem:[%s634 + $0x8c] sm:$0xf]
      %v707 = vunpack.c.l.b16 %v635
      %v708 = vunpack.c.l.b16 %v636
      %v709 = vunpack.c.l.b16 %v637
      %v710 = vunpack.c.l.b16 %v638
      %v711 = vunpack.c.l.b16 %v639
      %v712 = vunpack.c.l.b16 %v640
      %v713 = vunpack.c.l.b16 %v641
      %v714 = vunpack.c.l.b16 %v642
      %v715 = vunpack.c.l.b16 %v643
      %v716 = vunpack.c.l.b16 %v644
      %v717 = vunpack.c.l.b16 %v645
      %v718 = vunpack.c.l.b16 %v646
      %v719 = vunpack.c.l.b16 %v647
      %v720 = vunpack.c.l.b16 %v648
      %v721 = vunpack.c.l.b16 %v649
      %v722 = vunpack.c.l.b16 %v650
      %v723 = vunpack.c.l.b16 %v651
      %v724 = vunpack.c.l.b16 %v652
      %v725 = vunpack.c.l.b16 %v653
      %v726 = vunpack.c.l.b16 %v654
      %v727 = vunpack.c.l.b16 %v655
      %v728 = vunpack.c.l.b16 %v656
      %v729 = vunpack.c.l.b16 %v657
      %v730 = vunpack.c.l.b16 %v658
      %v731 = vunpack.c.l.b16 %v659
      %v732 = vunpack.c.l.b16 %v660
      %v733 = vunpack.c.l.b16 %v661
      %v734 = vunpack.c.l.b16 %v662
      %v735 = vunpack.c.l.b16 %v663
      %v736 = vunpack.c.l.b16 %v664
      %v737 = vunpack.c.l.b16 %v665
      %v738 = vunpack.c.l.b16 %v666
      %v739 = vunpack.c.l.b16 %v667
      %v740 = vunpack.c.l.b16 %v668
      %v741 = vunpack.c.l.b16 %v669
      %v742 = vunpack.c.l.b16 %v670
      %v743 = vpack.c.b16 %v708, %v707
      %v744 = vpack.c.b16 %v710, %v709
      %v745 = vpack.c.b16 %v712, %v711
      %v746 = vpack.c.b16 %v714, %v713
      %v747 = vpack.c.b16 %v716, %v715
      %v748 = vpack.c.b16 %v718, %v717
      %v749 = vpack.c.b16 %v720, %v719
      %v750 = vpack.c.b16 %v722, %v721
      %v751 = vpack.c.b16 %v724, %v723
      %v752 = vpack.c.b16 %v726, %v725
      %v753 = vpack.c.b16 %v728, %v727
      %v754 = vpack.c.b16 %v730, %v729
      %v755 = vpack.c.b16 %v732, %v731
      %v756 = vpack.c.b16 %v734, %v733
      %v757 = vpack.c.b16 %v736, %v735
      %v758 = vpack.c.b16 %v738, %v737
      %v759 = vpack.c.b16 %v740, %v739
      %v760 = vpack.c.b16 %v742, %v741
      %vm761 = vcmask 523264
      %v763 = vsel %vm761, %v743, 0
      %v766 = vsel %vm761, %v744, 0
      %v769 = vsel %vm761, %v745, 0
      %v772 = vsel %vm761, %v746, 0
      %v775 = vsel %vm761, %v747, 0
      %v778 = vsel %vm761, %v748, 0
      %v781 = vsel %vm761, %v749, 0
      %v784 = vsel %vm761, %v750, 0
      %v787 = vsel %vm761, %v751, 0
      %v790 = vsel %vm761, %v752, 0
      %v793 = vsel %vm761, %v753, 0
      %v796 = vsel %vm761, %v754, 0
      %v799 = vsel %vm761, %v755, 0
      %v802 = vsel %vm761, %v756, 0
      %v805 = vsel %vm761, %v757, 0
      %v808 = vsel %vm761, %v758, 0
      %v811 = vsel %vm761, %v759, 0
      %v814 = vsel %vm761, %v760, 0
      %816 = vmatpush.bf16.msra.mxu0 0
      %817 = vmatpush.bf16.msra.mxu0 0
      %818 = vmatpush.bf16.msra.mxu0 0
      %819 = vmatpush.bf16.msra.mxu0 0
      %820 = vmatpush.bf16.msra.mxu0 %v624
      %821 = vmatpush.bf16.msra.mxu0 %v616
      %822 = vmatpush.bf16.msra.mxu0 %v608
      %823 = vmatpush.bf16.msra.mxu0 %v600
      %824 = vmatmul.bf16.gmra.mxu0 %v763
      %v825 = vpop.f32.mrf.mxu0
      %v826 = vadd.f32 0.0, %v825
      %v827 = vpop.f32.mrf.mxu0
      %v828 = vadd.f32 0.0, %v827
      %829 = vmatmul.bf16.gmra.mxu0 %v766
      %v830 = vpop.f32.mrf.mxu0
      %v831 = vadd.f32 0.0, %v830
      %v832 = vpop.f32.mrf.mxu0
      %v833 = vadd.f32 0.0, %v832
      %834 = vmatmul.bf16.gmra.mxu0 %v769
      %v835 = vpop.f32.mrf.mxu0
      %v836 = vadd.f32 0.0, %v835
      %v837 = vpop.f32.mrf.mxu0
      %v838 = vadd.f32 0.0, %v837
      %839 = vmatmul.bf16.gmra.mxu0 %v772
      %v840 = vpop.f32.mrf.mxu0
      %v841 = vadd.f32 0.0, %v840
      %v842 = vpop.f32.mrf.mxu0
      %v843 = vadd.f32 0.0, %v842
      %844 = vmatmul.bf16.gmra.mxu0 %v775
      %v845 = vpop.f32.mrf.mxu0
      %v846 = vadd.f32 0.0, %v845
      %v847 = vpop.f32.mrf.mxu0
      %v848 = vadd.f32 0.0, %v847
      %849 = vmatmul.bf16.gmra.mxu0 %v778
      %v850 = vpop.f32.mrf.mxu0
      %v851 = vadd.f32 0.0, %v850
      %v852 = vpop.f32.mrf.mxu0
      %v853 = vadd.f32 0.0, %v852
      %854 = vmatmul.bf16.gmra.mxu0 %v781
      %v855 = vpop.f32.mrf.mxu0
      %v856 = vadd.f32 0.0, %v855
      %v857 = vpop.f32.mrf.mxu0
      %v858 = vadd.f32 0.0, %v857
      %859 = vmatmul.bf16.gmra.mxu0 %v784
      %v860 = vpop.f32.mrf.mxu0
      %v861 = vadd.f32 0.0, %v860
      %v862 = vpop.f32.mrf.mxu0
      %v863 = vadd.f32 0.0, %v862
      %864 = vmatmul.bf16.gmra.mxu0 %v787
      %v865 = vpop.f32.mrf.mxu0
      %v866 = vadd.f32 0.0, %v865
      %v867 = vpop.f32.mrf.mxu0
      %v868 = vadd.f32 0.0, %v867
      %869 = vmatmul.bf16.gmra.mxu0 %v790
      %v870 = vpop.f32.mrf.mxu0
      %v871 = vadd.f32 0.0, %v870
      %v872 = vpop.f32.mrf.mxu0
      %v873 = vadd.f32 0.0, %v872
      %874 = vmatmul.bf16.gmra.mxu0 %v793
      %v875 = vpop.f32.mrf.mxu0
      %v876 = vadd.f32 0.0, %v875
      %v877 = vpop.f32.mrf.mxu0
      %v878 = vadd.f32 0.0, %v877
      %879 = vmatmul.bf16.gmra.mxu0 %v796
      %v880 = vpop.f32.mrf.mxu0
      %v881 = vadd.f32 0.0, %v880
      %v882 = vpop.f32.mrf.mxu0
      %v883 = vadd.f32 0.0, %v882
      %884 = vmatmul.bf16.gmra.mxu0 %v799
      %v885 = vpop.f32.mrf.mxu0
      %v886 = vadd.f32 0.0, %v885
      %v887 = vpop.f32.mrf.mxu0
      %v888 = vadd.f32 0.0, %v887
      %889 = vmatmul.bf16.gmra.mxu0 %v802
      %v890 = vpop.f32.mrf.mxu0
      %v891 = vadd.f32 0.0, %v890
      %v892 = vpop.f32.mrf.mxu0
      %v893 = vadd.f32 0.0, %v892
      %894 = vmatmul.bf16.gmra.mxu0 %v805
      %v895 = vpop.f32.mrf.mxu0
      %v896 = vadd.f32 0.0, %v895
      %v897 = vpop.f32.mrf.mxu0
      %v898 = vadd.f32 0.0, %v897
      %899 = vmatmul.bf16.gmra.mxu0 %v808
      %v900 = vpop.f32.mrf.mxu0
      %v901 = vadd.f32 0.0, %v900
      %v902 = vpop.f32.mrf.mxu0
      %v903 = vadd.f32 0.0, %v902
      %904 = vmatmul.bf16.gmra.mxu0 %v811
      %v905 = vpop.f32.mrf.mxu0
      %v906 = vadd.f32 0.0, %v905
      %v907 = vpop.f32.mrf.mxu0
      %v908 = vadd.f32 0.0, %v907
      %909 = vmatmul.bf16.gmra.mxu0 %v814
      %v910 = vpop.f32.mrf.mxu0
      %v911 = vadd.f32 0.0, %v910
      %v912 = vpop.f32.mrf.mxu0
      %v913 = vadd.f32 0.0, %v912
      %914 = vdwg.mxu0
      %915 = vmatpush.bf16.msra.mxu0 0
      %916 = vmatpush.bf16.msra.mxu0 0
      %917 = vmatpush.bf16.msra.mxu0 0
      %918 = vmatpush.bf16.msra.mxu0 0
      %919 = vmatpush.bf16.msra.mxu0 %v625
      %920 = vmatpush.bf16.msra.mxu0 %v617
      %921 = vmatpush.bf16.msra.mxu0 %v609
      %922 = vmatpush.bf16.msra.mxu0 %v601
      %923 = vmatmul.bf16.gmra.mxu0 %v763
      %v924 = vpop.f32.mrf.mxu0
      %v925 = vadd.f32 0.0, %v924
      %v926 = vpop.f32.mrf.mxu0
      %v927 = vadd.f32 0.0, %v926
      %928 = vmatmul.bf16.gmra.mxu0 %v766
      %v929 = vpop.f32.mrf.mxu0
      %v930 = vadd.f32 0.0, %v929
      %v931 = vpop.f32.mrf.mxu0
      %v932 = vadd.f32 0.0, %v931
      %933 = vmatmul.bf16.gmra.mxu0 %v769
      %v934 = vpop.f32.mrf.mxu0
      %v935 = vadd.f32 0.0, %v934
      %v936 = vpop.f32.mrf.mxu0
      %v937 = vadd.f32 0.0, %v936
      %938 = vmatmul.bf16.gmra.mxu0 %v772
      %v939 = vpop.f32.mrf.mxu0
      %v940 = vadd.f32 0.0, %v939
      %v941 = vpop.f32.mrf.mxu0
      %v942 = vadd.f32 0.0, %v941
      %943 = vmatmul.bf16.gmra.mxu0 %v775
      %v944 = vpop.f32.mrf.mxu0
      %v945 = vadd.f32 0.0, %v944
      %v946 = vpop.f32.mrf.mxu0
      %v947 = vadd.f32 0.0, %v946
      %948 = vmatmul.bf16.gmra.mxu0 %v778
      %v949 = vpop.f32.mrf.mxu0
      %v950 = vadd.f32 0.0, %v949
      %v951 = vpop.f32.mrf.mxu0
      %v952 = vadd.f32 0.0, %v951
      %953 = vmatmul.bf16.gmra.mxu0 %v781
      %v954 = vpop.f32.mrf.mxu0
      %v955 = vadd.f32 0.0, %v954
      %v956 = vpop.f32.mrf.mxu0
      %v957 = vadd.f32 0.0, %v956
      %958 = vmatmul.bf16.gmra.mxu0 %v784
      %v959 = vpop.f32.mrf.mxu0
      %v960 = vadd.f32 0.0, %v959
      %v961 = vpop.f32.mrf.mxu0
      %v962 = vadd.f32 0.0, %v961
      %963 = vmatmul.bf16.gmra.mxu0 %v787
      %v964 = vpop.f32.mrf.mxu0
      %v965 = vadd.f32 0.0, %v964
      %v966 = vpop.f32.mrf.mxu0
      %v967 = vadd.f32 0.0, %v966
      %968 = vmatmul.bf16.gmra.mxu0 %v790
      %v969 = vpop.f32.mrf.mxu0
      %v970 = vadd.f32 0.0, %v969
      %v971 = vpop.f32.mrf.mxu0
      %v972 = vadd.f32 0.0, %v971
      %973 = vmatmul.bf16.gmra.mxu0 %v793
      %v974 = vpop.f32.mrf.mxu0
      %v975 = vadd.f32 0.0, %v974
      %v976 = vpop.f32.mrf.mxu0
      %v977 = vadd.f32 0.0, %v976
      %978 = vmatmul.bf16.gmra.mxu0 %v796
      %v979 = vpop.f32.mrf.mxu0
      %v980 = vadd.f32 0.0, %v979
      %v981 = vpop.f32.mrf.mxu0
      %v982 = vadd.f32 0.0, %v981
      %983 = vmatmul.bf16.gmra.mxu0 %v799
      %v984 = vpop.f32.mrf.mxu0
      %v985 = vadd.f32 0.0, %v984
      %v986 = vpop.f32.mrf.mxu0
      %v987 = vadd.f32 0.0, %v986
      %988 = vmatmul.bf16.gmra.mxu0 %v802
      %v989 = vpop.f32.mrf.mxu0
      %v990 = vadd.f32 0.0, %v989
      %v991 = vpop.f32.mrf.mxu0
      %v992 = vadd.f32 0.0, %v991
      %993 = vmatmul.bf16.gmra.mxu0 %v805
      %v994 = vpop.f32.mrf.mxu0
      %v995 = vadd.f32 0.0, %v994
      %v996 = vpop.f32.mrf.mxu0
      %v997 = vadd.f32 0.0, %v996
      %998 = vmatmul.bf16.gmra.mxu0 %v808
      %v999 = vpop.f32.mrf.mxu0
      %v1000 = vadd.f32 0.0, %v999
      %v1001 = vpop.f32.mrf.mxu0
      %v1002 = vadd.f32 0.0, %v1001
      %1003 = vmatmul.bf16.gmra.mxu0 %v811
      %v1004 = vpop.f32.mrf.mxu0
      %v1005 = vadd.f32 0.0, %v1004
      %v1006 = vpop.f32.mrf.mxu0
      %v1007 = vadd.f32 0.0, %v1006
      %1008 = vmatmul.bf16.gmra.mxu0 %v814
      %v1009 = vpop.f32.mrf.mxu0
      %v1010 = vadd.f32 0.0, %v1009
      %v1011 = vpop.f32.mrf.mxu0
      %v1012 = vadd.f32 0.0, %v1011
      %1013 = vdwg.mxu0
      %1014 = vmatpush.bf16.msra.mxu0 0
      %1015 = vmatpush.bf16.msra.mxu0 0
      %1016 = vmatpush.bf16.msra.mxu0 0
      %1017 = vmatpush.bf16.msra.mxu0 0
      %1018 = vmatpush.bf16.msra.mxu0 %v626
      %1019 = vmatpush.bf16.msra.mxu0 %v618
      %1020 = vmatpush.bf16.msra.mxu0 %v610
      %1021 = vmatpush.bf16.msra.mxu0 %v602
      %1022 = vmatmul.bf16.gmra.mxu0 %v763
      %v1023 = vpop.f32.mrf.mxu0
      %v1024 = vadd.f32 0.0, %v1023
      %v1025 = vpop.f32.mrf.mxu0
      %v1026 = vadd.f32 0.0, %v1025
      %1027 = vmatmul.bf16.gmra.mxu0 %v766
      %v1028 = vpop.f32.mrf.mxu0
      %v1029 = vadd.f32 0.0, %v1028
      %v1030 = vpop.f32.mrf.mxu0
      %v1031 = vadd.f32 0.0, %v1030
      %1032 = vmatmul.bf16.gmra.mxu0 %v769
      %v1033 = vpop.f32.mrf.mxu0
      %v1034 = vadd.f32 0.0, %v1033
      %v1035 = vpop.f32.mrf.mxu0
      %v1036 = vadd.f32 0.0, %v1035
      %1037 = vmatmul.bf16.gmra.mxu0 %v772
      %v1038 = vpop.f32.mrf.mxu0
      %v1039 = vadd.f32 0.0, %v1038
      %v1040 = vpop.f32.mrf.mxu0
      %v1041 = vadd.f32 0.0, %v1040
      %1042 = vmatmul.bf16.gmra.mxu0 %v775
      %v1043 = vpop.f32.mrf.mxu0
      %v1044 = vadd.f32 0.0, %v1043
      %v1045 = vpop.f32.mrf.mxu0
      %v1046 = vadd.f32 0.0, %v1045
      %1047 = vmatmul.bf16.gmra.mxu0 %v778
      %v1048 = vpop.f32.mrf.mxu0
      %v1049 = vadd.f32 0.0, %v1048
      %v1050 = vpop.f32.mrf.mxu0
      %v1051 = vadd.f32 0.0, %v1050
      %1052 = vmatmul.bf16.gmra.mxu0 %v781
      %v1053 = vpop.f32.mrf.mxu0
      %v1054 = vadd.f32 0.0, %v1053
      %v1055 = vpop.f32.mrf.mxu0
      %v1056 = vadd.f32 0.0, %v1055
      %1057 = vmatmul.bf16.gmra.mxu0 %v784
      %v1058 = vpop.f32.mrf.mxu0
      %v1059 = vadd.f32 0.0, %v1058
      %v1060 = vpop.f32.mrf.mxu0
      %v1061 = vadd.f32 0.0, %v1060
      %1062 = vmatmul.bf16.gmra.mxu0 %v787
      %v1063 = vpop.f32.mrf.mxu0
      %v1064 = vadd.f32 0.0, %v1063
      %v1065 = vpop.f32.mrf.mxu0
      %v1066 = vadd.f32 0.0, %v1065
      %1067 = vmatmul.bf16.gmra.mxu0 %v790
      %v1068 = vpop.f32.mrf.mxu0
      %v1069 = vadd.f32 0.0, %v1068
      %v1070 = vpop.f32.mrf.mxu0
      %v1071 = vadd.f32 0.0, %v1070
      %1072 = vmatmul.bf16.gmra.mxu0 %v793
      %v1073 = vpop.f32.mrf.mxu0
      %v1074 = vadd.f32 0.0, %v1073
      %v1075 = vpop.f32.mrf.mxu0
      %v1076 = vadd.f32 0.0, %v1075
      %1077 = vmatmul.bf16.gmra.mxu0 %v796
      %v1078 = vpop.f32.mrf.mxu0
      %v1079 = vadd.f32 0.0, %v1078
      %v1080 = vpop.f32.mrf.mxu0
      %v1081 = vadd.f32 0.0, %v1080
      %1082 = vmatmul.bf16.gmra.mxu0 %v799
      %v1083 = vpop.f32.mrf.mxu0
      %v1084 = vadd.f32 0.0, %v1083
      %v1085 = vpop.f32.mrf.mxu0
      %v1086 = vadd.f32 0.0, %v1085
      %1087 = vmatmul.bf16.gmra.mxu0 %v802
      %v1088 = vpop.f32.mrf.mxu0
      %v1089 = vadd.f32 0.0, %v1088
      %v1090 = vpop.f32.mrf.mxu0
      %v1091 = vadd.f32 0.0, %v1090
      %1092 = vmatmul.bf16.gmra.mxu0 %v805
      %v1093 = vpop.f32.mrf.mxu0
      %v1094 = vadd.f32 0.0, %v1093
      %v1095 = vpop.f32.mrf.mxu0
      %v1096 = vadd.f32 0.0, %v1095
      %1097 = vmatmul.bf16.gmra.mxu0 %v808
      %v1098 = vpop.f32.mrf.mxu0
      %v1099 = vadd.f32 0.0, %v1098
      %v1100 = vpop.f32.mrf.mxu0
      %v1101 = vadd.f32 0.0, %v1100
      %1102 = vmatmul.bf16.gmra.mxu0 %v811
      %v1103 = vpop.f32.mrf.mxu0
      %v1104 = vadd.f32 0.0, %v1103
      %v1105 = vpop.f32.mrf.mxu0
      %v1106 = vadd.f32 0.0, %v1105
      %1107 = vmatmul.bf16.gmra.mxu0 %v814
      %v1108 = vpop.f32.mrf.mxu0
      %v1109 = vadd.f32 0.0, %v1108
      %v1110 = vpop.f32.mrf.mxu0
      %v1111 = vadd.f32 0.0, %v1110
      %1112 = vdwg.mxu0
      %1113 = vmatpush.bf16.msra.mxu0 0
      %1114 = vmatpush.bf16.msra.mxu0 0
      %1115 = vmatpush.bf16.msra.mxu0 0
      %1116 = vmatpush.bf16.msra.mxu0 0
      %1117 = vmatpush.bf16.msra.mxu0 %v627
      %1118 = vmatpush.bf16.msra.mxu0 %v619
      %1119 = vmatpush.bf16.msra.mxu0 %v611
      %1120 = vmatpush.bf16.msra.mxu0 %v603
      %1121 = vmatmul.bf16.gmra.mxu0 %v763
      %v1122 = vpop.f32.mrf.mxu0
      %v1123 = vadd.f32 0.0, %v1122
      %v1124 = vpop.f32.mrf.mxu0
      %v1125 = vadd.f32 0.0, %v1124
      %1126 = vmatmul.bf16.gmra.mxu0 %v766
      %v1127 = vpop.f32.mrf.mxu0
      %v1128 = vadd.f32 0.0, %v1127
      %v1129 = vpop.f32.mrf.mxu0
      %v1130 = vadd.f32 0.0, %v1129
      %1131 = vmatmul.bf16.gmra.mxu0 %v769
      %v1132 = vpop.f32.mrf.mxu0
      %v1133 = vadd.f32 0.0, %v1132
      %v1134 = vpop.f32.mrf.mxu0
      %v1135 = vadd.f32 0.0, %v1134
      %1136 = vmatmul.bf16.gmra.mxu0 %v772
      %v1137 = vpop.f32.mrf.mxu0
      %v1138 = vadd.f32 0.0, %v1137
      %v1139 = vpop.f32.mrf.mxu0
      %v1140 = vadd.f32 0.0, %v1139
      %1141 = vmatmul.bf16.gmra.mxu0 %v775
      %v1142 = vpop.f32.mrf.mxu0
      %v1143 = vadd.f32 0.0, %v1142
      %v1144 = vpop.f32.mrf.mxu0
      %v1145 = vadd.f32 0.0, %v1144
      %1146 = vmatmul.bf16.gmra.mxu0 %v778
      %v1147 = vpop.f32.mrf.mxu0
      %v1148 = vadd.f32 0.0, %v1147
      %v1149 = vpop.f32.mrf.mxu0
      %v1150 = vadd.f32 0.0, %v1149
      %1151 = vmatmul.bf16.gmra.mxu0 %v781
      %v1152 = vpop.f32.mrf.mxu0
      %v1153 = vadd.f32 0.0, %v1152
      %v1154 = vpop.f32.mrf.mxu0
      %v1155 = vadd.f32 0.0, %v1154
      %1156 = vmatmul.bf16.gmra.mxu0 %v784
      %v1157 = vpop.f32.mrf.mxu0
      %v1158 = vadd.f32 0.0, %v1157
      %v1159 = vpop.f32.mrf.mxu0
      %v1160 = vadd.f32 0.0, %v1159
      %1161 = vmatmul.bf16.gmra.mxu0 %v787
      %v1162 = vpop.f32.mrf.mxu0
      %v1163 = vadd.f32 0.0, %v1162
      %v1164 = vpop.f32.mrf.mxu0
      %v1165 = vadd.f32 0.0, %v1164
      %1166 = vmatmul.bf16.gmra.mxu0 %v790
      %v1167 = vpop.f32.mrf.mxu0
      %v1168 = vadd.f32 0.0, %v1167
      %v1169 = vpop.f32.mrf.mxu0
      %v1170 = vadd.f32 0.0, %v1169
      %1171 = vmatmul.bf16.gmra.mxu0 %v793
      %v1172 = vpop.f32.mrf.mxu0
      %v1173 = vadd.f32 0.0, %v1172
      %v1174 = vpop.f32.mrf.mxu0
      %v1175 = vadd.f32 0.0, %v1174
      %1176 = vmatmul.bf16.gmra.mxu0 %v796
      %v1177 = vpop.f32.mrf.mxu0
      %v1178 = vadd.f32 0.0, %v1177
      %v1179 = vpop.f32.mrf.mxu0
      %v1180 = vadd.f32 0.0, %v1179
      %1181 = vmatmul.bf16.gmra.mxu0 %v799
      %v1182 = vpop.f32.mrf.mxu0
      %v1183 = vadd.f32 0.0, %v1182
      %v1184 = vpop.f32.mrf.mxu0
      %v1185 = vadd.f32 0.0, %v1184
      %1186 = vmatmul.bf16.gmra.mxu0 %v802
      %v1187 = vpop.f32.mrf.mxu0
      %v1188 = vadd.f32 0.0, %v1187
      %v1189 = vpop.f32.mrf.mxu0
      %v1190 = vadd.f32 0.0, %v1189
      %1191 = vmatmul.bf16.gmra.mxu0 %v805
      %v1192 = vpop.f32.mrf.mxu0
      %v1193 = vadd.f32 0.0, %v1192
      %v1194 = vpop.f32.mrf.mxu0
      %v1195 = vadd.f32 0.0, %v1194
      %1196 = vmatmul.bf16.gmra.mxu0 %v808
      %v1197 = vpop.f32.mrf.mxu0
      %v1198 = vadd.f32 0.0, %v1197
      %v1199 = vpop.f32.mrf.mxu0
      %v1200 = vadd.f32 0.0, %v1199
      %1201 = vmatmul.bf16.gmra.mxu0 %v811
      %v1202 = vpop.f32.mrf.mxu0
      %v1203 = vadd.f32 0.0, %v1202
      %v1204 = vpop.f32.mrf.mxu0
      %v1205 = vadd.f32 0.0, %v1204
      %1206 = vmatmul.bf16.gmra.mxu0 %v814
      %v1207 = vpop.f32.mrf.mxu0
      %v1208 = vadd.f32 0.0, %v1207
      %v1209 = vpop.f32.mrf.mxu0
      %v1210 = vadd.f32 0.0, %v1209
      %1211 = vdwg.mxu0
      %1212 = vmatpush.bf16.msra.mxu0 0
      %1213 = vmatpush.bf16.msra.mxu0 0
      %1214 = vmatpush.bf16.msra.mxu0 0
      %1215 = vmatpush.bf16.msra.mxu0 0
      %1216 = vmatpush.bf16.msra.mxu0 %v628
      %1217 = vmatpush.bf16.msra.mxu0 %v620
      %1218 = vmatpush.bf16.msra.mxu0 %v612
      %1219 = vmatpush.bf16.msra.mxu0 %v604
      %1220 = vmatmul.bf16.gmra.mxu0 %v763
      %v1221 = vpop.f32.mrf.mxu0
      %v1222 = vadd.f32 0.0, %v1221
      %v1223 = vpop.f32.mrf.mxu0
      %v1224 = vadd.f32 0.0, %v1223
      %1225 = vmatmul.bf16.gmra.mxu0 %v766
      %v1226 = vpop.f32.mrf.mxu0
      %v1227 = vadd.f32 0.0, %v1226
      %v1228 = vpop.f32.mrf.mxu0
      %v1229 = vadd.f32 0.0, %v1228
      %1230 = vmatmul.bf16.gmra.mxu0 %v769
      %v1231 = vpop.f32.mrf.mxu0
      %v1232 = vadd.f32 0.0, %v1231
      %v1233 = vpop.f32.mrf.mxu0
      %v1234 = vadd.f32 0.0, %v1233
      %1235 = vmatmul.bf16.gmra.mxu0 %v772
      %v1236 = vpop.f32.mrf.mxu0
      %v1237 = vadd.f32 0.0, %v1236
      %v1238 = vpop.f32.mrf.mxu0
      %v1239 = vadd.f32 0.0, %v1238
      %1240 = vmatmul.bf16.gmra.mxu0 %v775
      %v1241 = vpop.f32.mrf.mxu0
      %v1242 = vadd.f32 0.0, %v1241
      %v1243 = vpop.f32.mrf.mxu0
      %v1244 = vadd.f32 0.0, %v1243
      %1245 = vmatmul.bf16.gmra.mxu0 %v778
      %v1246 = vpop.f32.mrf.mxu0
      %v1247 = vadd.f32 0.0, %v1246
      %v1248 = vpop.f32.mrf.mxu0
      %v1249 = vadd.f32 0.0, %v1248
      %1250 = vmatmul.bf16.gmra.mxu0 %v781
      %v1251 = vpop.f32.mrf.mxu0
      %v1252 = vadd.f32 0.0, %v1251
      %v1253 = vpop.f32.mrf.mxu0
      %v1254 = vadd.f32 0.0, %v1253
      %1255 = vmatmul.bf16.gmra.mxu0 %v784
      %v1256 = vpop.f32.mrf.mxu0
      %v1257 = vadd.f32 0.0, %v1256
      %v1258 = vpop.f32.mrf.mxu0
      %v1259 = vadd.f32 0.0, %v1258
      %1260 = vmatmul.bf16.gmra.mxu0 %v787
      %v1261 = vpop.f32.mrf.mxu0
      %v1262 = vadd.f32 0.0, %v1261
      %v1263 = vpop.f32.mrf.mxu0
      %v1264 = vadd.f32 0.0, %v1263
      %1265 = vmatmul.bf16.gmra.mxu0 %v790
      %v1266 = vpop.f32.mrf.mxu0
      %v1267 = vadd.f32 0.0, %v1266
      %v1268 = vpop.f32.mrf.mxu0
      %v1269 = vadd.f32 0.0, %v1268
      %1270 = vmatmul.bf16.gmra.mxu0 %v793
      %v1271 = vpop.f32.mrf.mxu0
      %v1272 = vadd.f32 0.0, %v1271
      %v1273 = vpop.f32.mrf.mxu0
      %v1274 = vadd.f32 0.0, %v1273
      %1275 = vmatmul.bf16.gmra.mxu0 %v796
      %v1276 = vpop.f32.mrf.mxu0
      %v1277 = vadd.f32 0.0, %v1276
      %v1278 = vpop.f32.mrf.mxu0
      %v1279 = vadd.f32 0.0, %v1278
      %1280 = vmatmul.bf16.gmra.mxu0 %v799
      %v1281 = vpop.f32.mrf.mxu0
      %v1282 = vadd.f32 0.0, %v1281
      %v1283 = vpop.f32.mrf.mxu0
      %v1284 = vadd.f32 0.0, %v1283
      %1285 = vmatmul.bf16.gmra.mxu0 %v802
      %v1286 = vpop.f32.mrf.mxu0
      %v1287 = vadd.f32 0.0, %v1286
      %v1288 = vpop.f32.mrf.mxu0
      %v1289 = vadd.f32 0.0, %v1288
      %1290 = vmatmul.bf16.gmra.mxu0 %v805
      %v1291 = vpop.f32.mrf.mxu0
      %v1292 = vadd.f32 0.0, %v1291
      %v1293 = vpop.f32.mrf.mxu0
      %v1294 = vadd.f32 0.0, %v1293
      %1295 = vmatmul.bf16.gmra.mxu0 %v808
      %v1296 = vpop.f32.mrf.mxu0
      %v1297 = vadd.f32 0.0, %v1296
      %v1298 = vpop.f32.mrf.mxu0
      %v1299 = vadd.f32 0.0, %v1298
      %1300 = vmatmul.bf16.gmra.mxu0 %v811
      %v1301 = vpop.f32.mrf.mxu0
      %v1302 = vadd.f32 0.0, %v1301
      %v1303 = vpop.f32.mrf.mxu0
      %v1304 = vadd.f32 0.0, %v1303
      %1305 = vmatmul.bf16.gmra.mxu0 %v814
      %v1306 = vpop.f32.mrf.mxu0
      %v1307 = vadd.f32 0.0, %v1306
      %v1308 = vpop.f32.mrf.mxu0
      %v1309 = vadd.f32 0.0, %v1308
      %1310 = vdwg.mxu0
      %1311 = vmatpush.bf16.msra.mxu0 0
      %1312 = vmatpush.bf16.msra.mxu0 0
      %1313 = vmatpush.bf16.msra.mxu0 0
      %1314 = vmatpush.bf16.msra.mxu0 0
      %1315 = vmatpush.bf16.msra.mxu0 %v629
      %1316 = vmatpush.bf16.msra.mxu0 %v621
      %1317 = vmatpush.bf16.msra.mxu0 %v613
      %1318 = vmatpush.bf16.msra.mxu0 %v605
      %1319 = vmatmul.bf16.gmra.mxu0 %v763
      %v1320 = vpop.f32.mrf.mxu0
      %v1321 = vadd.f32 0.0, %v1320
      %v1322 = vpop.f32.mrf.mxu0
      %v1323 = vadd.f32 0.0, %v1322
      %1324 = vmatmul.bf16.gmra.mxu0 %v766
      %v1325 = vpop.f32.mrf.mxu0
      %v1326 = vadd.f32 0.0, %v1325
      %v1327 = vpop.f32.mrf.mxu0
      %v1328 = vadd.f32 0.0, %v1327
      %1329 = vmatmul.bf16.gmra.mxu0 %v769
      %v1330 = vpop.f32.mrf.mxu0
      %v1331 = vadd.f32 0.0, %v1330
      %v1332 = vpop.f32.mrf.mxu0
      %v1333 = vadd.f32 0.0, %v1332
      %1334 = vmatmul.bf16.gmra.mxu0 %v772
      %v1335 = vpop.f32.mrf.mxu0
      %v1336 = vadd.f32 0.0, %v1335
      %v1337 = vpop.f32.mrf.mxu0
      %v1338 = vadd.f32 0.0, %v1337
      %1339 = vmatmul.bf16.gmra.mxu0 %v775
      %v1340 = vpop.f32.mrf.mxu0
      %v1341 = vadd.f32 0.0, %v1340
      %v1342 = vpop.f32.mrf.mxu0
      %v1343 = vadd.f32 0.0, %v1342
      %1344 = vmatmul.bf16.gmra.mxu0 %v778
      %v1345 = vpop.f32.mrf.mxu0
      %v1346 = vadd.f32 0.0, %v1345
      %v1347 = vpop.f32.mrf.mxu0
      %v1348 = vadd.f32 0.0, %v1347
      %1349 = vmatmul.bf16.gmra.mxu0 %v781
      %v1350 = vpop.f32.mrf.mxu0
      %v1351 = vadd.f32 0.0, %v1350
      %v1352 = vpop.f32.mrf.mxu0
      %v1353 = vadd.f32 0.0, %v1352
      %1354 = vmatmul.bf16.gmra.mxu0 %v784
      %v1355 = vpop.f32.mrf.mxu0
      %v1356 = vadd.f32 0.0, %v1355
      %v1357 = vpop.f32.mrf.mxu0
      %v1358 = vadd.f32 0.0, %v1357
      %1359 = vmatmul.bf16.gmra.mxu0 %v787
      %v1360 = vpop.f32.mrf.mxu0
      %v1361 = vadd.f32 0.0, %v1360
      %v1362 = vpop.f32.mrf.mxu0
      %v1363 = vadd.f32 0.0, %v1362
      %1364 = vmatmul.bf16.gmra.mxu0 %v790
      %v1365 = vpop.f32.mrf.mxu0
      %v1366 = vadd.f32 0.0, %v1365
      %v1367 = vpop.f32.mrf.mxu0
      %v1368 = vadd.f32 0.0, %v1367
      %1369 = vmatmul.bf16.gmra.mxu0 %v793
      %v1370 = vpop.f32.mrf.mxu0
      %v1371 = vadd.f32 0.0, %v1370
      %v1372 = vpop.f32.mrf.mxu0
      %v1373 = vadd.f32 0.0, %v1372
      %1374 = vmatmul.bf16.gmra.mxu0 %v796
      %v1375 = vpop.f32.mrf.mxu0
      %v1376 = vadd.f32 0.0, %v1375
      %v1377 = vpop.f32.mrf.mxu0
      %v1378 = vadd.f32 0.0, %v1377
      %1379 = vmatmul.bf16.gmra.mxu0 %v799
      %v1380 = vpop.f32.mrf.mxu0
      %v1381 = vadd.f32 0.0, %v1380
      %v1382 = vpop.f32.mrf.mxu0
      %v1383 = vadd.f32 0.0, %v1382
      %1384 = vmatmul.bf16.gmra.mxu0 %v802
      %v1385 = vpop.f32.mrf.mxu0
      %v1386 = vadd.f32 0.0, %v1385
      %v1387 = vpop.f32.mrf.mxu0
      %v1388 = vadd.f32 0.0, %v1387
      %1389 = vmatmul.bf16.gmra.mxu0 %v805
      %v1390 = vpop.f32.mrf.mxu0
      %v1391 = vadd.f32 0.0, %v1390
      %v1392 = vpop.f32.mrf.mxu0
      %v1393 = vadd.f32 0.0, %v1392
      %1394 = vmatmul.bf16.gmra.mxu0 %v808
      %v1395 = vpop.f32.mrf.mxu0
      %v1396 = vadd.f32 0.0, %v1395
      %v1397 = vpop.f32.mrf.mxu0
      %v1398 = vadd.f32 0.0, %v1397
      %1399 = vmatmul.bf16.gmra.mxu0 %v811
      %v1400 = vpop.f32.mrf.mxu0
      %v1401 = vadd.f32 0.0, %v1400
      %v1402 = vpop.f32.mrf.mxu0
      %v1403 = vadd.f32 0.0, %v1402
      %1404 = vmatmul.bf16.gmra.mxu0 %v814
      %v1405 = vpop.f32.mrf.mxu0
      %v1406 = vadd.f32 0.0, %v1405
      %v1407 = vpop.f32.mrf.mxu0
      %v1408 = vadd.f32 0.0, %v1407
      %1409 = vdwg.mxu0
      %1410 = vmatpush.bf16.msra.mxu0 0
      %1411 = vmatpush.bf16.msra.mxu0 0
      %1412 = vmatpush.bf16.msra.mxu0 0
      %1413 = vmatpush.bf16.msra.mxu0 0
      %1414 = vmatpush.bf16.msra.mxu0 %v630
      %1415 = vmatpush.bf16.msra.mxu0 %v622
      %1416 = vmatpush.bf16.msra.mxu0 %v614
      %1417 = vmatpush.bf16.msra.mxu0 %v606
      %1418 = vmatmul.bf16.gmra.mxu0 %v763
      %v1419 = vpop.f32.mrf.mxu0
      %v1420 = vadd.f32 0.0, %v1419
      %v1421 = vpop.f32.mrf.mxu0
      %v1422 = vadd.f32 0.0, %v1421
      %1423 = vmatmul.bf16.gmra.mxu0 %v766
      %v1424 = vpop.f32.mrf.mxu0
      %v1425 = vadd.f32 0.0, %v1424
      %v1426 = vpop.f32.mrf.mxu0
      %v1427 = vadd.f32 0.0, %v1426
      %1428 = vmatmul.bf16.gmra.mxu0 %v769
      %v1429 = vpop.f32.mrf.mxu0
      %v1430 = vadd.f32 0.0, %v1429
      %v1431 = vpop.f32.mrf.mxu0
      %v1432 = vadd.f32 0.0, %v1431
      %1433 = vmatmul.bf16.gmra.mxu0 %v772
      %v1434 = vpop.f32.mrf.mxu0
      %v1435 = vadd.f32 0.0, %v1434
      %v1436 = vpop.f32.mrf.mxu0
      %v1437 = vadd.f32 0.0, %v1436
      %1438 = vmatmul.bf16.gmra.mxu0 %v775
      %v1439 = vpop.f32.mrf.mxu0
      %v1440 = vadd.f32 0.0, %v1439
      %v1441 = vpop.f32.mrf.mxu0
      %v1442 = vadd.f32 0.0, %v1441
      %1443 = vmatmul.bf16.gmra.mxu0 %v778
      %v1444 = vpop.f32.mrf.mxu0
      %v1445 = vadd.f32 0.0, %v1444
      %v1446 = vpop.f32.mrf.mxu0
      %v1447 = vadd.f32 0.0, %v1446
      %1448 = vmatmul.bf16.gmra.mxu0 %v781
      %v1449 = vpop.f32.mrf.mxu0
      %v1450 = vadd.f32 0.0, %v1449
      %v1451 = vpop.f32.mrf.mxu0
      %v1452 = vadd.f32 0.0, %v1451
      %1453 = vmatmul.bf16.gmra.mxu0 %v784
      %v1454 = vpop.f32.mrf.mxu0
      %v1455 = vadd.f32 0.0, %v1454
      %v1456 = vpop.f32.mrf.mxu0
      %v1457 = vadd.f32 0.0, %v1456
      %1458 = vmatmul.bf16.gmra.mxu0 %v787
      %v1459 = vpop.f32.mrf.mxu0
      %v1460 = vadd.f32 0.0, %v1459
      %v1461 = vpop.f32.mrf.mxu0
      %v1462 = vadd.f32 0.0, %v1461
      %1463 = vmatmul.bf16.gmra.mxu0 %v790
      %v1464 = vpop.f32.mrf.mxu0
      %v1465 = vadd.f32 0.0, %v1464
      %v1466 = vpop.f32.mrf.mxu0
      %v1467 = vadd.f32 0.0, %v1466
      %1468 = vmatmul.bf16.gmra.mxu0 %v793
      %v1469 = vpop.f32.mrf.mxu0
      %v1470 = vadd.f32 0.0, %v1469
      %v1471 = vpop.f32.mrf.mxu0
      %v1472 = vadd.f32 0.0, %v1471
      %1473 = vmatmul.bf16.gmra.mxu0 %v796
      %v1474 = vpop.f32.mrf.mxu0
      %v1475 = vadd.f32 0.0, %v1474
      %v1476 = vpop.f32.mrf.mxu0
      %v1477 = vadd.f32 0.0, %v1476
      %1478 = vmatmul.bf16.gmra.mxu0 %v799
      %v1479 = vpop.f32.mrf.mxu0
      %v1480 = vadd.f32 0.0, %v1479
      %v1481 = vpop.f32.mrf.mxu0
      %v1482 = vadd.f32 0.0, %v1481
      %1483 = vmatmul.bf16.gmra.mxu0 %v802
      %v1484 = vpop.f32.mrf.mxu0
      %v1485 = vadd.f32 0.0, %v1484
      %v1486 = vpop.f32.mrf.mxu0
      %v1487 = vadd.f32 0.0, %v1486
      %1488 = vmatmul.bf16.gmra.mxu0 %v805
      %v1489 = vpop.f32.mrf.mxu0
      %v1490 = vadd.f32 0.0, %v1489
      %v1491 = vpop.f32.mrf.mxu0
      %v1492 = vadd.f32 0.0, %v1491
      %1493 = vmatmul.bf16.gmra.mxu0 %v808
      %v1494 = vpop.f32.mrf.mxu0
      %v1495 = vadd.f32 0.0, %v1494
      %v1496 = vpop.f32.mrf.mxu0
      %v1497 = vadd.f32 0.0, %v1496
      %1498 = vmatmul.bf16.gmra.mxu0 %v811
      %v1499 = vpop.f32.mrf.mxu0
      %v1500 = vadd.f32 0.0, %v1499
      %v1501 = vpop.f32.mrf.mxu0
      %v1502 = vadd.f32 0.0, %v1501
      %1503 = vmatmul.bf16.gmra.mxu0 %v814
      %v1504 = vpop.f32.mrf.mxu0
      %v1505 = vadd.f32 0.0, %v1504
      %v1506 = vpop.f32.mrf.mxu0
      %v1507 = vadd.f32 0.0, %v1506
      %1508 = vdwg.mxu0
      %1509 = vmatpush.bf16.msra.mxu0 0
      %1510 = vmatpush.bf16.msra.mxu0 0
      %1511 = vmatpush.bf16.msra.mxu0 0
      %1512 = vmatpush.bf16.msra.mxu0 0
      %1513 = vmatpush.bf16.msra.mxu0 %v631
      %1514 = vmatpush.bf16.msra.mxu0 %v623
      %1515 = vmatpush.bf16.msra.mxu0 %v615
      %1516 = vmatpush.bf16.msra.mxu0 %v607
      %1517 = vmatmul.bf16.gmra.mxu0 %v763
      %v1518 = vpop.f32.mrf.mxu0
      %v1519 = vadd.f32 0.0, %v1518
      %v1520 = vpop.f32.mrf.mxu0
      %v1521 = vadd.f32 0.0, %v1520
      %1522 = vmatmul.bf16.gmra.mxu0 %v766
      %v1523 = vpop.f32.mrf.mxu0
      %v1524 = vadd.f32 0.0, %v1523
      %v1525 = vpop.f32.mrf.mxu0
      %v1526 = vadd.f32 0.0, %v1525
      %1527 = vmatmul.bf16.gmra.mxu0 %v769
      %v1528 = vpop.f32.mrf.mxu0
      %v1529 = vadd.f32 0.0, %v1528
      %v1530 = vpop.f32.mrf.mxu0
      %v1531 = vadd.f32 0.0, %v1530
      %1532 = vmatmul.bf16.gmra.mxu0 %v772
      %v1533 = vpop.f32.mrf.mxu0
      %v1534 = vadd.f32 0.0, %v1533
      %v1535 = vpop.f32.mrf.mxu0
      %v1536 = vadd.f32 0.0, %v1535
      %1537 = vmatmul.bf16.gmra.mxu0 %v775
      %v1538 = vpop.f32.mrf.mxu0
      %v1539 = vadd.f32 0.0, %v1538
      %v1540 = vpop.f32.mrf.mxu0
      %v1541 = vadd.f32 0.0, %v1540
      %1542 = vmatmul.bf16.gmra.mxu0 %v778
      %v1543 = vpop.f32.mrf.mxu0
      %v1544 = vadd.f32 0.0, %v1543
      %v1545 = vpop.f32.mrf.mxu0
      %v1546 = vadd.f32 0.0, %v1545
      %1547 = vmatmul.bf16.gmra.mxu0 %v781
      %v1548 = vpop.f32.mrf.mxu0
      %v1549 = vadd.f32 0.0, %v1548
      %v1550 = vpop.f32.mrf.mxu0
      %v1551 = vadd.f32 0.0, %v1550
      %1552 = vmatmul.bf16.gmra.mxu0 %v784
      %v1553 = vpop.f32.mrf.mxu0
      %v1554 = vadd.f32 0.0, %v1553
      %v1555 = vpop.f32.mrf.mxu0
      %v1556 = vadd.f32 0.0, %v1555
      %1557 = vmatmul.bf16.gmra.mxu0 %v787
      %v1558 = vpop.f32.mrf.mxu0
      %v1559 = vadd.f32 0.0, %v1558
      %v1560 = vpop.f32.mrf.mxu0
      %v1561 = vadd.f32 0.0, %v1560
      %1562 = vmatmul.bf16.gmra.mxu0 %v790
      %v1563 = vpop.f32.mrf.mxu0
      %v1564 = vadd.f32 0.0, %v1563
      %v1565 = vpop.f32.mrf.mxu0
      %v1566 = vadd.f32 0.0, %v1565
      %1567 = vmatmul.bf16.gmra.mxu0 %v793
      %v1568 = vpop.f32.mrf.mxu0
      %v1569 = vadd.f32 0.0, %v1568
      %v1570 = vpop.f32.mrf.mxu0
      %v1571 = vadd.f32 0.0, %v1570
      %1572 = vmatmul.bf16.gmra.mxu0 %v796
      %v1573 = vpop.f32.mrf.mxu0
      %v1574 = vadd.f32 0.0, %v1573
      %v1575 = vpop.f32.mrf.mxu0
      %v1576 = vadd.f32 0.0, %v1575
      %1577 = vmatmul.bf16.gmra.mxu0 %v799
      %v1578 = vpop.f32.mrf.mxu0
      %v1579 = vadd.f32 0.0, %v1578
      %v1580 = vpop.f32.mrf.mxu0
      %v1581 = vadd.f32 0.0, %v1580
      %1582 = vmatmul.bf16.gmra.mxu0 %v802
      %v1583 = vpop.f32.mrf.mxu0
      %v1584 = vadd.f32 0.0, %v1583
      %v1585 = vpop.f32.mrf.mxu0
      %v1586 = vadd.f32 0.0, %v1585
      %1587 = vmatmul.bf16.gmra.mxu0 %v805
      %v1588 = vpop.f32.mrf.mxu0
      %v1589 = vadd.f32 0.0, %v1588
      %v1590 = vpop.f32.mrf.mxu0
      %v1591 = vadd.f32 0.0, %v1590
      %1592 = vmatmul.bf16.gmra.mxu0 %v808
      %v1593 = vpop.f32.mrf.mxu0
      %v1594 = vadd.f32 0.0, %v1593
      %v1595 = vpop.f32.mrf.mxu0
      %v1596 = vadd.f32 0.0, %v1595
      %1597 = vmatmul.bf16.gmra.mxu0 %v811
      %v1598 = vpop.f32.mrf.mxu0
      %v1599 = vadd.f32 0.0, %v1598
      %v1600 = vpop.f32.mrf.mxu0
      %v1601 = vadd.f32 0.0, %v1600
      %1602 = vmatmul.bf16.gmra.mxu0 %v814
      %v1603 = vpop.f32.mrf.mxu0
      %v1604 = vadd.f32 0.0, %v1603
      %v1605 = vpop.f32.mrf.mxu0
      %v1606 = vadd.f32 0.0, %v1605
      %1607 = vdwg.mxu0
      %v1608 = vld [vmem:[#allocation2] sm:$0xff]
      %v1609 = vld [vmem:[#allocation2 + $0x8] sm:$0xff]
      %v1610 = vld [vmem:[#allocation2 + $0x10] sm:$0xff]
      %v1611 = vld [vmem:[#allocation2 + $0x18] sm:$0xff]
      %v1612 = vld [vmem:[#allocation2 + $0x20] sm:$0xff]
      %v1613 = vld [vmem:[#allocation2 + $0x28] sm:$0xff]
      %v1614 = vld [vmem:[#allocation2 + $0x30] sm:$0xff]
      %v1615 = vld [vmem:[#allocation2 + $0x38] sm:$0xff]
      %v1616 = vld [vmem:[#allocation2 + $0x40] sm:$0xff]
      %v1617 = vld [vmem:[#allocation2 + $0x48] sm:$0xff]
      %v1618 = vld [vmem:[#allocation2 + $0x50] sm:$0xff]
      %v1619 = vld [vmem:[#allocation2 + $0x58] sm:$0xff]
      %v1620 = vld [vmem:[#allocation2 + $0x60] sm:$0xff]
      %v1621 = vld [vmem:[#allocation2 + $0x68] sm:$0xff]
      %v1622 = vld [vmem:[#allocation2 + $0x70] sm:$0xff]
      %v1623 = vld [vmem:[#allocation2 + $0x78] sm:$0xff]
      %v1624 = vld [vmem:[#allocation2 + $0x80] sm:$0xff]
      %v1625 = vld [vmem:[#allocation2 + $0x88] sm:$0xff]
      %v1626 = vld [vmem:[#allocation2 + $0x90] sm:$0xff]
      %v1627 = vld [vmem:[#allocation2 + $0x98] sm:$0xff]
      %v1628 = vld [vmem:[#allocation2 + $0xa0] sm:$0xff]
      %v1629 = vld [vmem:[#allocation2 + $0xa8] sm:$0xff]
      %v1630 = vld [vmem:[#allocation2 + $0xb0] sm:$0xff]
      %v1631 = vld [vmem:[#allocation2 + $0xb8] sm:$0xff]
      %v1632 = vld [vmem:[#allocation2 + $0xc0] sm:$0xff]
      %v1633 = vld [vmem:[#allocation2 + $0xc8] sm:$0xff]
      %v1634 = vld [vmem:[#allocation2 + $0xd0] sm:$0xff]
      %v1635 = vld [vmem:[#allocation2 + $0xd8] sm:$0xff]
      %v1636 = vld [vmem:[#allocation2 + $0xe0] sm:$0xff]
      %v1637 = vld [vmem:[#allocation2 + $0xe8] sm:$0xff]
      %v1638 = vld [vmem:[#allocation2 + $0xf0] sm:$0xff]
      %v1639 = vld [vmem:[#allocation2 + $0xf8] sm:$0xff]
      %1640 = vrot.lane.b32.xlu0 %v826, 33
      %v1641 = vpop.permute.xlu0 %1640
      %1642 = vrot.lane.b32.xlu0 %v828, 33
      %v1643 = vpop.permute.xlu0 %1642
      %1644 = vrot.lane.b32.xlu0 %v831, 33
      %v1645 = vpop.permute.xlu0 %1644
      %1646 = vrot.lane.b32.xlu0 %v833, 33
      %v1647 = vpop.permute.xlu0 %1646
      %1648 = vrot.lane.b32.xlu0 %v925, 33
      %v1649 = vpop.permute.xlu0 %1648
      %1650 = vrot.lane.b32.xlu0 %v927, 33
      %v1651 = vpop.permute.xlu0 %1650
      %1652 = vrot.lane.b32.xlu0 %v930, 33
      %v1653 = vpop.permute.xlu0 %1652
      %1654 = vrot.lane.b32.xlu0 %v932, 33
      %v1655 = vpop.permute.xlu0 %1654
      %1656 = vrot.lane.b32.xlu0 %v1024, 33
      %v1657 = vpop.permute.xlu0 %1656
      %1658 = vrot.lane.b32.xlu0 %v1026, 33
      %v1659 = vpop.permute.xlu0 %1658
      %1660 = vrot.lane.b32.xlu0 %v1029, 33
      %v1661 = vpop.permute.xlu0 %1660
      %1662 = vrot.lane.b32.xlu0 %v1031, 33
      %v1663 = vpop.permute.xlu0 %1662
      %1664 = vrot.lane.b32.xlu0 %v1123, 33
      %v1665 = vpop.permute.xlu0 %1664
      %1666 = vrot.lane.b32.xlu0 %v1125, 33
      %v1667 = vpop.permute.xlu0 %1666
      %1668 = vrot.lane.b32.xlu0 %v1128, 33
      %v1669 = vpop.permute.xlu0 %1668
      %1670 = vrot.lane.b32.xlu0 %v1130, 33
      %v1671 = vpop.permute.xlu0 %1670
      %1672 = vrot.lane.b32.xlu0 %v1222, 33
      %v1673 = vpop.permute.xlu0 %1672
      %1674 = vrot.lane.b32.xlu0 %v1224, 33
      %v1675 = vpop.permute.xlu0 %1674
      %1676 = vrot.lane.b32.xlu0 %v1227, 33
      %v1677 = vpop.permute.xlu0 %1676
      %1678 = vrot.lane.b32.xlu0 %v1229, 33
      %v1679 = vpop.permute.xlu0 %1678
      %1680 = vrot.lane.b32.xlu0 %v1321, 33
      %v1681 = vpop.permute.xlu0 %1680
      %1682 = vrot.lane.b32.xlu0 %v1323, 33
      %v1683 = vpop.permute.xlu0 %1682
      %1684 = vrot.lane.b32.xlu0 %v1326, 33
      %v1685 = vpop.permute.xlu0 %1684
      %1686 = vrot.lane.b32.xlu0 %v1328, 33
      %v1687 = vpop.permute.xlu0 %1686
      %1688 = vrot.lane.b32.xlu0 %v1420, 33
      %v1689 = vpop.permute.xlu0 %1688
      %1690 = vrot.lane.b32.xlu0 %v1422, 33
      %v1691 = vpop.permute.xlu0 %1690
      %1692 = vrot.lane.b32.xlu0 %v1425, 33
      %v1693 = vpop.permute.xlu0 %1692
      %1694 = vrot.lane.b32.xlu0 %v1427, 33
      %v1695 = vpop.permute.xlu0 %1694
      %1696 = vrot.lane.b32.xlu0 %v1519, 33
      %v1697 = vpop.permute.xlu0 %1696
      %1698 = vrot.lane.b32.xlu0 %v1521, 33
      %v1699 = vpop.permute.xlu0 %1698
      %1700 = vrot.lane.b32.xlu0 %v1524, 33
      %v1701 = vpop.permute.xlu0 %1700
      %1702 = vrot.lane.b32.xlu0 %v1526, 33
      %v1703 = vpop.permute.xlu0 %1702
      %v1704 = vlaneseq
      %v1705 = vand.u32 %v1704, 127
      %vm1706 = vcmp.lt.s32.totalorder %v1705, 33
      %v1707 = vsel %vm1706, %v1689, %v1697
      %v1708 = vsel %vm1706, %v1691, %v1699
      %v1709 = vsel %vm1706, %v1693, %v1701
      %v1710 = vsel %vm1706, %v1695, %v1703
      %v1711 = vsel %vm1706, %v1681, %v1689
      %v1712 = vsel %vm1706, %v1683, %v1691
      %v1713 = vsel %vm1706, %v1685, %v1693
      %v1714 = vsel %vm1706, %v1687, %v1695
      %v1715 = vsel %vm1706, %v1673, %v1681
      %v1716 = vsel %vm1706, %v1675, %v1683
      %v1717 = vsel %vm1706, %v1677, %v1685
      %v1718 = vsel %vm1706, %v1679, %v1687
      %v1719 = vsel %vm1706, %v1665, %v1673
      %v1720 = vsel %vm1706, %v1667, %v1675
      %v1721 = vsel %vm1706, %v1669, %v1677
      %v1722 = vsel %vm1706, %v1671, %v1679
      %v1723 = vsel %vm1706, %v1657, %v1665
      %v1724 = vsel %vm1706, %v1659, %v1667
      %v1725 = vsel %vm1706, %v1661, %v1669
      %v1726 = vsel %vm1706, %v1663, %v1671
      %v1727 = vsel %vm1706, %v1649, %v1657
      %v1728 = vsel %vm1706, %v1651, %v1659
      %v1729 = vsel %vm1706, %v1653, %v1661
      %v1730 = vsel %vm1706, %v1655, %v1663
      %v1731 = vsel %vm1706, %v1641, %v1649
      %v1732 = vsel %vm1706, %v1643, %v1651
      %v1733 = vsel %vm1706, %v1645, %v1653
      %v1734 = vsel %vm1706, %v1647, %v1655
      %v1735 = vsel %vm1706, %v1697, %v1641
      %v1736 = vsel %vm1706, %v1699, %v1643
      %v1737 = vsel %vm1706, %v1701, %v1645
      %v1738 = vsel %vm1706, %v1703, %v1647
      %v1739 = vperm.slane %v484, 0
      %v1740 = vperm.slane %v485, 0
      %v1741 = vperm.slane %v486, 0
      %v1742 = vperm.slane %v487, 0
      %v1743 = vperm.slane %v488, 0
      %v1744 = vperm.slane %v489, 0
      %v1745 = vperm.slane %v490, 0
      %v1746 = vperm.slane %v491, 0
      %v1747 = vmul.f32 %v1735, %v1739
      %v1748 = vmul.f32 %v1731, %v1740
      %v1749 = vmul.f32 %v1727, %v1741
      %v1750 = vmul.f32 %v1723, %v1742
      %v1751 = vmul.f32 %v1719, %v1743
      %v1752 = vmul.f32 %v1715, %v1744
      %v1753 = vmul.f32 %v1711, %v1745
      %v1754 = vmul.f32 %v1707, %v1746
      %v1755 = vmul.f32 %v1736, %v1739
      %v1756 = vmul.f32 %v1732, %v1740
      %v1757 = vmul.f32 %v1728, %v1741
      %v1758 = vmul.f32 %v1724, %v1742
      %v1759 = vmul.f32 %v1720, %v1743
      %v1760 = vmul.f32 %v1716, %v1744
      %v1761 = vmul.f32 %v1712, %v1745
      %v1762 = vmul.f32 %v1708, %v1746
      %v1763 = vmul.f32 %v1737, %v1739
      %v1764 = vmul.f32 %v1733, %v1740
      %v1765 = vmul.f32 %v1729, %v1741
      %v1766 = vmul.f32 %v1725, %v1742
      %v1767 = vmul.f32 %v1721, %v1743
      %v1768 = vmul.f32 %v1717, %v1744
      %v1769 = vmul.f32 %v1713, %v1745
      %v1770 = vmul.f32 %v1709, %v1746
      %v1771 = vmul.f32 %v1738, %v1739
      %v1772 = vmul.f32 %v1734, %v1740
      %v1773 = vmul.f32 %v1730, %v1741
      %v1774 = vmul.f32 %v1726, %v1742
      %v1775 = vmul.f32 %v1722, %v1743
      %v1776 = vmul.f32 %v1718, %v1744
      %v1777 = vmul.f32 %v1714, %v1745
      %v1778 = vmul.f32 %v1710, %v1746
      %1779 = vrot.lane.b32.xlu0 %v836, 32
      %v1780 = vpop.permute.xlu0 %1779
      %1781 = vrot.lane.b32.xlu0 %v838, 32
      %v1782 = vpop.permute.xlu0 %1781
      %1783 = vrot.lane.b32.xlu0 %v841, 32
      %v1784 = vpop.permute.xlu0 %1783
      %1785 = vrot.lane.b32.xlu0 %v843, 32
      %v1786 = vpop.permute.xlu0 %1785
      %1787 = vrot.lane.b32.xlu0 %v935, 32
      %v1788 = vpop.permute.xlu0 %1787
      %1789 = vrot.lane.b32.xlu0 %v937, 32
      %v1790 = vpop.permute.xlu0 %1789
      %1791 = vrot.lane.b32.xlu0 %v940, 32
      %v1792 = vpop.permute.xlu0 %1791
      %1793 = vrot.lane.b32.xlu0 %v942, 32
      %v1794 = vpop.permute.xlu0 %1793
      %1795 = vrot.lane.b32.xlu0 %v1034, 32
      %v1796 = vpop.permute.xlu0 %1795
      %1797 = vrot.lane.b32.xlu0 %v1036, 32
      %v1798 = vpop.permute.xlu0 %1797
      %1799 = vrot.lane.b32.xlu0 %v1039, 32
      %v1800 = vpop.permute.xlu0 %1799
      %1801 = vrot.lane.b32.xlu0 %v1041, 32
      %v1802 = vpop.permute.xlu0 %1801
      %1803 = vrot.lane.b32.xlu0 %v1133, 32
      %v1804 = vpop.permute.xlu0 %1803
      %1805 = vrot.lane.b32.xlu0 %v1135, 32
      %v1806 = vpop.permute.xlu0 %1805
      %1807 = vrot.lane.b32.xlu0 %v1138, 32
      %v1808 = vpop.permute.xlu0 %1807
      %1809 = vrot.lane.b32.xlu0 %v1140, 32
      %v1810 = vpop.permute.xlu0 %1809
      %1811 = vrot.lane.b32.xlu0 %v1232, 32
      %v1812 = vpop.permute.xlu0 %1811
      %1813 = vrot.lane.b32.xlu0 %v1234, 32
      %v1814 = vpop.permute.xlu0 %1813
      %1815 = vrot.lane.b32.xlu0 %v1237, 32
      %v1816 = vpop.permute.xlu0 %1815
      %1817 = vrot.lane.b32.xlu0 %v1239, 32
      %v1818 = vpop.permute.xlu0 %1817
      %1819 = vrot.lane.b32.xlu0 %v1331, 32
      %v1820 = vpop.permute.xlu0 %1819
      %1821 = vrot.lane.b32.xlu0 %v1333, 32
      %v1822 = vpop.permute.xlu0 %1821
      %1823 = vrot.lane.b32.xlu0 %v1336, 32
      %v1824 = vpop.permute.xlu0 %1823
      %1825 = vrot.lane.b32.xlu0 %v1338, 32
      %v1826 = vpop.permute.xlu0 %1825
      %1827 = vrot.lane.b32.xlu0 %v1430, 32
      %v1828 = vpop.permute.xlu0 %1827
      %1829 = vrot.lane.b32.xlu0 %v1432, 32
      %v1830 = vpop.permute.xlu0 %1829
      %1831 = vrot.lane.b32.xlu0 %v1435, 32
      %v1832 = vpop.permute.xlu0 %1831
      %1833 = vrot.lane.b32.xlu0 %v1437, 32
      %v1834 = vpop.permute.xlu0 %1833
      %1835 = vrot.lane.b32.xlu0 %v1529, 32
      %v1836 = vpop.permute.xlu0 %1835
      %1837 = vrot.lane.b32.xlu0 %v1531, 32
      %v1838 = vpop.permute.xlu0 %1837
      %1839 = vrot.lane.b32.xlu0 %v1534, 32
      %v1840 = vpop.permute.xlu0 %1839
      %1841 = vrot.lane.b32.xlu0 %v1536, 32
      %v1842 = vpop.permute.xlu0 %1841
      %vm1843 = vcmp.lt.s32.totalorder %v1705, 32
      %v1844 = vsel %vm1843, %v1828, %v1836
      %v1845 = vsel %vm1843, %v1830, %v1838
      %v1846 = vsel %vm1843, %v1832, %v1840
      %v1847 = vsel %vm1843, %v1834, %v1842
      %v1848 = vsel %vm1843, %v1820, %v1828
      %v1849 = vsel %vm1843, %v1822, %v1830
      %v1850 = vsel %vm1843, %v1824, %v1832
      %v1851 = vsel %vm1843, %v1826, %v1834
      %v1852 = vsel %vm1843, %v1812, %v1820
      %v1853 = vsel %vm1843, %v1814, %v1822
      %v1854 = vsel %vm1843, %v1816, %v1824
      %v1855 = vsel %vm1843, %v1818, %v1826
      %v1856 = vsel %vm1843, %v1804, %v1812
      %v1857 = vsel %vm1843, %v1806, %v1814
      %v1858 = vsel %vm1843, %v1808, %v1816
      %v1859 = vsel %vm1843, %v1810, %v1818
      %v1860 = vsel %vm1843, %v1796, %v1804
      %v1861 = vsel %vm1843, %v1798, %v1806
      %v1862 = vsel %vm1843, %v1800, %v1808
      %v1863 = vsel %vm1843, %v1802, %v1810
      %v1864 = vsel %vm1843, %v1788, %v1796
      %v1865 = vsel %vm1843, %v1790, %v1798
      %v1866 = vsel %vm1843, %v1792, %v1800
      %v1867 = vsel %vm1843, %v1794, %v1802
      %v1868 = vsel %vm1843, %v1780, %v1788
      %v1869 = vsel %vm1843, %v1782, %v1790
      %v1870 = vsel %vm1843, %v1784, %v1792
      %v1871 = vsel %vm1843, %v1786, %v1794
      %v1872 = vsel %vm1843, %v1836, %v1780
      %v1873 = vsel %vm1843, %v1838, %v1782
      %v1874 = vsel %vm1843, %v1840, %v1784
      %v1875 = vsel %vm1843, %v1842, %v1786
      %v1876 = vperm.slane %v484, 1
      %v1877 = vperm.slane %v485, 1
      %v1878 = vperm.slane %v486, 1
      %v1879 = vperm.slane %v487, 1
      %v1880 = vperm.slane %v488, 1
      %v1881 = vperm.slane %v489, 1
      %v1882 = vperm.slane %v490, 1
      %v1883 = vperm.slane %v491, 1
      %v1884 = vmul.f32 %v1872, %v1876
      %v1885 = vmul.f32 %v1868, %v1877
      %v1886 = vmul.f32 %v1864, %v1878
      %v1887 = vmul.f32 %v1860, %v1879
      %v1888 = vmul.f32 %v1856, %v1880
      %v1889 = vmul.f32 %v1852, %v1881
      %v1890 = vmul.f32 %v1848, %v1882
      %v1891 = vmul.f32 %v1844, %v1883
      %v1892 = vmul.f32 %v1873, %v1876
      %v1893 = vmul.f32 %v1869, %v1877
      %v1894 = vmul.f32 %v1865, %v1878
      %v1895 = vmul.f32 %v1861, %v1879
      %v1896 = vmul.f32 %v1857, %v1880
      %v1897 = vmul.f32 %v1853, %v1881
      %v1898 = vmul.f32 %v1849, %v1882
      %v1899 = vmul.f32 %v1845, %v1883
      %v1900 = vmul.f32 %v1874, %v1876
      %v1901 = vmul.f32 %v1870, %v1877
      %v1902 = vmul.f32 %v1866, %v1878
      %v1903 = vmul.f32 %v1862, %v1879
      %v1904 = vmul.f32 %v1858, %v1880
      %v1905 = vmul.f32 %v1854, %v1881
      %v1906 = vmul.f32 %v1850, %v1882
      %v1907 = vmul.f32 %v1846, %v1883
      %v1908 = vmul.f32 %v1875, %v1876
      %v1909 = vmul.f32 %v1871, %v1877
      %v1910 = vmul.f32 %v1867, %v1878
      %v1911 = vmul.f32 %v1863, %v1879
      %v1912 = vmul.f32 %v1859, %v1880
      %v1913 = vmul.f32 %v1855, %v1881
      %v1914 = vmul.f32 %v1851, %v1882
      %v1915 = vmul.f32 %v1847, %v1883
      %v1916 = vadd.f32 %v1747, %v1884
      %v1917 = vadd.f32 %v1748, %v1885
      %v1918 = vadd.f32 %v1749, %v1886
      %v1919 = vadd.f32 %v1750, %v1887
      %v1920 = vadd.f32 %v1751, %v1888
      %v1921 = vadd.f32 %v1752, %v1889
      %v1922 = vadd.f32 %v1753, %v1890
      %v1923 = vadd.f32 %v1754, %v1891
      %v1924 = vadd.f32 %v1755, %v1892
      %v1925 = vadd.f32 %v1756, %v1893
      %v1926 = vadd.f32 %v1757, %v1894
      %v1927 = vadd.f32 %v1758, %v1895
      %v1928 = vadd.f32 %v1759, %v1896
      %v1929 = vadd.f32 %v1760, %v1897
      %v1930 = vadd.f32 %v1761, %v1898
      %v1931 = vadd.f32 %v1762, %v1899
      %v1932 = vadd.f32 %v1763, %v1900
      %v1933 = vadd.f32 %v1764, %v1901
      %v1934 = vadd.f32 %v1765, %v1902
      %v1935 = vadd.f32 %v1766, %v1903
      %v1936 = vadd.f32 %v1767, %v1904
      %v1937 = vadd.f32 %v1768, %v1905
      %v1938 = vadd.f32 %v1769, %v1906
      %v1939 = vadd.f32 %v1770, %v1907
      %v1940 = vadd.f32 %v1771, %v1908
      %v1941 = vadd.f32 %v1772, %v1909
      %v1942 = vadd.f32 %v1773, %v1910
      %v1943 = vadd.f32 %v1774, %v1911
      %v1944 = vadd.f32 %v1775, %v1912
      %v1945 = vadd.f32 %v1776, %v1913
      %v1946 = vadd.f32 %v1777, %v1914
      %v1947 = vadd.f32 %v1778, %v1915
      %1948 = vrot.lane.b32.xlu0 %v846, 31
      %v1949 = vpop.permute.xlu0 %1948
      %1950 = vrot.lane.b32.xlu0 %v848, 31
      %v1951 = vpop.permute.xlu0 %1950
      %1952 = vrot.lane.b32.xlu0 %v851, 31
      %v1953 = vpop.permute.xlu0 %1952
      %1954 = vrot.lane.b32.xlu0 %v853, 31
      %v1955 = vpop.permute.xlu0 %1954
      %1956 = vrot.lane.b32.xlu0 %v945, 31
      %v1957 = vpop.permute.xlu0 %1956
      %1958 = vrot.lane.b32.xlu0 %v947, 31
      %v1959 = vpop.permute.xlu0 %1958
      %1960 = vrot.lane.b32.xlu0 %v950, 31
      %v1961 = vpop.permute.xlu0 %1960
      %1962 = vrot.lane.b32.xlu0 %v952, 31
      %v1963 = vpop.permute.xlu0 %1962
      %1964 = vrot.lane.b32.xlu0 %v1044, 31
      %v1965 = vpop.permute.xlu0 %1964
      %1966 = vrot.lane.b32.xlu0 %v1046, 31
      %v1967 = vpop.permute.xlu0 %1966
      %1968 = vrot.lane.b32.xlu0 %v1049, 31
      %v1969 = vpop.permute.xlu0 %1968
      %1970 = vrot.lane.b32.xlu0 %v1051, 31
      %v1971 = vpop.permute.xlu0 %1970
      %1972 = vrot.lane.b32.xlu0 %v1143, 31
      %v1973 = vpop.permute.xlu0 %1972
      %1974 = vrot.lane.b32.xlu0 %v1145, 31
      %v1975 = vpop.permute.xlu0 %1974
      %1976 = vrot.lane.b32.xlu0 %v1148, 31
      %v1977 = vpop.permute.xlu0 %1976
      %1978 = vrot.lane.b32.xlu0 %v1150, 31
      %v1979 = vpop.permute.xlu0 %1978
      %1980 = vrot.lane.b32.xlu0 %v1242, 31
      %v1981 = vpop.permute.xlu0 %1980
      %1982 = vrot.lane.b32.xlu0 %v1244, 31
      %v1983 = vpop.permute.xlu0 %1982
      %1984 = vrot.lane.b32.xlu0 %v1247, 31
      %v1985 = vpop.permute.xlu0 %1984
      %1986 = vrot.lane.b32.xlu0 %v1249, 31
      %v1987 = vpop.permute.xlu0 %1986
      %1988 = vrot.lane.b32.xlu0 %v1341, 31
      %v1989 = vpop.permute.xlu0 %1988
      %1990 = vrot.lane.b32.xlu0 %v1343, 31
      %v1991 = vpop.permute.xlu0 %1990
      %1992 = vrot.lane.b32.xlu0 %v1346, 31
      %v1993 = vpop.permute.xlu0 %1992
      %1994 = vrot.lane.b32.xlu0 %v1348, 31
      %v1995 = vpop.permute.xlu0 %1994
      %1996 = vrot.lane.b32.xlu0 %v1440, 31
      %v1997 = vpop.permute.xlu0 %1996
      %1998 = vrot.lane.b32.xlu0 %v1442, 31
      %v1999 = vpop.permute.xlu0 %1998
      %2000 = vrot.lane.b32.xlu0 %v1445, 31
      %v2001 = vpop.permute.xlu0 %2000
      %2002 = vrot.lane.b32.xlu0 %v1447, 31
      %v2003 = vpop.permute.xlu0 %2002
      %2004 = vrot.lane.b32.xlu0 %v1539, 31
      %v2005 = vpop.permute.xlu0 %2004
      %2006 = vrot.lane.b32.xlu0 %v1541, 31
      %v2007 = vpop.permute.xlu0 %2006
      %2008 = vrot.lane.b32.xlu0 %v1544, 31
      %v2009 = vpop.permute.xlu0 %2008
      %2010 = vrot.lane.b32.xlu0 %v1546, 31
      %v2011 = vpop.permute.xlu0 %2010
      %vm2012 = vcmp.lt.s32.totalorder %v1705, 31
      %v2013 = vsel %vm2012, %v1997, %v2005
      %v2014 = vsel %vm2012, %v1999, %v2007
      %v2015 = vsel %vm2012, %v2001, %v2009
      %v2016 = vsel %vm2012, %v2003, %v2011
      %v2017 = vsel %vm2012, %v1989, %v1997
      %v2018 = vsel %vm2012, %v1991, %v1999
      %v2019 = vsel %vm2012, %v1993, %v2001
      %v2020 = vsel %vm2012, %v1995, %v2003
      %v2021 = vsel %vm2012, %v1981, %v1989
      %v2022 = vsel %vm2012, %v1983, %v1991
      %v2023 = vsel %vm2012, %v1985, %v1993
      %v2024 = vsel %vm2012, %v1987, %v1995
      %v2025 = vsel %vm2012, %v1973, %v1981
      %v2026 = vsel %vm2012, %v1975, %v1983
      %v2027 = vsel %vm2012, %v1977, %v1985
      %v2028 = vsel %vm2012, %v1979, %v1987
      %v2029 = vsel %vm2012, %v1965, %v1973
      %v2030 = vsel %vm2012, %v1967, %v1975
      %v2031 = vsel %vm2012, %v1969, %v1977
      %v2032 = vsel %vm2012, %v1971, %v1979
      %v2033 = vsel %vm2012, %v1957, %v1965
      %v2034 = vsel %vm2012, %v1959, %v1967
      %v2035 = vsel %vm2012, %v1961, %v1969
      %v2036 = vsel %vm2012, %v1963, %v1971
      %v2037 = vsel %vm2012, %v1949, %v1957
      %v2038 = vsel %vm2012, %v1951, %v1959
      %v2039 = vsel %vm2012, %v1953, %v1961
      %v2040 = vsel %vm2012, %v1955, %v1963
      %v2041 = vsel %vm2012, %v2005, %v1949
      %v2042 = vsel %vm2012, %v2007, %v1951
      %v2043 = vsel %vm2012, %v2009, %v1953
      %v2044 = vsel %vm2012, %v2011, %v1955
      %v2045 = vperm.slane %v484, 2
      %v2046 = vperm.slane %v485, 2
      %v2047 = vperm.slane %v486, 2
      %v2048 = vperm.slane %v487, 2
      %v2049 = vperm.slane %v488, 2
      %v2050 = vperm.slane %v489, 2
      %v2051 = vperm.slane %v490, 2
      %v2052 = vperm.slane %v491, 2
      %v2053 = vmul.f32 %v2041, %v2045
      %v2054 = vmul.f32 %v2037, %v2046
      %v2055 = vmul.f32 %v2033, %v2047
      %v2056 = vmul.f32 %v2029, %v2048
      %v2057 = vmul.f32 %v2025, %v2049
      %v2058 = vmul.f32 %v2021, %v2050
      %v2059 = vmul.f32 %v2017, %v2051
      %v2060 = vmul.f32 %v2013, %v2052
      %v2061 = vmul.f32 %v2042, %v2045
      %v2062 = vmul.f32 %v2038, %v2046
      %v2063 = vmul.f32 %v2034, %v2047
      %v2064 = vmul.f32 %v2030, %v2048
      %v2065 = vmul.f32 %v2026, %v2049
      %v2066 = vmul.f32 %v2022, %v2050
      %v2067 = vmul.f32 %v2018, %v2051
      %v2068 = vmul.f32 %v2014, %v2052
      %v2069 = vmul.f32 %v2043, %v2045
      %v2070 = vmul.f32 %v2039, %v2046
      %v2071 = vmul.f32 %v2035, %v2047
      %v2072 = vmul.f32 %v2031, %v2048
      %v2073 = vmul.f32 %v2027, %v2049
      %v2074 = vmul.f32 %v2023, %v2050
      %v2075 = vmul.f32 %v2019, %v2051
      %v2076 = vmul.f32 %v2015, %v2052
      %v2077 = vmul.f32 %v2044, %v2045
      %v2078 = vmul.f32 %v2040, %v2046
      %v2079 = vmul.f32 %v2036, %v2047
      %v2080 = vmul.f32 %v2032, %v2048
      %v2081 = vmul.f32 %v2028, %v2049
      %v2082 = vmul.f32 %v2024, %v2050
      %v2083 = vmul.f32 %v2020, %v2051
      %v2084 = vmul.f32 %v2016, %v2052
      %v2085 = vadd.f32 %v1916, %v2053
      %v2086 = vadd.f32 %v1917, %v2054
      %v2087 = vadd.f32 %v1918, %v2055
      %v2088 = vadd.f32 %v1919, %v2056
      %v2089 = vadd.f32 %v1920, %v2057
      %v2090 = vadd.f32 %v1921, %v2058
      %v2091 = vadd.f32 %v1922, %v2059
      %v2092 = vadd.f32 %v1923, %v2060
      %v2093 = vadd.f32 %v1924, %v2061
      %v2094 = vadd.f32 %v1925, %v2062
      %v2095 = vadd.f32 %v1926, %v2063
      %v2096 = vadd.f32 %v1927, %v2064
      %v2097 = vadd.f32 %v1928, %v2065
      %v2098 = vadd.f32 %v1929, %v2066
      %v2099 = vadd.f32 %v1930, %v2067
      %v2100 = vadd.f32 %v1931, %v2068
      %v2101 = vadd.f32 %v1932, %v2069
      %v2102 = vadd.f32 %v1933, %v2070
      %v2103 = vadd.f32 %v1934, %v2071
      %v2104 = vadd.f32 %v1935, %v2072
      %v2105 = vadd.f32 %v1936, %v2073
      %v2106 = vadd.f32 %v1937, %v2074
      %v2107 = vadd.f32 %v1938, %v2075
      %v2108 = vadd.f32 %v1939, %v2076
      %v2109 = vadd.f32 %v1940, %v2077
      %v2110 = vadd.f32 %v1941, %v2078
      %v2111 = vadd.f32 %v1942, %v2079
      %v2112 = vadd.f32 %v1943, %v2080
      %v2113 = vadd.f32 %v1944, %v2081
      %v2114 = vadd.f32 %v1945, %v2082
      %v2115 = vadd.f32 %v1946, %v2083
      %v2116 = vadd.f32 %v1947, %v2084
      %2117 = vrot.lane.b32.xlu0 %v856, 1
      %v2118 = vpop.permute.xlu0 %2117
      %2119 = vrot.lane.b32.xlu0 %v858, 1
      %v2120 = vpop.permute.xlu0 %2119
      %2121 = vrot.lane.b32.xlu0 %v861, 1
      %v2122 = vpop.permute.xlu0 %2121
      %2123 = vrot.lane.b32.xlu0 %v863, 1
      %v2124 = vpop.permute.xlu0 %2123
      %2125 = vrot.lane.b32.xlu0 %v955, 1
      %v2126 = vpop.permute.xlu0 %2125
      %2127 = vrot.lane.b32.xlu0 %v957, 1
      %v2128 = vpop.permute.xlu0 %2127
      %2129 = vrot.lane.b32.xlu0 %v960, 1
      %v2130 = vpop.permute.xlu0 %2129
      %2131 = vrot.lane.b32.xlu0 %v962, 1
      %v2132 = vpop.permute.xlu0 %2131
      %2133 = vrot.lane.b32.xlu0 %v1054, 1
      %v2134 = vpop.permute.xlu0 %2133
      %2135 = vrot.lane.b32.xlu0 %v1056, 1
      %v2136 = vpop.permute.xlu0 %2135
      %2137 = vrot.lane.b32.xlu0 %v1059, 1
      %v2138 = vpop.permute.xlu0 %2137
      %2139 = vrot.lane.b32.xlu0 %v1061, 1
      %v2140 = vpop.permute.xlu0 %2139
      %2141 = vrot.lane.b32.xlu0 %v1153, 1
      %v2142 = vpop.permute.xlu0 %2141
      %2143 = vrot.lane.b32.xlu0 %v1155, 1
      %v2144 = vpop.permute.xlu0 %2143
      %2145 = vrot.lane.b32.xlu0 %v1158, 1
      %v2146 = vpop.permute.xlu0 %2145
      %2147 = vrot.lane.b32.xlu0 %v1160, 1
      %v2148 = vpop.permute.xlu0 %2147
      %2149 = vrot.lane.b32.xlu0 %v1252, 1
      %v2150 = vpop.permute.xlu0 %2149
      %2151 = vrot.lane.b32.xlu0 %v1254, 1
      %v2152 = vpop.permute.xlu0 %2151
      %2153 = vrot.lane.b32.xlu0 %v1257, 1
      %v2154 = vpop.permute.xlu0 %2153
      %2155 = vrot.lane.b32.xlu0 %v1259, 1
      %v2156 = vpop.permute.xlu0 %2155
      %2157 = vrot.lane.b32.xlu0 %v1351, 1
      %v2158 = vpop.permute.xlu0 %2157
      %2159 = vrot.lane.b32.xlu0 %v1353, 1
      %v2160 = vpop.permute.xlu0 %2159
      %2161 = vrot.lane.b32.xlu0 %v1356, 1
      %v2162 = vpop.permute.xlu0 %2161
      %2163 = vrot.lane.b32.xlu0 %v1358, 1
      %v2164 = vpop.permute.xlu0 %2163
      %2165 = vrot.lane.b32.xlu0 %v1450, 1
      %v2166 = vpop.permute.xlu0 %2165
      %2167 = vrot.lane.b32.xlu0 %v1452, 1
      %v2168 = vpop.permute.xlu0 %2167
      %2169 = vrot.lane.b32.xlu0 %v1455, 1
      %v2170 = vpop.permute.xlu0 %2169
      %2171 = vrot.lane.b32.xlu0 %v1457, 1
      %v2172 = vpop.permute.xlu0 %2171
      %2173 = vrot.lane.b32.xlu0 %v1549, 1
      %v2174 = vpop.permute.xlu0 %2173
      %2175 = vrot.lane.b32.xlu0 %v1551, 1
      %v2176 = vpop.permute.xlu0 %2175
      %2177 = vrot.lane.b32.xlu0 %v1554, 1
      %v2178 = vpop.permute.xlu0 %2177
      %2179 = vrot.lane.b32.xlu0 %v1556, 1
      %v2180 = vpop.permute.xlu0 %2179
      %vm2181 = vcmp.lt.s32.totalorder %v1705, 1
      %v2182 = vsel %vm2181, %v2166, %v2174
      %v2183 = vsel %vm2181, %v2168, %v2176
      %v2184 = vsel %vm2181, %v2170, %v2178
      %v2185 = vsel %vm2181, %v2172, %v2180
      %v2186 = vsel %vm2181, %v2158, %v2166
      %v2187 = vsel %vm2181, %v2160, %v2168
      %v2188 = vsel %vm2181, %v2162, %v2170
      %v2189 = vsel %vm2181, %v2164, %v2172
      %v2190 = vsel %vm2181, %v2150, %v2158
      %v2191 = vsel %vm2181, %v2152, %v2160
      %v2192 = vsel %vm2181, %v2154, %v2162
      %v2193 = vsel %vm2181, %v2156, %v2164
      %v2194 = vsel %vm2181, %v2142, %v2150
      %v2195 = vsel %vm2181, %v2144, %v2152
      %v2196 = vsel %vm2181, %v2146, %v2154
      %v2197 = vsel %vm2181, %v2148, %v2156
      %v2198 = vsel %vm2181, %v2134, %v2142
      %v2199 = vsel %vm2181, %v2136, %v2144
      %v2200 = vsel %vm2181, %v2138, %v2146
      %v2201 = vsel %vm2181, %v2140, %v2148
      %v2202 = vsel %vm2181, %v2126, %v2134
      %v2203 = vsel %vm2181, %v2128, %v2136
      %v2204 = vsel %vm2181, %v2130, %v2138
      %v2205 = vsel %vm2181, %v2132, %v2140
      %v2206 = vsel %vm2181, %v2118, %v2126
      %v2207 = vsel %vm2181, %v2120, %v2128
      %v2208 = vsel %vm2181, %v2122, %v2130
      %v2209 = vsel %vm2181, %v2124, %v2132
      %v2210 = vsel %vm2181, %v2174, %v2118
      %v2211 = vsel %vm2181, %v2176, %v2120
      %v2212 = vsel %vm2181, %v2178, %v2122
      %v2213 = vsel %vm2181, %v2180, %v2124
      %v2214 = vperm.slane %v484, 3
      %v2215 = vperm.slane %v485, 3
      %v2216 = vperm.slane %v486, 3
      %v2217 = vperm.slane %v487, 3
      %v2218 = vperm.slane %v488, 3
      %v2219 = vperm.slane %v489, 3
      %v2220 = vperm.slane %v490, 3
      %v2221 = vperm.slane %v491, 3
      %v2222 = vmul.f32 %v2210, %v2214
      %v2223 = vmul.f32 %v2206, %v2215
      %v2224 = vmul.f32 %v2202, %v2216
      %v2225 = vmul.f32 %v2198, %v2217
      %v2226 = vmul.f32 %v2194, %v2218
      %v2227 = vmul.f32 %v2190, %v2219
      %v2228 = vmul.f32 %v2186, %v2220
      %v2229 = vmul.f32 %v2182, %v2221
      %v2230 = vmul.f32 %v2211, %v2214
      %v2231 = vmul.f32 %v2207, %v2215
      %v2232 = vmul.f32 %v2203, %v2216
      %v2233 = vmul.f32 %v2199, %v2217
      %v2234 = vmul.f32 %v2195, %v2218
      %v2235 = vmul.f32 %v2191, %v2219
      %v2236 = vmul.f32 %v2187, %v2220
      %v2237 = vmul.f32 %v2183, %v2221
      %v2238 = vmul.f32 %v2212, %v2214
      %v2239 = vmul.f32 %v2208, %v2215
      %v2240 = vmul.f32 %v2204, %v2216
      %v2241 = vmul.f32 %v2200, %v2217
      %v2242 = vmul.f32 %v2196, %v2218
      %v2243 = vmul.f32 %v2192, %v2219
      %v2244 = vmul.f32 %v2188, %v2220
      %v2245 = vmul.f32 %v2184, %v2221
      %v2246 = vmul.f32 %v2213, %v2214
      %v2247 = vmul.f32 %v2209, %v2215
      %v2248 = vmul.f32 %v2205, %v2216
      %v2249 = vmul.f32 %v2201, %v2217
      %v2250 = vmul.f32 %v2197, %v2218
      %v2251 = vmul.f32 %v2193, %v2219
      %v2252 = vmul.f32 %v2189, %v2220
      %v2253 = vmul.f32 %v2185, %v2221
      %v2254 = vadd.f32 %v2085, %v2222
      %v2255 = vadd.f32 %v2086, %v2223
      %v2256 = vadd.f32 %v2087, %v2224
      %v2257 = vadd.f32 %v2088, %v2225
      %v2258 = vadd.f32 %v2089, %v2226
      %v2259 = vadd.f32 %v2090, %v2227
      %v2260 = vadd.f32 %v2091, %v2228
      %v2261 = vadd.f32 %v2092, %v2229
      %v2262 = vadd.f32 %v2093, %v2230
      %v2263 = vadd.f32 %v2094, %v2231
      %v2264 = vadd.f32 %v2095, %v2232
      %v2265 = vadd.f32 %v2096, %v2233
      %v2266 = vadd.f32 %v2097, %v2234
      %v2267 = vadd.f32 %v2098, %v2235
      %v2268 = vadd.f32 %v2099, %v2236
      %v2269 = vadd.f32 %v2100, %v2237
      %v2270 = vadd.f32 %v2101, %v2238
      %v2271 = vadd.f32 %v2102, %v2239
      %v2272 = vadd.f32 %v2103, %v2240
      %v2273 = vadd.f32 %v2104, %v2241
      %v2274 = vadd.f32 %v2105, %v2242
      %v2275 = vadd.f32 %v2106, %v2243
      %v2276 = vadd.f32 %v2107, %v2244
      %v2277 = vadd.f32 %v2108, %v2245
      %v2278 = vadd.f32 %v2109, %v2246
      %v2279 = vadd.f32 %v2110, %v2247
      %v2280 = vadd.f32 %v2111, %v2248
      %v2281 = vadd.f32 %v2112, %v2249
      %v2282 = vadd.f32 %v2113, %v2250
      %v2283 = vadd.f32 %v2114, %v2251
      %v2284 = vadd.f32 %v2115, %v2252
      %v2285 = vadd.f32 %v2116, %v2253
      %v2286 = vadd.f32 %v2254, %v866
      %v2287 = vadd.f32 %v2255, %v965
      %v2288 = vadd.f32 %v2256, %v1064
      %v2289 = vadd.f32 %v2257, %v1163
      %v2290 = vadd.f32 %v2258, %v1262
      %v2291 = vadd.f32 %v2259, %v1361
      %v2292 = vadd.f32 %v2260, %v1460
      %v2293 = vadd.f32 %v2261, %v1559
      %v2294 = vadd.f32 %v2262, %v868
      %v2295 = vadd.f32 %v2263, %v967
      %v2296 = vadd.f32 %v2264, %v1066
      %v2297 = vadd.f32 %v2265, %v1165
      %v2298 = vadd.f32 %v2266, %v1264
      %v2299 = vadd.f32 %v2267, %v1363
      %v2300 = vadd.f32 %v2268, %v1462
      %v2301 = vadd.f32 %v2269, %v1561
      %v2302 = vadd.f32 %v2270, %v871
      %v2303 = vadd.f32 %v2271, %v970
      %v2304 = vadd.f32 %v2272, %v1069
      %v2305 = vadd.f32 %v2273, %v1168
      %v2306 = vadd.f32 %v2274, %v1267
      %v2307 = vadd.f32 %v2275, %v1366
      %v2308 = vadd.f32 %v2276, %v1465
      %v2309 = vadd.f32 %v2277, %v1564
      %v2310 = vadd.f32 %v2278, %v873
      %v2311 = vadd.f32 %v2279, %v972
      %v2312 = vadd.f32 %v2280, %v1071
      %v2313 = vadd.f32 %v2281, %v1170
      %v2314 = vadd.f32 %v2282, %v1269
      %v2315 = vadd.f32 %v2283, %v1368
      %v2316 = vadd.f32 %v2284, %v1467
      %v2317 = vadd.f32 %v2285, %v1566
      %2318 = vrot.lane.b32.xlu0 %v876, 127
      %v2319 = vpop.permute.xlu0 %2318
      %2320 = vrot.lane.b32.xlu0 %v878, 127
      %v2321 = vpop.permute.xlu0 %2320
      %2322 = vrot.lane.b32.xlu0 %v881, 127
      %v2323 = vpop.permute.xlu0 %2322
      %2324 = vrot.lane.b32.xlu0 %v883, 127
      %v2325 = vpop.permute.xlu0 %2324
      %2326 = vrot.lane.b32.xlu0 %v975, 127
      %v2327 = vpop.permute.xlu0 %2326
      %2328 = vrot.lane.b32.xlu0 %v977, 127
      %v2329 = vpop.permute.xlu0 %2328
      %2330 = vrot.lane.b32.xlu0 %v980, 127
      %v2331 = vpop.permute.xlu0 %2330
      %2332 = vrot.lane.b32.xlu0 %v982, 127
      %v2333 = vpop.permute.xlu0 %2332
      %2334 = vrot.lane.b32.xlu0 %v1074, 127
      %v2335 = vpop.permute.xlu0 %2334
      %2336 = vrot.lane.b32.xlu0 %v1076, 127
      %v2337 = vpop.permute.xlu0 %2336
      %2338 = vrot.lane.b32.xlu0 %v1079, 127
      %v2339 = vpop.permute.xlu0 %2338
      %2340 = vrot.lane.b32.xlu0 %v1081, 127
      %v2341 = vpop.permute.xlu0 %2340
      %2342 = vrot.lane.b32.xlu0 %v1173, 127
      %v2343 = vpop.permute.xlu0 %2342
      %2344 = vrot.lane.b32.xlu0 %v1175, 127
      %v2345 = vpop.permute.xlu0 %2344
      %2346 = vrot.lane.b32.xlu0 %v1178, 127
      %v2347 = vpop.permute.xlu0 %2346
      %2348 = vrot.lane.b32.xlu0 %v1180, 127
      %v2349 = vpop.permute.xlu0 %2348
      %2350 = vrot.lane.b32.xlu0 %v1272, 127
      %v2351 = vpop.permute.xlu0 %2350
      %2352 = vrot.lane.b32.xlu0 %v1274, 127
      %v2353 = vpop.permute.xlu0 %2352
      %2354 = vrot.lane.b32.xlu0 %v1277, 127
      %v2355 = vpop.permute.xlu0 %2354
      %2356 = vrot.lane.b32.xlu0 %v1279, 127
      %v2357 = vpop.permute.xlu0 %2356
      %2358 = vrot.lane.b32.xlu0 %v1371, 127
      %v2359 = vpop.permute.xlu0 %2358
      %2360 = vrot.lane.b32.xlu0 %v1373, 127
      %v2361 = vpop.permute.xlu0 %2360
      %2362 = vrot.lane.b32.xlu0 %v1376, 127
      %v2363 = vpop.permute.xlu0 %2362
      %2364 = vrot.lane.b32.xlu0 %v1378, 127
      %v2365 = vpop.permute.xlu0 %2364
      %2366 = vrot.lane.b32.xlu0 %v1470, 127
      %v2367 = vpop.permute.xlu0 %2366
      %2368 = vrot.lane.b32.xlu0 %v1472, 127
      %v2369 = vpop.permute.xlu0 %2368
      %2370 = vrot.lane.b32.xlu0 %v1475, 127
      %v2371 = vpop.permute.xlu0 %2370
      %2372 = vrot.lane.b32.xlu0 %v1477, 127
      %v2373 = vpop.permute.xlu0 %2372
      %2374 = vrot.lane.b32.xlu0 %v1569, 127
      %v2375 = vpop.permute.xlu0 %2374
      %2376 = vrot.lane.b32.xlu0 %v1571, 127
      %v2377 = vpop.permute.xlu0 %2376
      %2378 = vrot.lane.b32.xlu0 %v1574, 127
      %v2379 = vpop.permute.xlu0 %2378
      %2380 = vrot.lane.b32.xlu0 %v1576, 127
      %v2381 = vpop.permute.xlu0 %2380
      %vm2382 = vcmp.lt.s32.totalorder %v1705, 127
      %v2383 = vsel %vm2382, %v2367, %v2375
      %v2384 = vsel %vm2382, %v2369, %v2377
      %v2385 = vsel %vm2382, %v2371, %v2379
      %v2386 = vsel %vm2382, %v2373, %v2381
      %v2387 = vsel %vm2382, %v2359, %v2367
      %v2388 = vsel %vm2382, %v2361, %v2369
      %v2389 = vsel %vm2382, %v2363, %v2371
      %v2390 = vsel %vm2382, %v2365, %v2373
      %v2391 = vsel %vm2382, %v2351, %v2359
      %v2392 = vsel %vm2382, %v2353, %v2361
      %v2393 = vsel %vm2382, %v2355, %v2363
      %v2394 = vsel %vm2382, %v2357, %v2365
      %v2395 = vsel %vm2382, %v2343, %v2351
      %v2396 = vsel %vm2382, %v2345, %v2353
      %v2397 = vsel %vm2382, %v2347, %v2355
      %v2398 = vsel %vm2382, %v2349, %v2357
      %v2399 = vsel %vm2382, %v2335, %v2343
      %v2400 = vsel %vm2382, %v2337, %v2345
      %v2401 = vsel %vm2382, %v2339, %v2347
      %v2402 = vsel %vm2382, %v2341, %v2349
      %v2403 = vsel %vm2382, %v2327, %v2335
      %v2404 = vsel %vm2382, %v2329, %v2337
      %v2405 = vsel %vm2382, %v2331, %v2339
      %v2406 = vsel %vm2382, %v2333, %v2341
      %v2407 = vsel %vm2382, %v2319, %v2327
      %v2408 = vsel %vm2382, %v2321, %v2329
      %v2409 = vsel %vm2382, %v2323, %v2331
      %v2410 = vsel %vm2382, %v2325, %v2333
      %v2411 = vsel %vm2382, %v2375, %v2319
      %v2412 = vsel %vm2382, %v2377, %v2321
      %v2413 = vsel %vm2382, %v2379, %v2323
      %v2414 = vsel %vm2382, %v2381, %v2325
      %v2415 = vperm.slane %v484, 5
      %v2416 = vperm.slane %v485, 5
      %v2417 = vperm.slane %v486, 5
      %v2418 = vperm.slane %v487, 5
      %v2419 = vperm.slane %v488, 5
      %v2420 = vperm.slane %v489, 5
      %v2421 = vperm.slane %v490, 5
      %v2422 = vperm.slane %v491, 5
      %v2423 = vmul.f32 %v2407, %v2415
      %v2424 = vmul.f32 %v2403, %v2416
      %v2425 = vmul.f32 %v2399, %v2417
      %v2426 = vmul.f32 %v2395, %v2418
      %v2427 = vmul.f32 %v2391, %v2419
      %v2428 = vmul.f32 %v2387, %v2420
      %v2429 = vmul.f32 %v2383, %v2421
      %v2430 = vmul.f32 %v2411, %v2422
      %v2431 = vmul.f32 %v2408, %v2415
      %v2432 = vmul.f32 %v2404, %v2416
      %v2433 = vmul.f32 %v2400, %v2417
      %v2434 = vmul.f32 %v2396, %v2418
      %v2435 = vmul.f32 %v2392, %v2419
      %v2436 = vmul.f32 %v2388, %v2420
      %v2437 = vmul.f32 %v2384, %v2421
      %v2438 = vmul.f32 %v2412, %v2422
      %v2439 = vmul.f32 %v2409, %v2415
      %v2440 = vmul.f32 %v2405, %v2416
      %v2441 = vmul.f32 %v2401, %v2417
      %v2442 = vmul.f32 %v2397, %v2418
      %v2443 = vmul.f32 %v2393, %v2419
      %v2444 = vmul.f32 %v2389, %v2420
      %v2445 = vmul.f32 %v2385, %v2421
      %v2446 = vmul.f32 %v2413, %v2422
      %v2447 = vmul.f32 %v2410, %v2415
      %v2448 = vmul.f32 %v2406, %v2416
      %v2449 = vmul.f32 %v2402, %v2417
      %v2450 = vmul.f32 %v2398, %v2418
      %v2451 = vmul.f32 %v2394, %v2419
      %v2452 = vmul.f32 %v2390, %v2420
      %v2453 = vmul.f32 %v2386, %v2421
      %v2454 = vmul.f32 %v2414, %v2422
      %v2455 = vadd.f32 %v2286, %v2423
      %v2456 = vadd.f32 %v2287, %v2424
      %v2457 = vadd.f32 %v2288, %v2425
      %v2458 = vadd.f32 %v2289, %v2426
      %v2459 = vadd.f32 %v2290, %v2427
      %v2460 = vadd.f32 %v2291, %v2428
      %v2461 = vadd.f32 %v2292, %v2429
      %v2462 = vadd.f32 %v2293, %v2430
      %v2463 = vadd.f32 %v2294, %v2431
      %v2464 = vadd.f32 %v2295, %v2432
      %v2465 = vadd.f32 %v2296, %v2433
      %v2466 = vadd.f32 %v2297, %v2434
      %v2467 = vadd.f32 %v2298, %v2435
      %v2468 = vadd.f32 %v2299, %v2436
      %v2469 = vadd.f32 %v2300, %v2437
      %v2470 = vadd.f32 %v2301, %v2438
      %v2471 = vadd.f32 %v2302, %v2439
      %v2472 = vadd.f32 %v2303, %v2440
      %v2473 = vadd.f32 %v2304, %v2441
      %v2474 = vadd.f32 %v2305, %v2442
      %v2475 = vadd.f32 %v2306, %v2443
      %v2476 = vadd.f32 %v2307, %v2444
      %v2477 = vadd.f32 %v2308, %v2445
      %v2478 = vadd.f32 %v2309, %v2446
      %v2479 = vadd.f32 %v2310, %v2447
      %v2480 = vadd.f32 %v2311, %v2448
      %v2481 = vadd.f32 %v2312, %v2449
      %v2482 = vadd.f32 %v2313, %v2450
      %v2483 = vadd.f32 %v2314, %v2451
      %v2484 = vadd.f32 %v2315, %v2452
      %v2485 = vadd.f32 %v2316, %v2453
      %v2486 = vadd.f32 %v2317, %v2454
      %2487 = vrot.lane.b32.xlu0 %v886, 97
      %v2488 = vpop.permute.xlu0 %2487
      %2489 = vrot.lane.b32.xlu0 %v888, 97
      %v2490 = vpop.permute.xlu0 %2489
      %2491 = vrot.lane.b32.xlu0 %v891, 97
      %v2492 = vpop.permute.xlu0 %2491
      %2493 = vrot.lane.b32.xlu0 %v893, 97
      %v2494 = vpop.permute.xlu0 %2493
      %2495 = vrot.lane.b32.xlu0 %v985, 97
      %v2496 = vpop.permute.xlu0 %2495
      %2497 = vrot.lane.b32.xlu0 %v987, 97
      %v2498 = vpop.permute.xlu0 %2497
      %2499 = vrot.lane.b32.xlu0 %v990, 97
      %v2500 = vpop.permute.xlu0 %2499
      %2501 = vrot.lane.b32.xlu0 %v992, 97
      %v2502 = vpop.permute.xlu0 %2501
      %2503 = vrot.lane.b32.xlu0 %v1084, 97
      %v2504 = vpop.permute.xlu0 %2503
      %2505 = vrot.lane.b32.xlu0 %v1086, 97
      %v2506 = vpop.permute.xlu0 %2505
      %2507 = vrot.lane.b32.xlu0 %v1089, 97
      %v2508 = vpop.permute.xlu0 %2507
      %2509 = vrot.lane.b32.xlu0 %v1091, 97
      %v2510 = vpop.permute.xlu0 %2509
      %2511 = vrot.lane.b32.xlu0 %v1183, 97
      %v2512 = vpop.permute.xlu0 %2511
      %2513 = vrot.lane.b32.xlu0 %v1185, 97
      %v2514 = vpop.permute.xlu0 %2513
      %2515 = vrot.lane.b32.xlu0 %v1188, 97
      %v2516 = vpop.permute.xlu0 %2515
      %2517 = vrot.lane.b32.xlu0 %v1190, 97
      %v2518 = vpop.permute.xlu0 %2517
      %2519 = vrot.lane.b32.xlu0 %v1282, 97
      %v2520 = vpop.permute.xlu0 %2519
      %2521 = vrot.lane.b32.xlu0 %v1284, 97
      %v2522 = vpop.permute.xlu0 %2521
      %2523 = vrot.lane.b32.xlu0 %v1287, 97
      %v2524 = vpop.permute.xlu0 %2523
      %2525 = vrot.lane.b32.xlu0 %v1289, 97
      %v2526 = vpop.permute.xlu0 %2525
      %2527 = vrot.lane.b32.xlu0 %v1381, 97
      %v2528 = vpop.permute.xlu0 %2527
      %2529 = vrot.lane.b32.xlu0 %v1383, 97
      %v2530 = vpop.permute.xlu0 %2529
      %2531 = vrot.lane.b32.xlu0 %v1386, 97
      %v2532 = vpop.permute.xlu0 %2531
      %2533 = vrot.lane.b32.xlu0 %v1388, 97
      %v2534 = vpop.permute.xlu0 %2533
      %2535 = vrot.lane.b32.xlu0 %v1480, 97
      %v2536 = vpop.permute.xlu0 %2535
      %2537 = vrot.lane.b32.xlu0 %v1482, 97
      %v2538 = vpop.permute.xlu0 %2537
      %2539 = vrot.lane.b32.xlu0 %v1485, 97
      %v2540 = vpop.permute.xlu0 %2539
      %2541 = vrot.lane.b32.xlu0 %v1487, 97
      %v2542 = vpop.permute.xlu0 %2541
      %2543 = vrot.lane.b32.xlu0 %v1579, 97
      %v2544 = vpop.permute.xlu0 %2543
      %2545 = vrot.lane.b32.xlu0 %v1581, 97
      %v2546 = vpop.permute.xlu0 %2545
      %2547 = vrot.lane.b32.xlu0 %v1584, 97
      %v2548 = vpop.permute.xlu0 %2547
      %2549 = vrot.lane.b32.xlu0 %v1586, 97
      %v2550 = vpop.permute.xlu0 %2549
      %vm2551 = vcmp.lt.s32.totalorder %v1705, 97
      %v2552 = vsel %vm2551, %v2536, %v2544
      %v2553 = vsel %vm2551, %v2538, %v2546
      %v2554 = vsel %vm2551, %v2540, %v2548
      %v2555 = vsel %vm2551, %v2542, %v2550
      %v2556 = vsel %vm2551, %v2528, %v2536
      %v2557 = vsel %vm2551, %v2530, %v2538
      %v2558 = vsel %vm2551, %v2532, %v2540
      %v2559 = vsel %vm2551, %v2534, %v2542
      %v2560 = vsel %vm2551, %v2520, %v2528
      %v2561 = vsel %vm2551, %v2522, %v2530
      %v2562 = vsel %vm2551, %v2524, %v2532
      %v2563 = vsel %vm2551, %v2526, %v2534
      %v2564 = vsel %vm2551, %v2512, %v2520
      %v2565 = vsel %vm2551, %v2514, %v2522
      %v2566 = vsel %vm2551, %v2516, %v2524
      %v2567 = vsel %vm2551, %v2518, %v2526
      %v2568 = vsel %vm2551, %v2504, %v2512
      %v2569 = vsel %vm2551, %v2506, %v2514
      %v2570 = vsel %vm2551, %v2508, %v2516
      %v2571 = vsel %vm2551, %v2510, %v2518
      %v2572 = vsel %vm2551, %v2496, %v2504
      %v2573 = vsel %vm2551, %v2498, %v2506
      %v2574 = vsel %vm2551, %v2500, %v2508
      %v2575 = vsel %vm2551, %v2502, %v2510
      %v2576 = vsel %vm2551, %v2488, %v2496
      %v2577 = vsel %vm2551, %v2490, %v2498
      %v2578 = vsel %vm2551, %v2492, %v2500
      %v2579 = vsel %vm2551, %v2494, %v2502
      %v2580 = vsel %vm2551, %v2544, %v2488
      %v2581 = vsel %vm2551, %v2546, %v2490
      %v2582 = vsel %vm2551, %v2548, %v2492
      %v2583 = vsel %vm2551, %v2550, %v2494
      %v2584 = vperm.slane %v484, 6
      %v2585 = vperm.slane %v485, 6
      %v2586 = vperm.slane %v486, 6
      %v2587 = vperm.slane %v487, 6
      %v2588 = vperm.slane %v488, 6
      %v2589 = vperm.slane %v489, 6
      %v2590 = vperm.slane %v490, 6
      %v2591 = vperm.slane %v491, 6
      %v2592 = vmul.f32 %v2576, %v2584
      %v2593 = vmul.f32 %v2572, %v2585
      %v2594 = vmul.f32 %v2568, %v2586
      %v2595 = vmul.f32 %v2564, %v2587
      %v2596 = vmul.f32 %v2560, %v2588
      %v2597 = vmul.f32 %v2556, %v2589
      %v2598 = vmul.f32 %v2552, %v2590
      %v2599 = vmul.f32 %v2580, %v2591
      %v2600 = vmul.f32 %v2577, %v2584
      %v2601 = vmul.f32 %v2573, %v2585
      %v2602 = vmul.f32 %v2569, %v2586
      %v2603 = vmul.f32 %v2565, %v2587
      %v2604 = vmul.f32 %v2561, %v2588
      %v2605 = vmul.f32 %v2557, %v2589
      %v2606 = vmul.f32 %v2553, %v2590
      %v2607 = vmul.f32 %v2581, %v2591
      %v2608 = vmul.f32 %v2578, %v2584
      %v2609 = vmul.f32 %v2574, %v2585
      %v2610 = vmul.f32 %v2570, %v2586
      %v2611 = vmul.f32 %v2566, %v2587
      %v2612 = vmul.f32 %v2562, %v2588
      %v2613 = vmul.f32 %v2558, %v2589
      %v2614 = vmul.f32 %v2554, %v2590
      %v2615 = vmul.f32 %v2582, %v2591
      %v2616 = vmul.f32 %v2579, %v2584
      %v2617 = vmul.f32 %v2575, %v2585
      %v2618 = vmul.f32 %v2571, %v2586
      %v2619 = vmul.f32 %v2567, %v2587
      %v2620 = vmul.f32 %v2563, %v2588
      %v2621 = vmul.f32 %v2559, %v2589
      %v2622 = vmul.f32 %v2555, %v2590
      %v2623 = vmul.f32 %v2583, %v2591
      %v2624 = vadd.f32 %v2455, %v2592
      %v2625 = vadd.f32 %v2456, %v2593
      %v2626 = vadd.f32 %v2457, %v2594
      %v2627 = vadd.f32 %v2458, %v2595
      %v2628 = vadd.f32 %v2459, %v2596
      %v2629 = vadd.f32 %v2460, %v2597
      %v2630 = vadd.f32 %v2461, %v2598
      %v2631 = vadd.f32 %v2462, %v2599
      %v2632 = vadd.f32 %v2463, %v2600
      %v2633 = vadd.f32 %v2464, %v2601
      %v2634 = vadd.f32 %v2465, %v2602
      %v2635 = vadd.f32 %v2466, %v2603
      %v2636 = vadd.f32 %v2467, %v2604
      %v2637 = vadd.f32 %v2468, %v2605
      %v2638 = vadd.f32 %v2469, %v2606
      %v2639 = vadd.f32 %v2470, %v2607
      %v2640 = vadd.f32 %v2471, %v2608
      %v2641 = vadd.f32 %v2472, %v2609
      %v2642 = vadd.f32 %v2473, %v2610
      %v2643 = vadd.f32 %v2474, %v2611
      %v2644 = vadd.f32 %v2475, %v2612
      %v2645 = vadd.f32 %v2476, %v2613
      %v2646 = vadd.f32 %v2477, %v2614
      %v2647 = vadd.f32 %v2478, %v2615
      %v2648 = vadd.f32 %v2479, %v2616
      %v2649 = vadd.f32 %v2480, %v2617
      %v2650 = vadd.f32 %v2481, %v2618
      %v2651 = vadd.f32 %v2482, %v2619
      %v2652 = vadd.f32 %v2483, %v2620
      %v2653 = vadd.f32 %v2484, %v2621
      %v2654 = vadd.f32 %v2485, %v2622
      %v2655 = vadd.f32 %v2486, %v2623
      %2656 = vrot.lane.b32.xlu0 %v896, 96
      %v2657 = vpop.permute.xlu0 %2656
      %2658 = vrot.lane.b32.xlu0 %v898, 96
      %v2659 = vpop.permute.xlu0 %2658
      %2660 = vrot.lane.b32.xlu0 %v901, 96
      %v2661 = vpop.permute.xlu0 %2660
      %2662 = vrot.lane.b32.xlu0 %v903, 96
      %v2663 = vpop.permute.xlu0 %2662
      %2664 = vrot.lane.b32.xlu0 %v995, 96
      %v2665 = vpop.permute.xlu0 %2664
      %2666 = vrot.lane.b32.xlu0 %v997, 96
      %v2667 = vpop.permute.xlu0 %2666
      %2668 = vrot.lane.b32.xlu0 %v1000, 96
      %v2669 = vpop.permute.xlu0 %2668
      %2670 = vrot.lane.b32.xlu0 %v1002, 96
      %v2671 = vpop.permute.xlu0 %2670
      %2672 = vrot.lane.b32.xlu0 %v1094, 96
      %v2673 = vpop.permute.xlu0 %2672
      %2674 = vrot.lane.b32.xlu0 %v1096, 96
      %v2675 = vpop.permute.xlu0 %2674
      %2676 = vrot.lane.b32.xlu0 %v1099, 96
      %v2677 = vpop.permute.xlu0 %2676
      %2678 = vrot.lane.b32.xlu0 %v1101, 96
      %v2679 = vpop.permute.xlu0 %2678
      %2680 = vrot.lane.b32.xlu0 %v1193, 96
      %v2681 = vpop.permute.xlu0 %2680
      %2682 = vrot.lane.b32.xlu0 %v1195, 96
      %v2683 = vpop.permute.xlu0 %2682
      %2684 = vrot.lane.b32.xlu0 %v1198, 96
      %v2685 = vpop.permute.xlu0 %2684
      %2686 = vrot.lane.b32.xlu0 %v1200, 96
      %v2687 = vpop.permute.xlu0 %2686
      %2688 = vrot.lane.b32.xlu0 %v1292, 96
      %v2689 = vpop.permute.xlu0 %2688
      %2690 = vrot.lane.b32.xlu0 %v1294, 96
      %v2691 = vpop.permute.xlu0 %2690
      %2692 = vrot.lane.b32.xlu0 %v1297, 96
      %v2693 = vpop.permute.xlu0 %2692
      %2694 = vrot.lane.b32.xlu0 %v1299, 96
      %v2695 = vpop.permute.xlu0 %2694
      %2696 = vrot.lane.b32.xlu0 %v1391, 96
      %v2697 = vpop.permute.xlu0 %2696
      %2698 = vrot.lane.b32.xlu0 %v1393, 96
      %v2699 = vpop.permute.xlu0 %2698
      %2700 = vrot.lane.b32.xlu0 %v1396, 96
      %v2701 = vpop.permute.xlu0 %2700
      %2702 = vrot.lane.b32.xlu0 %v1398, 96
      %v2703 = vpop.permute.xlu0 %2702
      %2704 = vrot.lane.b32.xlu0 %v1490, 96
      %v2705 = vpop.permute.xlu0 %2704
      %2706 = vrot.lane.b32.xlu0 %v1492, 96
      %v2707 = vpop.permute.xlu0 %2706
      %2708 = vrot.lane.b32.xlu0 %v1495, 96
      %v2709 = vpop.permute.xlu0 %2708
      %2710 = vrot.lane.b32.xlu0 %v1497, 96
      %v2711 = vpop.permute.xlu0 %2710
      %2712 = vrot.lane.b32.xlu0 %v1589, 96
      %v2713 = vpop.permute.xlu0 %2712
      %2714 = vrot.lane.b32.xlu0 %v1591, 96
      %v2715 = vpop.permute.xlu0 %2714
      %2716 = vrot.lane.b32.xlu0 %v1594, 96
      %v2717 = vpop.permute.xlu0 %2716
      %2718 = vrot.lane.b32.xlu0 %v1596, 96
      %v2719 = vpop.permute.xlu0 %2718
      %vm2720 = vcmp.lt.s32.totalorder %v1705, 96
      %v2721 = vsel %vm2720, %v2705, %v2713
      %v2722 = vsel %vm2720, %v2707, %v2715
      %v2723 = vsel %vm2720, %v2709, %v2717
      %v2724 = vsel %vm2720, %v2711, %v2719
      %v2725 = vsel %vm2720, %v2697, %v2705
      %v2726 = vsel %vm2720, %v2699, %v2707
      %v2727 = vsel %vm2720, %v2701, %v2709
      %v2728 = vsel %vm2720, %v2703, %v2711
      %v2729 = vsel %vm2720, %v2689, %v2697
      %v2730 = vsel %vm2720, %v2691, %v2699
      %v2731 = vsel %vm2720, %v2693, %v2701
      %v2732 = vsel %vm2720, %v2695, %v2703
      %v2733 = vsel %vm2720, %v2681, %v2689
      %v2734 = vsel %vm2720, %v2683, %v2691
      %v2735 = vsel %vm2720, %v2685, %v2693
      %v2736 = vsel %vm2720, %v2687, %v2695
      %v2737 = vsel %vm2720, %v2673, %v2681
      %v2738 = vsel %vm2720, %v2675, %v2683
      %v2739 = vsel %vm2720, %v2677, %v2685
      %v2740 = vsel %vm2720, %v2679, %v2687
      %v2741 = vsel %vm2720, %v2665, %v2673
      %v2742 = vsel %vm2720, %v2667, %v2675
      %v2743 = vsel %vm2720, %v2669, %v2677
      %v2744 = vsel %vm2720, %v2671, %v2679
      %v2745 = vsel %vm2720, %v2657, %v2665
      %v2746 = vsel %vm2720, %v2659, %v2667
      %v2747 = vsel %vm2720, %v2661, %v2669
      %v2748 = vsel %vm2720, %v2663, %v2671
      %v2749 = vsel %vm2720, %v2713, %v2657
      %v2750 = vsel %vm2720, %v2715, %v2659
      %v2751 = vsel %vm2720, %v2717, %v2661
      %v2752 = vsel %vm2720, %v2719, %v2663
      %v2753 = vperm.slane %v484, 7
      %v2754 = vperm.slane %v485, 7
      %v2755 = vperm.slane %v486, 7
      %v2756 = vperm.slane %v487, 7
      %v2757 = vperm.slane %v488, 7
      %v2758 = vperm.slane %v489, 7
      %v2759 = vperm.slane %v490, 7
      %v2760 = vperm.slane %v491, 7
      %v2761 = vmul.f32 %v2745, %v2753
      %v2762 = vmul.f32 %v2741, %v2754
      %v2763 = vmul.f32 %v2737, %v2755
      %v2764 = vmul.f32 %v2733, %v2756
      %v2765 = vmul.f32 %v2729, %v2757
      %v2766 = vmul.f32 %v2725, %v2758
      %v2767 = vmul.f32 %v2721, %v2759
      %v2768 = vmul.f32 %v2749, %v2760
      %v2769 = vmul.f32 %v2746, %v2753
      %v2770 = vmul.f32 %v2742, %v2754
      %v2771 = vmul.f32 %v2738, %v2755
      %v2772 = vmul.f32 %v2734, %v2756
      %v2773 = vmul.f32 %v2730, %v2757
      %v2774 = vmul.f32 %v2726, %v2758
      %v2775 = vmul.f32 %v2722, %v2759
      %v2776 = vmul.f32 %v2750, %v2760
      %v2777 = vmul.f32 %v2747, %v2753
      %v2778 = vmul.f32 %v2743, %v2754
      %v2779 = vmul.f32 %v2739, %v2755
      %v2780 = vmul.f32 %v2735, %v2756
      %v2781 = vmul.f32 %v2731, %v2757
      %v2782 = vmul.f32 %v2727, %v2758
      %v2783 = vmul.f32 %v2723, %v2759
      %v2784 = vmul.f32 %v2751, %v2760
      %v2785 = vmul.f32 %v2748, %v2753
      %v2786 = vmul.f32 %v2744, %v2754
      %v2787 = vmul.f32 %v2740, %v2755
      %v2788 = vmul.f32 %v2736, %v2756
      %v2789 = vmul.f32 %v2732, %v2757
      %v2790 = vmul.f32 %v2728, %v2758
      %v2791 = vmul.f32 %v2724, %v2759
      %v2792 = vmul.f32 %v2752, %v2760
      %v2793 = vadd.f32 %v2624, %v2761
      %v2794 = vadd.f32 %v2625, %v2762
      %v2795 = vadd.f32 %v2626, %v2763
      %v2796 = vadd.f32 %v2627, %v2764
      %v2797 = vadd.f32 %v2628, %v2765
      %v2798 = vadd.f32 %v2629, %v2766
      %v2799 = vadd.f32 %v2630, %v2767
      %v2800 = vadd.f32 %v2631, %v2768
      %v2801 = vadd.f32 %v2632, %v2769
      %v2802 = vadd.f32 %v2633, %v2770
      %v2803 = vadd.f32 %v2634, %v2771
      %v2804 = vadd.f32 %v2635, %v2772
      %v2805 = vadd.f32 %v2636, %v2773
      %v2806 = vadd.f32 %v2637, %v2774
      %v2807 = vadd.f32 %v2638, %v2775
      %v2808 = vadd.f32 %v2639, %v2776
      %v2809 = vadd.f32 %v2640, %v2777
      %v2810 = vadd.f32 %v2641, %v2778
      %v2811 = vadd.f32 %v2642, %v2779
      %v2812 = vadd.f32 %v2643, %v2780
      %v2813 = vadd.f32 %v2644, %v2781
      %v2814 = vadd.f32 %v2645, %v2782
      %v2815 = vadd.f32 %v2646, %v2783
      %v2816 = vadd.f32 %v2647, %v2784
      %v2817 = vadd.f32 %v2648, %v2785
      %v2818 = vadd.f32 %v2649, %v2786
      %v2819 = vadd.f32 %v2650, %v2787
      %v2820 = vadd.f32 %v2651, %v2788
      %v2821 = vadd.f32 %v2652, %v2789
      %v2822 = vadd.f32 %v2653, %v2790
      %v2823 = vadd.f32 %v2654, %v2791
      %v2824 = vadd.f32 %v2655, %v2792
      %2825 = vrot.lane.b32.xlu0 %v906, 95
      %v2826 = vpop.permute.xlu0 %2825
      %2827 = vrot.lane.b32.xlu0 %v908, 95
      %v2828 = vpop.permute.xlu0 %2827
      %2829 = vrot.lane.b32.xlu0 %v911, 95
      %v2830 = vpop.permute.xlu0 %2829
      %2831 = vrot.lane.b32.xlu0 %v913, 95
      %v2832 = vpop.permute.xlu0 %2831
      %2833 = vrot.lane.b32.xlu0 %v1005, 95
      %v2834 = vpop.permute.xlu0 %2833
      %2835 = vrot.lane.b32.xlu0 %v1007, 95
      %v2836 = vpop.permute.xlu0 %2835
      %2837 = vrot.lane.b32.xlu0 %v1010, 95
      %v2838 = vpop.permute.xlu0 %2837
      %2839 = vrot.lane.b32.xlu0 %v1012, 95
      %v2840 = vpop.permute.xlu0 %2839
      %2841 = vrot.lane.b32.xlu0 %v1104, 95
      %v2842 = vpop.permute.xlu0 %2841
      %2843 = vrot.lane.b32.xlu0 %v1106, 95
      %v2844 = vpop.permute.xlu0 %2843
      %2845 = vrot.lane.b32.xlu0 %v1109, 95
      %v2846 = vpop.permute.xlu0 %2845
      %2847 = vrot.lane.b32.xlu0 %v1111, 95
      %v2848 = vpop.permute.xlu0 %2847
      %2849 = vrot.lane.b32.xlu0 %v1203, 95
      %v2850 = vpop.permute.xlu0 %2849
      %2851 = vrot.lane.b32.xlu0 %v1205, 95
      %v2852 = vpop.permute.xlu0 %2851
      %2853 = vrot.lane.b32.xlu0 %v1208, 95
      %v2854 = vpop.permute.xlu0 %2853
      %2855 = vrot.lane.b32.xlu0 %v1210, 95
      %v2856 = vpop.permute.xlu0 %2855
      %2857 = vrot.lane.b32.xlu0 %v1302, 95
      %v2858 = vpop.permute.xlu0 %2857
      %2859 = vrot.lane.b32.xlu0 %v1304, 95
      %v2860 = vpop.permute.xlu0 %2859
      %2861 = vrot.lane.b32.xlu0 %v1307, 95
      %v2862 = vpop.permute.xlu0 %2861
      %2863 = vrot.lane.b32.xlu0 %v1309, 95
      %v2864 = vpop.permute.xlu0 %2863
      %2865 = vrot.lane.b32.xlu0 %v1401, 95
      %v2866 = vpop.permute.xlu0 %2865
      %2867 = vrot.lane.b32.xlu0 %v1403, 95
      %v2868 = vpop.permute.xlu0 %2867
      %2869 = vrot.lane.b32.xlu0 %v1406, 95
      %v2870 = vpop.permute.xlu0 %2869
      %2871 = vrot.lane.b32.xlu0 %v1408, 95
      %v2872 = vpop.permute.xlu0 %2871
      %2873 = vrot.lane.b32.xlu0 %v1500, 95
      %v2874 = vpop.permute.xlu0 %2873
      %2875 = vrot.lane.b32.xlu0 %v1502, 95
      %v2876 = vpop.permute.xlu0 %2875
      %2877 = vrot.lane.b32.xlu0 %v1505, 95
      %v2878 = vpop.permute.xlu0 %2877
      %2879 = vrot.lane.b32.xlu0 %v1507, 95
      %v2880 = vpop.permute.xlu0 %2879
      %2881 = vrot.lane.b32.xlu0 %v1599, 95
      %v2882 = vpop.permute.xlu0 %2881
      %2883 = vrot.lane.b32.xlu0 %v1601, 95
      %v2884 = vpop.permute.xlu0 %2883
      %2885 = vrot.lane.b32.xlu0 %v1604, 95
      %v2886 = vpop.permute.xlu0 %2885
      %2887 = vrot.lane.b32.xlu0 %v1606, 95
      %v2888 = vpop.permute.xlu0 %2887
      %vm2889 = vcmp.lt.s32.totalorder %v1705, 95
      %v2890 = vsel %vm2889, %v2874, %v2882
      %v2891 = vsel %vm2889, %v2876, %v2884
      %v2892 = vsel %vm2889, %v2878, %v2886
      %v2893 = vsel %vm2889, %v2880, %v2888
      %v2894 = vsel %vm2889, %v2866, %v2874
      %v2895 = vsel %vm2889, %v2868, %v2876
      %v2896 = vsel %vm2889, %v2870, %v2878
      %v2897 = vsel %vm2889, %v2872, %v2880
      %v2898 = vsel %vm2889, %v2858, %v2866
      %v2899 = vsel %vm2889, %v2860, %v2868
      %v2900 = vsel %vm2889, %v2862, %v2870
      %v2901 = vsel %vm2889, %v2864, %v2872
      %v2902 = vsel %vm2889, %v2850, %v2858
      %v2903 = vsel %vm2889, %v2852, %v2860
      %v2904 = vsel %vm2889, %v2854, %v2862
      %v2905 = vsel %vm2889, %v2856, %v2864
      %v2906 = vsel %vm2889, %v2842, %v2850
      %v2907 = vsel %vm2889, %v2844, %v2852
      %v2908 = vsel %vm2889, %v2846, %v2854
      %v2909 = vsel %vm2889, %v2848, %v2856
      %v2910 = vsel %vm2889, %v2834, %v2842
      %v2911 = vsel %vm2889, %v2836, %v2844
      %v2912 = vsel %vm2889, %v2838, %v2846
      %v2913 = vsel %vm2889, %v2840, %v2848
      %v2914 = vsel %vm2889, %v2826, %v2834
      %v2915 = vsel %vm2889, %v2828, %v2836
      %v2916 = vsel %vm2889, %v2830, %v2838
      %v2917 = vsel %vm2889, %v2832, %v2840
      %v2918 = vsel %vm2889, %v2882, %v2826
      %v2919 = vsel %vm2889, %v2884, %v2828
      %v2920 = vsel %vm2889, %v2886, %v2830
      %v2921 = vsel %vm2889, %v2888, %v2832
      %v2922 = vperm.slane %v492, 0
      %v2923 = vperm.slane %v493, 0
      %v2924 = vperm.slane %v494, 0
      %v2925 = vperm.slane %v495, 0
      %v2926 = vperm.slane %v496, 0
      %v2927 = vperm.slane %v497, 0
      %v2928 = vperm.slane %v498, 0
      %v2929 = vperm.slane %v499, 0
      %v2930 = vmul.f32 %v2914, %v2922
      %v2931 = vmul.f32 %v2910, %v2923
      %v2932 = vmul.f32 %v2906, %v2924
      %v2933 = vmul.f32 %v2902, %v2925
      %v2934 = vmul.f32 %v2898, %v2926
      %v2935 = vmul.f32 %v2894, %v2927
      %v2936 = vmul.f32 %v2890, %v2928
      %v2937 = vmul.f32 %v2918, %v2929
      %v2938 = vmul.f32 %v2915, %v2922
      %v2939 = vmul.f32 %v2911, %v2923
      %v2940 = vmul.f32 %v2907, %v2924
      %v2941 = vmul.f32 %v2903, %v2925
      %v2942 = vmul.f32 %v2899, %v2926
      %v2943 = vmul.f32 %v2895, %v2927
      %v2944 = vmul.f32 %v2891, %v2928
      %v2945 = vmul.f32 %v2919, %v2929
      %v2946 = vmul.f32 %v2916, %v2922
      %v2947 = vmul.f32 %v2912, %v2923
      %v2948 = vmul.f32 %v2908, %v2924
      %v2949 = vmul.f32 %v2904, %v2925
      %v2950 = vmul.f32 %v2900, %v2926
      %v2951 = vmul.f32 %v2896, %v2927
      %v2952 = vmul.f32 %v2892, %v2928
      %v2953 = vmul.f32 %v2920, %v2929
      %v2954 = vmul.f32 %v2917, %v2922
      %v2955 = vmul.f32 %v2913, %v2923
      %v2956 = vmul.f32 %v2909, %v2924
      %v2957 = vmul.f32 %v2905, %v2925
      %v2958 = vmul.f32 %v2901, %v2926
      %v2959 = vmul.f32 %v2897, %v2927
      %v2960 = vmul.f32 %v2893, %v2928
      %v2961 = vmul.f32 %v2921, %v2929
      %v2962 = vadd.f32 %v2793, %v2930
      %v2963 = vadd.f32 %v2794, %v2931
      %v2964 = vadd.f32 %v2795, %v2932
      %v2965 = vadd.f32 %v2796, %v2933
      %v2966 = vadd.f32 %v2797, %v2934
      %v2967 = vadd.f32 %v2798, %v2935
      %v2968 = vadd.f32 %v2799, %v2936
      %v2969 = vadd.f32 %v2800, %v2937
      %v2970 = vadd.f32 %v2801, %v2938
      %v2971 = vadd.f32 %v2802, %v2939
      %v2972 = vadd.f32 %v2803, %v2940
      %v2973 = vadd.f32 %v2804, %v2941
      %v2974 = vadd.f32 %v2805, %v2942
      %v2975 = vadd.f32 %v2806, %v2943
      %v2976 = vadd.f32 %v2807, %v2944
      %v2977 = vadd.f32 %v2808, %v2945
      %v2978 = vadd.f32 %v2809, %v2946
      %v2979 = vadd.f32 %v2810, %v2947
      %v2980 = vadd.f32 %v2811, %v2948
      %v2981 = vadd.f32 %v2812, %v2949
      %v2982 = vadd.f32 %v2813, %v2950
      %v2983 = vadd.f32 %v2814, %v2951
      %v2984 = vadd.f32 %v2815, %v2952
      %v2985 = vadd.f32 %v2816, %v2953
      %v2986 = vadd.f32 %v2817, %v2954
      %v2987 = vadd.f32 %v2818, %v2955
      %v2988 = vadd.f32 %v2819, %v2956
      %v2989 = vadd.f32 %v2820, %v2957
      %v2990 = vadd.f32 %v2821, %v2958
      %v2991 = vadd.f32 %v2822, %v2959
      %v2992 = vadd.f32 %v2823, %v2960
      %v2993 = vadd.f32 %v2824, %v2961
      %v2994 = vadd.f32 %v1608, %v2962
      %v2995 = vadd.f32 %v1609, %v2963
      %v2996 = vadd.f32 %v1610, %v2964
      %v2997 = vadd.f32 %v1611, %v2965
      %v2998 = vadd.f32 %v1612, %v2966
      %v2999 = vadd.f32 %v1613, %v2967
      %v3000 = vadd.f32 %v1614, %v2968
      %v3001 = vadd.f32 %v1615, %v2969
      %v3002 = vadd.f32 %v1616, %v2970
      %v3003 = vadd.f32 %v1617, %v2971
      %v3004 = vadd.f32 %v1618, %v2972
      %v3005 = vadd.f32 %v1619, %v2973
      %v3006 = vadd.f32 %v1620, %v2974
      %v3007 = vadd.f32 %v1621, %v2975
      %v3008 = vadd.f32 %v1622, %v2976
      %v3009 = vadd.f32 %v1623, %v2977
      %v3010 = vadd.f32 %v1624, %v2978
      %v3011 = vadd.f32 %v1625, %v2979
      %v3012 = vadd.f32 %v1626, %v2980
      %v3013 = vadd.f32 %v1627, %v2981
      %v3014 = vadd.f32 %v1628, %v2982
      %v3015 = vadd.f32 %v1629, %v2983
      %v3016 = vadd.f32 %v1630, %v2984
      %v3017 = vadd.f32 %v1631, %v2985
      %v3018 = vadd.f32 %v1632, %v2986
      %v3019 = vadd.f32 %v1633, %v2987
      %v3020 = vadd.f32 %v1634, %v2988
      %v3021 = vadd.f32 %v1635, %v2989
      %v3022 = vadd.f32 %v1636, %v2990
      %v3023 = vadd.f32 %v1637, %v2991
      %v3024 = vadd.f32 %v1638, %v2992
      %v3025 = vadd.f32 %v1639, %v2993
      %3026 = vst [vmem:[#allocation2] sm:$0xff] %v2994
      %3027 = vst [vmem:[#allocation2 + $0x8] sm:$0xff] %v2995
      %3028 = vst [vmem:[#allocation2 + $0x10] sm:$0xff] %v2996
      %3029 = vst [vmem:[#allocation2 + $0x18] sm:$0xff] %v2997
      %3030 = vst [vmem:[#allocation2 + $0x20] sm:$0xff] %v2998
      %3031 = vst [vmem:[#allocation2 + $0x28] sm:$0xff] %v2999
      %3032 = vst [vmem:[#allocation2 + $0x30] sm:$0xff] %v3000
      %3033 = vst [vmem:[#allocation2 + $0x38] sm:$0xff] %v3001
      %3034 = vst [vmem:[#allocation2 + $0x40] sm:$0xff] %v3002
      %3035 = vst [vmem:[#allocation2 + $0x48] sm:$0xff] %v3003
      %3036 = vst [vmem:[#allocation2 + $0x50] sm:$0xff] %v3004
      %3037 = vst [vmem:[#allocation2 + $0x58] sm:$0xff] %v3005
      %3038 = vst [vmem:[#allocation2 + $0x60] sm:$0xff] %v3006
      %3039 = vst [vmem:[#allocation2 + $0x68] sm:$0xff] %v3007
      %3040 = vst [vmem:[#allocation2 + $0x70] sm:$0xff] %v3008
      %3041 = vst [vmem:[#allocation2 + $0x78] sm:$0xff] %v3009
      %3042 = vst [vmem:[#allocation2 + $0x80] sm:$0xff] %v3010
      %3043 = vst [vmem:[#allocation2 + $0x88] sm:$0xff] %v3011
      %3044 = vst [vmem:[#allocation2 + $0x90] sm:$0xff] %v3012
      %3045 = vst [vmem:[#allocation2 + $0x98] sm:$0xff] %v3013
      %3046 = vst [vmem:[#allocation2 + $0xa0] sm:$0xff] %v3014
      %3047 = vst [vmem:[#allocation2 + $0xa8] sm:$0xff] %v3015
      %3048 = vst [vmem:[#allocation2 + $0xb0] sm:$0xff] %v3016
      %3049 = vst [vmem:[#allocation2 + $0xb8] sm:$0xff] %v3017
      %3050 = vst [vmem:[#allocation2 + $0xc0] sm:$0xff] %v3018
      %3051 = vst [vmem:[#allocation2 + $0xc8] sm:$0xff] %v3019
      %3052 = vst [vmem:[#allocation2 + $0xd0] sm:$0xff] %v3020
      %3053 = vst [vmem:[#allocation2 + $0xd8] sm:$0xff] %v3021
      %3054 = vst [vmem:[#allocation2 + $0xe0] sm:$0xff] %v3022
      %3055 = vst [vmem:[#allocation2 + $0xe8] sm:$0xff] %v3023
      %3056 = vst [vmem:[#allocation2 + $0xf0] sm:$0xff] %v3024
      %3057 = vst [vmem:[#allocation2 + $0xf8] sm:$0xff] %v3025
      // Predicated region
      $region73: #{_lambda_.1} parent=67 // pred_check
        %p3058 = pneg %p500
      $region74: #{_lambda_.1} parent=67 // pred_check_branch
        %3060 = sbr.rel (%p3058) target = $region76
      $region75: #{_lambda_.1} parent=67 // pred_region
        %v3061 = vld [vmem:[#allocation2] sm:$0xff]
        %v3062 = vld [vmem:[#allocation2 + $0x8] sm:$0xff]
        %v3063 = vld [vmem:[#allocation2 + $0x10] sm:$0xff]
        %v3064 = vld [vmem:[#allocation2 + $0x18] sm:$0xff]
        %v3065 = vld [vmem:[#allocation2 + $0x20] sm:$0xff]
        %v3066 = vld [vmem:[#allocation2 + $0x28] sm:$0xff]
        %v3067 = vld [vmem:[#allocation2 + $0x30] sm:$0xff]
        %v3068 = vld [vmem:[#allocation2 + $0x38] sm:$0xff]
        %v3069 = vld [vmem:[#allocation2 + $0x40] sm:$0xff]
        %v3070 = vld [vmem:[#allocation2 + $0x48] sm:$0xff]
        %v3071 = vld [vmem:[#allocation2 + $0x50] sm:$0xff]
        %v3072 = vld [vmem:[#allocation2 + $0x58] sm:$0xff]
        %v3073 = vld [vmem:[#allocation2 + $0x60] sm:$0xff]
        %v3074 = vld [vmem:[#allocation2 + $0x68] sm:$0xff]
        %v3075 = vld [vmem:[#allocation2 + $0x70] sm:$0xff]
        %v3076 = vld [vmem:[#allocation2 + $0x78] sm:$0xff]
        %v3077 = vld [vmem:[#allocation2 + $0x80] sm:$0xff]
        %v3078 = vld [vmem:[#allocation2 + $0x88] sm:$0xff]
        %v3079 = vld [vmem:[#allocation2 + $0x90] sm:$0xff]
        %v3080 = vld [vmem:[#allocation2 + $0x98] sm:$0xff]
        %v3081 = vld [vmem:[#allocation2 + $0xa0] sm:$0xff]
        %v3082 = vld [vmem:[#allocation2 + $0xa8] sm:$0xff]
        %v3083 = vld [vmem:[#allocation2 + $0xb0] sm:$0xff]
        %v3084 = vld [vmem:[#allocation2 + $0xb8] sm:$0xff]
        %v3085 = vld [vmem:[#allocation2 + $0xc0] sm:$0xff]
        %v3086 = vld [vmem:[#allocation2 + $0xc8] sm:$0xff]
        %v3087 = vld [vmem:[#allocation2 + $0xd0] sm:$0xff]
        %v3088 = vld [vmem:[#allocation2 + $0xd8] sm:$0xff]
        %v3089 = vld [vmem:[#allocation2 + $0xe0] sm:$0xff]
        %v3090 = vld [vmem:[#allocation2 + $0xe8] sm:$0xff]
        %v3091 = vld [vmem:[#allocation2 + $0xf0] sm:$0xff]
        %v3092 = vld [vmem:[#allocation2 + $0xf8] sm:$0xff]
        %v3093 = vld [vmem:[%s2] sm:$0xff]
        %v3094 = vld [vmem:[%s2 + $0x8] sm:$0xff]
        %v3095 = vld [vmem:[%s2 + $0x10] sm:$0xff]
        %v3096 = vld [vmem:[%s2 + $0x18] sm:$0xff]
        %3098 = vset.pattern.permute.xlu0 0
        %3099 = vperm.xlu0 %3098, %v3093
        %v3100 = vpop.permute.xlu0 %3099
        %3103 = vset.pattern.permute.xlu0 0
        %3104 = vperm.xlu0 %3103, %v3094
        %v3105 = vpop.permute.xlu0 %3104
        %3108 = vset.pattern.permute.xlu0 0
        %3109 = vperm.xlu0 %3108, %v3095
        %v3110 = vpop.permute.xlu0 %3109
        %3113 = vset.pattern.permute.xlu0 0
        %3114 = vperm.xlu0 %3113, %v3096
        %v3115 = vpop.permute.xlu0 %3114
        %v3117 = vadd.f32 %v3061, %v3100
        %v3118 = vadd.f32 %v3062, %v3100
        %v3119 = vadd.f32 %v3063, %v3100
        %v3120 = vadd.f32 %v3064, %v3100
        %v3121 = vadd.f32 %v3065, %v3100
        %v3122 = vadd.f32 %v3066, %v3100
        %v3123 = vadd.f32 %v3067, %v3100
        %v3124 = vadd.f32 %v3068, %v3100
        %v3125 = vadd.f32 %v3069, %v3105
        %v3126 = vadd.f32 %v3070, %v3105
        %v3127 = vadd.f32 %v3071, %v3105
        %v3128 = vadd.f32 %v3072, %v3105
        %v3129 = vadd.f32 %v3073, %v3105
        %v3130 = vadd.f32 %v3074, %v3105
        %v3131 = vadd.f32 %v3075, %v3105
        %v3132 = vadd.f32 %v3076, %v3105
        %v3133 = vadd.f32 %v3077, %v3110
        %v3134 = vadd.f32 %v3078, %v3110
        %v3135 = vadd.f32 %v3079, %v3110
        %v3136 = vadd.f32 %v3080, %v3110
        %v3137 = vadd.f32 %v3081, %v3110
        %v3138 = vadd.f32 %v3082, %v3110
        %v3139 = vadd.f32 %v3083, %v3110
        %v3140 = vadd.f32 %v3084, %v3110
        %v3141 = vadd.f32 %v3085, %v3115
        %v3142 = vadd.f32 %v3086, %v3115
        %v3143 = vadd.f32 %v3087, %v3115
        %v3144 = vadd.f32 %v3088, %v3115
        %v3145 = vadd.f32 %v3089, %v3115
        %v3146 = vadd.f32 %v3090, %v3115
        %v3147 = vadd.f32 %v3091, %v3115
        %v3148 = vadd.f32 %v3092, %v3115
        %v3149 = vadd.f32 %v3117, %v3118
        %v3150 = vadd.f32 %v3149, %v3119
        %v3151 = vadd.f32 %v3150, %v3120
        %v3152 = vadd.f32 %v3151, %v3121
        %v3153 = vadd.f32 %v3152, %v3122
        %v3154 = vadd.f32 %v3153, %v3123
        %v3155 = vadd.f32 %v3154, %v3124
        %v3156 = vadd.f32 %v3155, %v3125
        %v3157 = vadd.f32 %v3156, %v3126
        %v3158 = vadd.f32 %v3157, %v3127
        %v3159 = vadd.f32 %v3158, %v3128
        %v3160 = vadd.f32 %v3159, %v3129
        %v3161 = vadd.f32 %v3160, %v3130
        %v3162 = vadd.f32 %v3161, %v3131
        %v3163 = vadd.f32 %v3162, %v3132
        %v3164 = vadd.f32 %v3163, %v3133
        %v3165 = vadd.f32 %v3164, %v3134
        %v3166 = vadd.f32 %v3165, %v3135
        %v3167 = vadd.f32 %v3166, %v3136
        %v3168 = vadd.f32 %v3167, %v3137
        %v3169 = vadd.f32 %v3168, %v3138
        %v3170 = vadd.f32 %v3169, %v3139
        %v3171 = vadd.f32 %v3170, %v3140
        %v3172 = vadd.f32 %v3171, %v3141
        %v3173 = vadd.f32 %v3172, %v3142
        %v3174 = vadd.f32 %v3173, %v3143
        %v3175 = vadd.f32 %v3174, %v3144
        %v3176 = vadd.f32 %v3175, %v3145
        %v3177 = vadd.f32 %v3176, %v3146
        %v3178 = vadd.f32 %v3177, %v3147
        %v3179 = vadd.f32 %v3178, %v3148
        %3180 = vadd.xlane.f32.xlu0 %v3179
        %v3181 = vpop.xlane.xlu0 %3180
        %v3182 = vrot.slane %v3181, 4
        %v3183 = vadd.f32 %v3181, %v3182
        %v3184 = vrot.slane %v3183, 2
        %v3185 = vadd.f32 %v3183, %v3184
        %v3186 = vrot.slane %v3185, 1
        %v3187 = vadd.f32 %v3185, %v3186
        %s3188 = vtos %v3187
        %v3189 = vrcp.pop 32768.0
        %v3190 = vmul.f32 32768.0, %v3189
        %v3191 = vsub.f32 1.0, %v3190
        %v3192 = vmul.f32 %v3189, %v3191
        %v3193 = vadd.f32 %v3189, %v3192
        %vm3194 = vweird.f32 %v3189
        %v3195 = vsel %vm3194, %v3189, %v3193
        %s3196 = vtos %v3195
        %s3197 = smul.f32 %s3188, %s3196
        %v3198 = vstv %s3197
        %v3199 = vsub.f32 %v3117, %v3198
        %v3200 = vsub.f32 %v3118, %v3198
        %v3201 = vsub.f32 %v3119, %v3198
        %v3202 = vsub.f32 %v3120, %v3198
        %v3203 = vsub.f32 %v3121, %v3198
        %v3204 = vsub.f32 %v3122, %v3198
        %v3205 = vsub.f32 %v3123, %v3198
        %v3206 = vsub.f32 %v3124, %v3198
        %v3207 = vsub.f32 %v3125, %v3198
        %v3208 = vsub.f32 %v3126, %v3198
        %v3209 = vsub.f32 %v3127, %v3198
        %v3210 = vsub.f32 %v3128, %v3198
        %v3211 = vsub.f32 %v3129, %v3198
        %v3212 = vsub.f32 %v3130, %v3198
        %v3213 = vsub.f32 %v3131, %v3198
        %v3214 = vsub.f32 %v3132, %v3198
        %v3215 = vsub.f32 %v3133, %v3198
        %v3216 = vsub.f32 %v3134, %v3198
        %v3217 = vsub.f32 %v3135, %v3198
        %v3218 = vsub.f32 %v3136, %v3198
        %v3219 = vsub.f32 %v3137, %v3198
        %v3220 = vsub.f32 %v3138, %v3198
        %v3221 = vsub.f32 %v3139, %v3198
        %v3222 = vsub.f32 %v3140, %v3198
        %v3223 = vsub.f32 %v3141, %v3198
        %v3224 = vsub.f32 %v3142, %v3198
        %v3225 = vsub.f32 %v3143, %v3198
        %v3226 = vsub.f32 %v3144, %v3198
        %v3227 = vsub.f32 %v3145, %v3198
        %v3228 = vsub.f32 %v3146, %v3198
        %v3229 = vsub.f32 %v3147, %v3198
        %v3230 = vsub.f32 %v3148, %v3198
        %v3231 = vmul.f32 %v3199, %v3199
        %v3232 = vmul.f32 %v3200, %v3200
        %v3233 = vmul.f32 %v3201, %v3201
        %v3234 = vmul.f32 %v3202, %v3202
        %v3235 = vmul.f32 %v3203, %v3203
        %v3236 = vmul.f32 %v3204, %v3204
        %v3237 = vmul.f32 %v3205, %v3205
        %v3238 = vmul.f32 %v3206, %v3206
        %v3239 = vmul.f32 %v3207, %v3207
        %v3240 = vmul.f32 %v3208, %v3208
        %v3241 = vmul.f32 %v3209, %v3209
        %v3242 = vmul.f32 %v3210, %v3210
        %v3243 = vmul.f32 %v3211, %v3211
        %v3244 = vmul.f32 %v3212, %v3212
        %v3245 = vmul.f32 %v3213, %v3213
        %v3246 = vmul.f32 %v3214, %v3214
        %v3247 = vmul.f32 %v3215, %v3215
        %v3248 = vmul.f32 %v3216, %v3216
        %v3249 = vmul.f32 %v3217, %v3217
        %v3250 = vmul.f32 %v3218, %v3218
        %v3251 = vmul.f32 %v3219, %v3219
        %v3252 = vmul.f32 %v3220, %v3220
        %v3253 = vmul.f32 %v3221, %v3221
        %v3254 = vmul.f32 %v3222, %v3222
        %v3255 = vmul.f32 %v3223, %v3223
        %v3256 = vmul.f32 %v3224, %v3224
        %v3257 = vmul.f32 %v3225, %v3225
        %v3258 = vmul.f32 %v3226, %v3226
        %v3259 = vmul.f32 %v3227, %v3227
        %v3260 = vmul.f32 %v3228, %v3228
        %v3261 = vmul.f32 %v3229, %v3229
        %v3262 = vmul.f32 %v3230, %v3230
        %v3263 = vadd.f32 %v3231, %v3232
        %v3264 = vadd.f32 %v3263, %v3233
        %v3265 = vadd.f32 %v3264, %v3234
        %v3266 = vadd.f32 %v3265, %v3235
        %v3267 = vadd.f32 %v3266, %v3236
        %v3268 = vadd.f32 %v3267, %v3237
        %v3269 = vadd.f32 %v3268, %v3238
        %v3270 = vadd.f32 %v3269, %v3239
        %v3271 = vadd.f32 %v3270, %v3240
        %v3272 = vadd.f32 %v3271, %v3241
        %v3273 = vadd.f32 %v3272, %v3242
        %v3274 = vadd.f32 %v3273, %v3243
        %v3275 = vadd.f32 %v3274, %v3244
        %v3276 = vadd.f32 %v3275, %v3245
        %v3277 = vadd.f32 %v3276, %v3246
        %v3278 = vadd.f32 %v3277, %v3247
        %v3279 = vadd.f32 %v3278, %v3248
        %v3280 = vadd.f32 %v3279, %v3249
        %v3281 = vadd.f32 %v3280, %v3250
        %v3282 = vadd.f32 %v3281, %v3251
        %v3283 = vadd.f32 %v3282, %v3252
        %v3284 = vadd.f32 %v3283, %v3253
        %v3285 = vadd.f32 %v3284, %v3254
        %v3286 = vadd.f32 %v3285, %v3255
        %v3287 = vadd.f32 %v3286, %v3256
        %v3288 = vadd.f32 %v3287, %v3257
        %v3289 = vadd.f32 %v3288, %v3258
        %v3290 = vadd.f32 %v3289, %v3259
        %v3291 = vadd.f32 %v3290, %v3260
        %v3292 = vadd.f32 %v3291, %v3261
        %v3293 = vadd.f32 %v3292, %v3262
        %3294 = vadd.xlane.f32.xlu0 %v3293
        %v3295 = vpop.xlane.xlu0 %3294
        %v3296 = vrot.slane %v3295, 4
        %v3297 = vadd.f32 %v3295, %v3296
        %v3298 = vrot.slane %v3297, 2
        %v3299 = vadd.f32 %v3297, %v3298
        %v3300 = vrot.slane %v3299, 1
        %v3301 = vadd.f32 %v3299, %v3300
        %s3302 = vtos %v3301
        %v3303 = vrcp.pop 32768.0
        %v3304 = vmul.f32 32768.0, %v3303
        %v3305 = vsub.f32 1.0, %v3304
        %v3306 = vmul.f32 %v3303, %v3305
        %v3307 = vadd.f32 %v3303, %v3306
        %vm3308 = vweird.f32 %v3303
        %v3309 = vsel %vm3308, %v3303, %v3307
        %s3310 = vtos %v3309
        %s3311 = smul.f32 %s3302, %s3310
        %s3312 = sadd.f32 %s3311, 1e-06
        %v3313 = vstv %s3312
        %v3314 = vrsqrt.pop %v3313
        %v3315 = vmul.f32 %v3314, %v3313
        %v3316 = vmul.f32 %v3315, %v3314
        %v3317 = vmul.f32 0.5, %v3316
        %v3318 = vsub.f32 1.5, %v3317
        %v3319 = vmul.f32 %v3314, %v3318
        %vm3320 = vweird.f32 %v3313
        %vm3321 = vweird.f32 %v3314
        %vm3322 = vmor %vm3320, %vm3321
        %v3323 = vsel %vm3322, %v3314, %v3319
        %s3324 = vtos %v3323
        %v3325 = vld [vmem:[%s473] sm:$0xff]
        %v3326 = vld [vmem:[%s473 + $0x8] sm:$0xff]
        %v3327 = vld [vmem:[%s473 + $0x10] sm:$0xff]
        %v3328 = vld [vmem:[%s473 + $0x18] sm:$0xff]
        %v3329 = vstv %s3324
        %v3330 = vmul.f32 %v3325, %v3329
        %v3331 = vmul.f32 %v3326, %v3329
        %v3332 = vmul.f32 %v3327, %v3329
        %v3333 = vmul.f32 %v3328, %v3329
        %v3334 = vld [vmem:[%s478] sm:$0xff]
        %v3335 = vld [vmem:[%s478 + $0x8] sm:$0xff]
        %v3336 = vld [vmem:[%s478 + $0x10] sm:$0xff]
        %v3337 = vld [vmem:[%s478 + $0x18] sm:$0xff]
        %v3338 = vmul.f32 %v3198, %v3330
        %v3339 = vmul.f32 %v3198, %v3331
        %v3340 = vmul.f32 %v3198, %v3332
        %v3341 = vmul.f32 %v3198, %v3333
        %v3342 = vsub.f32 %v3334, %v3338
        %v3343 = vsub.f32 %v3335, %v3339
        %v3344 = vsub.f32 %v3336, %v3340
        %v3345 = vsub.f32 %v3337, %v3341
        %3347 = vset.pattern.permute.xlu0 0
        %3348 = vperm.xlu0 %3347, %v3330
        %v3349 = vpop.permute.xlu0 %3348
        %3352 = vset.pattern.permute.xlu0 0
        %3353 = vperm.xlu0 %3352, %v3331
        %v3354 = vpop.permute.xlu0 %3353
        %3357 = vset.pattern.permute.xlu0 0
        %3358 = vperm.xlu0 %3357, %v3332
        %v3359 = vpop.permute.xlu0 %3358
        %3362 = vset.pattern.permute.xlu0 0
        %3363 = vperm.xlu0 %3362, %v3333
        %v3364 = vpop.permute.xlu0 %3363
        %v3366 = vmul.f32 %v3117, %v3349
        %v3367 = vmul.f32 %v3118, %v3349
        %v3368 = vmul.f32 %v3119, %v3349
        %v3369 = vmul.f32 %v3120, %v3349
        %v3370 = vmul.f32 %v3121, %v3349
        %v3371 = vmul.f32 %v3122, %v3349
        %v3372 = vmul.f32 %v3123, %v3349
        %v3373 = vmul.f32 %v3124, %v3349
        %v3374 = vmul.f32 %v3125, %v3354
        %v3375 = vmul.f32 %v3126, %v3354
        %v3376 = vmul.f32 %v3127, %v3354
        %v3377 = vmul.f32 %v3128, %v3354
        %v3378 = vmul.f32 %v3129, %v3354
        %v3379 = vmul.f32 %v3130, %v3354
        %v3380 = vmul.f32 %v3131, %v3354
        %v3381 = vmul.f32 %v3132, %v3354
        %v3382 = vmul.f32 %v3133, %v3359
        %v3383 = vmul.f32 %v3134, %v3359
        %v3384 = vmul.f32 %v3135, %v3359
        %v3385 = vmul.f32 %v3136, %v3359
        %v3386 = vmul.f32 %v3137, %v3359
        %v3387 = vmul.f32 %v3138, %v3359
        %v3388 = vmul.f32 %v3139, %v3359
        %v3389 = vmul.f32 %v3140, %v3359
        %v3390 = vmul.f32 %v3141, %v3364
        %v3391 = vmul.f32 %v3142, %v3364
        %v3392 = vmul.f32 %v3143, %v3364
        %v3393 = vmul.f32 %v3144, %v3364
        %v3394 = vmul.f32 %v3145, %v3364
        %v3395 = vmul.f32 %v3146, %v3364
        %v3396 = vmul.f32 %v3147, %v3364
        %v3397 = vmul.f32 %v3148, %v3364
        %3399 = vset.pattern.permute.xlu0 0
        %3400 = vperm.xlu0 %3399, %v3342
        %v3401 = vpop.permute.xlu0 %3400
        %3404 = vset.pattern.permute.xlu0 0
        %3405 = vperm.xlu0 %3404, %v3343
        %v3406 = vpop.permute.xlu0 %3405
        %3409 = vset.pattern.permute.xlu0 0
        %3410 = vperm.xlu0 %3409, %v3344
        %v3411 = vpop.permute.xlu0 %3410
        %3414 = vset.pattern.permute.xlu0 0
        %3415 = vperm.xlu0 %3414, %v3345
        %v3416 = vpop.permute.xlu0 %3415
        %v3418 = vadd.f32 %v3366, %v3401
        %v3419 = vadd.f32 %v3367, %v3401
        %v3420 = vadd.f32 %v3368, %v3401
        %v3421 = vadd.f32 %v3369, %v3401
        %v3422 = vadd.f32 %v3370, %v3401
        %v3423 = vadd.f32 %v3371, %v3401
        %v3424 = vadd.f32 %v3372, %v3401
        %v3425 = vadd.f32 %v3373, %v3401
        %v3426 = vadd.f32 %v3374, %v3406
        %v3427 = vadd.f32 %v3375, %v3406
        %v3428 = vadd.f32 %v3376, %v3406
        %v3429 = vadd.f32 %v3377, %v3406
        %v3430 = vadd.f32 %v3378, %v3406
        %v3431 = vadd.f32 %v3379, %v3406
        %v3432 = vadd.f32 %v3380, %v3406
        %v3433 = vadd.f32 %v3381, %v3406
        %v3434 = vadd.f32 %v3382, %v3411
        %v3435 = vadd.f32 %v3383, %v3411
        %v3436 = vadd.f32 %v3384, %v3411
        %v3437 = vadd.f32 %v3385, %v3411
        %v3438 = vadd.f32 %v3386, %v3411
        %v3439 = vadd.f32 %v3387, %v3411
        %v3440 = vadd.f32 %v3388, %v3411
        %v3441 = vadd.f32 %v3389, %v3411
        %v3442 = vadd.f32 %v3390, %v3416
        %v3443 = vadd.f32 %v3391, %v3416
        %v3444 = vadd.f32 %v3392, %v3416
        %v3445 = vadd.f32 %v3393, %v3416
        %v3446 = vadd.f32 %v3394, %v3416
        %v3447 = vadd.f32 %v3395, %v3416
        %v3448 = vadd.f32 %v3396, %v3416
        %v3449 = vadd.f32 %v3397, %v3416
        %v3450 = vxor.u32 %v3418, 2147483648
        %v3451 = vxor.u32 %v3419, 2147483648
        %v3452 = vxor.u32 %v3420, 2147483648
        %v3453 = vxor.u32 %v3421, 2147483648
        %v3454 = vxor.u32 %v3422, 2147483648
        %v3455 = vxor.u32 %v3423, 2147483648
        %v3456 = vxor.u32 %v3424, 2147483648
        %v3457 = vxor.u32 %v3425, 2147483648
        %v3458 = vxor.u32 %v3426, 2147483648
        %v3459 = vxor.u32 %v3427, 2147483648
        %v3460 = vxor.u32 %v3428, 2147483648
        %v3461 = vxor.u32 %v3429, 2147483648
        %v3462 = vxor.u32 %v3430, 2147483648
        %v3463 = vxor.u32 %v3431, 2147483648
        %v3464 = vxor.u32 %v3432, 2147483648
        %v3465 = vxor.u32 %v3433, 2147483648
        %v3466 = vxor.u32 %v3434, 2147483648
        %v3467 = vxor.u32 %v3435, 2147483648
        %v3468 = vxor.u32 %v3436, 2147483648
        %v3469 = vxor.u32 %v3437, 2147483648
        %v3470 = vxor.u32 %v3438, 2147483648
        %v3471 = vxor.u32 %v3439, 2147483648
        %v3472 = vxor.u32 %v3440, 2147483648
        %v3473 = vxor.u32 %v3441, 2147483648
        %v3474 = vxor.u32 %v3442, 2147483648
        %v3475 = vxor.u32 %v3443, 2147483648
        %v3476 = vxor.u32 %v3444, 2147483648
        %v3477 = vxor.u32 %v3445, 2147483648
        %v3478 = vxor.u32 %v3446, 2147483648
        %v3479 = vxor.u32 %v3447, 2147483648
        %v3480 = vxor.u32 %v3448, 2147483648
        %v3481 = vxor.u32 %v3449, 2147483648
        %v3482 = vmul.f32 %v3450, 1.442695
        %v3483 = vpow.pop %v3482
        %v3484 = vmul.f32 %v3451, 1.442695
        %v3485 = vpow.pop %v3484
        %v3486 = vmul.f32 %v3452, 1.442695
        %v3487 = vpow.pop %v3486
        %v3488 = vmul.f32 %v3453, 1.442695
        %v3489 = vpow.pop %v3488
        %v3490 = vmul.f32 %v3454, 1.442695
        %v3491 = vpow.pop %v3490
        %v3492 = vmul.f32 %v3455, 1.442695
        %v3493 = vpow.pop %v3492
        %v3494 = vmul.f32 %v3456, 1.442695
        %v3495 = vpow.pop %v3494
        %v3496 = vmul.f32 %v3457, 1.442695
        %v3497 = vpow.pop %v3496
        %v3498 = vmul.f32 %v3458, 1.442695
        %v3499 = vpow.pop %v3498
        %v3500 = vmul.f32 %v3459, 1.442695
        %v3501 = vpow.pop %v3500
        %v3502 = vmul.f32 %v3460, 1.442695
        %v3503 = vpow.pop %v3502
        %v3504 = vmul.f32 %v3461, 1.442695
        %v3505 = vpow.pop %v3504
        %v3506 = vmul.f32 %v3462, 1.442695
        %v3507 = vpow.pop %v3506
        %v3508 = vmul.f32 %v3463, 1.442695
        %v3509 = vpow.pop %v3508
        %v3510 = vmul.f32 %v3464, 1.442695
        %v3511 = vpow.pop %v3510
        %v3512 = vmul.f32 %v3465, 1.442695
        %v3513 = vpow.pop %v3512
        %v3514 = vmul.f32 %v3466, 1.442695
        %v3515 = vpow.pop %v3514
        %v3516 = vmul.f32 %v3467, 1.442695
        %v3517 = vpow.pop %v3516
        %v3518 = vmul.f32 %v3468, 1.442695
        %v3519 = vpow.pop %v3518
        %v3520 = vmul.f32 %v3469, 1.442695
        %v3521 = vpow.pop %v3520
        %v3522 = vmul.f32 %v3470, 1.442695
        %v3523 = vpow.pop %v3522
        %v3524 = vmul.f32 %v3471, 1.442695
        %v3525 = vpow.pop %v3524
        %v3526 = vmul.f32 %v3472, 1.442695
        %v3527 = vpow.pop %v3526
        %v3528 = vmul.f32 %v3473, 1.442695
        %v3529 = vpow.pop %v3528
        %v3530 = vmul.f32 %v3474, 1.442695
        %v3531 = vpow.pop %v3530
        %v3532 = vmul.f32 %v3475, 1.442695
        %v3533 = vpow.pop %v3532
        %v3534 = vmul.f32 %v3476, 1.442695
        %v3535 = vpow.pop %v3534
        %v3536 = vmul.f32 %v3477, 1.442695
        %v3537 = vpow.pop %v3536
        %v3538 = vmul.f32 %v3478, 1.442695
        %v3539 = vpow.pop %v3538
        %v3540 = vmul.f32 %v3479, 1.442695
        %v3541 = vpow.pop %v3540
        %v3542 = vmul.f32 %v3480, 1.442695
        %v3543 = vpow.pop %v3542
        %v3544 = vmul.f32 %v3481, 1.442695
        %v3545 = vpow.pop %v3544
        %v3546 = vadd.f32 %v3483, 1.0
        %v3547 = vadd.f32 %v3485, 1.0
        %v3548 = vadd.f32 %v3487, 1.0
        %v3549 = vadd.f32 %v3489, 1.0
        %v3550 = vadd.f32 %v3491, 1.0
        %v3551 = vadd.f32 %v3493, 1.0
        %v3552 = vadd.f32 %v3495, 1.0
        %v3553 = vadd.f32 %v3497, 1.0
        %v3554 = vadd.f32 %v3499, 1.0
        %v3555 = vadd.f32 %v3501, 1.0
        %v3556 = vadd.f32 %v3503, 1.0
        %v3557 = vadd.f32 %v3505, 1.0
        %v3558 = vadd.f32 %v3507, 1.0
        %v3559 = vadd.f32 %v3509, 1.0
        %v3560 = vadd.f32 %v3511, 1.0
        %v3561 = vadd.f32 %v3513, 1.0
        %v3562 = vadd.f32 %v3515, 1.0
        %v3563 = vadd.f32 %v3517, 1.0
        %v3564 = vadd.f32 %v3519, 1.0
        %v3565 = vadd.f32 %v3521, 1.0
        %v3566 = vadd.f32 %v3523, 1.0
        %v3567 = vadd.f32 %v3525, 1.0
        %v3568 = vadd.f32 %v3527, 1.0
        %v3569 = vadd.f32 %v3529, 1.0
        %v3570 = vadd.f32 %v3531, 1.0
        %v3571 = vadd.f32 %v3533, 1.0
        %v3572 = vadd.f32 %v3535, 1.0
        %v3573 = vadd.f32 %v3537, 1.0
        %v3574 = vadd.f32 %v3539, 1.0
        %v3575 = vadd.f32 %v3541, 1.0
        %v3576 = vadd.f32 %v3543, 1.0
        %v3577 = vadd.f32 %v3545, 1.0
        %v3578 = vrcp.pop %v3546
        %v3579 = vmul.f32 %v3546, %v3578
        %v3580 = vsub.f32 1.0, %v3579
        %v3581 = vmul.f32 %v3578, %v3580
        %v3582 = vadd.f32 %v3578, %v3581
        %vm3583 = vweird.f32 %v3546
        %vm3584 = vweird.f32 %v3578
        %vm3585 = vmor %vm3583, %vm3584
        %v3586 = vsel %vm3585, %v3578, %v3582
        %v3587 = vand.u32 2147483647, %v3546
        %vm3588 = vcmp.eq.f32.partialorder %v3587, 8.507059e+37
        %v3589 = vand.u32 %v3546, 2147483648
        %v3590 = vor.u32 1.1754944e-38, %v3589
        %v3591 = vsel %vm3588, %v3590, %v3586
        %v3592 = vmul.f32 1.0, %v3591
        %v3593 = vrcp.pop %v3547
        %v3594 = vmul.f32 %v3547, %v3593
        %v3595 = vsub.f32 1.0, %v3594
        %v3596 = vmul.f32 %v3593, %v3595
        %v3597 = vadd.f32 %v3593, %v3596
        %vm3598 = vweird.f32 %v3547
        %vm3599 = vweird.f32 %v3593
        %vm3600 = vmor %vm3598, %vm3599
        %v3601 = vsel %vm3600, %v3593, %v3597
        %v3602 = vand.u32 2147483647, %v3547
        %vm3603 = vcmp.eq.f32.partialorder %v3602, 8.507059e+37
        %v3604 = vand.u32 %v3547, 2147483648
        %v3605 = vor.u32 1.1754944e-38, %v3604
        %v3606 = vsel %vm3603, %v3605, %v3601
        %v3607 = vmul.f32 1.0, %v3606
        %v3608 = vrcp.pop %v3548
        %v3609 = vmul.f32 %v3548, %v3608
        %v3610 = vsub.f32 1.0, %v3609
        %v3611 = vmul.f32 %v3608, %v3610
        %v3612 = vadd.f32 %v3608, %v3611
        %vm3613 = vweird.f32 %v3548
        %vm3614 = vweird.f32 %v3608
        %vm3615 = vmor %vm3613, %vm3614
        %v3616 = vsel %vm3615, %v3608, %v3612
        %v3617 = vand.u32 2147483647, %v3548
        %vm3618 = vcmp.eq.f32.partialorder %v3617, 8.507059e+37
        %v3619 = vand.u32 %v3548, 2147483648
        %v3620 = vor.u32 1.1754944e-38, %v3619
        %v3621 = vsel %vm3618, %v3620, %v3616
        %v3622 = vmul.f32 1.0, %v3621
        %v3623 = vrcp.pop %v3549
        %v3624 = vmul.f32 %v3549, %v3623
        %v3625 = vsub.f32 1.0, %v3624
        %v3626 = vmul.f32 %v3623, %v3625
        %v3627 = vadd.f32 %v3623, %v3626
        %vm3628 = vweird.f32 %v3549
        %vm3629 = vweird.f32 %v3623
        %vm3630 = vmor %vm3628, %vm3629
        %v3631 = vsel %vm3630, %v3623, %v3627
        %v3632 = vand.u32 2147483647, %v3549
        %vm3633 = vcmp.eq.f32.partialorder %v3632, 8.507059e+37
        %v3634 = vand.u32 %v3549, 2147483648
        %v3635 = vor.u32 1.1754944e-38, %v3634
        %v3636 = vsel %vm3633, %v3635, %v3631
        %v3637 = vmul.f32 1.0, %v3636
        %v3638 = vrcp.pop %v3550
        %v3639 = vmul.f32 %v3550, %v3638
        %v3640 = vsub.f32 1.0, %v3639
        %v3641 = vmul.f32 %v3638, %v3640
        %v3642 = vadd.f32 %v3638, %v3641
        %vm3643 = vweird.f32 %v3550
        %vm3644 = vweird.f32 %v3638
        %vm3645 = vmor %vm3643, %vm3644
        %v3646 = vsel %vm3645, %v3638, %v3642
        %v3647 = vand.u32 2147483647, %v3550
        %vm3648 = vcmp.eq.f32.partialorder %v3647, 8.507059e+37
        %v3649 = vand.u32 %v3550, 2147483648
        %v3650 = vor.u32 1.1754944e-38, %v3649
        %v3651 = vsel %vm3648, %v3650, %v3646
        %v3652 = vmul.f32 1.0, %v3651
        %v3653 = vrcp.pop %v3551
        %v3654 = vmul.f32 %v3551, %v3653
        %v3655 = vsub.f32 1.0, %v3654
        %v3656 = vmul.f32 %v3653, %v3655
        %v3657 = vadd.f32 %v3653, %v3656
        %vm3658 = vweird.f32 %v3551
        %vm3659 = vweird.f32 %v3653
        %vm3660 = vmor %vm3658, %vm3659
        %v3661 = vsel %vm3660, %v3653, %v3657
        %v3662 = vand.u32 2147483647, %v3551
        %vm3663 = vcmp.eq.f32.partialorder %v3662, 8.507059e+37
        %v3664 = vand.u32 %v3551, 2147483648
        %v3665 = vor.u32 1.1754944e-38, %v3664
        %v3666 = vsel %vm3663, %v3665, %v3661
        %v3667 = vmul.f32 1.0, %v3666
        %v3668 = vrcp.pop %v3552
        %v3669 = vmul.f32 %v3552, %v3668
        %v3670 = vsub.f32 1.0, %v3669
        %v3671 = vmul.f32 %v3668, %v3670
        %v3672 = vadd.f32 %v3668, %v3671
        %vm3673 = vweird.f32 %v3552
        %vm3674 = vweird.f32 %v3668
        %vm3675 = vmor %vm3673, %vm3674
        %v3676 = vsel %vm3675, %v3668, %v3672
        %v3677 = vand.u32 2147483647, %v3552
        %vm3678 = vcmp.eq.f32.partialorder %v3677, 8.507059e+37
        %v3679 = vand.u32 %v3552, 2147483648
        %v3680 = vor.u32 1.1754944e-38, %v3679
        %v3681 = vsel %vm3678, %v3680, %v3676
        %v3682 = vmul.f32 1.0, %v3681
        %v3683 = vrcp.pop %v3553
        %v3684 = vmul.f32 %v3553, %v3683
        %v3685 = vsub.f32 1.0, %v3684
        %v3686 = vmul.f32 %v3683, %v3685
        %v3687 = vadd.f32 %v3683, %v3686
        %vm3688 = vweird.f32 %v3553
        %vm3689 = vweird.f32 %v3683
        %vm3690 = vmor %vm3688, %vm3689
        %v3691 = vsel %vm3690, %v3683, %v3687
        %v3692 = vand.u32 2147483647, %v3553
        %vm3693 = vcmp.eq.f32.partialorder %v3692, 8.507059e+37
        %v3694 = vand.u32 %v3553, 2147483648
        %v3695 = vor.u32 1.1754944e-38, %v3694
        %v3696 = vsel %vm3693, %v3695, %v3691
        %v3697 = vmul.f32 1.0, %v3696
        %v3698 = vrcp.pop %v3554
        %v3699 = vmul.f32 %v3554, %v3698
        %v3700 = vsub.f32 1.0, %v3699
        %v3701 = vmul.f32 %v3698, %v3700
        %v3702 = vadd.f32 %v3698, %v3701
        %vm3703 = vweird.f32 %v3554
        %vm3704 = vweird.f32 %v3698
        %vm3705 = vmor %vm3703, %vm3704
        %v3706 = vsel %vm3705, %v3698, %v3702
        %v3707 = vand.u32 2147483647, %v3554
        %vm3708 = vcmp.eq.f32.partialorder %v3707, 8.507059e+37
        %v3709 = vand.u32 %v3554, 2147483648
        %v3710 = vor.u32 1.1754944e-38, %v3709
        %v3711 = vsel %vm3708, %v3710, %v3706
        %v3712 = vmul.f32 1.0, %v3711
        %v3713 = vrcp.pop %v3555
        %v3714 = vmul.f32 %v3555, %v3713
        %v3715 = vsub.f32 1.0, %v3714
        %v3716 = vmul.f32 %v3713, %v3715
        %v3717 = vadd.f32 %v3713, %v3716
        %vm3718 = vweird.f32 %v3555
        %vm3719 = vweird.f32 %v3713
        %vm3720 = vmor %vm3718, %vm3719
        %v3721 = vsel %vm3720, %v3713, %v3717
        %v3722 = vand.u32 2147483647, %v3555
        %vm3723 = vcmp.eq.f32.partialorder %v3722, 8.507059e+37
        %v3724 = vand.u32 %v3555, 2147483648
        %v3725 = vor.u32 1.1754944e-38, %v3724
        %v3726 = vsel %vm3723, %v3725, %v3721
        %v3727 = vmul.f32 1.0, %v3726
        %v3728 = vrcp.pop %v3556
        %v3729 = vmul.f32 %v3556, %v3728
        %v3730 = vsub.f32 1.0, %v3729
        %v3731 = vmul.f32 %v3728, %v3730
        %v3732 = vadd.f32 %v3728, %v3731
        %vm3733 = vweird.f32 %v3556
        %vm3734 = vweird.f32 %v3728
        %vm3735 = vmor %vm3733, %vm3734
        %v3736 = vsel %vm3735, %v3728, %v3732
        %v3737 = vand.u32 2147483647, %v3556
        %vm3738 = vcmp.eq.f32.partialorder %v3737, 8.507059e+37
        %v3739 = vand.u32 %v3556, 2147483648
        %v3740 = vor.u32 1.1754944e-38, %v3739
        %v3741 = vsel %vm3738, %v3740, %v3736
        %v3742 = vmul.f32 1.0, %v3741
        %v3743 = vrcp.pop %v3557
        %v3744 = vmul.f32 %v3557, %v3743
        %v3745 = vsub.f32 1.0, %v3744
        %v3746 = vmul.f32 %v3743, %v3745
        %v3747 = vadd.f32 %v3743, %v3746
        %vm3748 = vweird.f32 %v3557
        %vm3749 = vweird.f32 %v3743
        %vm3750 = vmor %vm3748, %vm3749
        %v3751 = vsel %vm3750, %v3743, %v3747
        %v3752 = vand.u32 2147483647, %v3557
        %vm3753 = vcmp.eq.f32.partialorder %v3752, 8.507059e+37
        %v3754 = vand.u32 %v3557, 2147483648
        %v3755 = vor.u32 1.1754944e-38, %v3754
        %v3756 = vsel %vm3753, %v3755, %v3751
        %v3757 = vmul.f32 1.0, %v3756
        %v3758 = vrcp.pop %v3558
        %v3759 = vmul.f32 %v3558, %v3758
        %v3760 = vsub.f32 1.0, %v3759
        %v3761 = vmul.f32 %v3758, %v3760
        %v3762 = vadd.f32 %v3758, %v3761
        %vm3763 = vweird.f32 %v3558
        %vm3764 = vweird.f32 %v3758
        %vm3765 = vmor %vm3763, %vm3764
        %v3766 = vsel %vm3765, %v3758, %v3762
        %v3767 = vand.u32 2147483647, %v3558
        %vm3768 = vcmp.eq.f32.partialorder %v3767, 8.507059e+37
        %v3769 = vand.u32 %v3558, 2147483648
        %v3770 = vor.u32 1.1754944e-38, %v3769
        %v3771 = vsel %vm3768, %v3770, %v3766
        %v3772 = vmul.f32 1.0, %v3771
        %v3773 = vrcp.pop %v3559
        %v3774 = vmul.f32 %v3559, %v3773
        %v3775 = vsub.f32 1.0, %v3774
        %v3776 = vmul.f32 %v3773, %v3775
        %v3777 = vadd.f32 %v3773, %v3776
        %vm3778 = vweird.f32 %v3559
        %vm3779 = vweird.f32 %v3773
        %vm3780 = vmor %vm3778, %vm3779
        %v3781 = vsel %vm3780, %v3773, %v3777
        %v3782 = vand.u32 2147483647, %v3559
        %vm3783 = vcmp.eq.f32.partialorder %v3782, 8.507059e+37
        %v3784 = vand.u32 %v3559, 2147483648
        %v3785 = vor.u32 1.1754944e-38, %v3784
        %v3786 = vsel %vm3783, %v3785, %v3781
        %v3787 = vmul.f32 1.0, %v3786
        %v3788 = vrcp.pop %v3560
        %v3789 = vmul.f32 %v3560, %v3788
        %v3790 = vsub.f32 1.0, %v3789
        %v3791 = vmul.f32 %v3788, %v3790
        %v3792 = vadd.f32 %v3788, %v3791
        %vm3793 = vweird.f32 %v3560
        %vm3794 = vweird.f32 %v3788
        %vm3795 = vmor %vm3793, %vm3794
        %v3796 = vsel %vm3795, %v3788, %v3792
        %v3797 = vand.u32 2147483647, %v3560
        %vm3798 = vcmp.eq.f32.partialorder %v3797, 8.507059e+37
        %v3799 = vand.u32 %v3560, 2147483648
        %v3800 = vor.u32 1.1754944e-38, %v3799
        %v3801 = vsel %vm3798, %v3800, %v3796
        %v3802 = vmul.f32 1.0, %v3801
        %v3803 = vrcp.pop %v3561
        %v3804 = vmul.f32 %v3561, %v3803
        %v3805 = vsub.f32 1.0, %v3804
        %v3806 = vmul.f32 %v3803, %v3805
        %v3807 = vadd.f32 %v3803, %v3806
        %vm3808 = vweird.f32 %v3561
        %vm3809 = vweird.f32 %v3803
        %vm3810 = vmor %vm3808, %vm3809
        %v3811 = vsel %vm3810, %v3803, %v3807
        %v3812 = vand.u32 2147483647, %v3561
        %vm3813 = vcmp.eq.f32.partialorder %v3812, 8.507059e+37
        %v3814 = vand.u32 %v3561, 2147483648
        %v3815 = vor.u32 1.1754944e-38, %v3814
        %v3816 = vsel %vm3813, %v3815, %v3811
        %v3817 = vmul.f32 1.0, %v3816
        %v3818 = vrcp.pop %v3562
        %v3819 = vmul.f32 %v3562, %v3818
        %v3820 = vsub.f32 1.0, %v3819
        %v3821 = vmul.f32 %v3818, %v3820
        %v3822 = vadd.f32 %v3818, %v3821
        %vm3823 = vweird.f32 %v3562
        %vm3824 = vweird.f32 %v3818
        %vm3825 = vmor %vm3823, %vm3824
        %v3826 = vsel %vm3825, %v3818, %v3822
        %v3827 = vand.u32 2147483647, %v3562
        %vm3828 = vcmp.eq.f32.partialorder %v3827, 8.507059e+37
        %v3829 = vand.u32 %v3562, 2147483648
        %v3830 = vor.u32 1.1754944e-38, %v3829
        %v3831 = vsel %vm3828, %v3830, %v3826
        %v3832 = vmul.f32 1.0, %v3831
        %v3833 = vrcp.pop %v3563
        %v3834 = vmul.f32 %v3563, %v3833
        %v3835 = vsub.f32 1.0, %v3834
        %v3836 = vmul.f32 %v3833, %v3835
        %v3837 = vadd.f32 %v3833, %v3836
        %vm3838 = vweird.f32 %v3563
        %vm3839 = vweird.f32 %v3833
        %vm3840 = vmor %vm3838, %vm3839
        %v3841 = vsel %vm3840, %v3833, %v3837
        %v3842 = vand.u32 2147483647, %v3563
        %vm3843 = vcmp.eq.f32.partialorder %v3842, 8.507059e+37
        %v3844 = vand.u32 %v3563, 2147483648
        %v3845 = vor.u32 1.1754944e-38, %v3844
        %v3846 = vsel %vm3843, %v3845, %v3841
        %v3847 = vmul.f32 1.0, %v3846
        %v3848 = vrcp.pop %v3564
        %v3849 = vmul.f32 %v3564, %v3848
        %v3850 = vsub.f32 1.0, %v3849
        %v3851 = vmul.f32 %v3848, %v3850
        %v3852 = vadd.f32 %v3848, %v3851
        %vm3853 = vweird.f32 %v3564
        %vm3854 = vweird.f32 %v3848
        %vm3855 = vmor %vm3853, %vm3854
        %v3856 = vsel %vm3855, %v3848, %v3852
        %v3857 = vand.u32 2147483647, %v3564
        %vm3858 = vcmp.eq.f32.partialorder %v3857, 8.507059e+37
        %v3859 = vand.u32 %v3564, 2147483648
        %v3860 = vor.u32 1.1754944e-38, %v3859
        %v3861 = vsel %vm3858, %v3860, %v3856
        %v3862 = vmul.f32 1.0, %v3861
        %v3863 = vrcp.pop %v3565
        %v3864 = vmul.f32 %v3565, %v3863
        %v3865 = vsub.f32 1.0, %v3864
        %v3866 = vmul.f32 %v3863, %v3865
        %v3867 = vadd.f32 %v3863, %v3866
        %vm3868 = vweird.f32 %v3565
        %vm3869 = vweird.f32 %v3863
        %vm3870 = vmor %vm3868, %vm3869
        %v3871 = vsel %vm3870, %v3863, %v3867
        %v3872 = vand.u32 2147483647, %v3565
        %vm3873 = vcmp.eq.f32.partialorder %v3872, 8.507059e+37
        %v3874 = vand.u32 %v3565, 2147483648
        %v3875 = vor.u32 1.1754944e-38, %v3874
        %v3876 = vsel %vm3873, %v3875, %v3871
        %v3877 = vmul.f32 1.0, %v3876
        %v3878 = vrcp.pop %v3566
        %v3879 = vmul.f32 %v3566, %v3878
        %v3880 = vsub.f32 1.0, %v3879
        %v3881 = vmul.f32 %v3878, %v3880
        %v3882 = vadd.f32 %v3878, %v3881
        %vm3883 = vweird.f32 %v3566
        %vm3884 = vweird.f32 %v3878
        %vm3885 = vmor %vm3883, %vm3884
        %v3886 = vsel %vm3885, %v3878, %v3882
        %v3887 = vand.u32 2147483647, %v3566
        %vm3888 = vcmp.eq.f32.partialorder %v3887, 8.507059e+37
        %v3889 = vand.u32 %v3566, 2147483648
        %v3890 = vor.u32 1.1754944e-38, %v3889
        %v3891 = vsel %vm3888, %v3890, %v3886
        %v3892 = vmul.f32 1.0, %v3891
        %v3893 = vrcp.pop %v3567
        %v3894 = vmul.f32 %v3567, %v3893
        %v3895 = vsub.f32 1.0, %v3894
        %v3896 = vmul.f32 %v3893, %v3895
        %v3897 = vadd.f32 %v3893, %v3896
        %vm3898 = vweird.f32 %v3567
        %vm3899 = vweird.f32 %v3893
        %vm3900 = vmor %vm3898, %vm3899
        %v3901 = vsel %vm3900, %v3893, %v3897
        %v3902 = vand.u32 2147483647, %v3567
        %vm3903 = vcmp.eq.f32.partialorder %v3902, 8.507059e+37
        %v3904 = vand.u32 %v3567, 2147483648
        %v3905 = vor.u32 1.1754944e-38, %v3904
        %v3906 = vsel %vm3903, %v3905, %v3901
        %v3907 = vmul.f32 1.0, %v3906
        %v3908 = vrcp.pop %v3568
        %v3909 = vmul.f32 %v3568, %v3908
        %v3910 = vsub.f32 1.0, %v3909
        %v3911 = vmul.f32 %v3908, %v3910
        %v3912 = vadd.f32 %v3908, %v3911
        %vm3913 = vweird.f32 %v3568
        %vm3914 = vweird.f32 %v3908
        %vm3915 = vmor %vm3913, %vm3914
        %v3916 = vsel %vm3915, %v3908, %v3912
        %v3917 = vand.u32 2147483647, %v3568
        %vm3918 = vcmp.eq.f32.partialorder %v3917, 8.507059e+37
        %v3919 = vand.u32 %v3568, 2147483648
        %v3920 = vor.u32 1.1754944e-38, %v3919
        %v3921 = vsel %vm3918, %v3920, %v3916
        %v3922 = vmul.f32 1.0, %v3921
        %v3923 = vrcp.pop %v3569
        %v3924 = vmul.f32 %v3569, %v3923
        %v3925 = vsub.f32 1.0, %v3924
        %v3926 = vmul.f32 %v3923, %v3925
        %v3927 = vadd.f32 %v3923, %v3926
        %vm3928 = vweird.f32 %v3569
        %vm3929 = vweird.f32 %v3923
        %vm3930 = vmor %vm3928, %vm3929
        %v3931 = vsel %vm3930, %v3923, %v3927
        %v3932 = vand.u32 2147483647, %v3569
        %vm3933 = vcmp.eq.f32.partialorder %v3932, 8.507059e+37
        %v3934 = vand.u32 %v3569, 2147483648
        %v3935 = vor.u32 1.1754944e-38, %v3934
        %v3936 = vsel %vm3933, %v3935, %v3931
        %v3937 = vmul.f32 1.0, %v3936
        %v3938 = vrcp.pop %v3570
        %v3939 = vmul.f32 %v3570, %v3938
        %v3940 = vsub.f32 1.0, %v3939
        %v3941 = vmul.f32 %v3938, %v3940
        %v3942 = vadd.f32 %v3938, %v3941
        %vm3943 = vweird.f32 %v3570
        %vm3944 = vweird.f32 %v3938
        %vm3945 = vmor %vm3943, %vm3944
        %v3946 = vsel %vm3945, %v3938, %v3942
        %v3947 = vand.u32 2147483647, %v3570
        %vm3948 = vcmp.eq.f32.partialorder %v3947, 8.507059e+37
        %v3949 = vand.u32 %v3570, 2147483648
        %v3950 = vor.u32 1.1754944e-38, %v3949
        %v3951 = vsel %vm3948, %v3950, %v3946
        %v3952 = vmul.f32 1.0, %v3951
        %v3953 = vrcp.pop %v3571
        %v3954 = vmul.f32 %v3571, %v3953
        %v3955 = vsub.f32 1.0, %v3954
        %v3956 = vmul.f32 %v3953, %v3955
        %v3957 = vadd.f32 %v3953, %v3956
        %vm3958 = vweird.f32 %v3571
        %vm3959 = vweird.f32 %v3953
        %vm3960 = vmor %vm3958, %vm3959
        %v3961 = vsel %vm3960, %v3953, %v3957
        %v3962 = vand.u32 2147483647, %v3571
        %vm3963 = vcmp.eq.f32.partialorder %v3962, 8.507059e+37
        %v3964 = vand.u32 %v3571, 2147483648
        %v3965 = vor.u32 1.1754944e-38, %v3964
        %v3966 = vsel %vm3963, %v3965, %v3961
        %v3967 = vmul.f32 1.0, %v3966
        %v3968 = vrcp.pop %v3572
        %v3969 = vmul.f32 %v3572, %v3968
        %v3970 = vsub.f32 1.0, %v3969
        %v3971 = vmul.f32 %v3968, %v3970
        %v3972 = vadd.f32 %v3968, %v3971
        %vm3973 = vweird.f32 %v3572
        %vm3974 = vweird.f32 %v3968
        %vm3975 = vmor %vm3973, %vm3974
        %v3976 = vsel %vm3975, %v3968, %v3972
        %v3977 = vand.u32 2147483647, %v3572
        %vm3978 = vcmp.eq.f32.partialorder %v3977, 8.507059e+37
        %v3979 = vand.u32 %v3572, 2147483648
        %v3980 = vor.u32 1.1754944e-38, %v3979
        %v3981 = vsel %vm3978, %v3980, %v3976
        %v3982 = vmul.f32 1.0, %v3981
        %v3983 = vrcp.pop %v3573
        %v3984 = vmul.f32 %v3573, %v3983
        %v3985 = vsub.f32 1.0, %v3984
        %v3986 = vmul.f32 %v3983, %v3985
        %v3987 = vadd.f32 %v3983, %v3986
        %vm3988 = vweird.f32 %v3573
        %vm3989 = vweird.f32 %v3983
        %vm3990 = vmor %vm3988, %vm3989
        %v3991 = vsel %vm3990, %v3983, %v3987
        %v3992 = vand.u32 2147483647, %v3573
        %vm3993 = vcmp.eq.f32.partialorder %v3992, 8.507059e+37
        %v3994 = vand.u32 %v3573, 2147483648
        %v3995 = vor.u32 1.1754944e-38, %v3994
        %v3996 = vsel %vm3993, %v3995, %v3991
        %v3997 = vmul.f32 1.0, %v3996
        %v3998 = vrcp.pop %v3574
        %v3999 = vmul.f32 %v3574, %v3998
        %v4000 = vsub.f32 1.0, %v3999
        %v4001 = vmul.f32 %v3998, %v4000
        %v4002 = vadd.f32 %v3998, %v4001
        %vm4003 = vweird.f32 %v3574
        %vm4004 = vweird.f32 %v3998
        %vm4005 = vmor %vm4003, %vm4004
        %v4006 = vsel %vm4005, %v3998, %v4002
        %v4007 = vand.u32 2147483647, %v3574
        %vm4008 = vcmp.eq.f32.partialorder %v4007, 8.507059e+37
        %v4009 = vand.u32 %v3574, 2147483648
        %v4010 = vor.u32 1.1754944e-38, %v4009
        %v4011 = vsel %vm4008, %v4010, %v4006
        %v4012 = vmul.f32 1.0, %v4011
        %v4013 = vrcp.pop %v3575
        %v4014 = vmul.f32 %v3575, %v4013
        %v4015 = vsub.f32 1.0, %v4014
        %v4016 = vmul.f32 %v4013, %v4015
        %v4017 = vadd.f32 %v4013, %v4016
        %vm4018 = vweird.f32 %v3575
        %vm4019 = vweird.f32 %v4013
        %vm4020 = vmor %vm4018, %vm4019
        %v4021 = vsel %vm4020, %v4013, %v4017
        %v4022 = vand.u32 2147483647, %v3575
        %vm4023 = vcmp.eq.f32.partialorder %v4022, 8.507059e+37
        %v4024 = vand.u32 %v3575, 2147483648
        %v4025 = vor.u32 1.1754944e-38, %v4024
        %v4026 = vsel %vm4023, %v4025, %v4021
        %v4027 = vmul.f32 1.0, %v4026
        %v4028 = vrcp.pop %v3576
        %v4029 = vmul.f32 %v3576, %v4028
        %v4030 = vsub.f32 1.0, %v4029
        %v4031 = vmul.f32 %v4028, %v4030
        %v4032 = vadd.f32 %v4028, %v4031
        %vm4033 = vweird.f32 %v3576
        %vm4034 = vweird.f32 %v4028
        %vm4035 = vmor %vm4033, %vm4034
        %v4036 = vsel %vm4035, %v4028, %v4032
        %v4037 = vand.u32 2147483647, %v3576
        %vm4038 = vcmp.eq.f32.partialorder %v4037, 8.507059e+37
        %v4039 = vand.u32 %v3576, 2147483648
        %v4040 = vor.u32 1.1754944e-38, %v4039
        %v4041 = vsel %vm4038, %v4040, %v4036
        %v4042 = vmul.f32 1.0, %v4041
        %v4043 = vrcp.pop %v3577
        %v4044 = vmul.f32 %v3577, %v4043
        %v4045 = vsub.f32 1.0, %v4044
        %v4046 = vmul.f32 %v4043, %v4045
        %v4047 = vadd.f32 %v4043, %v4046
        %vm4048 = vweird.f32 %v3577
        %vm4049 = vweird.f32 %v4043
        %vm4050 = vmor %vm4048, %vm4049
        %v4051 = vsel %vm4050, %v4043, %v4047
        %v4052 = vand.u32 2147483647, %v3577
        %vm4053 = vcmp.eq.f32.partialorder %v4052, 8.507059e+37
        %v4054 = vand.u32 %v3577, 2147483648
        %v4055 = vor.u32 1.1754944e-38, %v4054
        %v4056 = vsel %vm4053, %v4055, %v4051
        %v4057 = vmul.f32 1.0, %v4056
        %v4058 = vmul.f32 %v3418, %v3592
        %v4059 = vmul.f32 %v3419, %v3607
        %v4060 = vmul.f32 %v3420, %v3622
        %v4061 = vmul.f32 %v3421, %v3637
        %v4062 = vmul.f32 %v3422, %v3652
        %v4063 = vmul.f32 %v3423, %v3667
        %v4064 = vmul.f32 %v3424, %v3682
        %v4065 = vmul.f32 %v3425, %v3697
        %v4066 = vmul.f32 %v3426, %v3712
        %v4067 = vmul.f32 %v3427, %v3727
        %v4068 = vmul.f32 %v3428, %v3742
        %v4069 = vmul.f32 %v3429, %v3757
        %v4070 = vmul.f32 %v3430, %v3772
        %v4071 = vmul.f32 %v3431, %v3787
        %v4072 = vmul.f32 %v3432, %v3802
        %v4073 = vmul.f32 %v3433, %v3817
        %v4074 = vmul.f32 %v3434, %v3832
        %v4075 = vmul.f32 %v3435, %v3847
        %v4076 = vmul.f32 %v3436, %v3862
        %v4077 = vmul.f32 %v3437, %v3877
        %v4078 = vmul.f32 %v3438, %v3892
        %v4079 = vmul.f32 %v3439, %v3907
        %v4080 = vmul.f32 %v3440, %v3922
        %v4081 = vmul.f32 %v3441, %v3937
        %v4082 = vmul.f32 %v3442, %v3952
        %v4083 = vmul.f32 %v3443, %v3967
        %v4084 = vmul.f32 %v3444, %v3982
        %v4085 = vmul.f32 %v3445, %v3997
        %v4086 = vmul.f32 %v3446, %v4012
        %v4087 = vmul.f32 %v3447, %v4027
        %v4088 = vmul.f32 %v3448, %v4042
        %v4089 = vmul.f32 %v3449, %v4057
        %v4090 = vld [vmem:[%s5] sm:$0xf]
        %v4091 = vld [vmem:[%s5 + $0x4] sm:$0xf]
        %v4092 = vld [vmem:[%s5 + $0x8] sm:$0xf]
        %v4093 = vld [vmem:[%s5 + $0xc] sm:$0xf]
        %v4094 = vld [vmem:[%s5 + $0x10] sm:$0xf]
        %v4095 = vld [vmem:[%s5 + $0x14] sm:$0xf]
        %v4096 = vld [vmem:[%s5 + $0x18] sm:$0xf]
        %v4097 = vld [vmem:[%s5 + $0x1c] sm:$0xf]
        %v4098 = vld [vmem:[%s5 + $0x20] sm:$0xf]
        %v4099 = vld [vmem:[%s5 + $0x24] sm:$0xf]
        %v4100 = vld [vmem:[%s5 + $0x28] sm:$0xf]
        %v4101 = vld [vmem:[%s5 + $0x2c] sm:$0xf]
        %v4102 = vld [vmem:[%s5 + $0x30] sm:$0xf]
        %v4103 = vld [vmem:[%s5 + $0x34] sm:$0xf]
        %v4104 = vld [vmem:[%s5 + $0x38] sm:$0xf]
        %v4105 = vld [vmem:[%s5 + $0x3c] sm:$0xf]
        %v4106 = vld [vmem:[%s5 + $0x40] sm:$0xf]
        %v4107 = vld [vmem:[%s5 + $0x44] sm:$0xf]
        %v4108 = vld [vmem:[%s5 + $0x48] sm:$0xf]
        %v4109 = vld [vmem:[%s5 + $0x4c] sm:$0xf]
        %v4110 = vld [vmem:[%s5 + $0x50] sm:$0xf]
        %v4111 = vld [vmem:[%s5 + $0x54] sm:$0xf]
        %v4112 = vld [vmem:[%s5 + $0x58] sm:$0xf]
        %v4113 = vld [vmem:[%s5 + $0x5c] sm:$0xf]
        %v4114 = vld [vmem:[%s5 + $0x60] sm:$0xf]
        %v4115 = vld [vmem:[%s5 + $0x64] sm:$0xf]
        %v4116 = vld [vmem:[%s5 + $0x68] sm:$0xf]
        %v4117 = vld [vmem:[%s5 + $0x6c] sm:$0xf]
        %v4118 = vld [vmem:[%s5 + $0x70] sm:$0xf]
        %v4119 = vld [vmem:[%s5 + $0x74] sm:$0xf]
        %v4120 = vld [vmem:[%s5 + $0x78] sm:$0xf]
        %v4121 = vld [vmem:[%s5 + $0x7c] sm:$0xf]
        %v4122 = vld [vmem:[%s5 + $0x80] sm:$0xf]
        %v4123 = vld [vmem:[%s5 + $0x84] sm:$0xf]
        %v4124 = vld [vmem:[%s5 + $0x88] sm:$0xf]
        %v4125 = vld [vmem:[%s5 + $0x8c] sm:$0xf]
        %v4126 = vpack.c.bf16 %v4066, %v4058
        %v4127 = vpack.c.bf16 %v4067, %v4059
        %v4128 = vpack.c.bf16 %v4068, %v4060
        %v4129 = vpack.c.bf16 %v4069, %v4061
        %v4130 = vpack.c.bf16 %v4070, %v4062
        %v4131 = vpack.c.bf16 %v4071, %v4063
        %v4132 = vpack.c.bf16 %v4072, %v4064
        %v4133 = vpack.c.bf16 %v4073, %v4065
        %v4134 = vpack.c.bf16 %v4082, %v4074
        %v4135 = vpack.c.bf16 %v4083, %v4075
        %v4136 = vpack.c.bf16 %v4084, %v4076
        %v4137 = vpack.c.bf16 %v4085, %v4077
        %v4138 = vpack.c.bf16 %v4086, %v4078
        %v4139 = vpack.c.bf16 %v4087, %v4079
        %v4140 = vpack.c.bf16 %v4088, %v4080
        %v4141 = vpack.c.bf16 %v4089, %v4081
        %v4178 = vunpack.c.l.b16 %v4090
        %v4179 = vunpack.c.l.b16 %v4091
        %v4180 = vunpack.c.l.b16 %v4092
        %v4181 = vunpack.c.l.b16 %v4093
        %v4182 = vunpack.c.l.b16 %v4094
        %v4183 = vunpack.c.l.b16 %v4095
        %v4184 = vunpack.c.l.b16 %v4096
        %v4185 = vunpack.c.l.b16 %v4097
        %v4186 = vunpack.c.l.b16 %v4098
        %v4187 = vunpack.c.l.b16 %v4099
        %v4188 = vunpack.c.l.b16 %v4100
        %v4189 = vunpack.c.l.b16 %v4101
        %v4190 = vunpack.c.l.b16 %v4102
        %v4191 = vunpack.c.l.b16 %v4103
        %v4192 = vunpack.c.l.b16 %v4104
        %v4193 = vunpack.c.l.b16 %v4105
        %v4194 = vunpack.c.l.b16 %v4106
        %v4195 = vunpack.c.l.b16 %v4107
        %v4196 = vunpack.c.l.b16 %v4108
        %v4197 = vunpack.c.l.b16 %v4109
        %v4198 = vunpack.c.l.b16 %v4110
        %v4199 = vunpack.c.l.b16 %v4111
        %v4200 = vunpack.c.l.b16 %v4112
        %v4201 = vunpack.c.l.b16 %v4113
        %v4202 = vunpack.c.l.b16 %v4114
        %v4203 = vunpack.c.l.b16 %v4115
        %v4204 = vunpack.c.l.b16 %v4116
        %v4205 = vunpack.c.l.b16 %v4117
        %v4206 = vunpack.c.l.b16 %v4118
        %v4207 = vunpack.c.l.b16 %v4119
        %v4208 = vunpack.c.l.b16 %v4120
        %v4209 = vunpack.c.l.b16 %v4121
        %v4210 = vunpack.c.l.b16 %v4122
        %v4211 = vunpack.c.l.b16 %v4123
        %v4212 = vunpack.c.l.b16 %v4124
        %v4213 = vunpack.c.l.b16 %v4125
        %v4214 = vpack.c.b16 %v4179, %v4178
        %v4215 = vpack.c.b16 %v4181, %v4180
        %v4216 = vpack.c.b16 %v4183, %v4182
        %v4217 = vpack.c.b16 %v4185, %v4184
        %v4218 = vpack.c.b16 %v4187, %v4186
        %v4219 = vpack.c.b16 %v4189, %v4188
        %v4220 = vpack.c.b16 %v4191, %v4190
        %v4221 = vpack.c.b16 %v4193, %v4192
        %v4222 = vpack.c.b16 %v4195, %v4194
        %v4223 = vpack.c.b16 %v4197, %v4196
        %v4224 = vpack.c.b16 %v4199, %v4198
        %v4225 = vpack.c.b16 %v4201, %v4200
        %v4226 = vpack.c.b16 %v4203, %v4202
        %v4227 = vpack.c.b16 %v4205, %v4204
        %v4228 = vpack.c.b16 %v4207, %v4206
        %v4229 = vpack.c.b16 %v4209, %v4208
        %v4230 = vpack.c.b16 %v4211, %v4210
        %v4231 = vpack.c.b16 %v4213, %v4212
        %vm4232 = vcmask 261120
        %v4234 = vsel %vm4232, %v4214, 0
        %v4237 = vsel %vm4232, %v4215, 0
        %v4240 = vsel %vm4232, %v4216, 0
        %v4243 = vsel %vm4232, %v4217, 0
        %v4246 = vsel %vm4232, %v4218, 0
        %v4249 = vsel %vm4232, %v4219, 0
        %v4252 = vsel %vm4232, %v4220, 0
        %v4255 = vsel %vm4232, %v4221, 0
        %v4258 = vsel %vm4232, %v4222, 0
        %v4261 = vsel %vm4232, %v4223, 0
        %v4264 = vsel %vm4232, %v4224, 0
        %v4267 = vsel %vm4232, %v4225, 0
        %v4270 = vsel %vm4232, %v4226, 0
        %v4273 = vsel %vm4232, %v4227, 0
        %v4276 = vsel %vm4232, %v4228, 0
        %v4279 = vsel %vm4232, %v4229, 0
        %v4282 = vsel %vm4232, %v4230, 0
        %v4285 = vsel %vm4232, %v4231, 0
        %4287 = vmatpush.bf16.msra.mxu0 0
        %4288 = vmatpush.bf16.msra.mxu0 0
        %4289 = vmatpush.bf16.msra.mxu0 0
        %4290 = vmatpush.bf16.msra.mxu0 0
        %4291 = vmatpush.bf16.msra.mxu0 0
        %4292 = vmatpush.bf16.msra.mxu0 0
        %4293 = vmatpush.bf16.msra.mxu0 %v4134
        %4294 = vmatpush.bf16.msra.mxu0 %v4126
        %4295 = vmatmul.bf16.gmra.mxu0 %v4234
        %v4296 = vpop.f32.mrf.mxu0
        %v4297 = vadd.f32 0.0, %v4296
        %v4298 = vpop.f32.mrf.mxu0
        %v4299 = vadd.f32 0.0, %v4298
        %4300 = vmatmul.bf16.gmra.mxu0 %v4237
        %v4301 = vpop.f32.mrf.mxu0
        %v4302 = vadd.f32 0.0, %v4301
        %v4303 = vpop.f32.mrf.mxu0
        %v4304 = vadd.f32 0.0, %v4303
        %4305 = vmatmul.bf16.gmra.mxu0 %v4240
        %v4306 = vpop.f32.mrf.mxu0
        %v4307 = vadd.f32 0.0, %v4306
        %v4308 = vpop.f32.mrf.mxu0
        %v4309 = vadd.f32 0.0, %v4308
        %4310 = vmatmul.bf16.gmra.mxu0 %v4243
        %v4311 = vpop.f32.mrf.mxu0
        %v4312 = vadd.f32 0.0, %v4311
        %v4313 = vpop.f32.mrf.mxu0
        %v4314 = vadd.f32 0.0, %v4313
        %4315 = vmatmul.bf16.gmra.mxu0 %v4246
        %v4316 = vpop.f32.mrf.mxu0
        %v4317 = vadd.f32 0.0, %v4316
        %v4318 = vpop.f32.mrf.mxu0
        %v4319 = vadd.f32 0.0, %v4318
        %4320 = vmatmul.bf16.gmra.mxu0 %v4249
        %v4321 = vpop.f32.mrf.mxu0
        %v4322 = vadd.f32 0.0, %v4321
        %v4323 = vpop.f32.mrf.mxu0
        %v4324 = vadd.f32 0.0, %v4323
        %4325 = vmatmul.bf16.gmra.mxu0 %v4252
        %v4326 = vpop.f32.mrf.mxu0
        %v4327 = vadd.f32 0.0, %v4326
        %v4328 = vpop.f32.mrf.mxu0
        %v4329 = vadd.f32 0.0, %v4328
        %4330 = vmatmul.bf16.gmra.mxu0 %v4255
        %v4331 = vpop.f32.mrf.mxu0
        %v4332 = vadd.f32 0.0, %v4331
        %v4333 = vpop.f32.mrf.mxu0
        %v4334 = vadd.f32 0.0, %v4333
        %4335 = vmatmul.bf16.gmra.mxu0 %v4258
        %v4336 = vpop.f32.mrf.mxu0
        %v4337 = vadd.f32 0.0, %v4336
        %v4338 = vpop.f32.mrf.mxu0
        %v4339 = vadd.f32 0.0, %v4338
        %4340 = vmatmul.bf16.gmra.mxu0 %v4261
        %v4341 = vpop.f32.mrf.mxu0
        %v4342 = vadd.f32 0.0, %v4341
        %v4343 = vpop.f32.mrf.mxu0
        %v4344 = vadd.f32 0.0, %v4343
        %4345 = vmatmul.bf16.gmra.mxu0 %v4264
        %v4346 = vpop.f32.mrf.mxu0
        %v4347 = vadd.f32 0.0, %v4346
        %v4348 = vpop.f32.mrf.mxu0
        %v4349 = vadd.f32 0.0, %v4348
        %4350 = vmatmul.bf16.gmra.mxu0 %v4267
        %v4351 = vpop.f32.mrf.mxu0
        %v4352 = vadd.f32 0.0, %v4351
        %v4353 = vpop.f32.mrf.mxu0
        %v4354 = vadd.f32 0.0, %v4353
        %4355 = vmatmul.bf16.gmra.mxu0 %v4270
        %v4356 = vpop.f32.mrf.mxu0
        %v4357 = vadd.f32 0.0, %v4356
        %v4358 = vpop.f32.mrf.mxu0
        %v4359 = vadd.f32 0.0, %v4358
        %4360 = vmatmul.bf16.gmra.mxu0 %v4273
        %v4361 = vpop.f32.mrf.mxu0
        %v4362 = vadd.f32 0.0, %v4361
        %v4363 = vpop.f32.mrf.mxu0
        %v4364 = vadd.f32 0.0, %v4363
        %4365 = vmatmul.bf16.gmra.mxu0 %v4276
        %v4366 = vpop.f32.mrf.mxu0
        %v4367 = vadd.f32 0.0, %v4366
        %v4368 = vpop.f32.mrf.mxu0
        %v4369 = vadd.f32 0.0, %v4368
        %4370 = vmatmul.bf16.gmra.mxu0 %v4279
        %v4371 = vpop.f32.mrf.mxu0
        %v4372 = vadd.f32 0.0, %v4371
        %v4373 = vpop.f32.mrf.mxu0
        %v4374 = vadd.f32 0.0, %v4373
        %4375 = vmatmul.bf16.gmra.mxu0 %v4282
        %v4376 = vpop.f32.mrf.mxu0
        %v4377 = vadd.f32 0.0, %v4376
        %v4378 = vpop.f32.mrf.mxu0
        %v4379 = vadd.f32 0.0, %v4378
        %4380 = vmatmul.bf16.gmra.mxu0 %v4285
        %v4381 = vpop.f32.mrf.mxu0
        %v4382 = vadd.f32 0.0, %v4381
        %v4383 = vpop.f32.mrf.mxu0
        %v4384 = vadd.f32 0.0, %v4383
        %4385 = vdwg.mxu0
        %4386 = vmatpush.bf16.msra.mxu0 0
        %4387 = vmatpush.bf16.msra.mxu0 0
        %4388 = vmatpush.bf16.msra.mxu0 0
        %4389 = vmatpush.bf16.msra.mxu0 0
        %4390 = vmatpush.bf16.msra.mxu0 0
        %4391 = vmatpush.bf16.msra.mxu0 0
        %4392 = vmatpush.bf16.msra.mxu0 %v4135
        %4393 = vmatpush.bf16.msra.mxu0 %v4127
        %4394 = vmatmul.bf16.gmra.mxu0 %v4234
        %v4395 = vpop.f32.mrf.mxu0
        %v4396 = vadd.f32 0.0, %v4395
        %v4397 = vpop.f32.mrf.mxu0
        %v4398 = vadd.f32 0.0, %v4397
        %4399 = vmatmul.bf16.gmra.mxu0 %v4237
        %v4400 = vpop.f32.mrf.mxu0
        %v4401 = vadd.f32 0.0, %v4400
        %v4402 = vpop.f32.mrf.mxu0
        %v4403 = vadd.f32 0.0, %v4402
        %4404 = vmatmul.bf16.gmra.mxu0 %v4240
        %v4405 = vpop.f32.mrf.mxu0
        %v4406 = vadd.f32 0.0, %v4405
        %v4407 = vpop.f32.mrf.mxu0
        %v4408 = vadd.f32 0.0, %v4407
        %4409 = vmatmul.bf16.gmra.mxu0 %v4243
        %v4410 = vpop.f32.mrf.mxu0
        %v4411 = vadd.f32 0.0, %v4410
        %v4412 = vpop.f32.mrf.mxu0
        %v4413 = vadd.f32 0.0, %v4412
        %4414 = vmatmul.bf16.gmra.mxu0 %v4246
        %v4415 = vpop.f32.mrf.mxu0
        %v4416 = vadd.f32 0.0, %v4415
        %v4417 = vpop.f32.mrf.mxu0
        %v4418 = vadd.f32 0.0, %v4417
        %4419 = vmatmul.bf16.gmra.mxu0 %v4249
        %v4420 = vpop.f32.mrf.mxu0
        %v4421 = vadd.f32 0.0, %v4420
        %v4422 = vpop.f32.mrf.mxu0
        %v4423 = vadd.f32 0.0, %v4422
        %4424 = vmatmul.bf16.gmra.mxu0 %v4252
        %v4425 = vpop.f32.mrf.mxu0
        %v4426 = vadd.f32 0.0, %v4425
        %v4427 = vpop.f32.mrf.mxu0
        %v4428 = vadd.f32 0.0, %v4427
        %4429 = vmatmul.bf16.gmra.mxu0 %v4255
        %v4430 = vpop.f32.mrf.mxu0
        %v4431 = vadd.f32 0.0, %v4430
        %v4432 = vpop.f32.mrf.mxu0
        %v4433 = vadd.f32 0.0, %v4432
        %4434 = vmatmul.bf16.gmra.mxu0 %v4258
        %v4435 = vpop.f32.mrf.mxu0
        %v4436 = vadd.f32 0.0, %v4435
        %v4437 = vpop.f32.mrf.mxu0
        %v4438 = vadd.f32 0.0, %v4437
        %4439 = vmatmul.bf16.gmra.mxu0 %v4261
        %v4440 = vpop.f32.mrf.mxu0
        %v4441 = vadd.f32 0.0, %v4440
        %v4442 = vpop.f32.mrf.mxu0
        %v4443 = vadd.f32 0.0, %v4442
        %4444 = vmatmul.bf16.gmra.mxu0 %v4264
        %v4445 = vpop.f32.mrf.mxu0
        %v4446 = vadd.f32 0.0, %v4445
        %v4447 = vpop.f32.mrf.mxu0
        %v4448 = vadd.f32 0.0, %v4447
        %4449 = vmatmul.bf16.gmra.mxu0 %v4267
        %v4450 = vpop.f32.mrf.mxu0
        %v4451 = vadd.f32 0.0, %v4450
        %v4452 = vpop.f32.mrf.mxu0
        %v4453 = vadd.f32 0.0, %v4452
        %4454 = vmatmul.bf16.gmra.mxu0 %v4270
        %v4455 = vpop.f32.mrf.mxu0
        %v4456 = vadd.f32 0.0, %v4455
        %v4457 = vpop.f32.mrf.mxu0
        %v4458 = vadd.f32 0.0, %v4457
        %4459 = vmatmul.bf16.gmra.mxu0 %v4273
        %v4460 = vpop.f32.mrf.mxu0
        %v4461 = vadd.f32 0.0, %v4460
        %v4462 = vpop.f32.mrf.mxu0
        %v4463 = vadd.f32 0.0, %v4462
        %4464 = vmatmul.bf16.gmra.mxu0 %v4276
        %v4465 = vpop.f32.mrf.mxu0
        %v4466 = vadd.f32 0.0, %v4465
        %v4467 = vpop.f32.mrf.mxu0
        %v4468 = vadd.f32 0.0, %v4467
        %4469 = vmatmul.bf16.gmra.mxu0 %v4279
        %v4470 = vpop.f32.mrf.mxu0
        %v4471 = vadd.f32 0.0, %v4470
        %v4472 = vpop.f32.mrf.mxu0
        %v4473 = vadd.f32 0.0, %v4472
        %4474 = vmatmul.bf16.gmra.mxu0 %v4282
        %v4475 = vpop.f32.mrf.mxu0
        %v4476 = vadd.f32 0.0, %v4475
        %v4477 = vpop.f32.mrf.mxu0
        %v4478 = vadd.f32 0.0, %v4477
        %4479 = vmatmul.bf16.gmra.mxu0 %v4285
        %v4480 = vpop.f32.mrf.mxu0
        %v4481 = vadd.f32 0.0, %v4480
        %v4482 = vpop.f32.mrf.mxu0
        %v4483 = vadd.f32 0.0, %v4482
        %4484 = vdwg.mxu0
        %4485 = vmatpush.bf16.msra.mxu0 0
        %4486 = vmatpush.bf16.msra.mxu0 0
        %4487 = vmatpush.bf16.msra.mxu0 0
        %4488 = vmatpush.bf16.msra.mxu0 0
        %4489 = vmatpush.bf16.msra.mxu0 0
        %4490 = vmatpush.bf16.msra.mxu0 0
        %4491 = vmatpush.bf16.msra.mxu0 %v4136
        %4492 = vmatpush.bf16.msra.mxu0 %v4128
        %4493 = vmatmul.bf16.gmra.mxu0 %v4234
        %v4494 = vpop.f32.mrf.mxu0
        %v4495 = vadd.f32 0.0, %v4494
        %v4496 = vpop.f32.mrf.mxu0
        %v4497 = vadd.f32 0.0, %v4496
        %4498 = vmatmul.bf16.gmra.mxu0 %v4237
        %v4499 = vpop.f32.mrf.mxu0
        %v4500 = vadd.f32 0.0, %v4499
        %v4501 = vpop.f32.mrf.mxu0
        %v4502 = vadd.f32 0.0, %v4501
        %4503 = vmatmul.bf16.gmra.mxu0 %v4240
        %v4504 = vpop.f32.mrf.mxu0
        %v4505 = vadd.f32 0.0, %v4504
        %v4506 = vpop.f32.mrf.mxu0
        %v4507 = vadd.f32 0.0, %v4506
        %4508 = vmatmul.bf16.gmra.mxu0 %v4243
        %v4509 = vpop.f32.mrf.mxu0
        %v4510 = vadd.f32 0.0, %v4509
        %v4511 = vpop.f32.mrf.mxu0
        %v4512 = vadd.f32 0.0, %v4511
        %4513 = vmatmul.bf16.gmra.mxu0 %v4246
        %v4514 = vpop.f32.mrf.mxu0
        %v4515 = vadd.f32 0.0, %v4514
        %v4516 = vpop.f32.mrf.mxu0
        %v4517 = vadd.f32 0.0, %v4516
        %4518 = vmatmul.bf16.gmra.mxu0 %v4249
        %v4519 = vpop.f32.mrf.mxu0
        %v4520 = vadd.f32 0.0, %v4519
        %v4521 = vpop.f32.mrf.mxu0
        %v4522 = vadd.f32 0.0, %v4521
        %4523 = vmatmul.bf16.gmra.mxu0 %v4252
        %v4524 = vpop.f32.mrf.mxu0
        %v4525 = vadd.f32 0.0, %v4524
        %v4526 = vpop.f32.mrf.mxu0
        %v4527 = vadd.f32 0.0, %v4526
        %4528 = vmatmul.bf16.gmra.mxu0 %v4255
        %v4529 = vpop.f32.mrf.mxu0
        %v4530 = vadd.f32 0.0, %v4529
        %v4531 = vpop.f32.mrf.mxu0
        %v4532 = vadd.f32 0.0, %v4531
        %4533 = vmatmul.bf16.gmra.mxu0 %v4258
        %v4534 = vpop.f32.mrf.mxu0
        %v4535 = vadd.f32 0.0, %v4534
        %v4536 = vpop.f32.mrf.mxu0
        %v4537 = vadd.f32 0.0, %v4536
        %4538 = vmatmul.bf16.gmra.mxu0 %v4261
        %v4539 = vpop.f32.mrf.mxu0
        %v4540 = vadd.f32 0.0, %v4539
        %v4541 = vpop.f32.mrf.mxu0
        %v4542 = vadd.f32 0.0, %v4541
        %4543 = vmatmul.bf16.gmra.mxu0 %v4264
        %v4544 = vpop.f32.mrf.mxu0
        %v4545 = vadd.f32 0.0, %v4544
        %v4546 = vpop.f32.mrf.mxu0
        %v4547 = vadd.f32 0.0, %v4546
        %4548 = vmatmul.bf16.gmra.mxu0 %v4267
        %v4549 = vpop.f32.mrf.mxu0
        %v4550 = vadd.f32 0.0, %v4549
        %v4551 = vpop.f32.mrf.mxu0
        %v4552 = vadd.f32 0.0, %v4551
        %4553 = vmatmul.bf16.gmra.mxu0 %v4270
        %v4554 = vpop.f32.mrf.mxu0
        %v4555 = vadd.f32 0.0, %v4554
        %v4556 = vpop.f32.mrf.mxu0
        %v4557 = vadd.f32 0.0, %v4556
        %4558 = vmatmul.bf16.gmra.mxu0 %v4273
        %v4559 = vpop.f32.mrf.mxu0
        %v4560 = vadd.f32 0.0, %v4559
        %v4561 = vpop.f32.mrf.mxu0
        %v4562 = vadd.f32 0.0, %v4561
        %4563 = vmatmul.bf16.gmra.mxu0 %v4276
        %v4564 = vpop.f32.mrf.mxu0
        %v4565 = vadd.f32 0.0, %v4564
        %v4566 = vpop.f32.mrf.mxu0
        %v4567 = vadd.f32 0.0, %v4566
        %4568 = vmatmul.bf16.gmra.mxu0 %v4279
        %v4569 = vpop.f32.mrf.mxu0
        %v4570 = vadd.f32 0.0, %v4569
        %v4571 = vpop.f32.mrf.mxu0
        %v4572 = vadd.f32 0.0, %v4571
        %4573 = vmatmul.bf16.gmra.mxu0 %v4282
        %v4574 = vpop.f32.mrf.mxu0
        %v4575 = vadd.f32 0.0, %v4574
        %v4576 = vpop.f32.mrf.mxu0
        %v4577 = vadd.f32 0.0, %v4576
        %4578 = vmatmul.bf16.gmra.mxu0 %v4285
        %v4579 = vpop.f32.mrf.mxu0
        %v4580 = vadd.f32 0.0, %v4579
        %v4581 = vpop.f32.mrf.mxu0
        %v4582 = vadd.f32 0.0, %v4581
        %4583 = vdwg.mxu0
        %4584 = vmatpush.bf16.msra.mxu0 0
        %4585 = vmatpush.bf16.msra.mxu0 0
        %4586 = vmatpush.bf16.msra.mxu0 0
        %4587 = vmatpush.bf16.msra.mxu0 0
        %4588 = vmatpush.bf16.msra.mxu0 0
        %4589 = vmatpush.bf16.msra.mxu0 0
        %4590 = vmatpush.bf16.msra.mxu0 %v4137
        %4591 = vmatpush.bf16.msra.mxu0 %v4129
        %4592 = vmatmul.bf16.gmra.mxu0 %v4234
        %v4593 = vpop.f32.mrf.mxu0
        %v4594 = vadd.f32 0.0, %v4593
        %v4595 = vpop.f32.mrf.mxu0
        %v4596 = vadd.f32 0.0, %v4595
        %4597 = vmatmul.bf16.gmra.mxu0 %v4237
        %v4598 = vpop.f32.mrf.mxu0
        %v4599 = vadd.f32 0.0, %v4598
        %v4600 = vpop.f32.mrf.mxu0
        %v4601 = vadd.f32 0.0, %v4600
        %4602 = vmatmul.bf16.gmra.mxu0 %v4240
        %v4603 = vpop.f32.mrf.mxu0
        %v4604 = vadd.f32 0.0, %v4603
        %v4605 = vpop.f32.mrf.mxu0
        %v4606 = vadd.f32 0.0, %v4605
        %4607 = vmatmul.bf16.gmra.mxu0 %v4243
        %v4608 = vpop.f32.mrf.mxu0
        %v4609 = vadd.f32 0.0, %v4608
        %v4610 = vpop.f32.mrf.mxu0
        %v4611 = vadd.f32 0.0, %v4610
        %4612 = vmatmul.bf16.gmra.mxu0 %v4246
        %v4613 = vpop.f32.mrf.mxu0
        %v4614 = vadd.f32 0.0, %v4613
        %v4615 = vpop.f32.mrf.mxu0
        %v4616 = vadd.f32 0.0, %v4615
        %4617 = vmatmul.bf16.gmra.mxu0 %v4249
        %v4618 = vpop.f32.mrf.mxu0
        %v4619 = vadd.f32 0.0, %v4618
        %v4620 = vpop.f32.mrf.mxu0
        %v4621 = vadd.f32 0.0, %v4620
        %4622 = vmatmul.bf16.gmra.mxu0 %v4252
        %v4623 = vpop.f32.mrf.mxu0
        %v4624 = vadd.f32 0.0, %v4623
        %v4625 = vpop.f32.mrf.mxu0
        %v4626 = vadd.f32 0.0, %v4625
        %4627 = vmatmul.bf16.gmra.mxu0 %v4255
        %v4628 = vpop.f32.mrf.mxu0
        %v4629 = vadd.f32 0.0, %v4628
        %v4630 = vpop.f32.mrf.mxu0
        %v4631 = vadd.f32 0.0, %v4630
        %4632 = vmatmul.bf16.gmra.mxu0 %v4258
        %v4633 = vpop.f32.mrf.mxu0
        %v4634 = vadd.f32 0.0, %v4633
        %v4635 = vpop.f32.mrf.mxu0
        %v4636 = vadd.f32 0.0, %v4635
        %4637 = vmatmul.bf16.gmra.mxu0 %v4261
        %v4638 = vpop.f32.mrf.mxu0
        %v4639 = vadd.f32 0.0, %v4638
        %v4640 = vpop.f32.mrf.mxu0
        %v4641 = vadd.f32 0.0, %v4640
        %4642 = vmatmul.bf16.gmra.mxu0 %v4264
        %v4643 = vpop.f32.mrf.mxu0
        %v4644 = vadd.f32 0.0, %v4643
        %v4645 = vpop.f32.mrf.mxu0
        %v4646 = vadd.f32 0.0, %v4645
        %4647 = vmatmul.bf16.gmra.mxu0 %v4267
        %v4648 = vpop.f32.mrf.mxu0
        %v4649 = vadd.f32 0.0, %v4648
        %v4650 = vpop.f32.mrf.mxu0
        %v4651 = vadd.f32 0.0, %v4650
        %4652 = vmatmul.bf16.gmra.mxu0 %v4270
        %v4653 = vpop.f32.mrf.mxu0
        %v4654 = vadd.f32 0.0, %v4653
        %v4655 = vpop.f32.mrf.mxu0
        %v4656 = vadd.f32 0.0, %v4655
        %4657 = vmatmul.bf16.gmra.mxu0 %v4273
        %v4658 = vpop.f32.mrf.mxu0
        %v4659 = vadd.f32 0.0, %v4658
        %v4660 = vpop.f32.mrf.mxu0
        %v4661 = vadd.f32 0.0, %v4660
        %4662 = vmatmul.bf16.gmra.mxu0 %v4276
        %v4663 = vpop.f32.mrf.mxu0
        %v4664 = vadd.f32 0.0, %v4663
        %v4665 = vpop.f32.mrf.mxu0
        %v4666 = vadd.f32 0.0, %v4665
        %4667 = vmatmul.bf16.gmra.mxu0 %v4279
        %v4668 = vpop.f32.mrf.mxu0
        %v4669 = vadd.f32 0.0, %v4668
        %v4670 = vpop.f32.mrf.mxu0
        %v4671 = vadd.f32 0.0, %v4670
        %4672 = vmatmul.bf16.gmra.mxu0 %v4282
        %v4673 = vpop.f32.mrf.mxu0
        %v4674 = vadd.f32 0.0, %v4673
        %v4675 = vpop.f32.mrf.mxu0
        %v4676 = vadd.f32 0.0, %v4675
        %4677 = vmatmul.bf16.gmra.mxu0 %v4285
        %v4678 = vpop.f32.mrf.mxu0
        %v4679 = vadd.f32 0.0, %v4678
        %v4680 = vpop.f32.mrf.mxu0
        %v4681 = vadd.f32 0.0, %v4680
        %4682 = vdwg.mxu0
        %4683 = vmatpush.bf16.msra.mxu0 0
        %4684 = vmatpush.bf16.msra.mxu0 0
        %4685 = vmatpush.bf16.msra.mxu0 0
        %4686 = vmatpush.bf16.msra.mxu0 0
        %4687 = vmatpush.bf16.msra.mxu0 0
        %4688 = vmatpush.bf16.msra.mxu0 0
        %4689 = vmatpush.bf16.msra.mxu0 %v4138
        %4690 = vmatpush.bf16.msra.mxu0 %v4130
        %4691 = vmatmul.bf16.gmra.mxu0 %v4234
        %v4692 = vpop.f32.mrf.mxu0
        %v4693 = vadd.f32 0.0, %v4692
        %v4694 = vpop.f32.mrf.mxu0
        %v4695 = vadd.f32 0.0, %v4694
        %4696 = vmatmul.bf16.gmra.mxu0 %v4237
        %v4697 = vpop.f32.mrf.mxu0
        %v4698 = vadd.f32 0.0, %v4697
        %v4699 = vpop.f32.mrf.mxu0
        %v4700 = vadd.f32 0.0, %v4699
        %4701 = vmatmul.bf16.gmra.mxu0 %v4240
        %v4702 = vpop.f32.mrf.mxu0
        %v4703 = vadd.f32 0.0, %v4702
        %v4704 = vpop.f32.mrf.mxu0
        %v4705 = vadd.f32 0.0, %v4704
        %4706 = vmatmul.bf16.gmra.mxu0 %v4243
        %v4707 = vpop.f32.mrf.mxu0
        %v4708 = vadd.f32 0.0, %v4707
        %v4709 = vpop.f32.mrf.mxu0
        %v4710 = vadd.f32 0.0, %v4709
        %4711 = vmatmul.bf16.gmra.mxu0 %v4246
        %v4712 = vpop.f32.mrf.mxu0
        %v4713 = vadd.f32 0.0, %v4712
        %v4714 = vpop.f32.mrf.mxu0
        %v4715 = vadd.f32 0.0, %v4714
        %4716 = vmatmul.bf16.gmra.mxu0 %v4249
        %v4717 = vpop.f32.mrf.mxu0
        %v4718 = vadd.f32 0.0, %v4717
        %v4719 = vpop.f32.mrf.mxu0
        %v4720 = vadd.f32 0.0, %v4719
        %4721 = vmatmul.bf16.gmra.mxu0 %v4252
        %v4722 = vpop.f32.mrf.mxu0
        %v4723 = vadd.f32 0.0, %v4722
        %v4724 = vpop.f32.mrf.mxu0
        %v4725 = vadd.f32 0.0, %v4724
        %4726 = vmatmul.bf16.gmra.mxu0 %v4255
        %v4727 = vpop.f32.mrf.mxu0
        %v4728 = vadd.f32 0.0, %v4727
        %v4729 = vpop.f32.mrf.mxu0
        %v4730 = vadd.f32 0.0, %v4729
        %4731 = vmatmul.bf16.gmra.mxu0 %v4258
        %v4732 = vpop.f32.mrf.mxu0
        %v4733 = vadd.f32 0.0, %v4732
        %v4734 = vpop.f32.mrf.mxu0
        %v4735 = vadd.f32 0.0, %v4734
        %4736 = vmatmul.bf16.gmra.mxu0 %v4261
        %v4737 = vpop.f32.mrf.mxu0
        %v4738 = vadd.f32 0.0, %v4737
        %v4739 = vpop.f32.mrf.mxu0
        %v4740 = vadd.f32 0.0, %v4739
        %4741 = vmatmul.bf16.gmra.mxu0 %v4264
        %v4742 = vpop.f32.mrf.mxu0
        %v4743 = vadd.f32 0.0, %v4742
        %v4744 = vpop.f32.mrf.mxu0
        %v4745 = vadd.f32 0.0, %v4744
        %4746 = vmatmul.bf16.gmra.mxu0 %v4267
        %v4747 = vpop.f32.mrf.mxu0
        %v4748 = vadd.f32 0.0, %v4747
        %v4749 = vpop.f32.mrf.mxu0
        %v4750 = vadd.f32 0.0, %v4749
        %4751 = vmatmul.bf16.gmra.mxu0 %v4270
        %v4752 = vpop.f32.mrf.mxu0
        %v4753 = vadd.f32 0.0, %v4752
        %v4754 = vpop.f32.mrf.mxu0
        %v4755 = vadd.f32 0.0, %v4754
        %4756 = vmatmul.bf16.gmra.mxu0 %v4273
        %v4757 = vpop.f32.mrf.mxu0
        %v4758 = vadd.f32 0.0, %v4757
        %v4759 = vpop.f32.mrf.mxu0
        %v4760 = vadd.f32 0.0, %v4759
        %4761 = vmatmul.bf16.gmra.mxu0 %v4276
        %v4762 = vpop.f32.mrf.mxu0
        %v4763 = vadd.f32 0.0, %v4762
        %v4764 = vpop.f32.mrf.mxu0
        %v4765 = vadd.f32 0.0, %v4764
        %4766 = vmatmul.bf16.gmra.mxu0 %v4279
        %v4767 = vpop.f32.mrf.mxu0
        %v4768 = vadd.f32 0.0, %v4767
        %v4769 = vpop.f32.mrf.mxu0
        %v4770 = vadd.f32 0.0, %v4769
        %4771 = vmatmul.bf16.gmra.mxu0 %v4282
        %v4772 = vpop.f32.mrf.mxu0
        %v4773 = vadd.f32 0.0, %v4772
        %v4774 = vpop.f32.mrf.mxu0
        %v4775 = vadd.f32 0.0, %v4774
        %4776 = vmatmul.bf16.gmra.mxu0 %v4285
        %v4777 = vpop.f32.mrf.mxu0
        %v4778 = vadd.f32 0.0, %v4777
        %v4779 = vpop.f32.mrf.mxu0
        %v4780 = vadd.f32 0.0, %v4779
        %4781 = vdwg.mxu0
        %4782 = vmatpush.bf16.msra.mxu0 0
        %4783 = vmatpush.bf16.msra.mxu0 0
        %4784 = vmatpush.bf16.msra.mxu0 0
        %4785 = vmatpush.bf16.msra.mxu0 0
        %4786 = vmatpush.bf16.msra.mxu0 0
        %4787 = vmatpush.bf16.msra.mxu0 0
        %4788 = vmatpush.bf16.msra.mxu0 %v4139
        %4789 = vmatpush.bf16.msra.mxu0 %v4131
        %4790 = vmatmul.bf16.gmra.mxu0 %v4234
        %v4791 = vpop.f32.mrf.mxu0
        %v4792 = vadd.f32 0.0, %v4791
        %v4793 = vpop.f32.mrf.mxu0
        %v4794 = vadd.f32 0.0, %v4793
        %4795 = vmatmul.bf16.gmra.mxu0 %v4237
        %v4796 = vpop.f32.mrf.mxu0
        %v4797 = vadd.f32 0.0, %v4796
        %v4798 = vpop.f32.mrf.mxu0
        %v4799 = vadd.f32 0.0, %v4798
        %4800 = vmatmul.bf16.gmra.mxu0 %v4240
        %v4801 = vpop.f32.mrf.mxu0
        %v4802 = vadd.f32 0.0, %v4801
        %v4803 = vpop.f32.mrf.mxu0
        %v4804 = vadd.f32 0.0, %v4803
        %4805 = vmatmul.bf16.gmra.mxu0 %v4243
        %v4806 = vpop.f32.mrf.mxu0
        %v4807 = vadd.f32 0.0, %v4806
        %v4808 = vpop.f32.mrf.mxu0
        %v4809 = vadd.f32 0.0, %v4808
        %4810 = vmatmul.bf16.gmra.mxu0 %v4246
        %v4811 = vpop.f32.mrf.mxu0
        %v4812 = vadd.f32 0.0, %v4811
        %v4813 = vpop.f32.mrf.mxu0
        %v4814 = vadd.f32 0.0, %v4813
        %4815 = vmatmul.bf16.gmra.mxu0 %v4249
        %v4816 = vpop.f32.mrf.mxu0
        %v4817 = vadd.f32 0.0, %v4816
        %v4818 = vpop.f32.mrf.mxu0
        %v4819 = vadd.f32 0.0, %v4818
        %4820 = vmatmul.bf16.gmra.mxu0 %v4252
        %v4821 = vpop.f32.mrf.mxu0
        %v4822 = vadd.f32 0.0, %v4821
        %v4823 = vpop.f32.mrf.mxu0
        %v4824 = vadd.f32 0.0, %v4823
        %4825 = vmatmul.bf16.gmra.mxu0 %v4255
        %v4826 = vpop.f32.mrf.mxu0
        %v4827 = vadd.f32 0.0, %v4826
        %v4828 = vpop.f32.mrf.mxu0
        %v4829 = vadd.f32 0.0, %v4828
        %4830 = vmatmul.bf16.gmra.mxu0 %v4258
        %v4831 = vpop.f32.mrf.mxu0
        %v4832 = vadd.f32 0.0, %v4831
        %v4833 = vpop.f32.mrf.mxu0
        %v4834 = vadd.f32 0.0, %v4833
        %4835 = vmatmul.bf16.gmra.mxu0 %v4261
        %v4836 = vpop.f32.mrf.mxu0
        %v4837 = vadd.f32 0.0, %v4836
        %v4838 = vpop.f32.mrf.mxu0
        %v4839 = vadd.f32 0.0, %v4838
        %4840 = vmatmul.bf16.gmra.mxu0 %v4264
        %v4841 = vpop.f32.mrf.mxu0
        %v4842 = vadd.f32 0.0, %v4841
        %v4843 = vpop.f32.mrf.mxu0
        %v4844 = vadd.f32 0.0, %v4843
        %4845 = vmatmul.bf16.gmra.mxu0 %v4267
        %v4846 = vpop.f32.mrf.mxu0
        %v4847 = vadd.f32 0.0, %v4846
        %v4848 = vpop.f32.mrf.mxu0
        %v4849 = vadd.f32 0.0, %v4848
        %4850 = vmatmul.bf16.gmra.mxu0 %v4270
        %v4851 = vpop.f32.mrf.mxu0
        %v4852 = vadd.f32 0.0, %v4851
        %v4853 = vpop.f32.mrf.mxu0
        %v4854 = vadd.f32 0.0, %v4853
        %4855 = vmatmul.bf16.gmra.mxu0 %v4273
        %v4856 = vpop.f32.mrf.mxu0
        %v4857 = vadd.f32 0.0, %v4856
        %v4858 = vpop.f32.mrf.mxu0
        %v4859 = vadd.f32 0.0, %v4858
        %4860 = vmatmul.bf16.gmra.mxu0 %v4276
        %v4861 = vpop.f32.mrf.mxu0
        %v4862 = vadd.f32 0.0, %v4861
        %v4863 = vpop.f32.mrf.mxu0
        %v4864 = vadd.f32 0.0, %v4863
        %4865 = vmatmul.bf16.gmra.mxu0 %v4279
        %v4866 = vpop.f32.mrf.mxu0
        %v4867 = vadd.f32 0.0, %v4866
        %v4868 = vpop.f32.mrf.mxu0
        %v4869 = vadd.f32 0.0, %v4868
        %4870 = vmatmul.bf16.gmra.mxu0 %v4282
        %v4871 = vpop.f32.mrf.mxu0
        %v4872 = vadd.f32 0.0, %v4871
        %v4873 = vpop.f32.mrf.mxu0
        %v4874 = vadd.f32 0.0, %v4873
        %4875 = vmatmul.bf16.gmra.mxu0 %v4285
        %v4876 = vpop.f32.mrf.mxu0
        %v4877 = vadd.f32 0.0, %v4876
        %v4878 = vpop.f32.mrf.mxu0
        %v4879 = vadd.f32 0.0, %v4878
        %4880 = vdwg.mxu0
        %4881 = vmatpush.bf16.msra.mxu0 0
        %4882 = vmatpush.bf16.msra.mxu0 0
        %4883 = vmatpush.bf16.msra.mxu0 0
        %4884 = vmatpush.bf16.msra.mxu0 0
        %4885 = vmatpush.bf16.msra.mxu0 0
        %4886 = vmatpush.bf16.msra.mxu0 0
        %4887 = vmatpush.bf16.msra.mxu0 %v4140
        %4888 = vmatpush.bf16.msra.mxu0 %v4132
        %4889 = vmatmul.bf16.gmra.mxu0 %v4234
        %v4890 = vpop.f32.mrf.mxu0
        %v4891 = vadd.f32 0.0, %v4890
        %v4892 = vpop.f32.mrf.mxu0
        %v4893 = vadd.f32 0.0, %v4892
        %4894 = vmatmul.bf16.gmra.mxu0 %v4237
        %v4895 = vpop.f32.mrf.mxu0
        %v4896 = vadd.f32 0.0, %v4895
        %v4897 = vpop.f32.mrf.mxu0
        %v4898 = vadd.f32 0.0, %v4897
        %4899 = vmatmul.bf16.gmra.mxu0 %v4240
        %v4900 = vpop.f32.mrf.mxu0
        %v4901 = vadd.f32 0.0, %v4900
        %v4902 = vpop.f32.mrf.mxu0
        %v4903 = vadd.f32 0.0, %v4902
        %4904 = vmatmul.bf16.gmra.mxu0 %v4243
        %v4905 = vpop.f32.mrf.mxu0
        %v4906 = vadd.f32 0.0, %v4905
        %v4907 = vpop.f32.mrf.mxu0
        %v4908 = vadd.f32 0.0, %v4907
        %4909 = vmatmul.bf16.gmra.mxu0 %v4246
        %v4910 = vpop.f32.mrf.mxu0
        %v4911 = vadd.f32 0.0, %v4910
        %v4912 = vpop.f32.mrf.mxu0
        %v4913 = vadd.f32 0.0, %v4912
        %4914 = vmatmul.bf16.gmra.mxu0 %v4249
        %v4915 = vpop.f32.mrf.mxu0
        %v4916 = vadd.f32 0.0, %v4915
        %v4917 = vpop.f32.mrf.mxu0
        %v4918 = vadd.f32 0.0, %v4917
        %4919 = vmatmul.bf16.gmra.mxu0 %v4252
        %v4920 = vpop.f32.mrf.mxu0
        %v4921 = vadd.f32 0.0, %v4920
        %v4922 = vpop.f32.mrf.mxu0
        %v4923 = vadd.f32 0.0, %v4922
        %4924 = vmatmul.bf16.gmra.mxu0 %v4255
        %v4925 = vpop.f32.mrf.mxu0
        %v4926 = vadd.f32 0.0, %v4925
        %v4927 = vpop.f32.mrf.mxu0
        %v4928 = vadd.f32 0.0, %v4927
        %4929 = vmatmul.bf16.gmra.mxu0 %v4258
        %v4930 = vpop.f32.mrf.mxu0
        %v4931 = vadd.f32 0.0, %v4930
        %v4932 = vpop.f32.mrf.mxu0
        %v4933 = vadd.f32 0.0, %v4932
        %4934 = vmatmul.bf16.gmra.mxu0 %v4261
        %v4935 = vpop.f32.mrf.mxu0
        %v4936 = vadd.f32 0.0, %v4935
        %v4937 = vpop.f32.mrf.mxu0
        %v4938 = vadd.f32 0.0, %v4937
        %4939 = vmatmul.bf16.gmra.mxu0 %v4264
        %v4940 = vpop.f32.mrf.mxu0
        %v4941 = vadd.f32 0.0, %v4940
        %v4942 = vpop.f32.mrf.mxu0
        %v4943 = vadd.f32 0.0, %v4942
        %4944 = vmatmul.bf16.gmra.mxu0 %v4267
        %v4945 = vpop.f32.mrf.mxu0
        %v4946 = vadd.f32 0.0, %v4945
        %v4947 = vpop.f32.mrf.mxu0
        %v4948 = vadd.f32 0.0, %v4947
        %4949 = vmatmul.bf16.gmra.mxu0 %v4270
        %v4950 = vpop.f32.mrf.mxu0
        %v4951 = vadd.f32 0.0, %v4950
        %v4952 = vpop.f32.mrf.mxu0
        %v4953 = vadd.f32 0.0, %v4952
        %4954 = vmatmul.bf16.gmra.mxu0 %v4273
        %v4955 = vpop.f32.mrf.mxu0
        %v4956 = vadd.f32 0.0, %v4955
        %v4957 = vpop.f32.mrf.mxu0
        %v4958 = vadd.f32 0.0, %v4957
        %4959 = vmatmul.bf16.gmra.mxu0 %v4276
        %v4960 = vpop.f32.mrf.mxu0
        %v4961 = vadd.f32 0.0, %v4960
        %v4962 = vpop.f32.mrf.mxu0
        %v4963 = vadd.f32 0.0, %v4962
        %4964 = vmatmul.bf16.gmra.mxu0 %v4279
        %v4965 = vpop.f32.mrf.mxu0
        %v4966 = vadd.f32 0.0, %v4965
        %v4967 = vpop.f32.mrf.mxu0
        %v4968 = vadd.f32 0.0, %v4967
        %4969 = vmatmul.bf16.gmra.mxu0 %v4282
        %v4970 = vpop.f32.mrf.mxu0
        %v4971 = vadd.f32 0.0, %v4970
        %v4972 = vpop.f32.mrf.mxu0
        %v4973 = vadd.f32 0.0, %v4972
        %4974 = vmatmul.bf16.gmra.mxu0 %v4285
        %v4975 = vpop.f32.mrf.mxu0
        %v4976 = vadd.f32 0.0, %v4975
        %v4977 = vpop.f32.mrf.mxu0
        %v4978 = vadd.f32 0.0, %v4977
        %4979 = vdwg.mxu0
        %4980 = vmatpush.bf16.msra.mxu0 0
        %4981 = vmatpush.bf16.msra.mxu0 0
        %4982 = vmatpush.bf16.msra.mxu0 0
        %4983 = vmatpush.bf16.msra.mxu0 0
        %4984 = vmatpush.bf16.msra.mxu0 0
        %4985 = vmatpush.bf16.msra.mxu0 0
        %4986 = vmatpush.bf16.msra.mxu0 %v4141
        %4987 = vmatpush.bf16.msra.mxu0 %v4133
        %4988 = vmatmul.bf16.gmra.mxu0 %v4234
        %v4989 = vpop.f32.mrf.mxu0
        %v4990 = vadd.f32 0.0, %v4989
        %v4991 = vpop.f32.mrf.mxu0
        %v4992 = vadd.f32 0.0, %v4991
        %4993 = vmatmul.bf16.gmra.mxu0 %v4237
        %v4994 = vpop.f32.mrf.mxu0
        %v4995 = vadd.f32 0.0, %v4994
        %v4996 = vpop.f32.mrf.mxu0
        %v4997 = vadd.f32 0.0, %v4996
        %4998 = vmatmul.bf16.gmra.mxu0 %v4240
        %v4999 = vpop.f32.mrf.mxu0
        %v5000 = vadd.f32 0.0, %v4999
        %v5001 = vpop.f32.mrf.mxu0
        %v5002 = vadd.f32 0.0, %v5001
        %5003 = vmatmul.bf16.gmra.mxu0 %v4243
        %v5004 = vpop.f32.mrf.mxu0
        %v5005 = vadd.f32 0.0, %v5004
        %v5006 = vpop.f32.mrf.mxu0
        %v5007 = vadd.f32 0.0, %v5006
        %5008 = vmatmul.bf16.gmra.mxu0 %v4246
        %v5009 = vpop.f32.mrf.mxu0
        %v5010 = vadd.f32 0.0, %v5009
        %v5011 = vpop.f32.mrf.mxu0
        %v5012 = vadd.f32 0.0, %v5011
        %5013 = vmatmul.bf16.gmra.mxu0 %v4249
        %v5014 = vpop.f32.mrf.mxu0
        %v5015 = vadd.f32 0.0, %v5014
        %v5016 = vpop.f32.mrf.mxu0
        %v5017 = vadd.f32 0.0, %v5016
        %5018 = vmatmul.bf16.gmra.mxu0 %v4252
        %v5019 = vpop.f32.mrf.mxu0
        %v5020 = vadd.f32 0.0, %v5019
        %v5021 = vpop.f32.mrf.mxu0
        %v5022 = vadd.f32 0.0, %v5021
        %5023 = vmatmul.bf16.gmra.mxu0 %v4255
        %v5024 = vpop.f32.mrf.mxu0
        %v5025 = vadd.f32 0.0, %v5024
        %v5026 = vpop.f32.mrf.mxu0
        %v5027 = vadd.f32 0.0, %v5026
        %5028 = vmatmul.bf16.gmra.mxu0 %v4258
        %v5029 = vpop.f32.mrf.mxu0
        %v5030 = vadd.f32 0.0, %v5029
        %v5031 = vpop.f32.mrf.mxu0
        %v5032 = vadd.f32 0.0, %v5031
        %5033 = vmatmul.bf16.gmra.mxu0 %v4261
        %v5034 = vpop.f32.mrf.mxu0
        %v5035 = vadd.f32 0.0, %v5034
        %v5036 = vpop.f32.mrf.mxu0
        %v5037 = vadd.f32 0.0, %v5036
        %5038 = vmatmul.bf16.gmra.mxu0 %v4264
        %v5039 = vpop.f32.mrf.mxu0
        %v5040 = vadd.f32 0.0, %v5039
        %v5041 = vpop.f32.mrf.mxu0
        %v5042 = vadd.f32 0.0, %v5041
        %5043 = vmatmul.bf16.gmra.mxu0 %v4267
        %v5044 = vpop.f32.mrf.mxu0
        %v5045 = vadd.f32 0.0, %v5044
        %v5046 = vpop.f32.mrf.mxu0
        %v5047 = vadd.f32 0.0, %v5046
        %5048 = vmatmul.bf16.gmra.mxu0 %v4270
        %v5049 = vpop.f32.mrf.mxu0
        %v5050 = vadd.f32 0.0, %v5049
        %v5051 = vpop.f32.mrf.mxu0
        %v5052 = vadd.f32 0.0, %v5051
        %5053 = vmatmul.bf16.gmra.mxu0 %v4273
        %v5054 = vpop.f32.mrf.mxu0
        %v5055 = vadd.f32 0.0, %v5054
        %v5056 = vpop.f32.mrf.mxu0
        %v5057 = vadd.f32 0.0, %v5056
        %5058 = vmatmul.bf16.gmra.mxu0 %v4276
        %v5059 = vpop.f32.mrf.mxu0
        %v5060 = vadd.f32 0.0, %v5059
        %v5061 = vpop.f32.mrf.mxu0
        %v5062 = vadd.f32 0.0, %v5061
        %5063 = vmatmul.bf16.gmra.mxu0 %v4279
        %v5064 = vpop.f32.mrf.mxu0
        %v5065 = vadd.f32 0.0, %v5064
        %v5066 = vpop.f32.mrf.mxu0
        %v5067 = vadd.f32 0.0, %v5066
        %5068 = vmatmul.bf16.gmra.mxu0 %v4282
        %v5069 = vpop.f32.mrf.mxu0
        %v5070 = vadd.f32 0.0, %v5069
        %v5071 = vpop.f32.mrf.mxu0
        %v5072 = vadd.f32 0.0, %v5071
        %5073 = vmatmul.bf16.gmra.mxu0 %v4285
        %v5074 = vpop.f32.mrf.mxu0
        %v5075 = vadd.f32 0.0, %v5074
        %v5076 = vpop.f32.mrf.mxu0
        %v5077 = vadd.f32 0.0, %v5076
        %5078 = vdwg.mxu0
        %5079 = vrot.lane.b32.xlu0 %v4297, 33
        %v5080 = vpop.permute.xlu0 %5079
        %5081 = vrot.lane.b32.xlu0 %v4299, 33
        %v5082 = vpop.permute.xlu0 %5081
        %5083 = vrot.lane.b32.xlu0 %v4302, 33
        %v5084 = vpop.permute.xlu0 %5083
        %5085 = vrot.lane.b32.xlu0 %v4304, 33
        %v5086 = vpop.permute.xlu0 %5085
        %5087 = vrot.lane.b32.xlu0 %v4396, 33
        %v5088 = vpop.permute.xlu0 %5087
        %5089 = vrot.lane.b32.xlu0 %v4398, 33
        %v5090 = vpop.permute.xlu0 %5089
        %5091 = vrot.lane.b32.xlu0 %v4401, 33
        %v5092 = vpop.permute.xlu0 %5091
        %5093 = vrot.lane.b32.xlu0 %v4403, 33
        %v5094 = vpop.permute.xlu0 %5093
        %5095 = vrot.lane.b32.xlu0 %v4495, 33
        %v5096 = vpop.permute.xlu0 %5095
        %5097 = vrot.lane.b32.xlu0 %v4497, 33
        %v5098 = vpop.permute.xlu0 %5097
        %5099 = vrot.lane.b32.xlu0 %v4500, 33
        %v5100 = vpop.permute.xlu0 %5099
        %5101 = vrot.lane.b32.xlu0 %v4502, 33
        %v5102 = vpop.permute.xlu0 %5101
        %5103 = vrot.lane.b32.xlu0 %v4594, 33
        %v5104 = vpop.permute.xlu0 %5103
        %5105 = vrot.lane.b32.xlu0 %v4596, 33
        %v5106 = vpop.permute.xlu0 %5105
        %5107 = vrot.lane.b32.xlu0 %v4599, 33
        %v5108 = vpop.permute.xlu0 %5107
        %5109 = vrot.lane.b32.xlu0 %v4601, 33
        %v5110 = vpop.permute.xlu0 %5109
        %5111 = vrot.lane.b32.xlu0 %v4693, 33
        %v5112 = vpop.permute.xlu0 %5111
        %5113 = vrot.lane.b32.xlu0 %v4695, 33
        %v5114 = vpop.permute.xlu0 %5113
        %5115 = vrot.lane.b32.xlu0 %v4698, 33
        %v5116 = vpop.permute.xlu0 %5115
        %5117 = vrot.lane.b32.xlu0 %v4700, 33
        %v5118 = vpop.permute.xlu0 %5117
        %5119 = vrot.lane.b32.xlu0 %v4792, 33
        %v5120 = vpop.permute.xlu0 %5119
        %5121 = vrot.lane.b32.xlu0 %v4794, 33
        %v5122 = vpop.permute.xlu0 %5121
        %5123 = vrot.lane.b32.xlu0 %v4797, 33
        %v5124 = vpop.permute.xlu0 %5123
        %5125 = vrot.lane.b32.xlu0 %v4799, 33
        %v5126 = vpop.permute.xlu0 %5125
        %5127 = vrot.lane.b32.xlu0 %v4891, 33
        %v5128 = vpop.permute.xlu0 %5127
        %5129 = vrot.lane.b32.xlu0 %v4893, 33
        %v5130 = vpop.permute.xlu0 %5129
        %5131 = vrot.lane.b32.xlu0 %v4896, 33
        %v5132 = vpop.permute.xlu0 %5131
        %5133 = vrot.lane.b32.xlu0 %v4898, 33
        %v5134 = vpop.permute.xlu0 %5133
        %5135 = vrot.lane.b32.xlu0 %v4990, 33
        %v5136 = vpop.permute.xlu0 %5135
        %5137 = vrot.lane.b32.xlu0 %v4992, 33
        %v5138 = vpop.permute.xlu0 %5137
        %5139 = vrot.lane.b32.xlu0 %v4995, 33
        %v5140 = vpop.permute.xlu0 %5139
        %5141 = vrot.lane.b32.xlu0 %v4997, 33
        %v5142 = vpop.permute.xlu0 %5141
        %v5143 = vsel %vm1706, %v5128, %v5136
        %v5144 = vsel %vm1706, %v5130, %v5138
        %v5145 = vsel %vm1706, %v5132, %v5140
        %v5146 = vsel %vm1706, %v5134, %v5142
        %v5147 = vsel %vm1706, %v5120, %v5128
        %v5148 = vsel %vm1706, %v5122, %v5130
        %v5149 = vsel %vm1706, %v5124, %v5132
        %v5150 = vsel %vm1706, %v5126, %v5134
        %v5151 = vsel %vm1706, %v5112, %v5120
        %v5152 = vsel %vm1706, %v5114, %v5122
        %v5153 = vsel %vm1706, %v5116, %v5124
        %v5154 = vsel %vm1706, %v5118, %v5126
        %v5155 = vsel %vm1706, %v5104, %v5112
        %v5156 = vsel %vm1706, %v5106, %v5114
        %v5157 = vsel %vm1706, %v5108, %v5116
        %v5158 = vsel %vm1706, %v5110, %v5118
        %v5159 = vsel %vm1706, %v5096, %v5104
        %v5160 = vsel %vm1706, %v5098, %v5106
        %v5161 = vsel %vm1706, %v5100, %v5108
        %v5162 = vsel %vm1706, %v5102, %v5110
        %v5163 = vsel %vm1706, %v5088, %v5096
        %v5164 = vsel %vm1706, %v5090, %v5098
        %v5165 = vsel %vm1706, %v5092, %v5100
        %v5166 = vsel %vm1706, %v5094, %v5102
        %v5167 = vsel %vm1706, %v5080, %v5088
        %v5168 = vsel %vm1706, %v5082, %v5090
        %v5169 = vsel %vm1706, %v5084, %v5092
        %v5170 = vsel %vm1706, %v5086, %v5094
        %v5171 = vsel %vm1706, %v5136, %v5080
        %v5172 = vsel %vm1706, %v5138, %v5082
        %v5173 = vsel %vm1706, %v5140, %v5084
        %v5174 = vsel %vm1706, %v5142, %v5086
        %v5175 = vmul.f32 %v5171, %v1739
        %v5176 = vmul.f32 %v5167, %v1740
        %v5177 = vmul.f32 %v5163, %v1741
        %v5178 = vmul.f32 %v5159, %v1742
        %v5179 = vmul.f32 %v5155, %v1743
        %v5180 = vmul.f32 %v5151, %v1744
        %v5181 = vmul.f32 %v5147, %v1745
        %v5182 = vmul.f32 %v5143, %v1746
        %v5183 = vmul.f32 %v5172, %v1739
        %v5184 = vmul.f32 %v5168, %v1740
        %v5185 = vmul.f32 %v5164, %v1741
        %v5186 = vmul.f32 %v5160, %v1742
        %v5187 = vmul.f32 %v5156, %v1743
        %v5188 = vmul.f32 %v5152, %v1744
        %v5189 = vmul.f32 %v5148, %v1745
        %v5190 = vmul.f32 %v5144, %v1746
        %v5191 = vmul.f32 %v5173, %v1739
        %v5192 = vmul.f32 %v5169, %v1740
        %v5193 = vmul.f32 %v5165, %v1741
        %v5194 = vmul.f32 %v5161, %v1742
        %v5195 = vmul.f32 %v5157, %v1743
        %v5196 = vmul.f32 %v5153, %v1744
        %v5197 = vmul.f32 %v5149, %v1745
        %v5198 = vmul.f32 %v5145, %v1746
        %v5199 = vmul.f32 %v5174, %v1739
        %v5200 = vmul.f32 %v5170, %v1740
        %v5201 = vmul.f32 %v5166, %v1741
        %v5202 = vmul.f32 %v5162, %v1742
        %v5203 = vmul.f32 %v5158, %v1743
        %v5204 = vmul.f32 %v5154, %v1744
        %v5205 = vmul.f32 %v5150, %v1745
        %v5206 = vmul.f32 %v5146, %v1746
        %5207 = vrot.lane.b32.xlu0 %v4307, 32
        %v5208 = vpop.permute.xlu0 %5207
        %5209 = vrot.lane.b32.xlu0 %v4309, 32
        %v5210 = vpop.permute.xlu0 %5209
        %5211 = vrot.lane.b32.xlu0 %v4312, 32
        %v5212 = vpop.permute.xlu0 %5211
        %5213 = vrot.lane.b32.xlu0 %v4314, 32
        %v5214 = vpop.permute.xlu0 %5213
        %5215 = vrot.lane.b32.xlu0 %v4406, 32
        %v5216 = vpop.permute.xlu0 %5215
        %5217 = vrot.lane.b32.xlu0 %v4408, 32
        %v5218 = vpop.permute.xlu0 %5217
        %5219 = vrot.lane.b32.xlu0 %v4411, 32
        %v5220 = vpop.permute.xlu0 %5219
        %5221 = vrot.lane.b32.xlu0 %v4413, 32
        %v5222 = vpop.permute.xlu0 %5221
        %5223 = vrot.lane.b32.xlu0 %v4505, 32
        %v5224 = vpop.permute.xlu0 %5223
        %5225 = vrot.lane.b32.xlu0 %v4507, 32
        %v5226 = vpop.permute.xlu0 %5225
        %5227 = vrot.lane.b32.xlu0 %v4510, 32
        %v5228 = vpop.permute.xlu0 %5227
        %5229 = vrot.lane.b32.xlu0 %v4512, 32
        %v5230 = vpop.permute.xlu0 %5229
        %5231 = vrot.lane.b32.xlu0 %v4604, 32
        %v5232 = vpop.permute.xlu0 %5231
        %5233 = vrot.lane.b32.xlu0 %v4606, 32
        %v5234 = vpop.permute.xlu0 %5233
        %5235 = vrot.lane.b32.xlu0 %v4609, 32
        %v5236 = vpop.permute.xlu0 %5235
        %5237 = vrot.lane.b32.xlu0 %v4611, 32
        %v5238 = vpop.permute.xlu0 %5237
        %5239 = vrot.lane.b32.xlu0 %v4703, 32
        %v5240 = vpop.permute.xlu0 %5239
        %5241 = vrot.lane.b32.xlu0 %v4705, 32
        %v5242 = vpop.permute.xlu0 %5241
        %5243 = vrot.lane.b32.xlu0 %v4708, 32
        %v5244 = vpop.permute.xlu0 %5243
        %5245 = vrot.lane.b32.xlu0 %v4710, 32
        %v5246 = vpop.permute.xlu0 %5245
        %5247 = vrot.lane.b32.xlu0 %v4802, 32
        %v5248 = vpop.permute.xlu0 %5247
        %5249 = vrot.lane.b32.xlu0 %v4804, 32
        %v5250 = vpop.permute.xlu0 %5249
        %5251 = vrot.lane.b32.xlu0 %v4807, 32
        %v5252 = vpop.permute.xlu0 %5251
        %5253 = vrot.lane.b32.xlu0 %v4809, 32
        %v5254 = vpop.permute.xlu0 %5253
        %5255 = vrot.lane.b32.xlu0 %v4901, 32
        %v5256 = vpop.permute.xlu0 %5255
        %5257 = vrot.lane.b32.xlu0 %v4903, 32
        %v5258 = vpop.permute.xlu0 %5257
        %5259 = vrot.lane.b32.xlu0 %v4906, 32
        %v5260 = vpop.permute.xlu0 %5259
        %5261 = vrot.lane.b32.xlu0 %v4908, 32
        %v5262 = vpop.permute.xlu0 %5261
        %5263 = vrot.lane.b32.xlu0 %v5000, 32
        %v5264 = vpop.permute.xlu0 %5263
        %5265 = vrot.lane.b32.xlu0 %v5002, 32
        %v5266 = vpop.permute.xlu0 %5265
        %5267 = vrot.lane.b32.xlu0 %v5005, 32
        %v5268 = vpop.permute.xlu0 %5267
        %5269 = vrot.lane.b32.xlu0 %v5007, 32
        %v5270 = vpop.permute.xlu0 %5269
        %v5271 = vsel %vm1843, %v5256, %v5264
        %v5272 = vsel %vm1843, %v5258, %v5266
        %v5273 = vsel %vm1843, %v5260, %v5268
        %v5274 = vsel %vm1843, %v5262, %v5270
        %v5275 = vsel %vm1843, %v5248, %v5256
        %v5276 = vsel %vm1843, %v5250, %v5258
        %v5277 = vsel %vm1843, %v5252, %v5260
        %v5278 = vsel %vm1843, %v5254, %v5262
        %v5279 = vsel %vm1843, %v5240, %v5248
        %v5280 = vsel %vm1843, %v5242, %v5250
        %v5281 = vsel %vm1843, %v5244, %v5252
        %v5282 = vsel %vm1843, %v5246, %v5254
        %v5283 = vsel %vm1843, %v5232, %v5240
        %v5284 = vsel %vm1843, %v5234, %v5242
        %v5285 = vsel %vm1843, %v5236, %v5244
        %v5286 = vsel %vm1843, %v5238, %v5246
        %v5287 = vsel %vm1843, %v5224, %v5232
        %v5288 = vsel %vm1843, %v5226, %v5234
        %v5289 = vsel %vm1843, %v5228, %v5236
        %v5290 = vsel %vm1843, %v5230, %v5238
        %v5291 = vsel %vm1843, %v5216, %v5224
        %v5292 = vsel %vm1843, %v5218, %v5226
        %v5293 = vsel %vm1843, %v5220, %v5228
        %v5294 = vsel %vm1843, %v5222, %v5230
        %v5295 = vsel %vm1843, %v5208, %v5216
        %v5296 = vsel %vm1843, %v5210, %v5218
        %v5297 = vsel %vm1843, %v5212, %v5220
        %v5298 = vsel %vm1843, %v5214, %v5222
        %v5299 = vsel %vm1843, %v5264, %v5208
        %v5300 = vsel %vm1843, %v5266, %v5210
        %v5301 = vsel %vm1843, %v5268, %v5212
        %v5302 = vsel %vm1843, %v5270, %v5214
        %v5303 = vmul.f32 %v5299, %v1876
        %v5304 = vmul.f32 %v5295, %v1877
        %v5305 = vmul.f32 %v5291, %v1878
        %v5306 = vmul.f32 %v5287, %v1879
        %v5307 = vmul.f32 %v5283, %v1880
        %v5308 = vmul.f32 %v5279, %v1881
        %v5309 = vmul.f32 %v5275, %v1882
        %v5310 = vmul.f32 %v5271, %v1883
        %v5311 = vmul.f32 %v5300, %v1876
        %v5312 = vmul.f32 %v5296, %v1877
        %v5313 = vmul.f32 %v5292, %v1878
        %v5314 = vmul.f32 %v5288, %v1879
        %v5315 = vmul.f32 %v5284, %v1880
        %v5316 = vmul.f32 %v5280, %v1881
        %v5317 = vmul.f32 %v5276, %v1882
        %v5318 = vmul.f32 %v5272, %v1883
        %v5319 = vmul.f32 %v5301, %v1876
        %v5320 = vmul.f32 %v5297, %v1877
        %v5321 = vmul.f32 %v5293, %v1878
        %v5322 = vmul.f32 %v5289, %v1879
        %v5323 = vmul.f32 %v5285, %v1880
        %v5324 = vmul.f32 %v5281, %v1881
        %v5325 = vmul.f32 %v5277, %v1882
        %v5326 = vmul.f32 %v5273, %v1883
        %v5327 = vmul.f32 %v5302, %v1876
        %v5328 = vmul.f32 %v5298, %v1877
        %v5329 = vmul.f32 %v5294, %v1878
        %v5330 = vmul.f32 %v5290, %v1879
        %v5331 = vmul.f32 %v5286, %v1880
        %v5332 = vmul.f32 %v5282, %v1881
        %v5333 = vmul.f32 %v5278, %v1882
        %v5334 = vmul.f32 %v5274, %v1883
        %v5335 = vadd.f32 %v5175, %v5303
        %v5336 = vadd.f32 %v5176, %v5304
        %v5337 = vadd.f32 %v5177, %v5305
        %v5338 = vadd.f32 %v5178, %v5306
        %v5339 = vadd.f32 %v5179, %v5307
        %v5340 = vadd.f32 %v5180, %v5308
        %v5341 = vadd.f32 %v5181, %v5309
        %v5342 = vadd.f32 %v5182, %v5310
        %v5343 = vadd.f32 %v5183, %v5311
        %v5344 = vadd.f32 %v5184, %v5312
        %v5345 = vadd.f32 %v5185, %v5313
        %v5346 = vadd.f32 %v5186, %v5314
        %v5347 = vadd.f32 %v5187, %v5315
        %v5348 = vadd.f32 %v5188, %v5316
        %v5349 = vadd.f32 %v5189, %v5317
        %v5350 = vadd.f32 %v5190, %v5318
        %v5351 = vadd.f32 %v5191, %v5319
        %v5352 = vadd.f32 %v5192, %v5320
        %v5353 = vadd.f32 %v5193, %v5321
        %v5354 = vadd.f32 %v5194, %v5322
        %v5355 = vadd.f32 %v5195, %v5323
        %v5356 = vadd.f32 %v5196, %v5324
        %v5357 = vadd.f32 %v5197, %v5325
        %v5358 = vadd.f32 %v5198, %v5326
        %v5359 = vadd.f32 %v5199, %v5327
        %v5360 = vadd.f32 %v5200, %v5328
        %v5361 = vadd.f32 %v5201, %v5329
        %v5362 = vadd.f32 %v5202, %v5330
        %v5363 = vadd.f32 %v5203, %v5331
        %v5364 = vadd.f32 %v5204, %v5332
        %v5365 = vadd.f32 %v5205, %v5333
        %v5366 = vadd.f32 %v5206, %v5334
        %5367 = vrot.lane.b32.xlu0 %v4317, 31
        %v5368 = vpop.permute.xlu0 %5367
        %5369 = vrot.lane.b32.xlu0 %v4319, 31
        %v5370 = vpop.permute.xlu0 %5369
        %5371 = vrot.lane.b32.xlu0 %v4322, 31
        %v5372 = vpop.permute.xlu0 %5371
        %5373 = vrot.lane.b32.xlu0 %v4324, 31
        %v5374 = vpop.permute.xlu0 %5373
        %5375 = vrot.lane.b32.xlu0 %v4416, 31
        %v5376 = vpop.permute.xlu0 %5375
        %5377 = vrot.lane.b32.xlu0 %v4418, 31
        %v5378 = vpop.permute.xlu0 %5377
        %5379 = vrot.lane.b32.xlu0 %v4421, 31
        %v5380 = vpop.permute.xlu0 %5379
        %5381 = vrot.lane.b32.xlu0 %v4423, 31
        %v5382 = vpop.permute.xlu0 %5381
        %5383 = vrot.lane.b32.xlu0 %v4515, 31
        %v5384 = vpop.permute.xlu0 %5383
        %5385 = vrot.lane.b32.xlu0 %v4517, 31
        %v5386 = vpop.permute.xlu0 %5385
        %5387 = vrot.lane.b32.xlu0 %v4520, 31
        %v5388 = vpop.permute.xlu0 %5387
        %5389 = vrot.lane.b32.xlu0 %v4522, 31
        %v5390 = vpop.permute.xlu0 %5389
        %5391 = vrot.lane.b32.xlu0 %v4614, 31
        %v5392 = vpop.permute.xlu0 %5391
        %5393 = vrot.lane.b32.xlu0 %v4616, 31
        %v5394 = vpop.permute.xlu0 %5393
        %5395 = vrot.lane.b32.xlu0 %v4619, 31
        %v5396 = vpop.permute.xlu0 %5395
        %5397 = vrot.lane.b32.xlu0 %v4621, 31
        %v5398 = vpop.permute.xlu0 %5397
        %5399 = vrot.lane.b32.xlu0 %v4713, 31
        %v5400 = vpop.permute.xlu0 %5399
        %5401 = vrot.lane.b32.xlu0 %v4715, 31
        %v5402 = vpop.permute.xlu0 %5401
        %5403 = vrot.lane.b32.xlu0 %v4718, 31
        %v5404 = vpop.permute.xlu0 %5403
        %5405 = vrot.lane.b32.xlu0 %v4720, 31
        %v5406 = vpop.permute.xlu0 %5405
        %5407 = vrot.lane.b32.xlu0 %v4812, 31
        %v5408 = vpop.permute.xlu0 %5407
        %5409 = vrot.lane.b32.xlu0 %v4814, 31
        %v5410 = vpop.permute.xlu0 %5409
        %5411 = vrot.lane.b32.xlu0 %v4817, 31
        %v5412 = vpop.permute.xlu0 %5411
        %5413 = vrot.lane.b32.xlu0 %v4819, 31
        %v5414 = vpop.permute.xlu0 %5413
        %5415 = vrot.lane.b32.xlu0 %v4911, 31
        %v5416 = vpop.permute.xlu0 %5415
        %5417 = vrot.lane.b32.xlu0 %v4913, 31
        %v5418 = vpop.permute.xlu0 %5417
        %5419 = vrot.lane.b32.xlu0 %v4916, 31
        %v5420 = vpop.permute.xlu0 %5419
        %5421 = vrot.lane.b32.xlu0 %v4918, 31
        %v5422 = vpop.permute.xlu0 %5421
        %5423 = vrot.lane.b32.xlu0 %v5010, 31
        %v5424 = vpop.permute.xlu0 %5423
        %5425 = vrot.lane.b32.xlu0 %v5012, 31
        %v5426 = vpop.permute.xlu0 %5425
        %5427 = vrot.lane.b32.xlu0 %v5015, 31
        %v5428 = vpop.permute.xlu0 %5427
        %5429 = vrot.lane.b32.xlu0 %v5017, 31
        %v5430 = vpop.permute.xlu0 %5429
        %v5431 = vsel %vm2012, %v5416, %v5424
        %v5432 = vsel %vm2012, %v5418, %v5426
        %v5433 = vsel %vm2012, %v5420, %v5428
        %v5434 = vsel %vm2012, %v5422, %v5430
        %v5435 = vsel %vm2012, %v5408, %v5416
        %v5436 = vsel %vm2012, %v5410, %v5418
        %v5437 = vsel %vm2012, %v5412, %v5420
        %v5438 = vsel %vm2012, %v5414, %v5422
        %v5439 = vsel %vm2012, %v5400, %v5408
        %v5440 = vsel %vm2012, %v5402, %v5410
        %v5441 = vsel %vm2012, %v5404, %v5412
        %v5442 = vsel %vm2012, %v5406, %v5414
        %v5443 = vsel %vm2012, %v5392, %v5400
        %v5444 = vsel %vm2012, %v5394, %v5402
        %v5445 = vsel %vm2012, %v5396, %v5404
        %v5446 = vsel %vm2012, %v5398, %v5406
        %v5447 = vsel %vm2012, %v5384, %v5392
        %v5448 = vsel %vm2012, %v5386, %v5394
        %v5449 = vsel %vm2012, %v5388, %v5396
        %v5450 = vsel %vm2012, %v5390, %v5398
        %v5451 = vsel %vm2012, %v5376, %v5384
        %v5452 = vsel %vm2012, %v5378, %v5386
        %v5453 = vsel %vm2012, %v5380, %v5388
        %v5454 = vsel %vm2012, %v5382, %v5390
        %v5455 = vsel %vm2012, %v5368, %v5376
        %v5456 = vsel %vm2012, %v5370, %v5378
        %v5457 = vsel %vm2012, %v5372, %v5380
        %v5458 = vsel %vm2012, %v5374, %v5382
        %v5459 = vsel %vm2012, %v5424, %v5368
        %v5460 = vsel %vm2012, %v5426, %v5370
        %v5461 = vsel %vm2012, %v5428, %v5372
        %v5462 = vsel %vm2012, %v5430, %v5374
        %v5463 = vmul.f32 %v5459, %v2045
        %v5464 = vmul.f32 %v5455, %v2046
        %v5465 = vmul.f32 %v5451, %v2047
        %v5466 = vmul.f32 %v5447, %v2048
        %v5467 = vmul.f32 %v5443, %v2049
        %v5468 = vmul.f32 %v5439, %v2050
        %v5469 = vmul.f32 %v5435, %v2051
        %v5470 = vmul.f32 %v5431, %v2052
        %v5471 = vmul.f32 %v5460, %v2045
        %v5472 = vmul.f32 %v5456, %v2046
        %v5473 = vmul.f32 %v5452, %v2047
        %v5474 = vmul.f32 %v5448, %v2048
        %v5475 = vmul.f32 %v5444, %v2049
        %v5476 = vmul.f32 %v5440, %v2050
        %v5477 = vmul.f32 %v5436, %v2051
        %v5478 = vmul.f32 %v5432, %v2052
        %v5479 = vmul.f32 %v5461, %v2045
        %v5480 = vmul.f32 %v5457, %v2046
        %v5481 = vmul.f32 %v5453, %v2047
        %v5482 = vmul.f32 %v5449, %v2048
        %v5483 = vmul.f32 %v5445, %v2049
        %v5484 = vmul.f32 %v5441, %v2050
        %v5485 = vmul.f32 %v5437, %v2051
        %v5486 = vmul.f32 %v5433, %v2052
        %v5487 = vmul.f32 %v5462, %v2045
        %v5488 = vmul.f32 %v5458, %v2046
        %v5489 = vmul.f32 %v5454, %v2047
        %v5490 = vmul.f32 %v5450, %v2048
        %v5491 = vmul.f32 %v5446, %v2049
        %v5492 = vmul.f32 %v5442, %v2050
        %v5493 = vmul.f32 %v5438, %v2051
        %v5494 = vmul.f32 %v5434, %v2052
        %v5495 = vadd.f32 %v5335, %v5463
        %v5496 = vadd.f32 %v5336, %v5464
        %v5497 = vadd.f32 %v5337, %v5465
        %v5498 = vadd.f32 %v5338, %v5466
        %v5499 = vadd.f32 %v5339, %v5467
        %v5500 = vadd.f32 %v5340, %v5468
        %v5501 = vadd.f32 %v5341, %v5469
        %v5502 = vadd.f32 %v5342, %v5470
        %v5503 = vadd.f32 %v5343, %v5471
        %v5504 = vadd.f32 %v5344, %v5472
        %v5505 = vadd.f32 %v5345, %v5473
        %v5506 = vadd.f32 %v5346, %v5474
        %v5507 = vadd.f32 %v5347, %v5475
        %v5508 = vadd.f32 %v5348, %v5476
        %v5509 = vadd.f32 %v5349, %v5477
        %v5510 = vadd.f32 %v5350, %v5478
        %v5511 = vadd.f32 %v5351, %v5479
        %v5512 = vadd.f32 %v5352, %v5480
        %v5513 = vadd.f32 %v5353, %v5481
        %v5514 = vadd.f32 %v5354, %v5482
        %v5515 = vadd.f32 %v5355, %v5483
        %v5516 = vadd.f32 %v5356, %v5484
        %v5517 = vadd.f32 %v5357, %v5485
        %v5518 = vadd.f32 %v5358, %v5486
        %v5519 = vadd.f32 %v5359, %v5487
        %v5520 = vadd.f32 %v5360, %v5488
        %v5521 = vadd.f32 %v5361, %v5489
        %v5522 = vadd.f32 %v5362, %v5490
        %v5523 = vadd.f32 %v5363, %v5491
        %v5524 = vadd.f32 %v5364, %v5492
        %v5525 = vadd.f32 %v5365, %v5493
        %v5526 = vadd.f32 %v5366, %v5494
        %5527 = vrot.lane.b32.xlu0 %v4327, 1
        %v5528 = vpop.permute.xlu0 %5527
        %5529 = vrot.lane.b32.xlu0 %v4329, 1
        %v5530 = vpop.permute.xlu0 %5529
        %5531 = vrot.lane.b32.xlu0 %v4332, 1
        %v5532 = vpop.permute.xlu0 %5531
        %5533 = vrot.lane.b32.xlu0 %v4334, 1
        %v5534 = vpop.permute.xlu0 %5533
        %5535 = vrot.lane.b32.xlu0 %v4426, 1
        %v5536 = vpop.permute.xlu0 %5535
        %5537 = vrot.lane.b32.xlu0 %v4428, 1
        %v5538 = vpop.permute.xlu0 %5537
        %5539 = vrot.lane.b32.xlu0 %v4431, 1
        %v5540 = vpop.permute.xlu0 %5539
        %5541 = vrot.lane.b32.xlu0 %v4433, 1
        %v5542 = vpop.permute.xlu0 %5541
        %5543 = vrot.lane.b32.xlu0 %v4525, 1
        %v5544 = vpop.permute.xlu0 %5543
        %5545 = vrot.lane.b32.xlu0 %v4527, 1
        %v5546 = vpop.permute.xlu0 %5545
        %5547 = vrot.lane.b32.xlu0 %v4530, 1
        %v5548 = vpop.permute.xlu0 %5547
        %5549 = vrot.lane.b32.xlu0 %v4532, 1
        %v5550 = vpop.permute.xlu0 %5549
        %5551 = vrot.lane.b32.xlu0 %v4624, 1
        %v5552 = vpop.permute.xlu0 %5551
        %5553 = vrot.lane.b32.xlu0 %v4626, 1
        %v5554 = vpop.permute.xlu0 %5553
        %5555 = vrot.lane.b32.xlu0 %v4629, 1
        %v5556 = vpop.permute.xlu0 %5555
        %5557 = vrot.lane.b32.xlu0 %v4631, 1
        %v5558 = vpop.permute.xlu0 %5557
        %5559 = vrot.lane.b32.xlu0 %v4723, 1
        %v5560 = vpop.permute.xlu0 %5559
        %5561 = vrot.lane.b32.xlu0 %v4725, 1
        %v5562 = vpop.permute.xlu0 %5561
        %5563 = vrot.lane.b32.xlu0 %v4728, 1
        %v5564 = vpop.permute.xlu0 %5563
        %5565 = vrot.lane.b32.xlu0 %v4730, 1
        %v5566 = vpop.permute.xlu0 %5565
        %5567 = vrot.lane.b32.xlu0 %v4822, 1
        %v5568 = vpop.permute.xlu0 %5567
        %5569 = vrot.lane.b32.xlu0 %v4824, 1
        %v5570 = vpop.permute.xlu0 %5569
        %5571 = vrot.lane.b32.xlu0 %v4827, 1
        %v5572 = vpop.permute.xlu0 %5571
        %5573 = vrot.lane.b32.xlu0 %v4829, 1
        %v5574 = vpop.permute.xlu0 %5573
        %5575 = vrot.lane.b32.xlu0 %v4921, 1
        %v5576 = vpop.permute.xlu0 %5575
        %5577 = vrot.lane.b32.xlu0 %v4923, 1
        %v5578 = vpop.permute.xlu0 %5577
        %5579 = vrot.lane.b32.xlu0 %v4926, 1
        %v5580 = vpop.permute.xlu0 %5579
        %5581 = vrot.lane.b32.xlu0 %v4928, 1
        %v5582 = vpop.permute.xlu0 %5581
        %5583 = vrot.lane.b32.xlu0 %v5020, 1
        %v5584 = vpop.permute.xlu0 %5583
        %5585 = vrot.lane.b32.xlu0 %v5022, 1
        %v5586 = vpop.permute.xlu0 %5585
        %5587 = vrot.lane.b32.xlu0 %v5025, 1
        %v5588 = vpop.permute.xlu0 %5587
        %5589 = vrot.lane.b32.xlu0 %v5027, 1
        %v5590 = vpop.permute.xlu0 %5589
        %v5591 = vsel %vm2181, %v5576, %v5584
        %v5592 = vsel %vm2181, %v5578, %v5586
        %v5593 = vsel %vm2181, %v5580, %v5588
        %v5594 = vsel %vm2181, %v5582, %v5590
        %v5595 = vsel %vm2181, %v5568, %v5576
        %v5596 = vsel %vm2181, %v5570, %v5578
        %v5597 = vsel %vm2181, %v5572, %v5580
        %v5598 = vsel %vm2181, %v5574, %v5582
        %v5599 = vsel %vm2181, %v5560, %v5568
        %v5600 = vsel %vm2181, %v5562, %v5570
        %v5601 = vsel %vm2181, %v5564, %v5572
        %v5602 = vsel %vm2181, %v5566, %v5574
        %v5603 = vsel %vm2181, %v5552, %v5560
        %v5604 = vsel %vm2181, %v5554, %v5562
        %v5605 = vsel %vm2181, %v5556, %v5564
        %v5606 = vsel %vm2181, %v5558, %v5566
        %v5607 = vsel %vm2181, %v5544, %v5552
        %v5608 = vsel %vm2181, %v5546, %v5554
        %v5609 = vsel %vm2181, %v5548, %v5556
        %v5610 = vsel %vm2181, %v5550, %v5558
        %v5611 = vsel %vm2181, %v5536, %v5544
        %v5612 = vsel %vm2181, %v5538, %v5546
        %v5613 = vsel %vm2181, %v5540, %v5548
        %v5614 = vsel %vm2181, %v5542, %v5550
        %v5615 = vsel %vm2181, %v5528, %v5536
        %v5616 = vsel %vm2181, %v5530, %v5538
        %v5617 = vsel %vm2181, %v5532, %v5540
        %v5618 = vsel %vm2181, %v5534, %v5542
        %v5619 = vsel %vm2181, %v5584, %v5528
        %v5620 = vsel %vm2181, %v5586, %v5530
        %v5621 = vsel %vm2181, %v5588, %v5532
        %v5622 = vsel %vm2181, %v5590, %v5534
        %v5623 = vmul.f32 %v5619, %v2214
        %v5624 = vmul.f32 %v5615, %v2215
        %v5625 = vmul.f32 %v5611, %v2216
        %v5626 = vmul.f32 %v5607, %v2217
        %v5627 = vmul.f32 %v5603, %v2218
        %v5628 = vmul.f32 %v5599, %v2219
        %v5629 = vmul.f32 %v5595, %v2220
        %v5630 = vmul.f32 %v5591, %v2221
        %v5631 = vmul.f32 %v5620, %v2214
        %v5632 = vmul.f32 %v5616, %v2215
        %v5633 = vmul.f32 %v5612, %v2216
        %v5634 = vmul.f32 %v5608, %v2217
        %v5635 = vmul.f32 %v5604, %v2218
        %v5636 = vmul.f32 %v5600, %v2219
        %v5637 = vmul.f32 %v5596, %v2220
        %v5638 = vmul.f32 %v5592, %v2221
        %v5639 = vmul.f32 %v5621, %v2214
        %v5640 = vmul.f32 %v5617, %v2215
        %v5641 = vmul.f32 %v5613, %v2216
        %v5642 = vmul.f32 %v5609, %v2217
        %v5643 = vmul.f32 %v5605, %v2218
        %v5644 = vmul.f32 %v5601, %v2219
        %v5645 = vmul.f32 %v5597, %v2220
        %v5646 = vmul.f32 %v5593, %v2221
        %v5647 = vmul.f32 %v5622, %v2214
        %v5648 = vmul.f32 %v5618, %v2215
        %v5649 = vmul.f32 %v5614, %v2216
        %v5650 = vmul.f32 %v5610, %v2217
        %v5651 = vmul.f32 %v5606, %v2218
        %v5652 = vmul.f32 %v5602, %v2219
        %v5653 = vmul.f32 %v5598, %v2220
        %v5654 = vmul.f32 %v5594, %v2221
        %v5655 = vadd.f32 %v5495, %v5623
        %v5656 = vadd.f32 %v5496, %v5624
        %v5657 = vadd.f32 %v5497, %v5625
        %v5658 = vadd.f32 %v5498, %v5626
        %v5659 = vadd.f32 %v5499, %v5627
        %v5660 = vadd.f32 %v5500, %v5628
        %v5661 = vadd.f32 %v5501, %v5629
        %v5662 = vadd.f32 %v5502, %v5630
        %v5663 = vadd.f32 %v5503, %v5631
        %v5664 = vadd.f32 %v5504, %v5632
        %v5665 = vadd.f32 %v5505, %v5633
        %v5666 = vadd.f32 %v5506, %v5634
        %v5667 = vadd.f32 %v5507, %v5635
        %v5668 = vadd.f32 %v5508, %v5636
        %v5669 = vadd.f32 %v5509, %v5637
        %v5670 = vadd.f32 %v5510, %v5638
        %v5671 = vadd.f32 %v5511, %v5639
        %v5672 = vadd.f32 %v5512, %v5640
        %v5673 = vadd.f32 %v5513, %v5641
        %v5674 = vadd.f32 %v5514, %v5642
        %v5675 = vadd.f32 %v5515, %v5643
        %v5676 = vadd.f32 %v5516, %v5644
        %v5677 = vadd.f32 %v5517, %v5645
        %v5678 = vadd.f32 %v5518, %v5646
        %v5679 = vadd.f32 %v5519, %v5647
        %v5680 = vadd.f32 %v5520, %v5648
        %v5681 = vadd.f32 %v5521, %v5649
        %v5682 = vadd.f32 %v5522, %v5650
        %v5683 = vadd.f32 %v5523, %v5651
        %v5684 = vadd.f32 %v5524, %v5652
        %v5685 = vadd.f32 %v5525, %v5653
        %v5686 = vadd.f32 %v5526, %v5654
        %v5687 = vadd.f32 %v5655, %v4337
        %v5688 = vadd.f32 %v5656, %v4436
        %v5689 = vadd.f32 %v5657, %v4535
        %v5690 = vadd.f32 %v5658, %v4634
        %v5691 = vadd.f32 %v5659, %v4733
        %v5692 = vadd.f32 %v5660, %v4832
        %v5693 = vadd.f32 %v5661, %v4931
        %v5694 = vadd.f32 %v5662, %v5030
        %v5695 = vadd.f32 %v5663, %v4339
        %v5696 = vadd.f32 %v5664, %v4438
        %v5697 = vadd.f32 %v5665, %v4537
        %v5698 = vadd.f32 %v5666, %v4636
        %v5699 = vadd.f32 %v5667, %v4735
        %v5700 = vadd.f32 %v5668, %v4834
        %v5701 = vadd.f32 %v5669, %v4933
        %v5702 = vadd.f32 %v5670, %v5032
        %v5703 = vadd.f32 %v5671, %v4342
        %v5704 = vadd.f32 %v5672, %v4441
        %v5705 = vadd.f32 %v5673, %v4540
        %v5706 = vadd.f32 %v5674, %v4639
        %v5707 = vadd.f32 %v5675, %v4738
        %v5708 = vadd.f32 %v5676, %v4837
        %v5709 = vadd.f32 %v5677, %v4936
        %v5710 = vadd.f32 %v5678, %v5035
        %v5711 = vadd.f32 %v5679, %v4344
        %v5712 = vadd.f32 %v5680, %v4443
        %v5713 = vadd.f32 %v5681, %v4542
        %v5714 = vadd.f32 %v5682, %v4641
        %v5715 = vadd.f32 %v5683, %v4740
        %v5716 = vadd.f32 %v5684, %v4839
        %v5717 = vadd.f32 %v5685, %v4938
        %v5718 = vadd.f32 %v5686, %v5037
        %5719 = vrot.lane.b32.xlu0 %v4347, 127
        %v5720 = vpop.permute.xlu0 %5719
        %5721 = vrot.lane.b32.xlu0 %v4349, 127
        %v5722 = vpop.permute.xlu0 %5721
        %5723 = vrot.lane.b32.xlu0 %v4352, 127
        %v5724 = vpop.permute.xlu0 %5723
        %5725 = vrot.lane.b32.xlu0 %v4354, 127
        %v5726 = vpop.permute.xlu0 %5725
        %5727 = vrot.lane.b32.xlu0 %v4446, 127
        %v5728 = vpop.permute.xlu0 %5727
        %5729 = vrot.lane.b32.xlu0 %v4448, 127
        %v5730 = vpop.permute.xlu0 %5729
        %5731 = vrot.lane.b32.xlu0 %v4451, 127
        %v5732 = vpop.permute.xlu0 %5731
        %5733 = vrot.lane.b32.xlu0 %v4453, 127
        %v5734 = vpop.permute.xlu0 %5733
        %5735 = vrot.lane.b32.xlu0 %v4545, 127
        %v5736 = vpop.permute.xlu0 %5735
        %5737 = vrot.lane.b32.xlu0 %v4547, 127
        %v5738 = vpop.permute.xlu0 %5737
        %5739 = vrot.lane.b32.xlu0 %v4550, 127
        %v5740 = vpop.permute.xlu0 %5739
        %5741 = vrot.lane.b32.xlu0 %v4552, 127
        %v5742 = vpop.permute.xlu0 %5741
        %5743 = vrot.lane.b32.xlu0 %v4644, 127
        %v5744 = vpop.permute.xlu0 %5743
        %5745 = vrot.lane.b32.xlu0 %v4646, 127
        %v5746 = vpop.permute.xlu0 %5745
        %5747 = vrot.lane.b32.xlu0 %v4649, 127
        %v5748 = vpop.permute.xlu0 %5747
        %5749 = vrot.lane.b32.xlu0 %v4651, 127
        %v5750 = vpop.permute.xlu0 %5749
        %5751 = vrot.lane.b32.xlu0 %v4743, 127
        %v5752 = vpop.permute.xlu0 %5751
        %5753 = vrot.lane.b32.xlu0 %v4745, 127
        %v5754 = vpop.permute.xlu0 %5753
        %5755 = vrot.lane.b32.xlu0 %v4748, 127
        %v5756 = vpop.permute.xlu0 %5755
        %5757 = vrot.lane.b32.xlu0 %v4750, 127
        %v5758 = vpop.permute.xlu0 %5757
        %5759 = vrot.lane.b32.xlu0 %v4842, 127
        %v5760 = vpop.permute.xlu0 %5759
        %5761 = vrot.lane.b32.xlu0 %v4844, 127
        %v5762 = vpop.permute.xlu0 %5761
        %5763 = vrot.lane.b32.xlu0 %v4847, 127
        %v5764 = vpop.permute.xlu0 %5763
        %5765 = vrot.lane.b32.xlu0 %v4849, 127
        %v5766 = vpop.permute.xlu0 %5765
        %5767 = vrot.lane.b32.xlu0 %v4941, 127
        %v5768 = vpop.permute.xlu0 %5767
        %5769 = vrot.lane.b32.xlu0 %v4943, 127
        %v5770 = vpop.permute.xlu0 %5769
        %5771 = vrot.lane.b32.xlu0 %v4946, 127
        %v5772 = vpop.permute.xlu0 %5771
        %5773 = vrot.lane.b32.xlu0 %v4948, 127
        %v5774 = vpop.permute.xlu0 %5773
        %5775 = vrot.lane.b32.xlu0 %v5040, 127
        %v5776 = vpop.permute.xlu0 %5775
        %5777 = vrot.lane.b32.xlu0 %v5042, 127
        %v5778 = vpop.permute.xlu0 %5777
        %5779 = vrot.lane.b32.xlu0 %v5045, 127
        %v5780 = vpop.permute.xlu0 %5779
        %5781 = vrot.lane.b32.xlu0 %v5047, 127
        %v5782 = vpop.permute.xlu0 %5781
        %v5783 = vsel %vm2382, %v5768, %v5776
        %v5784 = vsel %vm2382, %v5770, %v5778
        %v5785 = vsel %vm2382, %v5772, %v5780
        %v5786 = vsel %vm2382, %v5774, %v5782
        %v5787 = vsel %vm2382, %v5760, %v5768
        %v5788 = vsel %vm2382, %v5762, %v5770
        %v5789 = vsel %vm2382, %v5764, %v5772
        %v5790 = vsel %vm2382, %v5766, %v5774
        %v5791 = vsel %vm2382, %v5752, %v5760
        %v5792 = vsel %vm2382, %v5754, %v5762
        %v5793 = vsel %vm2382, %v5756, %v5764
        %v5794 = vsel %vm2382, %v5758, %v5766
        %v5795 = vsel %vm2382, %v5744, %v5752
        %v5796 = vsel %vm2382, %v5746, %v5754
        %v5797 = vsel %vm2382, %v5748, %v5756
        %v5798 = vsel %vm2382, %v5750, %v5758
        %v5799 = vsel %vm2382, %v5736, %v5744
        %v5800 = vsel %vm2382, %v5738, %v5746
        %v5801 = vsel %vm2382, %v5740, %v5748
        %v5802 = vsel %vm2382, %v5742, %v5750
        %v5803 = vsel %vm2382, %v5728, %v5736
        %v5804 = vsel %vm2382, %v5730, %v5738
        %v5805 = vsel %vm2382, %v5732, %v5740
        %v5806 = vsel %vm2382, %v5734, %v5742
        %v5807 = vsel %vm2382, %v5720, %v5728
        %v5808 = vsel %vm2382, %v5722, %v5730
        %v5809 = vsel %vm2382, %v5724, %v5732
        %v5810 = vsel %vm2382, %v5726, %v5734
        %v5811 = vsel %vm2382, %v5776, %v5720
        %v5812 = vsel %vm2382, %v5778, %v5722
        %v5813 = vsel %vm2382, %v5780, %v5724
        %v5814 = vsel %vm2382, %v5782, %v5726
        %v5815 = vmul.f32 %v5807, %v2415
        %v5816 = vmul.f32 %v5803, %v2416
        %v5817 = vmul.f32 %v5799, %v2417
        %v5818 = vmul.f32 %v5795, %v2418
        %v5819 = vmul.f32 %v5791, %v2419
        %v5820 = vmul.f32 %v5787, %v2420
        %v5821 = vmul.f32 %v5783, %v2421
        %v5822 = vmul.f32 %v5811, %v2422
        %v5823 = vmul.f32 %v5808, %v2415
        %v5824 = vmul.f32 %v5804, %v2416
        %v5825 = vmul.f32 %v5800, %v2417
        %v5826 = vmul.f32 %v5796, %v2418
        %v5827 = vmul.f32 %v5792, %v2419
        %v5828 = vmul.f32 %v5788, %v2420
        %v5829 = vmul.f32 %v5784, %v2421
        %v5830 = vmul.f32 %v5812, %v2422
        %v5831 = vmul.f32 %v5809, %v2415
        %v5832 = vmul.f32 %v5805, %v2416
        %v5833 = vmul.f32 %v5801, %v2417
        %v5834 = vmul.f32 %v5797, %v2418
        %v5835 = vmul.f32 %v5793, %v2419
        %v5836 = vmul.f32 %v5789, %v2420
        %v5837 = vmul.f32 %v5785, %v2421
        %v5838 = vmul.f32 %v5813, %v2422
        %v5839 = vmul.f32 %v5810, %v2415
        %v5840 = vmul.f32 %v5806, %v2416
        %v5841 = vmul.f32 %v5802, %v2417
        %v5842 = vmul.f32 %v5798, %v2418
        %v5843 = vmul.f32 %v5794, %v2419
        %v5844 = vmul.f32 %v5790, %v2420
        %v5845 = vmul.f32 %v5786, %v2421
        %v5846 = vmul.f32 %v5814, %v2422
        %v5847 = vadd.f32 %v5687, %v5815
        %v5848 = vadd.f32 %v5688, %v5816
        %v5849 = vadd.f32 %v5689, %v5817
        %v5850 = vadd.f32 %v5690, %v5818
        %v5851 = vadd.f32 %v5691, %v5819
        %v5852 = vadd.f32 %v5692, %v5820
        %v5853 = vadd.f32 %v5693, %v5821
        %v5854 = vadd.f32 %v5694, %v5822
        %v5855 = vadd.f32 %v5695, %v5823
        %v5856 = vadd.f32 %v5696, %v5824
        %v5857 = vadd.f32 %v5697, %v5825
        %v5858 = vadd.f32 %v5698, %v5826
        %v5859 = vadd.f32 %v5699, %v5827
        %v5860 = vadd.f32 %v5700, %v5828
        %v5861 = vadd.f32 %v5701, %v5829
        %v5862 = vadd.f32 %v5702, %v5830
        %v5863 = vadd.f32 %v5703, %v5831
        %v5864 = vadd.f32 %v5704, %v5832
        %v5865 = vadd.f32 %v5705, %v5833
        %v5866 = vadd.f32 %v5706, %v5834
        %v5867 = vadd.f32 %v5707, %v5835
        %v5868 = vadd.f32 %v5708, %v5836
        %v5869 = vadd.f32 %v5709, %v5837
        %v5870 = vadd.f32 %v5710, %v5838
        %v5871 = vadd.f32 %v5711, %v5839
        %v5872 = vadd.f32 %v5712, %v5840
        %v5873 = vadd.f32 %v5713, %v5841
        %v5874 = vadd.f32 %v5714, %v5842
        %v5875 = vadd.f32 %v5715, %v5843
        %v5876 = vadd.f32 %v5716, %v5844
        %v5877 = vadd.f32 %v5717, %v5845
        %v5878 = vadd.f32 %v5718, %v5846
        %5879 = vrot.lane.b32.xlu0 %v4357, 97
        %v5880 = vpop.permute.xlu0 %5879
        %5881 = vrot.lane.b32.xlu0 %v4359, 97
        %v5882 = vpop.permute.xlu0 %5881
        %5883 = vrot.lane.b32.xlu0 %v4362, 97
        %v5884 = vpop.permute.xlu0 %5883
        %5885 = vrot.lane.b32.xlu0 %v4364, 97
        %v5886 = vpop.permute.xlu0 %5885
        %5887 = vrot.lane.b32.xlu0 %v4456, 97
        %v5888 = vpop.permute.xlu0 %5887
        %5889 = vrot.lane.b32.xlu0 %v4458, 97
        %v5890 = vpop.permute.xlu0 %5889
        %5891 = vrot.lane.b32.xlu0 %v4461, 97
        %v5892 = vpop.permute.xlu0 %5891
        %5893 = vrot.lane.b32.xlu0 %v4463, 97
        %v5894 = vpop.permute.xlu0 %5893
        %5895 = vrot.lane.b32.xlu0 %v4555, 97
        %v5896 = vpop.permute.xlu0 %5895
        %5897 = vrot.lane.b32.xlu0 %v4557, 97
        %v5898 = vpop.permute.xlu0 %5897
        %5899 = vrot.lane.b32.xlu0 %v4560, 97
        %v5900 = vpop.permute.xlu0 %5899
        %5901 = vrot.lane.b32.xlu0 %v4562, 97
        %v5902 = vpop.permute.xlu0 %5901
        %5903 = vrot.lane.b32.xlu0 %v4654, 97
        %v5904 = vpop.permute.xlu0 %5903
        %5905 = vrot.lane.b32.xlu0 %v4656, 97
        %v5906 = vpop.permute.xlu0 %5905
        %5907 = vrot.lane.b32.xlu0 %v4659, 97
        %v5908 = vpop.permute.xlu0 %5907
        %5909 = vrot.lane.b32.xlu0 %v4661, 97
        %v5910 = vpop.permute.xlu0 %5909
        %5911 = vrot.lane.b32.xlu0 %v4753, 97
        %v5912 = vpop.permute.xlu0 %5911
        %5913 = vrot.lane.b32.xlu0 %v4755, 97
        %v5914 = vpop.permute.xlu0 %5913
        %5915 = vrot.lane.b32.xlu0 %v4758, 97
        %v5916 = vpop.permute.xlu0 %5915
        %5917 = vrot.lane.b32.xlu0 %v4760, 97
        %v5918 = vpop.permute.xlu0 %5917
        %5919 = vrot.lane.b32.xlu0 %v4852, 97
        %v5920 = vpop.permute.xlu0 %5919
        %5921 = vrot.lane.b32.xlu0 %v4854, 97
        %v5922 = vpop.permute.xlu0 %5921
        %5923 = vrot.lane.b32.xlu0 %v4857, 97
        %v5924 = vpop.permute.xlu0 %5923
        %5925 = vrot.lane.b32.xlu0 %v4859, 97
        %v5926 = vpop.permute.xlu0 %5925
        %5927 = vrot.lane.b32.xlu0 %v4951, 97
        %v5928 = vpop.permute.xlu0 %5927
        %5929 = vrot.lane.b32.xlu0 %v4953, 97
        %v5930 = vpop.permute.xlu0 %5929
        %5931 = vrot.lane.b32.xlu0 %v4956, 97
        %v5932 = vpop.permute.xlu0 %5931
        %5933 = vrot.lane.b32.xlu0 %v4958, 97
        %v5934 = vpop.permute.xlu0 %5933
        %5935 = vrot.lane.b32.xlu0 %v5050, 97
        %v5936 = vpop.permute.xlu0 %5935
        %5937 = vrot.lane.b32.xlu0 %v5052, 97
        %v5938 = vpop.permute.xlu0 %5937
        %5939 = vrot.lane.b32.xlu0 %v5055, 97
        %v5940 = vpop.permute.xlu0 %5939
        %5941 = vrot.lane.b32.xlu0 %v5057, 97
        %v5942 = vpop.permute.xlu0 %5941
        %v5943 = vsel %vm2551, %v5928, %v5936
        %v5944 = vsel %vm2551, %v5930, %v5938
        %v5945 = vsel %vm2551, %v5932, %v5940
        %v5946 = vsel %vm2551, %v5934, %v5942
        %v5947 = vsel %vm2551, %v5920, %v5928
        %v5948 = vsel %vm2551, %v5922, %v5930
        %v5949 = vsel %vm2551, %v5924, %v5932
        %v5950 = vsel %vm2551, %v5926, %v5934
        %v5951 = vsel %vm2551, %v5912, %v5920
        %v5952 = vsel %vm2551, %v5914, %v5922
        %v5953 = vsel %vm2551, %v5916, %v5924
        %v5954 = vsel %vm2551, %v5918, %v5926
        %v5955 = vsel %vm2551, %v5904, %v5912
        %v5956 = vsel %vm2551, %v5906, %v5914
        %v5957 = vsel %vm2551, %v5908, %v5916
        %v5958 = vsel %vm2551, %v5910, %v5918
        %v5959 = vsel %vm2551, %v5896, %v5904
        %v5960 = vsel %vm2551, %v5898, %v5906
        %v5961 = vsel %vm2551, %v5900, %v5908
        %v5962 = vsel %vm2551, %v5902, %v5910
        %v5963 = vsel %vm2551, %v5888, %v5896
        %v5964 = vsel %vm2551, %v5890, %v5898
        %v5965 = vsel %vm2551, %v5892, %v5900
        %v5966 = vsel %vm2551, %v5894, %v5902
        %v5967 = vsel %vm2551, %v5880, %v5888
        %v5968 = vsel %vm2551, %v5882, %v5890
        %v5969 = vsel %vm2551, %v5884, %v5892
        %v5970 = vsel %vm2551, %v5886, %v5894
        %v5971 = vsel %vm2551, %v5936, %v5880
        %v5972 = vsel %vm2551, %v5938, %v5882
        %v5973 = vsel %vm2551, %v5940, %v5884
        %v5974 = vsel %vm2551, %v5942, %v5886
        %v5975 = vmul.f32 %v5967, %v2584
        %v5976 = vmul.f32 %v5963, %v2585
        %v5977 = vmul.f32 %v5959, %v2586
        %v5978 = vmul.f32 %v5955, %v2587
        %v5979 = vmul.f32 %v5951, %v2588
        %v5980 = vmul.f32 %v5947, %v2589
        %v5981 = vmul.f32 %v5943, %v2590
        %v5982 = vmul.f32 %v5971, %v2591
        %v5983 = vmul.f32 %v5968, %v2584
        %v5984 = vmul.f32 %v5964, %v2585
        %v5985 = vmul.f32 %v5960, %v2586
        %v5986 = vmul.f32 %v5956, %v2587
        %v5987 = vmul.f32 %v5952, %v2588
        %v5988 = vmul.f32 %v5948, %v2589
        %v5989 = vmul.f32 %v5944, %v2590
        %v5990 = vmul.f32 %v5972, %v2591
        %v5991 = vmul.f32 %v5969, %v2584
        %v5992 = vmul.f32 %v5965, %v2585
        %v5993 = vmul.f32 %v5961, %v2586
        %v5994 = vmul.f32 %v5957, %v2587
        %v5995 = vmul.f32 %v5953, %v2588
        %v5996 = vmul.f32 %v5949, %v2589
        %v5997 = vmul.f32 %v5945, %v2590
        %v5998 = vmul.f32 %v5973, %v2591
        %v5999 = vmul.f32 %v5970, %v2584
        %v6000 = vmul.f32 %v5966, %v2585
        %v6001 = vmul.f32 %v5962, %v2586
        %v6002 = vmul.f32 %v5958, %v2587
        %v6003 = vmul.f32 %v5954, %v2588
        %v6004 = vmul.f32 %v5950, %v2589
        %v6005 = vmul.f32 %v5946, %v2590
        %v6006 = vmul.f32 %v5974, %v2591
        %v6007 = vadd.f32 %v5847, %v5975
        %v6008 = vadd.f32 %v5848, %v5976
        %v6009 = vadd.f32 %v5849, %v5977
        %v6010 = vadd.f32 %v5850, %v5978
        %v6011 = vadd.f32 %v5851, %v5979
        %v6012 = vadd.f32 %v5852, %v5980
        %v6013 = vadd.f32 %v5853, %v5981
        %v6014 = vadd.f32 %v5854, %v5982
        %v6015 = vadd.f32 %v5855, %v5983
        %v6016 = vadd.f32 %v5856, %v5984
        %v6017 = vadd.f32 %v5857, %v5985
        %v6018 = vadd.f32 %v5858, %v5986
        %v6019 = vadd.f32 %v5859, %v5987
        %v6020 = vadd.f32 %v5860, %v5988
        %v6021 = vadd.f32 %v5861, %v5989
        %v6022 = vadd.f32 %v5862, %v5990
        %v6023 = vadd.f32 %v5863, %v5991
        %v6024 = vadd.f32 %v5864, %v5992
        %v6025 = vadd.f32 %v5865, %v5993
        %v6026 = vadd.f32 %v5866, %v5994
        %v6027 = vadd.f32 %v5867, %v5995
        %v6028 = vadd.f32 %v5868, %v5996
        %v6029 = vadd.f32 %v5869, %v5997
        %v6030 = vadd.f32 %v5870, %v5998
        %v6031 = vadd.f32 %v5871, %v5999
        %v6032 = vadd.f32 %v5872, %v6000
        %v6033 = vadd.f32 %v5873, %v6001
        %v6034 = vadd.f32 %v5874, %v6002
        %v6035 = vadd.f32 %v5875, %v6003
        %v6036 = vadd.f32 %v5876, %v6004
        %v6037 = vadd.f32 %v5877, %v6005
        %v6038 = vadd.f32 %v5878, %v6006
        %6039 = vrot.lane.b32.xlu0 %v4367, 96
        %v6040 = vpop.permute.xlu0 %6039
        %6041 = vrot.lane.b32.xlu0 %v4369, 96
        %v6042 = vpop.permute.xlu0 %6041
        %6043 = vrot.lane.b32.xlu0 %v4372, 96
        %v6044 = vpop.permute.xlu0 %6043
        %6045 = vrot.lane.b32.xlu0 %v4374, 96
        %v6046 = vpop.permute.xlu0 %6045
        %6047 = vrot.lane.b32.xlu0 %v4466, 96
        %v6048 = vpop.permute.xlu0 %6047
        %6049 = vrot.lane.b32.xlu0 %v4468, 96
        %v6050 = vpop.permute.xlu0 %6049
        %6051 = vrot.lane.b32.xlu0 %v4471, 96
        %v6052 = vpop.permute.xlu0 %6051
        %6053 = vrot.lane.b32.xlu0 %v4473, 96
        %v6054 = vpop.permute.xlu0 %6053
        %6055 = vrot.lane.b32.xlu0 %v4565, 96
        %v6056 = vpop.permute.xlu0 %6055
        %6057 = vrot.lane.b32.xlu0 %v4567, 96
        %v6058 = vpop.permute.xlu0 %6057
        %6059 = vrot.lane.b32.xlu0 %v4570, 96
        %v6060 = vpop.permute.xlu0 %6059
        %6061 = vrot.lane.b32.xlu0 %v4572, 96
        %v6062 = vpop.permute.xlu0 %6061
        %6063 = vrot.lane.b32.xlu0 %v4664, 96
        %v6064 = vpop.permute.xlu0 %6063
        %6065 = vrot.lane.b32.xlu0 %v4666, 96
        %v6066 = vpop.permute.xlu0 %6065
        %6067 = vrot.lane.b32.xlu0 %v4669, 96
        %v6068 = vpop.permute.xlu0 %6067
        %6069 = vrot.lane.b32.xlu0 %v4671, 96
        %v6070 = vpop.permute.xlu0 %6069
        %6071 = vrot.lane.b32.xlu0 %v4763, 96
        %v6072 = vpop.permute.xlu0 %6071
        %6073 = vrot.lane.b32.xlu0 %v4765, 96
        %v6074 = vpop.permute.xlu0 %6073
        %6075 = vrot.lane.b32.xlu0 %v4768, 96
        %v6076 = vpop.permute.xlu0 %6075
        %6077 = vrot.lane.b32.xlu0 %v4770, 96
        %v6078 = vpop.permute.xlu0 %6077
        %6079 = vrot.lane.b32.xlu0 %v4862, 96
        %v6080 = vpop.permute.xlu0 %6079
        %6081 = vrot.lane.b32.xlu0 %v4864, 96
        %v6082 = vpop.permute.xlu0 %6081
        %6083 = vrot.lane.b32.xlu0 %v4867, 96
        %v6084 = vpop.permute.xlu0 %6083
        %6085 = vrot.lane.b32.xlu0 %v4869, 96
        %v6086 = vpop.permute.xlu0 %6085
        %6087 = vrot.lane.b32.xlu0 %v4961, 96
        %v6088 = vpop.permute.xlu0 %6087
        %6089 = vrot.lane.b32.xlu0 %v4963, 96
        %v6090 = vpop.permute.xlu0 %6089
        %6091 = vrot.lane.b32.xlu0 %v4966, 96
        %v6092 = vpop.permute.xlu0 %6091
        %6093 = vrot.lane.b32.xlu0 %v4968, 96
        %v6094 = vpop.permute.xlu0 %6093
        %6095 = vrot.lane.b32.xlu0 %v5060, 96
        %v6096 = vpop.permute.xlu0 %6095
        %6097 = vrot.lane.b32.xlu0 %v5062, 96
        %v6098 = vpop.permute.xlu0 %6097
        %6099 = vrot.lane.b32.xlu0 %v5065, 96
        %v6100 = vpop.permute.xlu0 %6099
        %6101 = vrot.lane.b32.xlu0 %v5067, 96
        %v6102 = vpop.permute.xlu0 %6101
        %v6103 = vsel %vm2720, %v6088, %v6096
        %v6104 = vsel %vm2720, %v6090, %v6098
        %v6105 = vsel %vm2720, %v6092, %v6100
        %v6106 = vsel %vm2720, %v6094, %v6102
        %v6107 = vsel %vm2720, %v6080, %v6088
        %v6108 = vsel %vm2720, %v6082, %v6090
        %v6109 = vsel %vm2720, %v6084, %v6092
        %v6110 = vsel %vm2720, %v6086, %v6094
        %v6111 = vsel %vm2720, %v6072, %v6080
        %v6112 = vsel %vm2720, %v6074, %v6082
        %v6113 = vsel %vm2720, %v6076, %v6084
        %v6114 = vsel %vm2720, %v6078, %v6086
        %v6115 = vsel %vm2720, %v6064, %v6072
        %v6116 = vsel %vm2720, %v6066, %v6074
        %v6117 = vsel %vm2720, %v6068, %v6076
        %v6118 = vsel %vm2720, %v6070, %v6078
        %v6119 = vsel %vm2720, %v6056, %v6064
        %v6120 = vsel %vm2720, %v6058, %v6066
        %v6121 = vsel %vm2720, %v6060, %v6068
        %v6122 = vsel %vm2720, %v6062, %v6070
        %v6123 = vsel %vm2720, %v6048, %v6056
        %v6124 = vsel %vm2720, %v6050, %v6058
        %v6125 = vsel %vm2720, %v6052, %v6060
        %v6126 = vsel %vm2720, %v6054, %v6062
        %v6127 = vsel %vm2720, %v6040, %v6048
        %v6128 = vsel %vm2720, %v6042, %v6050
        %v6129 = vsel %vm2720, %v6044, %v6052
        %v6130 = vsel %vm2720, %v6046, %v6054
        %v6131 = vsel %vm2720, %v6096, %v6040
        %v6132 = vsel %vm2720, %v6098, %v6042
        %v6133 = vsel %vm2720, %v6100, %v6044
        %v6134 = vsel %vm2720, %v6102, %v6046
        %v6135 = vmul.f32 %v6127, %v2753
        %v6136 = vmul.f32 %v6123, %v2754
        %v6137 = vmul.f32 %v6119, %v2755
        %v6138 = vmul.f32 %v6115, %v2756
        %v6139 = vmul.f32 %v6111, %v2757
        %v6140 = vmul.f32 %v6107, %v2758
        %v6141 = vmul.f32 %v6103, %v2759
        %v6142 = vmul.f32 %v6131, %v2760
        %v6143 = vmul.f32 %v6128, %v2753
        %v6144 = vmul.f32 %v6124, %v2754
        %v6145 = vmul.f32 %v6120, %v2755
        %v6146 = vmul.f32 %v6116, %v2756
        %v6147 = vmul.f32 %v6112, %v2757
        %v6148 = vmul.f32 %v6108, %v2758
        %v6149 = vmul.f32 %v6104, %v2759
        %v6150 = vmul.f32 %v6132, %v2760
        %v6151 = vmul.f32 %v6129, %v2753
        %v6152 = vmul.f32 %v6125, %v2754
        %v6153 = vmul.f32 %v6121, %v2755
        %v6154 = vmul.f32 %v6117, %v2756
        %v6155 = vmul.f32 %v6113, %v2757
        %v6156 = vmul.f32 %v6109, %v2758
        %v6157 = vmul.f32 %v6105, %v2759
        %v6158 = vmul.f32 %v6133, %v2760
        %v6159 = vmul.f32 %v6130, %v2753
        %v6160 = vmul.f32 %v6126, %v2754
        %v6161 = vmul.f32 %v6122, %v2755
        %v6162 = vmul.f32 %v6118, %v2756
        %v6163 = vmul.f32 %v6114, %v2757
        %v6164 = vmul.f32 %v6110, %v2758
        %v6165 = vmul.f32 %v6106, %v2759
        %v6166 = vmul.f32 %v6134, %v2760
        %v6167 = vadd.f32 %v6007, %v6135
        %v6168 = vadd.f32 %v6008, %v6136
        %v6169 = vadd.f32 %v6009, %v6137
        %v6170 = vadd.f32 %v6010, %v6138
        %v6171 = vadd.f32 %v6011, %v6139
        %v6172 = vadd.f32 %v6012, %v6140
        %v6173 = vadd.f32 %v6013, %v6141
        %v6174 = vadd.f32 %v6014, %v6142
        %v6175 = vadd.f32 %v6015, %v6143
        %v6176 = vadd.f32 %v6016, %v6144
        %v6177 = vadd.f32 %v6017, %v6145
        %v6178 = vadd.f32 %v6018, %v6146
        %v6179 = vadd.f32 %v6019, %v6147
        %v6180 = vadd.f32 %v6020, %v6148
        %v6181 = vadd.f32 %v6021, %v6149
        %v6182 = vadd.f32 %v6022, %v6150
        %v6183 = vadd.f32 %v6023, %v6151
        %v6184 = vadd.f32 %v6024, %v6152
        %v6185 = vadd.f32 %v6025, %v6153
        %v6186 = vadd.f32 %v6026, %v6154
        %v6187 = vadd.f32 %v6027, %v6155
        %v6188 = vadd.f32 %v6028, %v6156
        %v6189 = vadd.f32 %v6029, %v6157
        %v6190 = vadd.f32 %v6030, %v6158
        %v6191 = vadd.f32 %v6031, %v6159
        %v6192 = vadd.f32 %v6032, %v6160
        %v6193 = vadd.f32 %v6033, %v6161
        %v6194 = vadd.f32 %v6034, %v6162
        %v6195 = vadd.f32 %v6035, %v6163
        %v6196 = vadd.f32 %v6036, %v6164
        %v6197 = vadd.f32 %v6037, %v6165
        %v6198 = vadd.f32 %v6038, %v6166
        %6199 = vrot.lane.b32.xlu0 %v4377, 95
        %v6200 = vpop.permute.xlu0 %6199
        %6201 = vrot.lane.b32.xlu0 %v4379, 95
        %v6202 = vpop.permute.xlu0 %6201
        %6203 = vrot.lane.b32.xlu0 %v4382, 95
        %v6204 = vpop.permute.xlu0 %6203
        %6205 = vrot.lane.b32.xlu0 %v4384, 95
        %v6206 = vpop.permute.xlu0 %6205
        %6207 = vrot.lane.b32.xlu0 %v4476, 95
        %v6208 = vpop.permute.xlu0 %6207
        %6209 = vrot.lane.b32.xlu0 %v4478, 95
        %v6210 = vpop.permute.xlu0 %6209
        %6211 = vrot.lane.b32.xlu0 %v4481, 95
        %v6212 = vpop.permute.xlu0 %6211
        %6213 = vrot.lane.b32.xlu0 %v4483, 95
        %v6214 = vpop.permute.xlu0 %6213
        %6215 = vrot.lane.b32.xlu0 %v4575, 95
        %v6216 = vpop.permute.xlu0 %6215
        %6217 = vrot.lane.b32.xlu0 %v4577, 95
        %v6218 = vpop.permute.xlu0 %6217
        %6219 = vrot.lane.b32.xlu0 %v4580, 95
        %v6220 = vpop.permute.xlu0 %6219
        %6221 = vrot.lane.b32.xlu0 %v4582, 95
        %v6222 = vpop.permute.xlu0 %6221
        %6223 = vrot.lane.b32.xlu0 %v4674, 95
        %v6224 = vpop.permute.xlu0 %6223
        %6225 = vrot.lane.b32.xlu0 %v4676, 95
        %v6226 = vpop.permute.xlu0 %6225
        %6227 = vrot.lane.b32.xlu0 %v4679, 95
        %v6228 = vpop.permute.xlu0 %6227
        %6229 = vrot.lane.b32.xlu0 %v4681, 95
        %v6230 = vpop.permute.xlu0 %6229
        %6231 = vrot.lane.b32.xlu0 %v4773, 95
        %v6232 = vpop.permute.xlu0 %6231
        %6233 = vrot.lane.b32.xlu0 %v4775, 95
        %v6234 = vpop.permute.xlu0 %6233
        %6235 = vrot.lane.b32.xlu0 %v4778, 95
        %v6236 = vpop.permute.xlu0 %6235
        %6237 = vrot.lane.b32.xlu0 %v4780, 95
        %v6238 = vpop.permute.xlu0 %6237
        %6239 = vrot.lane.b32.xlu0 %v4872, 95
        %v6240 = vpop.permute.xlu0 %6239
        %6241 = vrot.lane.b32.xlu0 %v4874, 95
        %v6242 = vpop.permute.xlu0 %6241
        %6243 = vrot.lane.b32.xlu0 %v4877, 95
        %v6244 = vpop.permute.xlu0 %6243
        %6245 = vrot.lane.b32.xlu0 %v4879, 95
        %v6246 = vpop.permute.xlu0 %6245
        %6247 = vrot.lane.b32.xlu0 %v4971, 95
        %v6248 = vpop.permute.xlu0 %6247
        %6249 = vrot.lane.b32.xlu0 %v4973, 95
        %v6250 = vpop.permute.xlu0 %6249
        %6251 = vrot.lane.b32.xlu0 %v4976, 95
        %v6252 = vpop.permute.xlu0 %6251
        %6253 = vrot.lane.b32.xlu0 %v4978, 95
        %v6254 = vpop.permute.xlu0 %6253
        %6255 = vrot.lane.b32.xlu0 %v5070, 95
        %v6256 = vpop.permute.xlu0 %6255
        %6257 = vrot.lane.b32.xlu0 %v5072, 95
        %v6258 = vpop.permute.xlu0 %6257
        %6259 = vrot.lane.b32.xlu0 %v5075, 95
        %v6260 = vpop.permute.xlu0 %6259
        %6261 = vrot.lane.b32.xlu0 %v5077, 95
        %v6262 = vpop.permute.xlu0 %6261
        %v6263 = vsel %vm2889, %v6248, %v6256
        %v6264 = vsel %vm2889, %v6250, %v6258
        %v6265 = vsel %vm2889, %v6252, %v6260
        %v6266 = vsel %vm2889, %v6254, %v6262
        %v6267 = vsel %vm2889, %v6240, %v6248
        %v6268 = vsel %vm2889, %v6242, %v6250
        %v6269 = vsel %vm2889, %v6244, %v6252
        %v6270 = vsel %vm2889, %v6246, %v6254
        %v6271 = vsel %vm2889, %v6232, %v6240
        %v6272 = vsel %vm2889, %v6234, %v6242
        %v6273 = vsel %vm2889, %v6236, %v6244
        %v6274 = vsel %vm2889, %v6238, %v6246
        %v6275 = vsel %vm2889, %v6224, %v6232
        %v6276 = vsel %vm2889, %v6226, %v6234
        %v6277 = vsel %vm2889, %v6228, %v6236
        %v6278 = vsel %vm2889, %v6230, %v6238
        %v6279 = vsel %vm2889, %v6216, %v6224
        %v6280 = vsel %vm2889, %v6218, %v6226
        %v6281 = vsel %vm2889, %v6220, %v6228
        %v6282 = vsel %vm2889, %v6222, %v6230
        %v6283 = vsel %vm2889, %v6208, %v6216
        %v6284 = vsel %vm2889, %v6210, %v6218
        %v6285 = vsel %vm2889, %v6212, %v6220
        %v6286 = vsel %vm2889, %v6214, %v6222
        %v6287 = vsel %vm2889, %v6200, %v6208
        %v6288 = vsel %vm2889, %v6202, %v6210
        %v6289 = vsel %vm2889, %v6204, %v6212
        %v6290 = vsel %vm2889, %v6206, %v6214
        %v6291 = vsel %vm2889, %v6256, %v6200
        %v6292 = vsel %vm2889, %v6258, %v6202
        %v6293 = vsel %vm2889, %v6260, %v6204
        %v6294 = vsel %vm2889, %v6262, %v6206
        %v6295 = vmul.f32 %v6287, %v2922
        %v6296 = vmul.f32 %v6283, %v2923
        %v6297 = vmul.f32 %v6279, %v2924
        %v6298 = vmul.f32 %v6275, %v2925
        %v6299 = vmul.f32 %v6271, %v2926
        %v6300 = vmul.f32 %v6267, %v2927
        %v6301 = vmul.f32 %v6263, %v2928
        %v6302 = vmul.f32 %v6291, %v2929
        %v6303 = vmul.f32 %v6288, %v2922
        %v6304 = vmul.f32 %v6284, %v2923
        %v6305 = vmul.f32 %v6280, %v2924
        %v6306 = vmul.f32 %v6276, %v2925
        %v6307 = vmul.f32 %v6272, %v2926
        %v6308 = vmul.f32 %v6268, %v2927
        %v6309 = vmul.f32 %v6264, %v2928
        %v6310 = vmul.f32 %v6292, %v2929
        %v6311 = vmul.f32 %v6289, %v2922
        %v6312 = vmul.f32 %v6285, %v2923
        %v6313 = vmul.f32 %v6281, %v2924
        %v6314 = vmul.f32 %v6277, %v2925
        %v6315 = vmul.f32 %v6273, %v2926
        %v6316 = vmul.f32 %v6269, %v2927
        %v6317 = vmul.f32 %v6265, %v2928
        %v6318 = vmul.f32 %v6293, %v2929
        %v6319 = vmul.f32 %v6290, %v2922
        %v6320 = vmul.f32 %v6286, %v2923
        %v6321 = vmul.f32 %v6282, %v2924
        %v6322 = vmul.f32 %v6278, %v2925
        %v6323 = vmul.f32 %v6274, %v2926
        %v6324 = vmul.f32 %v6270, %v2927
        %v6325 = vmul.f32 %v6266, %v2928
        %v6326 = vmul.f32 %v6294, %v2929
        %v6327 = vadd.f32 %v6167, %v6295
        %v6328 = vadd.f32 %v6168, %v6296
        %v6329 = vadd.f32 %v6169, %v6297
        %v6330 = vadd.f32 %v6170, %v6298
        %v6331 = vadd.f32 %v6171, %v6299
        %v6332 = vadd.f32 %v6172, %v6300
        %v6333 = vadd.f32 %v6173, %v6301
        %v6334 = vadd.f32 %v6174, %v6302
        %v6335 = vadd.f32 %v6175, %v6303
        %v6336 = vadd.f32 %v6176, %v6304
        %v6337 = vadd.f32 %v6177, %v6305
        %v6338 = vadd.f32 %v6178, %v6306
        %v6339 = vadd.f32 %v6179, %v6307
        %v6340 = vadd.f32 %v6180, %v6308
        %v6341 = vadd.f32 %v6181, %v6309
        %v6342 = vadd.f32 %v6182, %v6310
        %v6343 = vadd.f32 %v6183, %v6311
        %v6344 = vadd.f32 %v6184, %v6312
        %v6345 = vadd.f32 %v6185, %v6313
        %v6346 = vadd.f32 %v6186, %v6314
        %v6347 = vadd.f32 %v6187, %v6315
        %v6348 = vadd.f32 %v6188, %v6316
        %v6349 = vadd.f32 %v6189, %v6317
        %v6350 = vadd.f32 %v6190, %v6318
        %v6351 = vadd.f32 %v6191, %v6319
        %v6352 = vadd.f32 %v6192, %v6320
        %v6353 = vadd.f32 %v6193, %v6321
        %v6354 = vadd.f32 %v6194, %v6322
        %v6355 = vadd.f32 %v6195, %v6323
        %v6356 = vadd.f32 %v6196, %v6324
        %v6357 = vadd.f32 %v6197, %v6325
        %v6358 = vadd.f32 %v6198, %v6326
        %v6359 = vld [vmem:[%s6] sm:$0xff]
        %v6360 = vld [vmem:[%s6 + $0x8] sm:$0xff]
        %v6361 = vld [vmem:[%s6 + $0x10] sm:$0xff]
        %v6362 = vld [vmem:[%s6 + $0x18] sm:$0xff]
        %6364 = vset.pattern.permute.xlu0 0
        %6365 = vperm.xlu0 %6364, %v6359
        %v6366 = vpop.permute.xlu0 %6365
        %6369 = vset.pattern.permute.xlu0 0
        %6370 = vperm.xlu0 %6369, %v6360
        %v6371 = vpop.permute.xlu0 %6370
        %6374 = vset.pattern.permute.xlu0 0
        %6375 = vperm.xlu0 %6374, %v6361
        %v6376 = vpop.permute.xlu0 %6375
        %6379 = vset.pattern.permute.xlu0 0
        %6380 = vperm.xlu0 %6379, %v6362
        %v6381 = vpop.permute.xlu0 %6380
        %v6383 = vadd.f32 %v6327, %v6366
        %v6384 = vadd.f32 %v6328, %v6366
        %v6385 = vadd.f32 %v6329, %v6366
        %v6386 = vadd.f32 %v6330, %v6366
        %v6387 = vadd.f32 %v6331, %v6366
        %v6388 = vadd.f32 %v6332, %v6366
        %v6389 = vadd.f32 %v6333, %v6366
        %v6390 = vadd.f32 %v6334, %v6366
        %v6391 = vadd.f32 %v6335, %v6371
        %v6392 = vadd.f32 %v6336, %v6371
        %v6393 = vadd.f32 %v6337, %v6371
        %v6394 = vadd.f32 %v6338, %v6371
        %v6395 = vadd.f32 %v6339, %v6371
        %v6396 = vadd.f32 %v6340, %v6371
        %v6397 = vadd.f32 %v6341, %v6371
        %v6398 = vadd.f32 %v6342, %v6371
        %v6399 = vadd.f32 %v6343, %v6376
        %v6400 = vadd.f32 %v6344, %v6376
        %v6401 = vadd.f32 %v6345, %v6376
        %v6402 = vadd.f32 %v6346, %v6376
        %v6403 = vadd.f32 %v6347, %v6376
        %v6404 = vadd.f32 %v6348, %v6376
        %v6405 = vadd.f32 %v6349, %v6376
        %v6406 = vadd.f32 %v6350, %v6376
        %v6407 = vadd.f32 %v6351, %v6381
        %v6408 = vadd.f32 %v6352, %v6381
        %v6409 = vadd.f32 %v6353, %v6381
        %v6410 = vadd.f32 %v6354, %v6381
        %v6411 = vadd.f32 %v6355, %v6381
        %v6412 = vadd.f32 %v6356, %v6381
        %v6413 = vadd.f32 %v6357, %v6381
        %v6414 = vadd.f32 %v6358, %v6381
        %vm6415 = vcmp.gt.f32.partialorder %v492, 0.0
        %vm6416 = vcmp.gt.f32.partialorder %v493, 0.0
        %vm6417 = vcmp.gt.f32.partialorder %v494, 0.0
        %vm6418 = vcmp.gt.f32.partialorder %v495, 0.0
        %vm6419 = vcmp.gt.f32.partialorder %v496, 0.0
        %vm6420 = vcmp.gt.f32.partialorder %v497, 0.0
        %vm6421 = vcmp.gt.f32.partialorder %v498, 0.0
        %vm6422 = vcmp.gt.f32.partialorder %v499, 0.0
        %v6423 = vsel %vm6415, 1, 0
        %v6424 = vsel %vm6416, 1, 0
        %v6425 = vsel %vm6417, 1, 0
        %v6426 = vsel %vm6418, 1, 0
        %v6427 = vsel %vm6419, 1, 0
        %v6428 = vsel %vm6420, 1, 0
        %v6429 = vsel %vm6421, 1, 0
        %v6430 = vsel %vm6422, 1, 0
        %v6431 = vperm.slane %v6423, 1
        %v6432 = vperm.slane %v6424, 1
        %v6433 = vperm.slane %v6425, 1
        %v6434 = vperm.slane %v6426, 1
        %v6435 = vperm.slane %v6427, 1
        %v6436 = vperm.slane %v6428, 1
        %v6437 = vperm.slane %v6429, 1
        %v6438 = vperm.slane %v6430, 1
        %vm6439 = vcmp.eq.s32.totalorder %v6431, 1
        %vm6440 = vcmp.eq.s32.totalorder %v6432, 1
        %vm6441 = vcmp.eq.s32.totalorder %v6433, 1
        %vm6442 = vcmp.eq.s32.totalorder %v6434, 1
        %vm6443 = vcmp.eq.s32.totalorder %v6435, 1
        %vm6444 = vcmp.eq.s32.totalorder %v6436, 1
        %vm6445 = vcmp.eq.s32.totalorder %v6437, 1
        %vm6446 = vcmp.eq.s32.totalorder %v6438, 1
        %v6447 = vsel %vm6439, %v6383, -inf
        %v6448 = vsel %vm6440, %v6384, -inf
        %v6449 = vsel %vm6441, %v6385, -inf
        %v6450 = vsel %vm6442, %v6386, -inf
        %v6451 = vsel %vm6443, %v6387, -inf
        %v6452 = vsel %vm6444, %v6388, -inf
        %v6453 = vsel %vm6445, %v6389, -inf
        %v6454 = vsel %vm6446, %v6390, -inf
        %v6455 = vsel %vm6439, %v6391, -inf
        %v6456 = vsel %vm6440, %v6392, -inf
        %v6457 = vsel %vm6441, %v6393, -inf
        %v6458 = vsel %vm6442, %v6394, -inf
        %v6459 = vsel %vm6443, %v6395, -inf
        %v6460 = vsel %vm6444, %v6396, -inf
        %v6461 = vsel %vm6445, %v6397, -inf
        %v6462 = vsel %vm6446, %v6398, -inf
        %v6463 = vsel %vm6439, %v6399, -inf
        %v6464 = vsel %vm6440, %v6400, -inf
        %v6465 = vsel %vm6441, %v6401, -inf
        %v6466 = vsel %vm6442, %v6402, -inf
        %v6467 = vsel %vm6443, %v6403, -inf
        %v6468 = vsel %vm6444, %v6404, -inf
        %v6469 = vsel %vm6445, %v6405, -inf
        %v6470 = vsel %vm6446, %v6406, -inf
        %v6471 = vsel %vm6439, %v6407, -inf
        %v6472 = vsel %vm6440, %v6408, -inf
        %v6473 = vsel %vm6441, %v6409, -inf
        %v6474 = vsel %vm6442, %v6410, -inf
        %v6475 = vsel %vm6443, %v6411, -inf
        %v6476 = vsel %vm6444, %v6412, -inf
        %v6477 = vsel %vm6445, %v6413, -inf
        %v6478 = vsel %vm6446, %v6414, -inf
        %v6479 = vmax.f32 %v6447, %v6448
        %v6480 = vmax.f32 %v6479, %v6449
        %v6481 = vmax.f32 %v6480, %v6450
        %v6482 = vmax.f32 %v6481, %v6451
        %v6483 = vmax.f32 %v6482, %v6452
        %v6484 = vmax.f32 %v6483, %v6453
        %v6485 = vmax.f32 %v6484, %v6454
        %6486 = vmax.xlane.f32.xlu0 %v6485
        %v6487 = vpop.xlane.xlu0 %6486
        %v6488 = vmax.f32 %v6455, %v6456
        %v6489 = vmax.f32 %v6488, %v6457
        %v6490 = vmax.f32 %v6489, %v6458
        %v6491 = vmax.f32 %v6490, %v6459
        %v6492 = vmax.f32 %v6491, %v6460
        %v6493 = vmax.f32 %v6492, %v6461
        %v6494 = vmax.f32 %v6493, %v6462
        %6495 = vmax.xlane.f32.xlu0 %v6494
        %v6496 = vpop.xlane.xlu0 %6495
        %v6497 = vmax.f32 %v6463, %v6464
        %v6498 = vmax.f32 %v6497, %v6465
        %v6499 = vmax.f32 %v6498, %v6466
        %v6500 = vmax.f32 %v6499, %v6467
        %v6501 = vmax.f32 %v6500, %v6468
        %v6502 = vmax.f32 %v6501, %v6469
        %v6503 = vmax.f32 %v6502, %v6470
        %6504 = vmax.xlane.f32.xlu0 %v6503
        %v6505 = vpop.xlane.xlu0 %6504
        %v6506 = vmax.f32 %v6471, %v6472
        %v6507 = vmax.f32 %v6506, %v6473
        %v6508 = vmax.f32 %v6507, %v6474
        %v6509 = vmax.f32 %v6508, %v6475
        %v6510 = vmax.f32 %v6509, %v6476
        %v6511 = vmax.f32 %v6510, %v6477
        %v6512 = vmax.f32 %v6511, %v6478
        %6513 = vmax.xlane.f32.xlu0 %v6512
        %v6514 = vpop.xlane.xlu0 %6513
        %v6515 = vld [vmem:[%s7] sm:$0xff]
        %v6516 = vld [vmem:[%s7 + $0x8] sm:$0xff]
        %v6517 = vld [vmem:[%s7 + $0x10] sm:$0xff]
        %v6518 = vld [vmem:[%s7 + $0x18] sm:$0xff]
        %v6519 = vld [vmem:[%s7 + $0x20] sm:$0xff]
        %v6520 = vld [vmem:[%s7 + $0x28] sm:$0xff]
        %v6521 = vld [vmem:[%s7 + $0x30] sm:$0xff]
        %v6522 = vld [vmem:[%s7 + $0x38] sm:$0xff]
        %v6523 = vld [vmem:[%s7 + $0x40] sm:$0xff]
        %v6524 = vld [vmem:[%s7 + $0x48] sm:$0xff]
        %v6525 = vld [vmem:[%s7 + $0x50] sm:$0xff]
        %v6526 = vld [vmem:[%s7 + $0x58] sm:$0xff]
        %v6527 = vld [vmem:[%s7 + $0x60] sm:$0xff]
        %v6528 = vld [vmem:[%s7 + $0x68] sm:$0xff]
        %v6529 = vld [vmem:[%s7 + $0x70] sm:$0xff]
        %v6530 = vld [vmem:[%s7 + $0x78] sm:$0xff]
        %v6531 = vld [vmem:[%s8] sm:$0xff]
        %v6532 = vld [vmem:[%s8 + $0x8] sm:$0xff]
        %v6533 = vld [vmem:[%s8 + $0x10] sm:$0xff]
        %v6534 = vld [vmem:[%s8 + $0x18] sm:$0xff]
        %v6535 = vld [vmem:[%s8 + $0x20] sm:$0xff]
        %v6536 = vld [vmem:[%s8 + $0x28] sm:$0xff]
        %v6537 = vld [vmem:[%s8 + $0x30] sm:$0xff]
        %v6538 = vld [vmem:[%s8 + $0x38] sm:$0xff]
        %v6539 = vld [vmem:[%s8 + $0x40] sm:$0xff]
        %v6540 = vld [vmem:[%s8 + $0x48] sm:$0xff]
        %v6541 = vld [vmem:[%s8 + $0x50] sm:$0xff]
        %v6542 = vld [vmem:[%s8 + $0x58] sm:$0xff]
        %v6543 = vld [vmem:[%s8 + $0x60] sm:$0xff]
        %v6544 = vld [vmem:[%s8 + $0x68] sm:$0xff]
        %v6545 = vld [vmem:[%s8 + $0x70] sm:$0xff]
        %v6546 = vld [vmem:[%s8 + $0x78] sm:$0xff]
        %v6548 = vsel %vm4232, %v6515, 0
        %v6551 = vsel %vm4232, %v6516, 0
        %v6554 = vsel %vm4232, %v6517, 0
        %v6557 = vsel %vm4232, %v6518, 0
        %v6560 = vsel %vm4232, %v6519, 0
        %v6563 = vsel %vm4232, %v6520, 0
        %v6566 = vsel %vm4232, %v6521, 0
        %v6569 = vsel %vm4232, %v6522, 0
        %v6572 = vsel %vm4232, %v6523, 0
        %v6575 = vsel %vm4232, %v6524, 0
        %v6578 = vsel %vm4232, %v6525, 0
        %v6581 = vsel %vm4232, %v6526, 0
        %v6584 = vsel %vm4232, %v6527, 0
        %v6587 = vsel %vm4232, %v6528, 0
        %v6590 = vsel %vm4232, %v6529, 0
        %v6593 = vsel %vm4232, %v6530, 0
        %6595 = vmatpush.msra.mxu0 0.0
        %6596 = vmatpush.msra.mxu0 0.0
        %6597 = vmatpush.msra.mxu0 0.0
        %6598 = vmatpush.msra.mxu0 0.0
        %6599 = vmatpush.msra.mxu0 0.0
        %6600 = vmatpush.msra.mxu0 0.0
        %6601 = vmatpush.msra.mxu0 0.0
        %6602 = vmatpush.msra.mxu0 0.0
        %6603 = vmatpush.msra.mxu0 0.0
        %6604 = vmatpush.msra.mxu0 0.0
        %6605 = vmatpush.msra.mxu0 0.0
        %6606 = vmatpush.msra.mxu0 0.0
        %6607 = vmatpush.msra.mxu0 %v6514
        %6608 = vmatpush.msra.mxu0 %v6505
        %6609 = vmatpush.msra.mxu0 %v6496
        %6610 = vmatpush.msra.mxu0 %v6487
        %6611 = vmatmul.f32.gmra.mxu0 %v6548
        %v6612 = vpop.f32.mrf.mxu0
        %v6613 = vadd.f32 %v6531, %v6612
        %6614 = vmatmul.f32.gmra.mxu0 %v6551
        %v6615 = vpop.f32.mrf.mxu0
        %v6616 = vadd.f32 %v6532, %v6615
        %6617 = vmatmul.f32.gmra.mxu0 %v6554
        %v6618 = vpop.f32.mrf.mxu0
        %v6619 = vadd.f32 %v6533, %v6618
        %6620 = vmatmul.f32.gmra.mxu0 %v6557
        %v6621 = vpop.f32.mrf.mxu0
        %v6622 = vadd.f32 %v6534, %v6621
        %6623 = vmatmul.f32.gmra.mxu0 %v6560
        %v6624 = vpop.f32.mrf.mxu0
        %v6625 = vadd.f32 %v6535, %v6624
        %6626 = vmatmul.f32.gmra.mxu0 %v6563
        %v6627 = vpop.f32.mrf.mxu0
        %v6628 = vadd.f32 %v6536, %v6627
        %6629 = vmatmul.f32.gmra.mxu0 %v6566
        %v6630 = vpop.f32.mrf.mxu0
        %v6631 = vadd.f32 %v6537, %v6630
        %6632 = vmatmul.f32.gmra.mxu0 %v6569
        %v6633 = vpop.f32.mrf.mxu0
        %v6634 = vadd.f32 %v6538, %v6633
        %6635 = vmatmul.f32.gmra.mxu0 %v6572
        %v6636 = vpop.f32.mrf.mxu0
        %v6637 = vadd.f32 %v6539, %v6636
        %6638 = vmatmul.f32.gmra.mxu0 %v6575
        %v6639 = vpop.f32.mrf.mxu0
        %v6640 = vadd.f32 %v6540, %v6639
        %6641 = vmatmul.f32.gmra.mxu0 %v6578
        %v6642 = vpop.f32.mrf.mxu0
        %v6643 = vadd.f32 %v6541, %v6642
        %6644 = vmatmul.f32.gmra.mxu0 %v6581
        %v6645 = vpop.f32.mrf.mxu0
        %v6646 = vadd.f32 %v6542, %v6645
        %6647 = vmatmul.f32.gmra.mxu0 %v6584
        %v6648 = vpop.f32.mrf.mxu0
        %v6649 = vadd.f32 %v6543, %v6648
        %6650 = vmatmul.f32.gmra.mxu0 %v6587
        %v6651 = vpop.f32.mrf.mxu0
        %v6652 = vadd.f32 %v6544, %v6651
        %6653 = vmatmul.f32.gmra.mxu0 %v6590
        %v6654 = vpop.f32.mrf.mxu0
        %v6655 = vadd.f32 %v6545, %v6654
        %6656 = vmatmul.f32.gmra.mxu0 %v6593
        %v6657 = vpop.f32.mrf.mxu0
        %v6658 = vadd.f32 %v6546, %v6657
        %6659 = vdwg.mxu0
        %v6660 = vxor.u32 %v6613, 2147483648
        %v6661 = vxor.u32 %v6616, 2147483648
        %v6662 = vxor.u32 %v6619, 2147483648
        %v6663 = vxor.u32 %v6622, 2147483648
        %v6664 = vxor.u32 %v6625, 2147483648
        %v6665 = vxor.u32 %v6628, 2147483648
        %v6666 = vxor.u32 %v6631, 2147483648
        %v6667 = vxor.u32 %v6634, 2147483648
        %v6668 = vxor.u32 %v6637, 2147483648
        %v6669 = vxor.u32 %v6640, 2147483648
        %v6670 = vxor.u32 %v6643, 2147483648
        %v6671 = vxor.u32 %v6646, 2147483648
        %v6672 = vxor.u32 %v6649, 2147483648
        %v6673 = vxor.u32 %v6652, 2147483648
        %v6674 = vxor.u32 %v6655, 2147483648
        %v6675 = vxor.u32 %v6658, 2147483648
        %v6676 = vmul.f32 %v6660, 1.442695
        %v6677 = vpow.pop %v6676
        %v6678 = vmul.f32 %v6661, 1.442695
        %v6679 = vpow.pop %v6678
        %v6680 = vmul.f32 %v6662, 1.442695
        %v6681 = vpow.pop %v6680
        %v6682 = vmul.f32 %v6663, 1.442695
        %v6683 = vpow.pop %v6682
        %v6684 = vmul.f32 %v6664, 1.442695
        %v6685 = vpow.pop %v6684
        %v6686 = vmul.f32 %v6665, 1.442695
        %v6687 = vpow.pop %v6686
        %v6688 = vmul.f32 %v6666, 1.442695
        %v6689 = vpow.pop %v6688
        %v6690 = vmul.f32 %v6667, 1.442695
        %v6691 = vpow.pop %v6690
        %v6692 = vmul.f32 %v6668, 1.442695
        %v6693 = vpow.pop %v6692
        %v6694 = vmul.f32 %v6669, 1.442695
        %v6695 = vpow.pop %v6694
        %v6696 = vmul.f32 %v6670, 1.442695
        %v6697 = vpow.pop %v6696
        %v6698 = vmul.f32 %v6671, 1.442695
        %v6699 = vpow.pop %v6698
        %v6700 = vmul.f32 %v6672, 1.442695
        %v6701 = vpow.pop %v6700
        %v6702 = vmul.f32 %v6673, 1.442695
        %v6703 = vpow.pop %v6702
        %v6704 = vmul.f32 %v6674, 1.442695
        %v6705 = vpow.pop %v6704
        %v6706 = vmul.f32 %v6675, 1.442695
        %v6707 = vpow.pop %v6706
        %v6708 = vadd.f32 %v6677, 1.0
        %v6709 = vadd.f32 %v6679, 1.0
        %v6710 = vadd.f32 %v6681, 1.0
        %v6711 = vadd.f32 %v6683, 1.0
        %v6712 = vadd.f32 %v6685, 1.0
        %v6713 = vadd.f32 %v6687, 1.0
        %v6714 = vadd.f32 %v6689, 1.0
        %v6715 = vadd.f32 %v6691, 1.0
        %v6716 = vadd.f32 %v6693, 1.0
        %v6717 = vadd.f32 %v6695, 1.0
        %v6718 = vadd.f32 %v6697, 1.0
        %v6719 = vadd.f32 %v6699, 1.0
        %v6720 = vadd.f32 %v6701, 1.0
        %v6721 = vadd.f32 %v6703, 1.0
        %v6722 = vadd.f32 %v6705, 1.0
        %v6723 = vadd.f32 %v6707, 1.0
        %v6724 = vrcp.pop %v6708
        %v6725 = vmul.f32 %v6708, %v6724
        %v6726 = vsub.f32 1.0, %v6725
        %v6727 = vmul.f32 %v6724, %v6726
        %v6728 = vadd.f32 %v6724, %v6727
        %vm6729 = vweird.f32 %v6708
        %vm6730 = vweird.f32 %v6724
        %vm6731 = vmor %vm6729, %vm6730
        %v6732 = vsel %vm6731, %v6724, %v6728
        %v6733 = vand.u32 2147483647, %v6708
        %vm6734 = vcmp.eq.f32.partialorder %v6733, 8.507059e+37
        %v6735 = vand.u32 %v6708, 2147483648
        %v6736 = vor.u32 1.1754944e-38, %v6735
        %v6737 = vsel %vm6734, %v6736, %v6732
        %v6738 = vmul.f32 1.0, %v6737
        %v6739 = vrcp.pop %v6709
        %v6740 = vmul.f32 %v6709, %v6739
        %v6741 = vsub.f32 1.0, %v6740
        %v6742 = vmul.f32 %v6739, %v6741
        %v6743 = vadd.f32 %v6739, %v6742
        %vm6744 = vweird.f32 %v6709
        %vm6745 = vweird.f32 %v6739
        %vm6746 = vmor %vm6744, %vm6745
        %v6747 = vsel %vm6746, %v6739, %v6743
        %v6748 = vand.u32 2147483647, %v6709
        %vm6749 = vcmp.eq.f32.partialorder %v6748, 8.507059e+37
        %v6750 = vand.u32 %v6709, 2147483648
        %v6751 = vor.u32 1.1754944e-38, %v6750
        %v6752 = vsel %vm6749, %v6751, %v6747
        %v6753 = vmul.f32 1.0, %v6752
        %v6754 = vrcp.pop %v6710
        %v6755 = vmul.f32 %v6710, %v6754
        %v6756 = vsub.f32 1.0, %v6755
        %v6757 = vmul.f32 %v6754, %v6756
        %v6758 = vadd.f32 %v6754, %v6757
        %vm6759 = vweird.f32 %v6710
        %vm6760 = vweird.f32 %v6754
        %vm6761 = vmor %vm6759, %vm6760
        %v6762 = vsel %vm6761, %v6754, %v6758
        %v6763 = vand.u32 2147483647, %v6710
        %vm6764 = vcmp.eq.f32.partialorder %v6763, 8.507059e+37
        %v6765 = vand.u32 %v6710, 2147483648
        %v6766 = vor.u32 1.1754944e-38, %v6765
        %v6767 = vsel %vm6764, %v6766, %v6762
        %v6768 = vmul.f32 1.0, %v6767
        %v6769 = vrcp.pop %v6711
        %v6770 = vmul.f32 %v6711, %v6769
        %v6771 = vsub.f32 1.0, %v6770
        %v6772 = vmul.f32 %v6769, %v6771
        %v6773 = vadd.f32 %v6769, %v6772
        %vm6774 = vweird.f32 %v6711
        %vm6775 = vweird.f32 %v6769
        %vm6776 = vmor %vm6774, %vm6775
        %v6777 = vsel %vm6776, %v6769, %v6773
        %v6778 = vand.u32 2147483647, %v6711
        %vm6779 = vcmp.eq.f32.partialorder %v6778, 8.507059e+37
        %v6780 = vand.u32 %v6711, 2147483648
        %v6781 = vor.u32 1.1754944e-38, %v6780
        %v6782 = vsel %vm6779, %v6781, %v6777
        %v6783 = vmul.f32 1.0, %v6782
        %v6784 = vrcp.pop %v6712
        %v6785 = vmul.f32 %v6712, %v6784
        %v6786 = vsub.f32 1.0, %v6785
        %v6787 = vmul.f32 %v6784, %v6786
        %v6788 = vadd.f32 %v6784, %v6787
        %vm6789 = vweird.f32 %v6712
        %vm6790 = vweird.f32 %v6784
        %vm6791 = vmor %vm6789, %vm6790
        %v6792 = vsel %vm6791, %v6784, %v6788
        %v6793 = vand.u32 2147483647, %v6712
        %vm6794 = vcmp.eq.f32.partialorder %v6793, 8.507059e+37
        %v6795 = vand.u32 %v6712, 2147483648
        %v6796 = vor.u32 1.1754944e-38, %v6795
        %v6797 = vsel %vm6794, %v6796, %v6792
        %v6798 = vmul.f32 1.0, %v6797
        %v6799 = vrcp.pop %v6713
        %v6800 = vmul.f32 %v6713, %v6799
        %v6801 = vsub.f32 1.0, %v6800
        %v6802 = vmul.f32 %v6799, %v6801
        %v6803 = vadd.f32 %v6799, %v6802
        %vm6804 = vweird.f32 %v6713
        %vm6805 = vweird.f32 %v6799
        %vm6806 = vmor %vm6804, %vm6805
        %v6807 = vsel %vm6806, %v6799, %v6803
        %v6808 = vand.u32 2147483647, %v6713
        %vm6809 = vcmp.eq.f32.partialorder %v6808, 8.507059e+37
        %v6810 = vand.u32 %v6713, 2147483648
        %v6811 = vor.u32 1.1754944e-38, %v6810
        %v6812 = vsel %vm6809, %v6811, %v6807
        %v6813 = vmul.f32 1.0, %v6812
        %v6814 = vrcp.pop %v6714
        %v6815 = vmul.f32 %v6714, %v6814
        %v6816 = vsub.f32 1.0, %v6815
        %v6817 = vmul.f32 %v6814, %v6816
        %v6818 = vadd.f32 %v6814, %v6817
        %vm6819 = vweird.f32 %v6714
        %vm6820 = vweird.f32 %v6814
        %vm6821 = vmor %vm6819, %vm6820
        %v6822 = vsel %vm6821, %v6814, %v6818
        %v6823 = vand.u32 2147483647, %v6714
        %vm6824 = vcmp.eq.f32.partialorder %v6823, 8.507059e+37
        %v6825 = vand.u32 %v6714, 2147483648
        %v6826 = vor.u32 1.1754944e-38, %v6825
        %v6827 = vsel %vm6824, %v6826, %v6822
        %v6828 = vmul.f32 1.0, %v6827
        %v6829 = vrcp.pop %v6715
        %v6830 = vmul.f32 %v6715, %v6829
        %v6831 = vsub.f32 1.0, %v6830
        %v6832 = vmul.f32 %v6829, %v6831
        %v6833 = vadd.f32 %v6829, %v6832
        %vm6834 = vweird.f32 %v6715
        %vm6835 = vweird.f32 %v6829
        %vm6836 = vmor %vm6834, %vm6835
        %v6837 = vsel %vm6836, %v6829, %v6833
        %v6838 = vand.u32 2147483647, %v6715
        %vm6839 = vcmp.eq.f32.partialorder %v6838, 8.507059e+37
        %v6840 = vand.u32 %v6715, 2147483648
        %v6841 = vor.u32 1.1754944e-38, %v6840
        %v6842 = vsel %vm6839, %v6841, %v6837
        %v6843 = vmul.f32 1.0, %v6842
        %v6844 = vrcp.pop %v6716
        %v6845 = vmul.f32 %v6716, %v6844
        %v6846 = vsub.f32 1.0, %v6845
        %v6847 = vmul.f32 %v6844, %v6846
        %v6848 = vadd.f32 %v6844, %v6847
        %vm6849 = vweird.f32 %v6716
        %vm6850 = vweird.f32 %v6844
        %vm6851 = vmor %vm6849, %vm6850
        %v6852 = vsel %vm6851, %v6844, %v6848
        %v6853 = vand.u32 2147483647, %v6716
        %vm6854 = vcmp.eq.f32.partialorder %v6853, 8.507059e+37
        %v6855 = vand.u32 %v6716, 2147483648
        %v6856 = vor.u32 1.1754944e-38, %v6855
        %v6857 = vsel %vm6854, %v6856, %v6852
        %v6858 = vmul.f32 1.0, %v6857
        %v6859 = vrcp.pop %v6717
        %v6860 = vmul.f32 %v6717, %v6859
        %v6861 = vsub.f32 1.0, %v6860
        %v6862 = vmul.f32 %v6859, %v6861
        %v6863 = vadd.f32 %v6859, %v6862
        %vm6864 = vweird.f32 %v6717
        %vm6865 = vweird.f32 %v6859
        %vm6866 = vmor %vm6864, %vm6865
        %v6867 = vsel %vm6866, %v6859, %v6863
        %v6868 = vand.u32 2147483647, %v6717
        %vm6869 = vcmp.eq.f32.partialorder %v6868, 8.507059e+37
        %v6870 = vand.u32 %v6717, 2147483648
        %v6871 = vor.u32 1.1754944e-38, %v6870
        %v6872 = vsel %vm6869, %v6871, %v6867
        %v6873 = vmul.f32 1.0, %v6872
        %v6874 = vrcp.pop %v6718
        %v6875 = vmul.f32 %v6718, %v6874
        %v6876 = vsub.f32 1.0, %v6875
        %v6877 = vmul.f32 %v6874, %v6876
        %v6878 = vadd.f32 %v6874, %v6877
        %vm6879 = vweird.f32 %v6718
        %vm6880 = vweird.f32 %v6874
        %vm6881 = vmor %vm6879, %vm6880
        %v6882 = vsel %vm6881, %v6874, %v6878
        %v6883 = vand.u32 2147483647, %v6718
        %vm6884 = vcmp.eq.f32.partialorder %v6883, 8.507059e+37
        %v6885 = vand.u32 %v6718, 2147483648
        %v6886 = vor.u32 1.1754944e-38, %v6885
        %v6887 = vsel %vm6884, %v6886, %v6882
        %v6888 = vmul.f32 1.0, %v6887
        %v6889 = vrcp.pop %v6719
        %v6890 = vmul.f32 %v6719, %v6889
        %v6891 = vsub.f32 1.0, %v6890
        %v6892 = vmul.f32 %v6889, %v6891
        %v6893 = vadd.f32 %v6889, %v6892
        %vm6894 = vweird.f32 %v6719
        %vm6895 = vweird.f32 %v6889
        %vm6896 = vmor %vm6894, %vm6895
        %v6897 = vsel %vm6896, %v6889, %v6893
        %v6898 = vand.u32 2147483647, %v6719
        %vm6899 = vcmp.eq.f32.partialorder %v6898, 8.507059e+37
        %v6900 = vand.u32 %v6719, 2147483648
        %v6901 = vor.u32 1.1754944e-38, %v6900
        %v6902 = vsel %vm6899, %v6901, %v6897
        %v6903 = vmul.f32 1.0, %v6902
        %v6904 = vrcp.pop %v6720
        %v6905 = vmul.f32 %v6720, %v6904
        %v6906 = vsub.f32 1.0, %v6905
        %v6907 = vmul.f32 %v6904, %v6906
        %v6908 = vadd.f32 %v6904, %v6907
        %vm6909 = vweird.f32 %v6720
        %vm6910 = vweird.f32 %v6904
        %vm6911 = vmor %vm6909, %vm6910
        %v6912 = vsel %vm6911, %v6904, %v6908
        %v6913 = vand.u32 2147483647, %v6720
        %vm6914 = vcmp.eq.f32.partialorder %v6913, 8.507059e+37
        %v6915 = vand.u32 %v6720, 2147483648
        %v6916 = vor.u32 1.1754944e-38, %v6915
        %v6917 = vsel %vm6914, %v6916, %v6912
        %v6918 = vmul.f32 1.0, %v6917
        %v6919 = vrcp.pop %v6721
        %v6920 = vmul.f32 %v6721, %v6919
        %v6921 = vsub.f32 1.0, %v6920
        %v6922 = vmul.f32 %v6919, %v6921
        %v6923 = vadd.f32 %v6919, %v6922
        %vm6924 = vweird.f32 %v6721
        %vm6925 = vweird.f32 %v6919
        %vm6926 = vmor %vm6924, %vm6925
        %v6927 = vsel %vm6926, %v6919, %v6923
        %v6928 = vand.u32 2147483647, %v6721
        %vm6929 = vcmp.eq.f32.partialorder %v6928, 8.507059e+37
        %v6930 = vand.u32 %v6721, 2147483648
        %v6931 = vor.u32 1.1754944e-38, %v6930
        %v6932 = vsel %vm6929, %v6931, %v6927
        %v6933 = vmul.f32 1.0, %v6932
        %v6934 = vrcp.pop %v6722
        %v6935 = vmul.f32 %v6722, %v6934
        %v6936 = vsub.f32 1.0, %v6935
        %v6937 = vmul.f32 %v6934, %v6936
        %v6938 = vadd.f32 %v6934, %v6937
        %vm6939 = vweird.f32 %v6722
        %vm6940 = vweird.f32 %v6934
        %vm6941 = vmor %vm6939, %vm6940
        %v6942 = vsel %vm6941, %v6934, %v6938
        %v6943 = vand.u32 2147483647, %v6722
        %vm6944 = vcmp.eq.f32.partialorder %v6943, 8.507059e+37
        %v6945 = vand.u32 %v6722, 2147483648
        %v6946 = vor.u32 1.1754944e-38, %v6945
        %v6947 = vsel %vm6944, %v6946, %v6942
        %v6948 = vmul.f32 1.0, %v6947
        %v6949 = vrcp.pop %v6723
        %v6950 = vmul.f32 %v6723, %v6949
        %v6951 = vsub.f32 1.0, %v6950
        %v6952 = vmul.f32 %v6949, %v6951
        %v6953 = vadd.f32 %v6949, %v6952
        %vm6954 = vweird.f32 %v6723
        %vm6955 = vweird.f32 %v6949
        %vm6956 = vmor %vm6954, %vm6955
        %v6957 = vsel %vm6956, %v6949, %v6953
        %v6958 = vand.u32 2147483647, %v6723
        %vm6959 = vcmp.eq.f32.partialorder %v6958, 8.507059e+37
        %v6960 = vand.u32 %v6723, 2147483648
        %v6961 = vor.u32 1.1754944e-38, %v6960
        %v6962 = vsel %vm6959, %v6961, %v6957
        %v6963 = vmul.f32 1.0, %v6962
        %v6964 = vmul.f32 %v6613, %v6738
        %v6965 = vmul.f32 %v6616, %v6753
        %v6966 = vmul.f32 %v6619, %v6768
        %v6967 = vmul.f32 %v6622, %v6783
        %v6968 = vmul.f32 %v6625, %v6798
        %v6969 = vmul.f32 %v6628, %v6813
        %v6970 = vmul.f32 %v6631, %v6828
        %v6971 = vmul.f32 %v6634, %v6843
        %v6972 = vmul.f32 %v6637, %v6858
        %v6973 = vmul.f32 %v6640, %v6873
        %v6974 = vmul.f32 %v6643, %v6888
        %v6975 = vmul.f32 %v6646, %v6903
        %v6976 = vmul.f32 %v6649, %v6918
        %v6977 = vmul.f32 %v6652, %v6933
        %v6978 = vmul.f32 %v6655, %v6948
        %v6979 = vmul.f32 %v6658, %v6963
        %v6980 = vld [vmem:[%s9] sm:$0x3]
        %v6981 = vld [vmem:[%s10] sm:$0x3]
        %6982 = vmatpush.msra.mxu0 %v6979
        %6983 = vmatpush.msra.mxu0 %v6978
        %6984 = vmatpush.msra.mxu0 %v6977
        %6985 = vmatpush.msra.mxu0 %v6976
        %6986 = vmatpush.msra.mxu0 %v6975
        %6987 = vmatpush.msra.mxu0 %v6974
        %6988 = vmatpush.msra.mxu0 %v6973
        %6989 = vmatpush.msra.mxu0 %v6972
        %6990 = vmatpush.msra.mxu0 %v6971
        %6991 = vmatpush.msra.mxu0 %v6970
        %6992 = vmatpush.msra.mxu0 %v6969
        %6993 = vmatpush.msra.mxu0 %v6968
        %6994 = vmatpush.msra.mxu0 %v6967
        %6995 = vmatpush.msra.mxu0 %v6966
        %6996 = vmatpush.msra.mxu0 %v6965
        %6997 = vmatpush.msra.mxu0 %v6964
        %6998 = vmatmul.f32.gmra.mxu0 %v6980
        %v6999 = vpop.f32.mrf.mxu0
        %v7000 = vadd.f32 %v6981, %v6999
        %7001 = vdwg.mxu0
        %v7002 = vmul.f32 %v7000, 1.442695
        %v7003 = vpow.pop %v7002
        %v7004 = vadd.f32 %v7003, 1.0
        %vm7005 = vcmask 1024
        %7006 = vst.msk [vmem:[%s482] sm:$0x3] %vm7005, %v7004
      $region76: #{_lambda_.1} parent=67 // pred_fallthru
        _
      %p7007 = scmp.lt.s32.totalorder %s27, 1
      %s7008 = scalar_select %p7007, %s27, 1
      %s7009 = smul.addr %s7008, 2
      %s7010 = scalar_lea.vmem %s12, %s7009
      // Predicated region
      $region77: #{_lambda_.1} parent=67 // pred_check
        %p7011 = pneg %p322
      $region78: #{_lambda_.1} parent=67 // pred_check_branch
        %7013 = sbr.rel (%p7011) target = $region80
      $region79: #{_lambda_.1} parent=67 // pred_region
        _
      $region80: #{_lambda_.1} parent=67 // pred_fallthru
        _
    $region68: #{_lambda_.1} parent=5 // pred_fallthru
      _
    %p7014 = scmp.le.s32.totalorder 2, %s18
    // Predicated region
    $region81: #{_lambda_.1} parent=5 // pred_check
      %p7015 = pneg %p7014
    $region82: #{_lambda_.1} parent=5 // pred_check_branch
      %7017 = sbr.rel (%p7015) target = $region84
    $region83: #{_lambda_.1} parent=5 // pred_region
      %s7018 = ssub.s32 %s18, 2
      // Predicated region
      $region85: #{_lambda_.1} parent=83 // pred_check
        %p7019 = pneg %p328
      $region86: #{_lambda_.1} parent=83 // pred_check_branch
        %7021 = sbr.rel (%p7019) target = $region88
      $region87: #{_lambda_.1} parent=83 // pred_region
        %p7022 = scmp.lt.s32.totalorder %s29, 1
        %s7023 = scalar_select %p7022, %s29, 1
        %s7024 = smul.addr %s7023, 2
        %s7025 = scalar_lea.vmem %s12, %s7024
      $region88: #{_lambda_.1} parent=83 // pred_fallthru
        _
    $region84: #{_lambda_.1} parent=5 // pred_fallthru
      _
  $region6: #{_lambda_.1} parent=0 // loop_footer
    %s22 = sadd.s32 1, %s18
  $region7: #{_lambda_.1} parent=0 // loop_footer_branch
    %17 = sbr.rel target = $region3
  $region8: #{_lambda_.1} parent=0 // loop_exit
    _

</llo_original>
